<compile_context>
chip_gen: v5e
topology: v5e:2x2
jax: 0.10.0
libtpu: 0.0.40
codegen_flags: <defaults>
</compile_context>

<pallas_src>
import jax
import jax.numpy as jnp
from jax.experimental import pallas as pl
from jax.experimental.pallas import tpu as pltpu

EPS = 1e-5
_PAD = 8   # data column offset in the padded scratch (f32 sublane-tile aligned)
_CP = pltpu.CompilerParams(vmem_limit_bytes=32 * 1024 * 1024)


# ----------------------------------------------------------------------------
# In-kernel helpers
# ----------------------------------------------------------------------------
def _conv3x3_im2col(pad_ref, x_f32, w_ref, b_ref):
    """3x3, padding=1 conv as a single im2col MXU matmul.

    pad_ref : (N, H+2, W+_PAD+1, C) f32 VMEM scratch (zero border).
    x_f32   : (N, H, W, C) f32 value.
    w_ref   : (9*C, Cout) bf16 ref, rows ordered (dy, dx, ci).
    b_ref   : (1, Cout) f32 ref.
    Returns : (N*H*W, Cout) f32.
    """
    N, H, W, C = x_f32.shape
    M = N * H * W
    # Zero the scratch, then drop the image at column offset _PAD (aligned).
    pad_ref[...] = jnp.zeros(pad_ref.shape, jnp.float32)
    pad_ref[:, 1:H + 1, _PAD:_PAD + W, :] = x_f32
    # Tap (dy, dx) lives at rows [dy, dy+H), cols [_PAD-1+dx, _PAD-1+dx+W).
    patches = jnp.concatenate(
        [pad_ref[:, dy:dy + H, _PAD - 1 + dx:_PAD - 1 + dx + W, :].reshape(M, C)
         for dy in range(3) for dx in range(3)],
        axis=-1).astype(jnp.bfloat16)                       # (M, 9*C)
    return (jnp.dot(patches, w_ref[...],
                    preferred_element_type=jnp.float32) + b_ref[...])


def _bn_relu(y, gamma, beta):
    """Train-mode BatchNorm (biased batch var, two-pass) + ReLU.  y: (M, C) f32."""
    m = y.shape[0]
    mean = jnp.sum(y, axis=0, keepdims=True) * (1.0 / m)
    d = y - mean
    var = jnp.sum(d * d, axis=0, keepdims=True) * (1.0 / m)
    inv = jax.lax.rsqrt(var + EPS)
    return jnp.maximum(d * (inv * gamma) + beta, 0.0)


# ----------------------------------------------------------------------------
# Pallas kernels
# ----------------------------------------------------------------------------
def subnet2conv_kernel(x_ref, w1_ref, b1_ref, g1_ref, be1_ref,
                       w2_ref, b2_ref, g2_ref, be2_ref,
                       o_ref, pad1_ref, pad2_ref):
    """Fused SubNet2Conv: conv3x3 -> BN -> ReLU -> conv3x3 -> BN -> ReLU."""
    N, H, W, _ = x_ref.shape
    Cout = o_ref.shape[-1]
    y = _conv3x3_im2col(pad1_ref, x_ref[...].astype(jnp.float32),
                        w1_ref, b1_ref[...])
    y = _bn_relu(y, g1_ref[...], be1_ref[...])              # (M, Cout) f32
    z = _conv3x3_im2col(pad2_ref, y.reshape(N, H, W, Cout),
                        w2_ref, b2_ref[...])
    z = _bn_relu(z, g2_ref[...], be2_ref[...])
    o_ref[...] = z.reshape(N, H, W, Cout).astype(o_ref.dtype)


def make_matmul_bn_relu_kernel(groups):
    """matmul + bias + train-mode BN + ReLU, with per-channel stats taken
    across `groups` channel groups (groups=4 for the 2x2 transposed conv,
    where columns are ordered (dy, dx, co))."""

    def kernel(x_ref, w_ref, b_ref, g_ref, be_ref, o_ref):
        # x: (M, K) bf16, w: (K, groups*C) bf16, b/g/be: (1, C) f32
        M = x_ref.shape[0]
        C = b_ref.shape[1]

        def tile_groups(v):          # (1, C) -> (1, groups*C)
            return jnp.concatenate([v] * groups, axis=1) if groups > 1 else v

        def group_sum(v):            # (1, groups*C) -> (1, C)
            acc = v[:, 0:C]
            for gi in range(1, groups):
                acc = acc + v[:, gi * C:(gi + 1) * C]
            return acc

        y = (jnp.dot(x_ref[...], w_ref[...],
                     preferred_element_type=jnp.float32)
             + tile_groups(b_ref[...]))
        cnt = M * groups
        mean = group_sum(jnp.sum(y, axis=0, keepdims=True)) * (1.0 / cnt)
        d = y - tile_groups(mean)
        var = group_sum(jnp.sum(d * d, axis=0, keepdims=True)) * (1.0 / cnt)
        scale = tile_groups(jax.lax.rsqrt(var + EPS) * g_ref[...])
        shift = tile_groups(be_ref[...])
        o_ref[...] = jnp.maximum(d * scale + shift, 0.0).astype(o_ref.dtype)

    return kernel


# ----------------------------------------------------------------------------
# Pallas-call wrappers
# ----------------------------------------------------------------------------
def subnet2conv(p, x):
    """Fused SubNet2Conv.  x: (N,H,W,Cin) bf16 -> (N,H,W,Cout) bf16."""
    N, H, W, Cin = x.shape
    Cout = p['w1'].shape[-1]
    return pl.pallas_call(
        subnet2conv_kernel,
        out_shape=jax.ShapeDtypeStruct((N, H, W, Cout), jnp.bfloat16),
        scratch_shapes=[
            pltpu.VMEM((N, H + 2, W + _PAD + 1, Cin), jnp.float32),
            pltpu.VMEM((N, H + 2, W + _PAD + 1, Cout), jnp.float32),
        ],
        compiler_params=_CP,
    )(x, p['w1'], p['b1'], p['g1'], p['be1'],
      p['w2'], p['b2'], p['g2'], p['be2'])


def matmul_bn_relu(x2d, w, b, gamma, beta, groups):
    M = x2d.shape[0]
    GC = w.shape[1]
    return pl.pallas_call(
        make_matmul_bn_relu_kernel(groups),
        out_shape=jax.ShapeDtypeStruct((M, GC), jnp.bfloat16),
        compiler_params=_CP,
    )(x2d, w, b, gamma, beta)


def conv_down_bn_relu(p, x):
    """2x2 stride-2 conv + BN + ReLU.  x: (N,H,W,C) bf16."""
    N, H, W, C = x.shape
    Cout = p['conv_down_w'].shape[-1]
    # space-to-depth (cheap XLA copy); feature order (dy, dx, ci)
    xr = (x.reshape(N, H // 2, 2, W // 2, 2, C)
           .transpose(0, 1, 3, 2, 4, 5)
           .reshape(N * (H // 2) * (W // 2), 4 * C))
    y = matmul_bn_relu(xr, p['conv_down_w'], p['conv_down_b'],
                       p['g0'], p['be0'], groups=1)
    return y.reshape(N, H // 2, W // 2, Cout)


def convt_bn_relu(p, x):
    """2x2 stride-2 transposed conv + BN + ReLU.  x: (N,H,W,Cin) bf16."""
    N, H, W, Cin = x.shape
    Cout = p['convt_w'].shape[-1] // 4
    z = matmul_bn_relu(x.reshape(N * H * W, Cin), p['convt_w'],
                       p['convt_b'], p['g1'], p['be1'], groups=4)
    # depth-to-space (cheap XLA copy); columns ordered (dy, dx, co)
    return (z.reshape(N, H, W, 2, 2, Cout)
             .transpose(0, 1, 3, 2, 4, 5)
             .reshape(N, 2 * H, 2 * W, Cout))


# ----------------------------------------------------------------------------
# Parameter init (deterministic, synthetic, kernel-friendly layouts)
# ----------------------------------------------------------------------------
def _conv3x3_params(key, cin, cout):
    kw, kb = jax.random.split(key)
    w = 0.1 * jax.random.normal(kw, (3, 3, cin, cout), jnp.float32)
    b = 0.1 * jax.random.normal(kb, (cout,), jnp.float32)
    # im2col layout: (9*cin, cout), rows ordered (dy, dx, ci)
    return w.reshape(9 * cin, cout).astype(jnp.bfloat16), b.reshape(1, cout)


def init_subnet2conv(key, n_in, n_out):
    k1, k2 = jax.random.split(key)
    w1, b1 = _conv3x3_params(k1, n_in, n_out)
    w2, b2 = _conv3x3_params(k2, n_out, n_out)
    ones = jnp.ones((1, n_out), jnp.float32)
    zeros = jnp.zeros((1, n_out), jnp.float32)
    return dict(w1=w1, b1=b1, g1=ones, be1=zeros,
                w2=w2, b2=b2, g2=ones, be2=zeros)


def init_net_recurse(key, n_in, mult_chan=2, depth=0):
    n_out = n_in * mult_chan
    keys = jax.random.split(key, 5)
    p = dict(depth=depth,
             sub_2conv_more=init_subnet2conv(keys[0], n_in, n_out))
    if depth > 0:
        p['sub_2conv_less'] = init_subnet2conv(keys[1], 2 * n_out, n_out)
        # 2x2 stride-2 conv: matmul layout (4*C, C), rows ordered (dy, dx, ci)
        p['conv_down_w'] = (0.1 * jax.random.normal(
            keys[2], (2, 2, n_out, n_out), jnp.float32)
        ).reshape(4 * n_out, n_out).astype(jnp.bfloat16)
        p['conv_down_b'] = jnp.zeros((1, n_out), jnp.float32)
        p['g0'] = jnp.ones((1, n_out), jnp.float32)
        p['be0'] = jnp.zeros((1, n_out), jnp.float32)
        # 2x2 stride-2 convT: matmul layout (Cin, 4*Cout), cols ordered (dy,dx,co)
        p['convt_w'] = (0.1 * jax.random.normal(
            keys[3], (2 * n_out, 2, 2, n_out), jnp.float32)
        ).reshape(2 * n_out, 4 * n_out).astype(jnp.bfloat16)
        p['convt_b'] = jnp.zeros((1, n_out), jnp.float32)
        p['g1'] = jnp.ones((1, n_out), jnp.float32)
        p['be1'] = jnp.zeros((1, n_out), jnp.float32)
        p['sub_u'] = init_net_recurse(keys[4], n_out, 2, depth - 1)
    return p


# ----------------------------------------------------------------------------
# Forward passes (NHWC, bf16 activations)
# ----------------------------------------------------------------------------
def net_recurse_forward(p, x):
    if p['depth'] == 0:
        return subnet2conv(p['sub_2conv_more'], x)
    x_more = subnet2conv(p['sub_2conv_more'], x)
    x_relu0 = conv_down_bn_relu(p, x_more)
    x_sub = net_recurse_forward(p['sub_u'], x_relu0)
    x_relu1 = convt_bn_relu(p, x_sub)
    diffY = x_more.shape[1] - x_relu1.shape[1]
    diffX = x_more.shape[2] - x_relu1.shape[2]
    if diffY != 0 or diffX != 0:
        x_relu1 = jnp.pad(
            x_relu1,
            ((0, 0),
             (diffY // 2, diffY - diffY // 2),
             (diffX // 2, diffX - diffX // 2),
             (0, 0)))
    x_cat = jnp.concatenate([x_more, x_relu1], axis=-1)
    return subnet2conv(p['sub_2conv_less'], x_cat)


def net_recurse_nchw(p, x_nchw):
    x = jnp.transpose(x_nchw, (0, 2, 3, 1)).astype(jnp.bfloat16)   # NCHW -> NHWC
    y = net_recurse_forward(p, x)
    return jnp.transpose(y, (0, 3, 1, 2)).astype(jnp.float32)      # NHWC -> NCHW


# ----------------------------------------------------------------------------
if __name__ == "__main__":
    key = jax.random.PRNGKey(0)
    k_params, k_x = jax.random.split(key)

    N, C_IN, H, W = 2, 4, 16, 16
    DEPTH, MULT = 1, 2

    params = init_net_recurse(k_params, C_IN, mult_chan=MULT, depth=DEPTH)
    x = jax.random.normal(k_x, (N, C_IN, H, W), jnp.float32)

    out = jax.block_until_ready(net_recurse_nchw(params, x))

    expected = (N, C_IN * MULT, H, W)
    assert out.shape == expected, (out.shape, expected)
    assert jnp.all(jnp.isfinite(out))
    print("KERNEL_OK")
</pallas_src>

<mosaic_0001>
module attributes {stable_mosaic.version = 11 : i64} {
  func.func @subnet2conv_kernel(%arg0: memref<2x16x16x4xbf16, #tpu.memory_space<vmem>>, %arg1: memref<36x8xbf16, #tpu.memory_space<vmem>>, %arg2: memref<1x8xf32, #tpu.memory_space<vmem>>, %arg3: memref<1x8xf32, #tpu.memory_space<vmem>>, %arg4: memref<1x8xf32, #tpu.memory_space<vmem>>, %arg5: memref<72x8xbf16, #tpu.memory_space<vmem>>, %arg6: memref<1x8xf32, #tpu.memory_space<vmem>>, %arg7: memref<1x8xf32, #tpu.memory_space<vmem>>, %arg8: memref<1x8xf32, #tpu.memory_space<vmem>>, %arg9: memref<2x16x16x8xbf16, #tpu.memory_space<vmem>>, %arg10: memref<2x18x25x4xf32, #tpu.memory_space<vmem>>, %arg11: memref<2x18x25x8xf32, #tpu.memory_space<vmem>>) attributes {dimension_semantics = [], scalar_prefetch = 0 : i64, scratch_operands = 2 : i64, tpu.core_type = #tpu.core_type<tc>} {
    %c0 = arith.constant 0 : index
    %c0_0 = arith.constant 0 : index
    %c0_1 = arith.constant 0 : index
    %c0_2 = arith.constant 0 : index
    %0 = vector.load %arg0[%c0, %c0_0, %c0_1, %c0_2] : memref<2x16x16x4xbf16, #tpu.memory_space<vmem>>, vector<2x16x16x4xbf16>
    %1 = arith.extf %0 : vector<2x16x16x4xbf16> to vector<2x16x16x4xf32>
    %c0_3 = arith.constant 0 : index
    %c0_4 = arith.constant 0 : index
    %2 = vector.load %arg2[%c0_3, %c0_4] : memref<1x8xf32, #tpu.memory_space<vmem>>, vector<1x8xf32>
    %cst = arith.constant 0.000000e+00 : f32
    %3 = vector.broadcast %cst : f32 to vector<2x18x25x4xf32>
    %c0_5 = arith.constant 0 : index
    %c0_6 = arith.constant 0 : index
    %c0_7 = arith.constant 0 : index
    %c0_8 = arith.constant 0 : index
    %4 = vector.load %arg10[%c0_5, %c0_6, %c0_7, %c0_8] : memref<2x18x25x4xf32, #tpu.memory_space<vmem>>, vector<2x18x25x4xf32>
    tpu.vector_store %arg10[%c0_5, %c0_6, %c0_7, %c0_8], %3 {strides = array<i32>} : memref<2x18x25x4xf32, #tpu.memory_space<vmem>>, vector<2x18x25x4xf32>,
    %c0_9 = arith.constant 0 : index
    %c1 = arith.constant 1 : index
    %c8 = arith.constant 8 : index
    %c0_10 = arith.constant 0 : index
    %5 = vector.load %arg10[%c0_9, %c1, %c8, %c0_10] : memref<2x18x25x4xf32, #tpu.memory_space<vmem>>, vector<2x16x16x4xf32>
    tpu.vector_store %arg10[%c0_9, %c1, %c8, %c0_10], %1 {strides = array<i32>} : memref<2x18x25x4xf32, #tpu.memory_space<vmem>>, vector<2x16x16x4xf32>,
    %c0_11 = arith.constant 0 : index
    %c0_12 = arith.constant 0 : index
    %c7 = arith.constant 7 : index
    %c0_13 = arith.constant 0 : index
    %6 = vector.load %arg10[%c0_11, %c0_12, %c7, %c0_13] : memref<2x18x25x4xf32, #tpu.memory_space<vmem>>, vector<2x16x16x4xf32>
    %7 = vector.shape_cast %6 : vector<2x16x16x4xf32> to vector<512x4xf32>
    %c0_14 = arith.constant 0 : index
    %c0_15 = arith.constant 0 : index
    %c8_16 = arith.constant 8 : index
    %c0_17 = arith.constant 0 : index
    %8 = vector.load %arg10[%c0_14, %c0_15, %c8_16, %c0_17] : memref<2x18x25x4xf32, #tpu.memory_space<vmem>>, vector<2x16x16x4xf32>
    %9 = vector.shape_cast %8 : vector<2x16x16x4xf32> to vector<512x4xf32>
    %c0_18 = arith.constant 0 : index
    %c0_19 = arith.constant 0 : index
    %c9 = arith.constant 9 : index
    %c0_20 = arith.constant 0 : index
    %10 = vector.load %arg10[%c0_18, %c0_19, %c9, %c0_20] : memref<2x18x25x4xf32, #tpu.memory_space<vmem>>, vector<2x16x16x4xf32>
    %11 = vector.shape_cast %10 : vector<2x16x16x4xf32> to vector<512x4xf32>
    %c0_21 = arith.constant 0 : index
    %c1_22 = arith.constant 1 : index
    %c7_23 = arith.constant 7 : index
    %c0_24 = arith.constant 0 : index
    %12 = vector.load %arg10[%c0_21, %c1_22, %c7_23, %c0_24] : memref<2x18x25x4xf32, #tpu.memory_space<vmem>>, vector<2x16x16x4xf32>
    %13 = vector.shape_cast %12 : vector<2x16x16x4xf32> to vector<512x4xf32>
    %c0_25 = arith.constant 0 : index
    %c1_26 = arith.constant 1 : index
    %c8_27 = arith.constant 8 : index
    %c0_28 = arith.constant 0 : index
    %14 = vector.load %arg10[%c0_25, %c1_26, %c8_27, %c0_28] : memref<2x18x25x4xf32, #tpu.memory_space<vmem>>, vector<2x16x16x4xf32>
    %15 = vector.shape_cast %14 : vector<2x16x16x4xf32> to vector<512x4xf32>
    %c0_29 = arith.constant 0 : index
    %c1_30 = arith.constant 1 : index
    %c9_31 = arith.constant 9 : index
    %c0_32 = arith.constant 0 : index
    %16 = vector.load %arg10[%c0_29, %c1_30, %c9_31, %c0_32] : memref<2x18x25x4xf32, #tpu.memory_space<vmem>>, vector<2x16x16x4xf32>
    %17 = vector.shape_cast %16 : vector<2x16x16x4xf32> to vector<512x4xf32>
    %c0_33 = arith.constant 0 : index
    %c2 = arith.constant 2 : index
    %c7_34 = arith.constant 7 : index
    %c0_35 = arith.constant 0 : index
    %18 = vector.load %arg10[%c0_33, %c2, %c7_34, %c0_35] : memref<2x18x25x4xf32, #tpu.memory_space<vmem>>, vector<2x16x16x4xf32>
    %19 = vector.shape_cast %18 : vector<2x16x16x4xf32> to vector<512x4xf32>
    %c0_36 = arith.constant 0 : index
    %c2_37 = arith.constant 2 : index
    %c8_38 = arith.constant 8 : index
    %c0_39 = arith.constant 0 : index
    %20 = vector.load %arg10[%c0_36, %c2_37, %c8_38, %c0_39] : memref<2x18x25x4xf32, #tpu.memory_space<vmem>>, vector<2x16x16x4xf32>
    %21 = vector.shape_cast %20 : vector<2x16x16x4xf32> to vector<512x4xf32>
    %c0_40 = arith.constant 0 : index
    %c2_41 = arith.constant 2 : index
    %c9_42 = arith.constant 9 : index
    %c0_43 = arith.constant 0 : index
    %22 = vector.load %arg10[%c0_40, %c2_41, %c9_42, %c0_43] : memref<2x18x25x4xf32, #tpu.memory_space<vmem>>, vector<2x16x16x4xf32>
    %23 = vector.shape_cast %22 : vector<2x16x16x4xf32> to vector<512x4xf32>
    %24 = tpu.concatenate %7, %9, %11, %13, %15, %17, %19, %21, %23 in 1 : vector<512x4xf32>, vector<512x4xf32>, vector<512x4xf32>, vector<512x4xf32>, vector<512x4xf32>, vector<512x4xf32>, vector<512x4xf32>, vector<512x4xf32>, vector<512x4xf32> -> vector<512x36xf32>
    %25 = arith.truncf %24 : vector<512x36xf32> to vector<512x36xbf16>
    %c0_44 = arith.constant 0 : index
    %c0_45 = arith.constant 0 : index
    %26 = vector.load %arg1[%c0_44, %c0_45] : memref<36x8xbf16, #tpu.memory_space<vmem>>, vector<36x8xbf16>
    %cst_46 = arith.constant dense<0.000000e+00> : vector<512x8xf32>
    %27 = tpu.matmul %25, %26, %cst_46 {dimension_numbers = #tpu.dot_dimension_numbers<[1], [0], [0], [1], [0, 0, 1, 1], [], []>} : vector<512x36xbf16>, vector<36x8xbf16>, vector<512x8xf32> -> vector<512x8xf32>
    %28 = vector.broadcast %2 : vector<1x8xf32> to vector<512x8xf32>
    %29 = arith.addf %27, %28 : vector<512x8xf32>
    %c0_47 = arith.constant 0 : index
    %c0_48 = arith.constant 0 : index
    %30 = vector.load %arg3[%c0_47, %c0_48] : memref<1x8xf32, #tpu.memory_space<vmem>>, vector<1x8xf32>
    %c0_49 = arith.constant 0 : index
    %c0_50 = arith.constant 0 : index
    %31 = vector.load %arg4[%c0_49, %c0_50] : memref<1x8xf32, #tpu.memory_space<vmem>>, vector<1x8xf32>
    %cst_51 = arith.constant dense<0.000000e+00> : vector<8xf32>
    %32 = vector.multi_reduction <add>, %29, %cst_51 [0] : vector<512x8xf32> to vector<8xf32>
    %33 = vector.shape_cast %32 : vector<8xf32> to vector<1x8xf32>
    %cst_52 = arith.constant 0.001953125 : f32
    %34 = vector.broadcast %cst_52 : f32 to vector<1x8xf32>
    %35 = arith.mulf %33, %34 : vector<1x8xf32>
    %36 = vector.broadcast %35 : vector<1x8xf32> to vector<512x8xf32>
    %37 = arith.subf %29, %36 : vector<512x8xf32>
    %38 = arith.mulf %37, %37 : vector<512x8xf32>
    %cst_53 = arith.constant dense<0.000000e+00> : vector<8xf32>
    %39 = vector.multi_reduction <add>, %38, %cst_53 [0] : vector<512x8xf32> to vector<8xf32>
    %40 = vector.shape_cast %39 : vector<8xf32> to vector<1x8xf32>
    %cst_54 = arith.constant 0.001953125 : f32
    %41 = vector.broadcast %cst_54 : f32 to vector<1x8xf32>
    %42 = arith.mulf %40, %41 : vector<1x8xf32>
    %cst_55 = arith.constant 9.99999974E-6 : f32
    %43 = vector.broadcast %cst_55 : f32 to vector<1x8xf32>
    %44 = arith.addf %42, %43 : vector<1x8xf32>
    %45 = math.rsqrt %44 : vector<1x8xf32>
    %46 = arith.mulf %45, %30 : vector<1x8xf32>
    %47 = vector.broadcast %46 : vector<1x8xf32> to vector<512x8xf32>
    %48 = arith.mulf %37, %47 : vector<512x8xf32>
    %49 = vector.broadcast %31 : vector<1x8xf32> to vector<512x8xf32>
    %50 = arith.addf %48, %49 : vector<512x8xf32>
    %cst_56 = arith.constant 0.000000e+00 : f32
    %51 = vector.broadcast %cst_56 : f32 to vector<512x8xf32>
    %52 = arith.maximumf %50, %51 : vector<512x8xf32>
    %53 = vector.shape_cast %52 : vector<512x8xf32> to vector<2x16x16x8xf32>
    %c0_57 = arith.constant 0 : index
    %c0_58 = arith.constant 0 : index
    %54 = vector.load %arg6[%c0_57, %c0_58] : memref<1x8xf32, #tpu.memory_space<vmem>>, vector<1x8xf32>
    %cst_59 = arith.constant 0.000000e+00 : f32
    %55 = vector.broadcast %cst_59 : f32 to vector<2x18x25x8xf32>
    %c0_60 = arith.constant 0 : index
    %c0_61 = arith.constant 0 : index
    %c0_62 = arith.constant 0 : index
    %c0_63 = arith.constant 0 : index
    %56 = vector.load %arg11[%c0_60, %c0_61, %c0_62, %c0_63] : memref<2x18x25x8xf32, #tpu.memory_space<vmem>>, vector<2x18x25x8xf32>
    tpu.vector_store %arg11[%c0_60, %c0_61, %c0_62, %c0_63], %55 {strides = array<i32>} : memref<2x18x25x8xf32, #tpu.memory_space<vmem>>, vector<2x18x25x8xf32>,
    %c0_64 = arith.constant 0 : index
    %c1_65 = arith.constant 1 : index
    %c8_66 = arith.constant 8 : index
    %c0_67 = arith.constant 0 : index
    %57 = vector.load %arg11[%c0_64, %c1_65, %c8_66, %c0_67] : memref<2x18x25x8xf32, #tpu.memory_space<vmem>>, vector<2x16x16x8xf32>
    tpu.vector_store %arg11[%c0_64, %c1_65, %c8_66, %c0_67], %53 {strides = array<i32>} : memref<2x18x25x8xf32, #tpu.memory_space<vmem>>, vector<2x16x16x8xf32>,
    %c0_68 = arith.constant 0 : index
    %c0_69 = arith.constant 0 : index
    %c7_70 = arith.constant 7 : index
    %c0_71 = arith.constant 0 : index
    %58 = vector.load %arg11[%c0_68, %c0_69, %c7_70, %c0_71] : memref<2x18x25x8xf32, #tpu.memory_space<vmem>>, vector<2x16x16x8xf32>
    %59 = vector.shape_cast %58 : vector<2x16x16x8xf32> to vector<512x8xf32>
    %c0_72 = arith.constant 0 : index
    %c0_73 = arith.constant 0 : index
    %c8_74 = arith.constant 8 : index
    %c0_75 = arith.constant 0 : index
    %60 = vector.load %arg11[%c0_72, %c0_73, %c8_74, %c0_75] : memref<2x18x25x8xf32, #tpu.memory_space<vmem>>, vector<2x16x16x8xf32>
    %61 = vector.shape_cast %60 : vector<2x16x16x8xf32> to vector<512x8xf32>
    %c0_76 = arith.constant 0 : index
    %c0_77 = arith.constant 0 : index
    %c9_78 = arith.constant 9 : index
    %c0_79 = arith.constant 0 : index
    %62 = vector.load %arg11[%c0_76, %c0_77, %c9_78, %c0_79] : memref<2x18x25x8xf32, #tpu.memory_space<vmem>>, vector<2x16x16x8xf32>
    %63 = vector.shape_cast %62 : vector<2x16x16x8xf32> to vector<512x8xf32>
    %c0_80 = arith.constant 0 : index
    %c1_81 = arith.constant 1 : index
    %c7_82 = arith.constant 7 : index
    %c0_83 = arith.constant 0 : index
    %64 = vector.load %arg11[%c0_80, %c1_81, %c7_82, %c0_83] : memref<2x18x25x8xf32, #tpu.memory_space<vmem>>, vector<2x16x16x8xf32>
    %65 = vector.shape_cast %64 : vector<2x16x16x8xf32> to vector<512x8xf32>
    %c0_84 = arith.constant 0 : index
    %c1_85 = arith.constant 1 : index
    %c8_86 = arith.constant 8 : index
    %c0_87 = arith.constant 0 : index
    %66 = vector.load %arg11[%c0_84, %c1_85, %c8_86, %c0_87] : memref<2x18x25x8xf32, #tpu.memory_space<vmem>>, vector<2x16x16x8xf32>
    %67 = vector.shape_cast %66 : vector<2x16x16x8xf32> to vector<512x8xf32>
    %c0_88 = arith.constant 0 : index
    %c1_89 = arith.constant 1 : index
    %c9_90 = arith.constant 9 : index
    %c0_91 = arith.constant 0 : index
    %68 = vector.load %arg11[%c0_88, %c1_89, %c9_90, %c0_91] : memref<2x18x25x8xf32, #tpu.memory_space<vmem>>, vector<2x16x16x8xf32>
    %69 = vector.shape_cast %68 : vector<2x16x16x8xf32> to vector<512x8xf32>
    %c0_92 = arith.constant 0 : index
    %c2_93 = arith.constant 2 : index
    %c7_94 = arith.constant 7 : index
    %c0_95 = arith.constant 0 : index
    %70 = vector.load %arg11[%c0_92, %c2_93, %c7_94, %c0_95] : memref<2x18x25x8xf32, #tpu.memory_space<vmem>>, vector<2x16x16x8xf32>
    %71 = vector.shape_cast %70 : vector<2x16x16x8xf32> to vector<512x8xf32>
    %c0_96 = arith.constant 0 : index
    %c2_97 = arith.constant 2 : index
    %c8_98 = arith.constant 8 : index
    %c0_99 = arith.constant 0 : index
    %72 = vector.load %arg11[%c0_96, %c2_97, %c8_98, %c0_99] : memref<2x18x25x8xf32, #tpu.memory_space<vmem>>, vector<2x16x16x8xf32>
    %73 = vector.shape_cast %72 : vector<2x16x16x8xf32> to vector<512x8xf32>
    %c0_100 = arith.constant 0 : index
    %c2_101 = arith.constant 2 : index
    %c9_102 = arith.constant 9 : index
    %c0_103 = arith.constant 0 : index
    %74 = vector.load %arg11[%c0_100, %c2_101, %c9_102, %c0_103] : memref<2x18x25x8xf32, #tpu.memory_space<vmem>>, vector<2x16x16x8xf32>
    %75 = vector.shape_cast %74 : vector<2x16x16x8xf32> to vector<512x8xf32>
    %76 = tpu.concatenate %59, %61, %63, %65, %67, %69, %71, %73, %75 in 1 : vector<512x8xf32>, vector<512x8xf32>, vector<512x8xf32>, vector<512x8xf32>, vector<512x8xf32>, vector<512x8xf32>, vector<512x8xf32>, vector<512x8xf32>, vector<512x8xf32> -> vector<512x72xf32>
    %77 = arith.truncf %76 : vector<512x72xf32> to vector<512x72xbf16>
    %c0_104 = arith.constant 0 : index
    %c0_105 = arith.constant 0 : index
    %78 = vector.load %arg5[%c0_104, %c0_105] : memref<72x8xbf16, #tpu.memory_space<vmem>>, vector<72x8xbf16>
    %cst_106 = arith.constant dense<0.000000e+00> : vector<512x8xf32>
    %79 = tpu.matmul %77, %78, %cst_106 {dimension_numbers = #tpu.dot_dimension_numbers<[1], [0], [0], [1], [0, 0, 1, 1], [], []>} : vector<512x72xbf16>, vector<72x8xbf16>, vector<512x8xf32> -> vector<512x8xf32>
    %80 = vector.broadcast %54 : vector<1x8xf32> to vector<512x8xf32>
    %81 = arith.addf %79, %80 : vector<512x8xf32>
    %c0_107 = arith.constant 0 : index
    %c0_108 = arith.constant 0 : index
    %82 = vector.load %arg7[%c0_107, %c0_108] : memref<1x8xf32, #tpu.memory_space<vmem>>, vector<1x8xf32>
    %c0_109 = arith.constant 0 : index
    %c0_110 = arith.constant 0 : index
    %83 = vector.load %arg8[%c0_109, %c0_110] : memref<1x8xf32, #tpu.memory_space<vmem>>, vector<1x8xf32>
    %cst_111 = arith.constant dense<0.000000e+00> : vector<8xf32>
    %84 = vector.multi_reduction <add>, %81, %cst_111 [0] : vector<512x8xf32> to vector<8xf32>
    %85 = vector.shape_cast %84 : vector<8xf32> to vector<1x8xf32>
    %cst_112 = arith.constant 0.001953125 : f32
    %86 = vector.broadcast %cst_112 : f32 to vector<1x8xf32>
    %87 = arith.mulf %85, %86 : vector<1x8xf32>
    %88 = vector.broadcast %87 : vector<1x8xf32> to vector<512x8xf32>
    %89 = arith.subf %81, %88 : vector<512x8xf32>
    %90 = arith.mulf %89, %89 : vector<512x8xf32>
    %cst_113 = arith.constant dense<0.000000e+00> : vector<8xf32>
    %91 = vector.multi_reduction <add>, %90, %cst_113 [0] : vector<512x8xf32> to vector<8xf32>
    %92 = vector.shape_cast %91 : vector<8xf32> to vector<1x8xf32>
    %cst_114 = arith.constant 0.001953125 : f32
    %93 = vector.broadcast %cst_114 : f32 to vector<1x8xf32>
    %94 = arith.mulf %92, %93 : vector<1x8xf32>
    %cst_115 = arith.constant 9.99999974E-6 : f32
    %95 = vector.broadcast %cst_115 : f32 to vector<1x8xf32>
    %96 = arith.addf %94, %95 : vector<1x8xf32>
    %97 = math.rsqrt %96 : vector<1x8xf32>
    %98 = arith.mulf %97, %82 : vector<1x8xf32>
    %99 = vector.broadcast %98 : vector<1x8xf32> to vector<512x8xf32>
    %100 = arith.mulf %89, %99 : vector<512x8xf32>
    %101 = vector.broadcast %83 : vector<1x8xf32> to vector<512x8xf32>
    %102 = arith.addf %100, %101 : vector<512x8xf32>
    %cst_116 = arith.constant 0.000000e+00 : f32
    %103 = vector.broadcast %cst_116 : f32 to vector<512x8xf32>
    %104 = arith.maximumf %102, %103 : vector<512x8xf32>
    %105 = vector.shape_cast %104 : vector<512x8xf32> to vector<2x16x16x8xf32>
    %106 = arith.truncf %105 : vector<2x16x16x8xf32> to vector<2x16x16x8xbf16>
    %c0_117 = arith.constant 0 : index
    %c0_118 = arith.constant 0 : index
    %c0_119 = arith.constant 0 : index
    %c0_120 = arith.constant 0 : index
    %107 = vector.load %arg9[%c0_117, %c0_118, %c0_119, %c0_120] : memref<2x16x16x8xbf16, #tpu.memory_space<vmem>>, vector<2x16x16x8xbf16>
    tpu.vector_store %arg9[%c0_117, %c0_118, %c0_119, %c0_120], %106 {strides = array<i32>} : memref<2x16x16x8xbf16, #tpu.memory_space<vmem>>, vector<2x16x16x8xbf16>,
    return
  }
}

</mosaic_0001>

<llo_original>
// kernel: tpu_custom_call.1
$region0: #{tpu_custom_call.1}
  #allocation0 [shape = 'u32[]', space=smem, size = 0x4, offset = 0x4, fixed_abs, tag = 'smem constant byte address 0x4 - core index']
  #allocation1 [shape = 'u32[72,128]{1,0:T(1,128)}', space=vmem, size = 0x9000, scoped, tag = 'internal scratch']
  #allocation2 [shape = 'f32[2,18,25,4]{3,2,1,0:T(8,128)}', space=vmem, size = 0x90000, scoped, tag = 'scratch operand']
  #allocation3 [shape = 'f32[2,18,25,8]{3,2,1,0:T(8,128)}', space=vmem, size = 0x90000, scoped, tag = 'scratch operand']
  %s0 = inlined_call_operand.vmem [shape: bf16[2,16,16,4], index: 0, kind: input, shape index: {}]
  %s1 = inlined_call_operand.vmem [shape: bf16[36,8], index: 1, kind: input, shape index: {}]
  %s2 = inlined_call_operand.vmem [shape: f32[1,8], index: 2, kind: input, shape index: {}]
  %s3 = inlined_call_operand.vmem [shape: f32[1,8], index: 3, kind: input, shape index: {}]
  %s4 = inlined_call_operand.vmem [shape: f32[1,8], index: 4, kind: input, shape index: {}]
  %s5 = inlined_call_operand.vmem [shape: bf16[72,8], index: 5, kind: input, shape index: {}]
  %s6 = inlined_call_operand.vmem [shape: f32[1,8], index: 6, kind: input, shape index: {}]
  %s7 = inlined_call_operand.vmem [shape: f32[1,8], index: 7, kind: input, shape index: {}]
  %s8 = inlined_call_operand.vmem [shape: f32[1,8], index: 8, kind: input, shape index: {}]
  %s9 = inlined_call_operand.vmem [shape: bf16[2,16,16,8], index: 9, kind: output, shape index: {}]
  %s10 = sld [smem:[#allocation0]]
  $region46: #{tpu_custom_call.1} parent=0
    _
  %s12 = ssub.s32 1, %s10
  %s13 = scalar_select 0, %s12, %s10
  // Predicated region
  $region2: #{tpu_custom_call.1} parent=0 // pred_check
    _
  $region3: #{tpu_custom_call.1} parent=0 // pred_check_branch
    %15 = sbr.rel (0) target = $region5
  $region4: #{tpu_custom_call.1} parent=0 // pred_region
    _
  $region5: #{tpu_custom_call.1} parent=0 // pred_fallthru
    _
  // Predicated region
  $region6: #{tpu_custom_call.1} parent=0 // pred_check
    _
  $region7: #{tpu_custom_call.1} parent=0 // pred_check_branch
    %17 = sbr.rel (0) target = $region9
  $region8: #{tpu_custom_call.1} parent=0 // pred_region
    _
  $region9: #{tpu_custom_call.1} parent=0 // pred_fallthru
    _
  // Predicated region
  $region10: #{tpu_custom_call.1} parent=0 // pred_check
    _
  $region11: #{tpu_custom_call.1} parent=0 // pred_check_branch
    %19 = sbr.rel (0) target = $region13
  $region12: #{tpu_custom_call.1} parent=0 // pred_region
    _
  $region13: #{tpu_custom_call.1} parent=0 // pred_fallthru
    _
  // Predicated region
  $region14: #{tpu_custom_call.1} parent=0 // pred_check
    _
  $region15: #{tpu_custom_call.1} parent=0 // pred_check_branch
    %21 = sbr.rel (0) target = $region17
  $region16: #{tpu_custom_call.1} parent=0 // pred_region
    _
  $region17: #{tpu_custom_call.1} parent=0 // pred_fallthru
    _
  // Predicated region
  $region18: #{tpu_custom_call.1} parent=0 // pred_check
    _
  $region19: #{tpu_custom_call.1} parent=0 // pred_check_branch
    %23 = sbr.rel (0) target = $region21
  $region20: #{tpu_custom_call.1} parent=0 // pred_region
    _
  $region21: #{tpu_custom_call.1} parent=0 // pred_fallthru
    _
  // Predicated region
  $region22: #{tpu_custom_call.1} parent=0 // pred_check
    _
  $region23: #{tpu_custom_call.1} parent=0 // pred_check_branch
    %25 = sbr.rel (0) target = $region25
  $region24: #{tpu_custom_call.1} parent=0 // pred_region
    _
  $region25: #{tpu_custom_call.1} parent=0 // pred_fallthru
    _
  // Predicated region
  $region26: #{tpu_custom_call.1} parent=0 // pred_check
    _
  $region27: #{tpu_custom_call.1} parent=0 // pred_check_branch
    %27 = sbr.rel (0) target = $region29
  $region28: #{tpu_custom_call.1} parent=0 // pred_region
    _
  $region29: #{tpu_custom_call.1} parent=0 // pred_fallthru
    _
  // Predicated region
  $region30: #{tpu_custom_call.1} parent=0 // pred_check
    _
  $region31: #{tpu_custom_call.1} parent=0 // pred_check_branch
    %29 = sbr.rel (0) target = $region33
  $region32: #{tpu_custom_call.1} parent=0 // pred_region
    _
  $region33: #{tpu_custom_call.1} parent=0 // pred_fallthru
    _
  // Predicated region
  $region34: #{tpu_custom_call.1} parent=0 // pred_check
    _
  $region35: #{tpu_custom_call.1} parent=0 // pred_check_branch
    %31 = sbr.rel (0) target = $region37
  $region36: #{tpu_custom_call.1} parent=0 // pred_region
    _
  $region37: #{tpu_custom_call.1} parent=0 // pred_fallthru
    _
  %v33 = vld [vmem:[%s0] sm:$0xf]
  %v34 = vld [vmem:[%s0 + $0x4] sm:$0xf]
  %v35 = vld [vmem:[%s0 + $0x8] sm:$0xf]
  %v36 = vld [vmem:[%s0 + $0xc] sm:$0xf]
  %v37 = vld [vmem:[%s0 + $0x10] sm:$0xf]
  %v38 = vld [vmem:[%s0 + $0x14] sm:$0xf]
  %v39 = vld [vmem:[%s0 + $0x18] sm:$0xf]
  %v40 = vld [vmem:[%s0 + $0x1c] sm:$0xf]
  %v41 = vld [vmem:[%s0 + $0x20] sm:$0xf]
  %v42 = vld [vmem:[%s0 + $0x24] sm:$0xf]
  %v43 = vld [vmem:[%s0 + $0x28] sm:$0xf]
  %v44 = vld [vmem:[%s0 + $0x2c] sm:$0xf]
  %v45 = vld [vmem:[%s0 + $0x30] sm:$0xf]
  %v46 = vld [vmem:[%s0 + $0x34] sm:$0xf]
  %v47 = vld [vmem:[%s0 + $0x38] sm:$0xf]
  %v48 = vld [vmem:[%s0 + $0x3c] sm:$0xf]
  %v49 = vld [vmem:[%s0 + $0x40] sm:$0xf]
  %v50 = vld [vmem:[%s0 + $0x44] sm:$0xf]
  %v51 = vld [vmem:[%s0 + $0x48] sm:$0xf]
  %v52 = vld [vmem:[%s0 + $0x4c] sm:$0xf]
  %v53 = vld [vmem:[%s0 + $0x50] sm:$0xf]
  %v54 = vld [vmem:[%s0 + $0x54] sm:$0xf]
  %v55 = vld [vmem:[%s0 + $0x58] sm:$0xf]
  %v56 = vld [vmem:[%s0 + $0x5c] sm:$0xf]
  %v57 = vld [vmem:[%s0 + $0x60] sm:$0xf]
  %v58 = vld [vmem:[%s0 + $0x64] sm:$0xf]
  %v59 = vld [vmem:[%s0 + $0x68] sm:$0xf]
  %v60 = vld [vmem:[%s0 + $0x6c] sm:$0xf]
  %v61 = vld [vmem:[%s0 + $0x70] sm:$0xf]
  %v62 = vld [vmem:[%s0 + $0x74] sm:$0xf]
  %v63 = vld [vmem:[%s0 + $0x78] sm:$0xf]
  %v64 = vld [vmem:[%s0 + $0x7c] sm:$0xf]
  %v65 = vld [vmem:[%s0 + $0x80] sm:$0xf]
  %v66 = vld [vmem:[%s0 + $0x84] sm:$0xf]
  %v67 = vld [vmem:[%s0 + $0x88] sm:$0xf]
  %v68 = vld [vmem:[%s0 + $0x8c] sm:$0xf]
  %v69 = vld [vmem:[%s0 + $0x90] sm:$0xf]
  %v70 = vld [vmem:[%s0 + $0x94] sm:$0xf]
  %v71 = vld [vmem:[%s0 + $0x98] sm:$0xf]
  %v72 = vld [vmem:[%s0 + $0x9c] sm:$0xf]
  %v73 = vld [vmem:[%s0 + $0xa0] sm:$0xf]
  %v74 = vld [vmem:[%s0 + $0xa4] sm:$0xf]
  %v75 = vld [vmem:[%s0 + $0xa8] sm:$0xf]
  %v76 = vld [vmem:[%s0 + $0xac] sm:$0xf]
  %v77 = vld [vmem:[%s0 + $0xb0] sm:$0xf]
  %v78 = vld [vmem:[%s0 + $0xb4] sm:$0xf]
  %v79 = vld [vmem:[%s0 + $0xb8] sm:$0xf]
  %v80 = vld [vmem:[%s0 + $0xbc] sm:$0xf]
  %v81 = vld [vmem:[%s0 + $0xc0] sm:$0xf]
  %v82 = vld [vmem:[%s0 + $0xc4] sm:$0xf]
  %v83 = vld [vmem:[%s0 + $0xc8] sm:$0xf]
  %v84 = vld [vmem:[%s0 + $0xcc] sm:$0xf]
  %v85 = vld [vmem:[%s0 + $0xd0] sm:$0xf]
  %v86 = vld [vmem:[%s0 + $0xd4] sm:$0xf]
  %v87 = vld [vmem:[%s0 + $0xd8] sm:$0xf]
  %v88 = vld [vmem:[%s0 + $0xdc] sm:$0xf]
  %v89 = vld [vmem:[%s0 + $0xe0] sm:$0xf]
  %v90 = vld [vmem:[%s0 + $0xe4] sm:$0xf]
  %v91 = vld [vmem:[%s0 + $0xe8] sm:$0xf]
  %v92 = vld [vmem:[%s0 + $0xec] sm:$0xf]
  %v93 = vld [vmem:[%s0 + $0xf0] sm:$0xf]
  %v94 = vld [vmem:[%s0 + $0xf4] sm:$0xf]
  %v95 = vld [vmem:[%s0 + $0xf8] sm:$0xf]
  %v96 = vld [vmem:[%s0 + $0xfc] sm:$0xf]
  %v97 = vunpack.c.l.bf16 %v33
  %v98 = vunpack.c.l.bf16 %v34
  %v99 = vunpack.c.l.bf16 %v35
  %v100 = vunpack.c.l.bf16 %v36
  %v101 = vunpack.c.l.bf16 %v37
  %v102 = vunpack.c.l.bf16 %v38
  %v103 = vunpack.c.l.bf16 %v39
  %v104 = vunpack.c.l.bf16 %v40
  %v105 = vunpack.c.l.bf16 %v41
  %v106 = vunpack.c.l.bf16 %v42
  %v107 = vunpack.c.l.bf16 %v43
  %v108 = vunpack.c.l.bf16 %v44
  %v109 = vunpack.c.l.bf16 %v45
  %v110 = vunpack.c.l.bf16 %v46
  %v111 = vunpack.c.l.bf16 %v47
  %v112 = vunpack.c.l.bf16 %v48
  %v113 = vunpack.c.l.bf16 %v49
  %v114 = vunpack.c.l.bf16 %v50
  %v115 = vunpack.c.l.bf16 %v51
  %v116 = vunpack.c.l.bf16 %v52
  %v117 = vunpack.c.l.bf16 %v53
  %v118 = vunpack.c.l.bf16 %v54
  %v119 = vunpack.c.l.bf16 %v55
  %v120 = vunpack.c.l.bf16 %v56
  %v121 = vunpack.c.l.bf16 %v57
  %v122 = vunpack.c.l.bf16 %v58
  %v123 = vunpack.c.l.bf16 %v59
  %v124 = vunpack.c.l.bf16 %v60
  %v125 = vunpack.c.l.bf16 %v61
  %v126 = vunpack.c.l.bf16 %v62
  %v127 = vunpack.c.l.bf16 %v63
  %v128 = vunpack.c.l.bf16 %v64
  %v129 = vunpack.c.l.bf16 %v65
  %v130 = vunpack.c.l.bf16 %v66
  %v131 = vunpack.c.l.bf16 %v67
  %v132 = vunpack.c.l.bf16 %v68
  %v133 = vunpack.c.l.bf16 %v69
  %v134 = vunpack.c.l.bf16 %v70
  %v135 = vunpack.c.l.bf16 %v71
  %v136 = vunpack.c.l.bf16 %v72
  %v137 = vunpack.c.l.bf16 %v73
  %v138 = vunpack.c.l.bf16 %v74
  %v139 = vunpack.c.l.bf16 %v75
  %v140 = vunpack.c.l.bf16 %v76
  %v141 = vunpack.c.l.bf16 %v77
  %v142 = vunpack.c.l.bf16 %v78
  %v143 = vunpack.c.l.bf16 %v79
  %v144 = vunpack.c.l.bf16 %v80
  %v145 = vunpack.c.l.bf16 %v81
  %v146 = vunpack.c.l.bf16 %v82
  %v147 = vunpack.c.l.bf16 %v83
  %v148 = vunpack.c.l.bf16 %v84
  %v149 = vunpack.c.l.bf16 %v85
  %v150 = vunpack.c.l.bf16 %v86
  %v151 = vunpack.c.l.bf16 %v87
  %v152 = vunpack.c.l.bf16 %v88
  %v153 = vunpack.c.l.bf16 %v89
  %v154 = vunpack.c.l.bf16 %v90
  %v155 = vunpack.c.l.bf16 %v91
  %v156 = vunpack.c.l.bf16 %v92
  %v157 = vunpack.c.l.bf16 %v93
  %v158 = vunpack.c.l.bf16 %v94
  %v159 = vunpack.c.l.bf16 %v95
  %v160 = vunpack.c.l.bf16 %v96
  %v161 = vld [vmem:[%s2] sm:$0x1]
  %vm162 = vcmask 31744
  %163 = vst.msk [vmem:[#allocation2] sm:$0xff] %vm162, 0.0
  %164 = vst.msk [vmem:[#allocation2 + $0x8] sm:$0xff] %vm162, 0.0
  %165 = vst.msk [vmem:[#allocation2 + $0x10] sm:$0xff] %vm162, 0.0
  %vm166 = vcmask 24576
  %167 = vst.msk [vmem:[#allocation2 + $0x18] sm:$0x1] %vm166, 0.0
  %168 = vst.msk [vmem:[#allocation2 + $0x20] sm:$0xff] %vm162, 0.0
  %169 = vst.msk [vmem:[#allocation2 + $0x28] sm:$0xff] %vm162, 0.0
  %170 = vst.msk [vmem:[#allocation2 + $0x30] sm:$0xff] %vm162, 0.0
  %171 = vst.msk [vmem:[#allocation2 + $0x38] sm:$0x1] %vm166, 0.0
  %172 = vst.msk [vmem:[#allocation2 + $0x40] sm:$0xff] %vm162, 0.0
  %173 = vst.msk [vmem:[#allocation2 + $0x48] sm:$0xff] %vm162, 0.0
  %174 = vst.msk [vmem:[#allocation2 + $0x50] sm:$0xff] %vm162, 0.0
  %175 = vst.msk [vmem:[#allocation2 + $0x58] sm:$0x1] %vm166, 0.0
  %176 = vst.msk [vmem:[#allocation2 + $0x60] sm:$0xff] %vm162, 0.0
  %177 = vst.msk [vmem:[#allocation2 + $0x68] sm:$0xff] %vm162, 0.0
  %178 = vst.msk [vmem:[#allocation2 + $0x70] sm:$0xff] %vm162, 0.0
  %179 = vst.msk [vmem:[#allocation2 + $0x78] sm:$0x1] %vm166, 0.0
  %180 = vst.msk [vmem:[#allocation2 + $0x80] sm:$0xff] %vm162, 0.0
  %181 = vst.msk [vmem:[#allocation2 + $0x88] sm:$0xff] %vm162, 0.0
  %182 = vst.msk [vmem:[#allocation2 + $0x90] sm:$0xff] %vm162, 0.0
  %183 = vst.msk [vmem:[#allocation2 + $0x98] sm:$0x1] %vm166, 0.0
  %184 = vst.msk [vmem:[#allocation2 + $0xa0] sm:$0xff] %vm162, 0.0
  %185 = vst.msk [vmem:[#allocation2 + $0xa8] sm:$0xff] %vm162, 0.0
  %186 = vst.msk [vmem:[#allocation2 + $0xb0] sm:$0xff] %vm162, 0.0
  %187 = vst.msk [vmem:[#allocation2 + $0xb8] sm:$0x1] %vm166, 0.0
  %188 = vst.msk [vmem:[#allocation2 + $0xc0] sm:$0xff] %vm162, 0.0
  %189 = vst.msk [vmem:[#allocation2 + $0xc8] sm:$0xff] %vm162, 0.0
  %190 = vst.msk [vmem:[#allocation2 + $0xd0] sm:$0xff] %vm162, 0.0
  %191 = vst.msk [vmem:[#allocation2 + $0xd8] sm:$0x1] %vm166, 0.0
  %192 = vst.msk [vmem:[#allocation2 + $0xe0] sm:$0xff] %vm162, 0.0
  %193 = vst.msk [vmem:[#allocation2 + $0xe8] sm:$0xff] %vm162, 0.0
  %194 = vst.msk [vmem:[#allocation2 + $0xf0] sm:$0xff] %vm162, 0.0
  %195 = vst.msk [vmem:[#allocation2 + $0xf8] sm:$0x1] %vm166, 0.0
  %196 = vst.msk [vmem:[#allocation2 + $0x100] sm:$0xff] %vm162, 0.0
  %197 = vst.msk [vmem:[#allocation2 + $0x108] sm:$0xff] %vm162, 0.0
  %198 = vst.msk [vmem:[#allocation2 + $0x110] sm:$0xff] %vm162, 0.0
  %199 = vst.msk [vmem:[#allocation2 + $0x118] sm:$0x1] %vm166, 0.0
  %200 = vst.msk [vmem:[#allocation2 + $0x120] sm:$0xff] %vm162, 0.0
  %201 = vst.msk [vmem:[#allocation2 + $0x128] sm:$0xff] %vm162, 0.0
  %202 = vst.msk [vmem:[#allocation2 + $0x130] sm:$0xff] %vm162, 0.0
  %203 = vst.msk [vmem:[#allocation2 + $0x138] sm:$0x1] %vm166, 0.0
  %204 = vst.msk [vmem:[#allocation2 + $0x140] sm:$0xff] %vm162, 0.0
  %205 = vst.msk [vmem:[#allocation2 + $0x148] sm:$0xff] %vm162, 0.0
  %206 = vst.msk [vmem:[#allocation2 + $0x150] sm:$0xff] %vm162, 0.0
  %207 = vst.msk [vmem:[#allocation2 + $0x158] sm:$0x1] %vm166, 0.0
  %208 = vst.msk [vmem:[#allocation2 + $0x160] sm:$0xff] %vm162, 0.0
  %209 = vst.msk [vmem:[#allocation2 + $0x168] sm:$0xff] %vm162, 0.0
  %210 = vst.msk [vmem:[#allocation2 + $0x170] sm:$0xff] %vm162, 0.0
  %211 = vst.msk [vmem:[#allocation2 + $0x178] sm:$0x1] %vm166, 0.0
  %212 = vst.msk [vmem:[#allocation2 + $0x180] sm:$0xff] %vm162, 0.0
  %213 = vst.msk [vmem:[#allocation2 + $0x188] sm:$0xff] %vm162, 0.0
  %214 = vst.msk [vmem:[#allocation2 + $0x190] sm:$0xff] %vm162, 0.0
  %215 = vst.msk [vmem:[#allocation2 + $0x198] sm:$0x1] %vm166, 0.0
  %216 = vst.msk [vmem:[#allocation2 + $0x1a0] sm:$0xff] %vm162, 0.0
  %217 = vst.msk [vmem:[#allocation2 + $0x1a8] sm:$0xff] %vm162, 0.0
  %218 = vst.msk [vmem:[#allocation2 + $0x1b0] sm:$0xff] %vm162, 0.0
  %219 = vst.msk [vmem:[#allocation2 + $0x1b8] sm:$0x1] %vm166, 0.0
  %220 = vst.msk [vmem:[#allocation2 + $0x1c0] sm:$0xff] %vm162, 0.0
  %221 = vst.msk [vmem:[#allocation2 + $0x1c8] sm:$0xff] %vm162, 0.0
  %222 = vst.msk [vmem:[#allocation2 + $0x1d0] sm:$0xff] %vm162, 0.0
  %223 = vst.msk [vmem:[#allocation2 + $0x1d8] sm:$0x1] %vm166, 0.0
  %224 = vst.msk [vmem:[#allocation2 + $0x1e0] sm:$0xff] %vm162, 0.0
  %225 = vst.msk [vmem:[#allocation2 + $0x1e8] sm:$0xff] %vm162, 0.0
  %226 = vst.msk [vmem:[#allocation2 + $0x1f0] sm:$0xff] %vm162, 0.0
  %227 = vst.msk [vmem:[#allocation2 + $0x1f8] sm:$0x1] %vm166, 0.0
  %228 = vst.msk [vmem:[#allocation2 + $0x200] sm:$0xff] %vm162, 0.0
  %229 = vst.msk [vmem:[#allocation2 + $0x208] sm:$0xff] %vm162, 0.0
  %230 = vst.msk [vmem:[#allocation2 + $0x210] sm:$0xff] %vm162, 0.0
  %231 = vst.msk [vmem:[#allocation2 + $0x218] sm:$0x1] %vm166, 0.0
  %232 = vst.msk [vmem:[#allocation2 + $0x220] sm:$0xff] %vm162, 0.0
  %233 = vst.msk [vmem:[#allocation2 + $0x228] sm:$0xff] %vm162, 0.0
  %234 = vst.msk [vmem:[#allocation2 + $0x230] sm:$0xff] %vm162, 0.0
  %235 = vst.msk [vmem:[#allocation2 + $0x238] sm:$0x1] %vm166, 0.0
  %236 = vst.msk [vmem:[#allocation2 + $0x240] sm:$0xff] %vm162, 0.0
  %237 = vst.msk [vmem:[#allocation2 + $0x248] sm:$0xff] %vm162, 0.0
  %238 = vst.msk [vmem:[#allocation2 + $0x250] sm:$0xff] %vm162, 0.0
  %239 = vst.msk [vmem:[#allocation2 + $0x258] sm:$0x1] %vm166, 0.0
  %240 = vst.msk [vmem:[#allocation2 + $0x260] sm:$0xff] %vm162, 0.0
  %241 = vst.msk [vmem:[#allocation2 + $0x268] sm:$0xff] %vm162, 0.0
  %242 = vst.msk [vmem:[#allocation2 + $0x270] sm:$0xff] %vm162, 0.0
  %243 = vst.msk [vmem:[#allocation2 + $0x278] sm:$0x1] %vm166, 0.0
  %244 = vst.msk [vmem:[#allocation2 + $0x280] sm:$0xff] %vm162, 0.0
  %245 = vst.msk [vmem:[#allocation2 + $0x288] sm:$0xff] %vm162, 0.0
  %246 = vst.msk [vmem:[#allocation2 + $0x290] sm:$0xff] %vm162, 0.0
  %247 = vst.msk [vmem:[#allocation2 + $0x298] sm:$0x1] %vm166, 0.0
  %248 = vst.msk [vmem:[#allocation2 + $0x2a0] sm:$0xff] %vm162, 0.0
  %249 = vst.msk [vmem:[#allocation2 + $0x2a8] sm:$0xff] %vm162, 0.0
  %250 = vst.msk [vmem:[#allocation2 + $0x2b0] sm:$0xff] %vm162, 0.0
  %251 = vst.msk [vmem:[#allocation2 + $0x2b8] sm:$0x1] %vm166, 0.0
  %252 = vst.msk [vmem:[#allocation2 + $0x2c0] sm:$0xff] %vm162, 0.0
  %253 = vst.msk [vmem:[#allocation2 + $0x2c8] sm:$0xff] %vm162, 0.0
  %254 = vst.msk [vmem:[#allocation2 + $0x2d0] sm:$0xff] %vm162, 0.0
  %255 = vst.msk [vmem:[#allocation2 + $0x2d8] sm:$0x1] %vm166, 0.0
  %256 = vst.msk [vmem:[#allocation2 + $0x2e0] sm:$0xff] %vm162, 0.0
  %257 = vst.msk [vmem:[#allocation2 + $0x2e8] sm:$0xff] %vm162, 0.0
  %258 = vst.msk [vmem:[#allocation2 + $0x2f0] sm:$0xff] %vm162, 0.0
  %259 = vst.msk [vmem:[#allocation2 + $0x2f8] sm:$0x1] %vm166, 0.0
  %260 = vst.msk [vmem:[#allocation2 + $0x300] sm:$0xff] %vm162, 0.0
  %261 = vst.msk [vmem:[#allocation2 + $0x308] sm:$0xff] %vm162, 0.0
  %262 = vst.msk [vmem:[#allocation2 + $0x310] sm:$0xff] %vm162, 0.0
  %263 = vst.msk [vmem:[#allocation2 + $0x318] sm:$0x1] %vm166, 0.0
  %264 = vst.msk [vmem:[#allocation2 + $0x320] sm:$0xff] %vm162, 0.0
  %265 = vst.msk [vmem:[#allocation2 + $0x328] sm:$0xff] %vm162, 0.0
  %266 = vst.msk [vmem:[#allocation2 + $0x330] sm:$0xff] %vm162, 0.0
  %267 = vst.msk [vmem:[#allocation2 + $0x338] sm:$0x1] %vm166, 0.0
  %268 = vst.msk [vmem:[#allocation2 + $0x340] sm:$0xff] %vm162, 0.0
  %269 = vst.msk [vmem:[#allocation2 + $0x348] sm:$0xff] %vm162, 0.0
  %270 = vst.msk [vmem:[#allocation2 + $0x350] sm:$0xff] %vm162, 0.0
  %271 = vst.msk [vmem:[#allocation2 + $0x358] sm:$0x1] %vm166, 0.0
  %272 = vst.msk [vmem:[#allocation2 + $0x360] sm:$0xff] %vm162, 0.0
  %273 = vst.msk [vmem:[#allocation2 + $0x368] sm:$0xff] %vm162, 0.0
  %274 = vst.msk [vmem:[#allocation2 + $0x370] sm:$0xff] %vm162, 0.0
  %275 = vst.msk [vmem:[#allocation2 + $0x378] sm:$0x1] %vm166, 0.0
  %276 = vst.msk [vmem:[#allocation2 + $0x380] sm:$0xff] %vm162, 0.0
  %277 = vst.msk [vmem:[#allocation2 + $0x388] sm:$0xff] %vm162, 0.0
  %278 = vst.msk [vmem:[#allocation2 + $0x390] sm:$0xff] %vm162, 0.0
  %279 = vst.msk [vmem:[#allocation2 + $0x398] sm:$0x1] %vm166, 0.0
  %280 = vst.msk [vmem:[#allocation2 + $0x3a0] sm:$0xff] %vm162, 0.0
  %281 = vst.msk [vmem:[#allocation2 + $0x3a8] sm:$0xff] %vm162, 0.0
  %282 = vst.msk [vmem:[#allocation2 + $0x3b0] sm:$0xff] %vm162, 0.0
  %283 = vst.msk [vmem:[#allocation2 + $0x3b8] sm:$0x1] %vm166, 0.0
  %284 = vst.msk [vmem:[#allocation2 + $0x3c0] sm:$0xff] %vm162, 0.0
  %285 = vst.msk [vmem:[#allocation2 + $0x3c8] sm:$0xff] %vm162, 0.0
  %286 = vst.msk [vmem:[#allocation2 + $0x3d0] sm:$0xff] %vm162, 0.0
  %287 = vst.msk [vmem:[#allocation2 + $0x3d8] sm:$0x1] %vm166, 0.0
  %288 = vst.msk [vmem:[#allocation2 + $0x3e0] sm:$0xff] %vm162, 0.0
  %289 = vst.msk [vmem:[#allocation2 + $0x3e8] sm:$0xff] %vm162, 0.0
  %290 = vst.msk [vmem:[#allocation2 + $0x3f0] sm:$0xff] %vm162, 0.0
  %291 = vst.msk [vmem:[#allocation2 + $0x3f8] sm:$0x1] %vm166, 0.0
  %292 = vst.msk [vmem:[#allocation2 + $0x400] sm:$0xff] %vm162, 0.0
  %293 = vst.msk [vmem:[#allocation2 + $0x408] sm:$0xff] %vm162, 0.0
  %294 = vst.msk [vmem:[#allocation2 + $0x410] sm:$0xff] %vm162, 0.0
  %295 = vst.msk [vmem:[#allocation2 + $0x418] sm:$0x1] %vm166, 0.0
  %296 = vst.msk [vmem:[#allocation2 + $0x420] sm:$0xff] %vm162, 0.0
  %297 = vst.msk [vmem:[#allocation2 + $0x428] sm:$0xff] %vm162, 0.0
  %298 = vst.msk [vmem:[#allocation2 + $0x430] sm:$0xff] %vm162, 0.0
  %299 = vst.msk [vmem:[#allocation2 + $0x438] sm:$0x1] %vm166, 0.0
  %300 = vst.msk [vmem:[#allocation2 + $0x440] sm:$0xff] %vm162, 0.0
  %301 = vst.msk [vmem:[#allocation2 + $0x448] sm:$0xff] %vm162, 0.0
  %302 = vst.msk [vmem:[#allocation2 + $0x450] sm:$0xff] %vm162, 0.0
  %303 = vst.msk [vmem:[#allocation2 + $0x458] sm:$0x1] %vm166, 0.0
  %304 = vst.msk [vmem:[#allocation2 + $0x460] sm:$0xff] %vm162, 0.0
  %305 = vst.msk [vmem:[#allocation2 + $0x468] sm:$0xff] %vm162, 0.0
  %306 = vst.msk [vmem:[#allocation2 + $0x470] sm:$0xff] %vm162, 0.0
  %307 = vst.msk [vmem:[#allocation2 + $0x478] sm:$0x1] %vm166, 0.0
  %s308 = scalar_lea.vmem [#allocation2], 32
  %309 = vst.msk [vmem:[%s308 + $0x8] sm:$0xff] %vm162, %v97
  %310 = vst.msk [vmem:[%s308 + $0x10] sm:$0xff] %vm162, %v98
  %311 = vst.msk [vmem:[%s308 + $0x28] sm:$0xff] %vm162, %v99
  %312 = vst.msk [vmem:[%s308 + $0x30] sm:$0xff] %vm162, %v100
  %313 = vst.msk [vmem:[%s308 + $0x48] sm:$0xff] %vm162, %v101
  %314 = vst.msk [vmem:[%s308 + $0x50] sm:$0xff] %vm162, %v102
  %315 = vst.msk [vmem:[%s308 + $0x68] sm:$0xff] %vm162, %v103
  %316 = vst.msk [vmem:[%s308 + $0x70] sm:$0xff] %vm162, %v104
  %317 = vst.msk [vmem:[%s308 + $0x88] sm:$0xff] %vm162, %v105
  %318 = vst.msk [vmem:[%s308 + $0x90] sm:$0xff] %vm162, %v106
  %319 = vst.msk [vmem:[%s308 + $0xa8] sm:$0xff] %vm162, %v107
  %320 = vst.msk [vmem:[%s308 + $0xb0] sm:$0xff] %vm162, %v108
  %321 = vst.msk [vmem:[%s308 + $0xc8] sm:$0xff] %vm162, %v109
  %322 = vst.msk [vmem:[%s308 + $0xd0] sm:$0xff] %vm162, %v110
  %323 = vst.msk [vmem:[%s308 + $0xe8] sm:$0xff] %vm162, %v111
  %324 = vst.msk [vmem:[%s308 + $0xf0] sm:$0xff] %vm162, %v112
  %325 = vst.msk [vmem:[%s308 + $0x108] sm:$0xff] %vm162, %v113
  %326 = vst.msk [vmem:[%s308 + $0x110] sm:$0xff] %vm162, %v114
  %327 = vst.msk [vmem:[%s308 + $0x128] sm:$0xff] %vm162, %v115
  %328 = vst.msk [vmem:[%s308 + $0x130] sm:$0xff] %vm162, %v116
  %329 = vst.msk [vmem:[%s308 + $0x148] sm:$0xff] %vm162, %v117
  %330 = vst.msk [vmem:[%s308 + $0x150] sm:$0xff] %vm162, %v118
  %331 = vst.msk [vmem:[%s308 + $0x168] sm:$0xff] %vm162, %v119
  %332 = vst.msk [vmem:[%s308 + $0x170] sm:$0xff] %vm162, %v120
  %333 = vst.msk [vmem:[%s308 + $0x188] sm:$0xff] %vm162, %v121
  %334 = vst.msk [vmem:[%s308 + $0x190] sm:$0xff] %vm162, %v122
  %335 = vst.msk [vmem:[%s308 + $0x1a8] sm:$0xff] %vm162, %v123
  %336 = vst.msk [vmem:[%s308 + $0x1b0] sm:$0xff] %vm162, %v124
  %337 = vst.msk [vmem:[%s308 + $0x1c8] sm:$0xff] %vm162, %v125
  %338 = vst.msk [vmem:[%s308 + $0x1d0] sm:$0xff] %vm162, %v126
  %339 = vst.msk [vmem:[%s308 + $0x1e8] sm:$0xff] %vm162, %v127
  %340 = vst.msk [vmem:[%s308 + $0x1f0] sm:$0xff] %vm162, %v128
  %341 = vst.msk [vmem:[%s308 + $0x248] sm:$0xff] %vm162, %v129
  %342 = vst.msk [vmem:[%s308 + $0x250] sm:$0xff] %vm162, %v130
  %343 = vst.msk [vmem:[%s308 + $0x268] sm:$0xff] %vm162, %v131
  %344 = vst.msk [vmem:[%s308 + $0x270] sm:$0xff] %vm162, %v132
  %345 = vst.msk [vmem:[%s308 + $0x288] sm:$0xff] %vm162, %v133
  %346 = vst.msk [vmem:[%s308 + $0x290] sm:$0xff] %vm162, %v134
  %347 = vst.msk [vmem:[%s308 + $0x2a8] sm:$0xff] %vm162, %v135
  %348 = vst.msk [vmem:[%s308 + $0x2b0] sm:$0xff] %vm162, %v136
  %349 = vst.msk [vmem:[%s308 + $0x2c8] sm:$0xff] %vm162, %v137
  %350 = vst.msk [vmem:[%s308 + $0x2d0] sm:$0xff] %vm162, %v138
  %351 = vst.msk [vmem:[%s308 + $0x2e8] sm:$0xff] %vm162, %v139
  %352 = vst.msk [vmem:[%s308 + $0x2f0] sm:$0xff] %vm162, %v140
  %353 = vst.msk [vmem:[%s308 + $0x308] sm:$0xff] %vm162, %v141
  %354 = vst.msk [vmem:[%s308 + $0x310] sm:$0xff] %vm162, %v142
  %355 = vst.msk [vmem:[%s308 + $0x328] sm:$0xff] %vm162, %v143
  %356 = vst.msk [vmem:[%s308 + $0x330] sm:$0xff] %vm162, %v144
  %357 = vst.msk [vmem:[%s308 + $0x348] sm:$0xff] %vm162, %v145
  %358 = vst.msk [vmem:[%s308 + $0x350] sm:$0xff] %vm162, %v146
  %359 = vst.msk [vmem:[%s308 + $0x368] sm:$0xff] %vm162, %v147
  %360 = vst.msk [vmem:[%s308 + $0x370] sm:$0xff] %vm162, %v148
  %361 = vst.msk [vmem:[%s308 + $0x388] sm:$0xff] %vm162, %v149
  %362 = vst.msk [vmem:[%s308 + $0x390] sm:$0xff] %vm162, %v150
  %363 = vst.msk [vmem:[%s308 + $0x3a8] sm:$0xff] %vm162, %v151
  %364 = vst.msk [vmem:[%s308 + $0x3b0] sm:$0xff] %vm162, %v152
  %365 = vst.msk [vmem:[%s308 + $0x3c8] sm:$0xff] %vm162, %v153
  %366 = vst.msk [vmem:[%s308 + $0x3d0] sm:$0xff] %vm162, %v154
  %367 = vst.msk [vmem:[%s308 + $0x3e8] sm:$0xff] %vm162, %v155
  %368 = vst.msk [vmem:[%s308 + $0x3f0] sm:$0xff] %vm162, %v156
  %369 = vst.msk [vmem:[%s308 + $0x408] sm:$0xff] %vm162, %v157
  %370 = vst.msk [vmem:[%s308 + $0x410] sm:$0xff] %vm162, %v158
  %371 = vst.msk [vmem:[%s308 + $0x428] sm:$0xff] %vm162, %v159
  %372 = vst.msk [vmem:[%s308 + $0x430] sm:$0xff] %vm162, %v160
  %v373 = vld [vmem:[#allocation2 + $0x7] sm:$0xff]
  %v374 = vld [vmem:[#allocation2 + $0xf] sm:$0xff]
  %v375 = vld [vmem:[#allocation2 + $0x27] sm:$0xff]
  %v376 = vld [vmem:[#allocation2 + $0x2f] sm:$0xff]
  %v377 = vld [vmem:[#allocation2 + $0x47] sm:$0xff]
  %v378 = vld [vmem:[#allocation2 + $0x4f] sm:$0xff]
  %v379 = vld [vmem:[#allocation2 + $0x67] sm:$0xff]
  %v380 = vld [vmem:[#allocation2 + $0x6f] sm:$0xff]
  %v381 = vld [vmem:[#allocation2 + $0x87] sm:$0xff]
  %v382 = vld [vmem:[#allocation2 + $0x8f] sm:$0xff]
  %v383 = vld [vmem:[#allocation2 + $0xa7] sm:$0xff]
  %v384 = vld [vmem:[#allocation2 + $0xaf] sm:$0xff]
  %v385 = vld [vmem:[#allocation2 + $0xc7] sm:$0xff]
  %v386 = vld [vmem:[#allocation2 + $0xcf] sm:$0xff]
  %v387 = vld [vmem:[#allocation2 + $0xe7] sm:$0xff]
  %v388 = vld [vmem:[#allocation2 + $0xef] sm:$0xff]
  %v389 = vld [vmem:[#allocation2 + $0x107] sm:$0xff]
  %v390 = vld [vmem:[#allocation2 + $0x10f] sm:$0xff]
  %v391 = vld [vmem:[#allocation2 + $0x127] sm:$0xff]
  %v392 = vld [vmem:[#allocation2 + $0x12f] sm:$0xff]
  %v393 = vld [vmem:[#allocation2 + $0x147] sm:$0xff]
  %v394 = vld [vmem:[#allocation2 + $0x14f] sm:$0xff]
  %v395 = vld [vmem:[#allocation2 + $0x167] sm:$0xff]
  %v396 = vld [vmem:[#allocation2 + $0x16f] sm:$0xff]
  %v397 = vld [vmem:[#allocation2 + $0x187] sm:$0xff]
  %v398 = vld [vmem:[#allocation2 + $0x18f] sm:$0xff]
  %v399 = vld [vmem:[#allocation2 + $0x1a7] sm:$0xff]
  %v400 = vld [vmem:[#allocation2 + $0x1af] sm:$0xff]
  %v401 = vld [vmem:[#allocation2 + $0x1c7] sm:$0xff]
  %v402 = vld [vmem:[#allocation2 + $0x1cf] sm:$0xff]
  %v403 = vld [vmem:[#allocation2 + $0x1e7] sm:$0xff]
  %v404 = vld [vmem:[#allocation2 + $0x1ef] sm:$0xff]
  %v405 = vld [vmem:[#allocation2 + $0x247] sm:$0xff]
  %v406 = vld [vmem:[#allocation2 + $0x24f] sm:$0xff]
  %v407 = vld [vmem:[#allocation2 + $0x267] sm:$0xff]
  %v408 = vld [vmem:[#allocation2 + $0x26f] sm:$0xff]
  %v409 = vld [vmem:[#allocation2 + $0x287] sm:$0xff]
  %v410 = vld [vmem:[#allocation2 + $0x28f] sm:$0xff]
  %v411 = vld [vmem:[#allocation2 + $0x2a7] sm:$0xff]
  %v412 = vld [vmem:[#allocation2 + $0x2af] sm:$0xff]
  %v413 = vld [vmem:[#allocation2 + $0x2c7] sm:$0xff]
  %v414 = vld [vmem:[#allocation2 + $0x2cf] sm:$0xff]
  %v415 = vld [vmem:[#allocation2 + $0x2e7] sm:$0xff]
  %v416 = vld [vmem:[#allocation2 + $0x2ef] sm:$0xff]
  %v417 = vld [vmem:[#allocation2 + $0x307] sm:$0xff]
  %v418 = vld [vmem:[#allocation2 + $0x30f] sm:$0xff]
  %v419 = vld [vmem:[#allocation2 + $0x327] sm:$0xff]
  %v420 = vld [vmem:[#allocation2 + $0x32f] sm:$0xff]
  %v421 = vld [vmem:[#allocation2 + $0x347] sm:$0xff]
  %v422 = vld [vmem:[#allocation2 + $0x34f] sm:$0xff]
  %v423 = vld [vmem:[#allocation2 + $0x367] sm:$0xff]
  %v424 = vld [vmem:[#allocation2 + $0x36f] sm:$0xff]
  %v425 = vld [vmem:[#allocation2 + $0x387] sm:$0xff]
  %v426 = vld [vmem:[#allocation2 + $0x38f] sm:$0xff]
  %v427 = vld [vmem:[#allocation2 + $0x3a7] sm:$0xff]
  %v428 = vld [vmem:[#allocation2 + $0x3af] sm:$0xff]
  %v429 = vld [vmem:[#allocation2 + $0x3c7] sm:$0xff]
  %v430 = vld [vmem:[#allocation2 + $0x3cf] sm:$0xff]
  %v431 = vld [vmem:[#allocation2 + $0x3e7] sm:$0xff]
  %v432 = vld [vmem:[#allocation2 + $0x3ef] sm:$0xff]
  %v433 = vld [vmem:[#allocation2 + $0x407] sm:$0xff]
  %v434 = vld [vmem:[#allocation2 + $0x40f] sm:$0xff]
  %v435 = vld [vmem:[#allocation2 + $0x427] sm:$0xff]
  %v436 = vld [vmem:[#allocation2 + $0x42f] sm:$0xff]
  %v437 = vld [vmem:[#allocation2 + $0x8] sm:$0xff]
  %v438 = vld [vmem:[#allocation2 + $0x10] sm:$0xff]
  %v439 = vld [vmem:[#allocation2 + $0x28] sm:$0xff]
  %v440 = vld [vmem:[#allocation2 + $0x30] sm:$0xff]
  %v441 = vld [vmem:[#allocation2 + $0x48] sm:$0xff]
  %v442 = vld [vmem:[#allocation2 + $0x50] sm:$0xff]
  %v443 = vld [vmem:[#allocation2 + $0x68] sm:$0xff]
  %v444 = vld [vmem:[#allocation2 + $0x70] sm:$0xff]
  %v445 = vld [vmem:[#allocation2 + $0x88] sm:$0xff]
  %v446 = vld [vmem:[#allocation2 + $0x90] sm:$0xff]
  %v447 = vld [vmem:[#allocation2 + $0xa8] sm:$0xff]
  %v448 = vld [vmem:[#allocation2 + $0xb0] sm:$0xff]
  %v449 = vld [vmem:[#allocation2 + $0xc8] sm:$0xff]
  %v450 = vld [vmem:[#allocation2 + $0xd0] sm:$0xff]
  %v451 = vld [vmem:[#allocation2 + $0xe8] sm:$0xff]
  %v452 = vld [vmem:[#allocation2 + $0xf0] sm:$0xff]
  %v453 = vld [vmem:[#allocation2 + $0x108] sm:$0xff]
  %v454 = vld [vmem:[#allocation2 + $0x110] sm:$0xff]
  %v455 = vld [vmem:[#allocation2 + $0x128] sm:$0xff]
  %v456 = vld [vmem:[#allocation2 + $0x130] sm:$0xff]
  %v457 = vld [vmem:[#allocation2 + $0x148] sm:$0xff]
  %v458 = vld [vmem:[#allocation2 + $0x150] sm:$0xff]
  %v459 = vld [vmem:[#allocation2 + $0x168] sm:$0xff]
  %v460 = vld [vmem:[#allocation2 + $0x170] sm:$0xff]
  %v461 = vld [vmem:[#allocation2 + $0x188] sm:$0xff]
  %v462 = vld [vmem:[#allocation2 + $0x190] sm:$0xff]
  %v463 = vld [vmem:[#allocation2 + $0x1a8] sm:$0xff]
  %v464 = vld [vmem:[#allocation2 + $0x1b0] sm:$0xff]
  %v465 = vld [vmem:[#allocation2 + $0x1c8] sm:$0xff]
  %v466 = vld [vmem:[#allocation2 + $0x1d0] sm:$0xff]
  %v467 = vld [vmem:[#allocation2 + $0x1e8] sm:$0xff]
  %v468 = vld [vmem:[#allocation2 + $0x1f0] sm:$0xff]
  %v469 = vld [vmem:[#allocation2 + $0x248] sm:$0xff]
  %v470 = vld [vmem:[#allocation2 + $0x250] sm:$0xff]
  %v471 = vld [vmem:[#allocation2 + $0x268] sm:$0xff]
  %v472 = vld [vmem:[#allocation2 + $0x270] sm:$0xff]
  %v473 = vld [vmem:[#allocation2 + $0x288] sm:$0xff]
  %v474 = vld [vmem:[#allocation2 + $0x290] sm:$0xff]
  %v475 = vld [vmem:[#allocation2 + $0x2a8] sm:$0xff]
  %v476 = vld [vmem:[#allocation2 + $0x2b0] sm:$0xff]
  %v477 = vld [vmem:[#allocation2 + $0x2c8] sm:$0xff]
  %v478 = vld [vmem:[#allocation2 + $0x2d0] sm:$0xff]
  %v479 = vld [vmem:[#allocation2 + $0x2e8] sm:$0xff]
  %v480 = vld [vmem:[#allocation2 + $0x2f0] sm:$0xff]
  %v481 = vld [vmem:[#allocation2 + $0x308] sm:$0xff]
  %v482 = vld [vmem:[#allocation2 + $0x310] sm:$0xff]
  %v483 = vld [vmem:[#allocation2 + $0x328] sm:$0xff]
  %v484 = vld [vmem:[#allocation2 + $0x330] sm:$0xff]
  %v485 = vld [vmem:[#allocation2 + $0x348] sm:$0xff]
  %v486 = vld [vmem:[#allocation2 + $0x350] sm:$0xff]
  %v487 = vld [vmem:[#allocation2 + $0x368] sm:$0xff]
  %v488 = vld [vmem:[#allocation2 + $0x370] sm:$0xff]
  %v489 = vld [vmem:[#allocation2 + $0x388] sm:$0xff]
  %v490 = vld [vmem:[#allocation2 + $0x390] sm:$0xff]
  %v491 = vld [vmem:[#allocation2 + $0x3a8] sm:$0xff]
  %v492 = vld [vmem:[#allocation2 + $0x3b0] sm:$0xff]
  %v493 = vld [vmem:[#allocation2 + $0x3c8] sm:$0xff]
  %v494 = vld [vmem:[#allocation2 + $0x3d0] sm:$0xff]
  %v495 = vld [vmem:[#allocation2 + $0x3e8] sm:$0xff]
  %v496 = vld [vmem:[#allocation2 + $0x3f0] sm:$0xff]
  %v497 = vld [vmem:[#allocation2 + $0x408] sm:$0xff]
  %v498 = vld [vmem:[#allocation2 + $0x410] sm:$0xff]
  %v499 = vld [vmem:[#allocation2 + $0x428] sm:$0xff]
  %v500 = vld [vmem:[#allocation2 + $0x430] sm:$0xff]
  %v501 = vld [vmem:[#allocation2 + $0x9] sm:$0xff]
  %v502 = vld [vmem:[#allocation2 + $0x11] sm:$0xff]
  %v503 = vld [vmem:[#allocation2 + $0x29] sm:$0xff]
  %v504 = vld [vmem:[#allocation2 + $0x31] sm:$0xff]
  %v505 = vld [vmem:[#allocation2 + $0x49] sm:$0xff]
  %v506 = vld [vmem:[#allocation2 + $0x51] sm:$0xff]
  %v507 = vld [vmem:[#allocation2 + $0x69] sm:$0xff]
  %v508 = vld [vmem:[#allocation2 + $0x71] sm:$0xff]
  %v509 = vld [vmem:[#allocation2 + $0x89] sm:$0xff]
  %v510 = vld [vmem:[#allocation2 + $0x91] sm:$0xff]
  %v511 = vld [vmem:[#allocation2 + $0xa9] sm:$0xff]
  %v512 = vld [vmem:[#allocation2 + $0xb1] sm:$0xff]
  %v513 = vld [vmem:[#allocation2 + $0xc9] sm:$0xff]
  %v514 = vld [vmem:[#allocation2 + $0xd1] sm:$0xff]
  %v515 = vld [vmem:[#allocation2 + $0xe9] sm:$0xff]
  %v516 = vld [vmem:[#allocation2 + $0xf1] sm:$0xff]
  %v517 = vld [vmem:[#allocation2 + $0x109] sm:$0xff]
  %v518 = vld [vmem:[#allocation2 + $0x111] sm:$0xff]
  %v519 = vld [vmem:[#allocation2 + $0x129] sm:$0xff]
  %v520 = vld [vmem:[#allocation2 + $0x131] sm:$0xff]
  %v521 = vld [vmem:[#allocation2 + $0x149] sm:$0xff]
  %v522 = vld [vmem:[#allocation2 + $0x151] sm:$0xff]
  %v523 = vld [vmem:[#allocation2 + $0x169] sm:$0xff]
  %v524 = vld [vmem:[#allocation2 + $0x171] sm:$0xff]
  %v525 = vld [vmem:[#allocation2 + $0x189] sm:$0xff]
  %v526 = vld [vmem:[#allocation2 + $0x191] sm:$0xff]
  %v527 = vld [vmem:[#allocation2 + $0x1a9] sm:$0xff]
  %v528 = vld [vmem:[#allocation2 + $0x1b1] sm:$0xff]
  %v529 = vld [vmem:[#allocation2 + $0x1c9] sm:$0xff]
  %v530 = vld [vmem:[#allocation2 + $0x1d1] sm:$0xff]
  %v531 = vld [vmem:[#allocation2 + $0x1e9] sm:$0xff]
  %v532 = vld [vmem:[#allocation2 + $0x1f1] sm:$0xff]
  %v533 = vld [vmem:[#allocation2 + $0x249] sm:$0xff]
  %v534 = vld [vmem:[#allocation2 + $0x251] sm:$0xff]
  %v535 = vld [vmem:[#allocation2 + $0x269] sm:$0xff]
  %v536 = vld [vmem:[#allocation2 + $0x271] sm:$0xff]
  %v537 = vld [vmem:[#allocation2 + $0x289] sm:$0xff]
  %v538 = vld [vmem:[#allocation2 + $0x291] sm:$0xff]
  %v539 = vld [vmem:[#allocation2 + $0x2a9] sm:$0xff]
  %v540 = vld [vmem:[#allocation2 + $0x2b1] sm:$0xff]
  %v541 = vld [vmem:[#allocation2 + $0x2c9] sm:$0xff]
  %v542 = vld [vmem:[#allocation2 + $0x2d1] sm:$0xff]
  %v543 = vld [vmem:[#allocation2 + $0x2e9] sm:$0xff]
  %v544 = vld [vmem:[#allocation2 + $0x2f1] sm:$0xff]
  %v545 = vld [vmem:[#allocation2 + $0x309] sm:$0xff]
  %v546 = vld [vmem:[#allocation2 + $0x311] sm:$0xff]
  %v547 = vld [vmem:[#allocation2 + $0x329] sm:$0xff]
  %v548 = vld [vmem:[#allocation2 + $0x331] sm:$0xff]
  %v549 = vld [vmem:[#allocation2 + $0x349] sm:$0xff]
  %v550 = vld [vmem:[#allocation2 + $0x351] sm:$0xff]
  %v551 = vld [vmem:[#allocation2 + $0x369] sm:$0xff]
  %v552 = vld [vmem:[#allocation2 + $0x371] sm:$0xff]
  %v553 = vld [vmem:[#allocation2 + $0x389] sm:$0xff]
  %v554 = vld [vmem:[#allocation2 + $0x391] sm:$0xff]
  %v555 = vld [vmem:[#allocation2 + $0x3a9] sm:$0xff]
  %v556 = vld [vmem:[#allocation2 + $0x3b1] sm:$0xff]
  %v557 = vld [vmem:[#allocation2 + $0x3c9] sm:$0xff]
  %v558 = vld [vmem:[#allocation2 + $0x3d1] sm:$0xff]
  %v559 = vld [vmem:[#allocation2 + $0x3e9] sm:$0xff]
  %v560 = vld [vmem:[#allocation2 + $0x3f1] sm:$0xff]
  %v561 = vld [vmem:[#allocation2 + $0x409] sm:$0xff]
  %v562 = vld [vmem:[#allocation2 + $0x411] sm:$0xff]
  %v563 = vld [vmem:[#allocation2 + $0x429] sm:$0xff]
  %v564 = vld [vmem:[#allocation2 + $0x431] sm:$0xff]
  %v565 = vld [vmem:[%s308 + $0x7] sm:$0xff]
  %v566 = vld [vmem:[%s308 + $0xf] sm:$0xff]
  %v567 = vld [vmem:[%s308 + $0x27] sm:$0xff]
  %v568 = vld [vmem:[%s308 + $0x2f] sm:$0xff]
  %v569 = vld [vmem:[%s308 + $0x47] sm:$0xff]
  %v570 = vld [vmem:[%s308 + $0x4f] sm:$0xff]
  %v571 = vld [vmem:[%s308 + $0x67] sm:$0xff]
  %v572 = vld [vmem:[%s308 + $0x6f] sm:$0xff]
  %v573 = vld [vmem:[%s308 + $0x87] sm:$0xff]
  %v574 = vld [vmem:[%s308 + $0x8f] sm:$0xff]
  %v575 = vld [vmem:[%s308 + $0xa7] sm:$0xff]
  %v576 = vld [vmem:[%s308 + $0xaf] sm:$0xff]
  %v577 = vld [vmem:[%s308 + $0xc7] sm:$0xff]
  %v578 = vld [vmem:[%s308 + $0xcf] sm:$0xff]
  %v579 = vld [vmem:[%s308 + $0xe7] sm:$0xff]
  %v580 = vld [vmem:[%s308 + $0xef] sm:$0xff]
  %v581 = vld [vmem:[%s308 + $0x107] sm:$0xff]
  %v582 = vld [vmem:[%s308 + $0x10f] sm:$0xff]
  %v583 = vld [vmem:[%s308 + $0x127] sm:$0xff]
  %v584 = vld [vmem:[%s308 + $0x12f] sm:$0xff]
  %v585 = vld [vmem:[%s308 + $0x147] sm:$0xff]
  %v586 = vld [vmem:[%s308 + $0x14f] sm:$0xff]
  %v587 = vld [vmem:[%s308 + $0x167] sm:$0xff]
  %v588 = vld [vmem:[%s308 + $0x16f] sm:$0xff]
  %v589 = vld [vmem:[%s308 + $0x187] sm:$0xff]
  %v590 = vld [vmem:[%s308 + $0x18f] sm:$0xff]
  %v591 = vld [vmem:[%s308 + $0x1a7] sm:$0xff]
  %v592 = vld [vmem:[%s308 + $0x1af] sm:$0xff]
  %v593 = vld [vmem:[%s308 + $0x1c7] sm:$0xff]
  %v594 = vld [vmem:[%s308 + $0x1cf] sm:$0xff]
  %v595 = vld [vmem:[%s308 + $0x1e7] sm:$0xff]
  %v596 = vld [vmem:[%s308 + $0x1ef] sm:$0xff]
  %v597 = vld [vmem:[%s308 + $0x247] sm:$0xff]
  %v598 = vld [vmem:[%s308 + $0x24f] sm:$0xff]
  %v599 = vld [vmem:[%s308 + $0x267] sm:$0xff]
  %v600 = vld [vmem:[%s308 + $0x26f] sm:$0xff]
  %v601 = vld [vmem:[%s308 + $0x287] sm:$0xff]
  %v602 = vld [vmem:[%s308 + $0x28f] sm:$0xff]
  %v603 = vld [vmem:[%s308 + $0x2a7] sm:$0xff]
  %v604 = vld [vmem:[%s308 + $0x2af] sm:$0xff]
  %v605 = vld [vmem:[%s308 + $0x2c7] sm:$0xff]
  %v606 = vld [vmem:[%s308 + $0x2cf] sm:$0xff]
  %v607 = vld [vmem:[%s308 + $0x2e7] sm:$0xff]
  %v608 = vld [vmem:[%s308 + $0x2ef] sm:$0xff]
  %v609 = vld [vmem:[%s308 + $0x307] sm:$0xff]
  %v610 = vld [vmem:[%s308 + $0x30f] sm:$0xff]
  %v611 = vld [vmem:[%s308 + $0x327] sm:$0xff]
  %v612 = vld [vmem:[%s308 + $0x32f] sm:$0xff]
  %v613 = vld [vmem:[%s308 + $0x347] sm:$0xff]
  %v614 = vld [vmem:[%s308 + $0x34f] sm:$0xff]
  %v615 = vld [vmem:[%s308 + $0x367] sm:$0xff]
  %v616 = vld [vmem:[%s308 + $0x36f] sm:$0xff]
  %v617 = vld [vmem:[%s308 + $0x387] sm:$0xff]
  %v618 = vld [vmem:[%s308 + $0x38f] sm:$0xff]
  %v619 = vld [vmem:[%s308 + $0x3a7] sm:$0xff]
  %v620 = vld [vmem:[%s308 + $0x3af] sm:$0xff]
  %v621 = vld [vmem:[%s308 + $0x3c7] sm:$0xff]
  %v622 = vld [vmem:[%s308 + $0x3cf] sm:$0xff]
  %v623 = vld [vmem:[%s308 + $0x3e7] sm:$0xff]
  %v624 = vld [vmem:[%s308 + $0x3ef] sm:$0xff]
  %v625 = vld [vmem:[%s308 + $0x407] sm:$0xff]
  %v626 = vld [vmem:[%s308 + $0x40f] sm:$0xff]
  %v627 = vld [vmem:[%s308 + $0x427] sm:$0xff]
  %v628 = vld [vmem:[%s308 + $0x42f] sm:$0xff]
  %v629 = vld [vmem:[%s308 + $0x8] sm:$0xff]
  %v630 = vld [vmem:[%s308 + $0x10] sm:$0xff]
  %v631 = vld [vmem:[%s308 + $0x28] sm:$0xff]
  %v632 = vld [vmem:[%s308 + $0x30] sm:$0xff]
  %v633 = vld [vmem:[%s308 + $0x48] sm:$0xff]
  %v634 = vld [vmem:[%s308 + $0x50] sm:$0xff]
  %v635 = vld [vmem:[%s308 + $0x68] sm:$0xff]
  %v636 = vld [vmem:[%s308 + $0x70] sm:$0xff]
  %v637 = vld [vmem:[%s308 + $0x88] sm:$0xff]
  %v638 = vld [vmem:[%s308 + $0x90] sm:$0xff]
  %v639 = vld [vmem:[%s308 + $0xa8] sm:$0xff]
  %v640 = vld [vmem:[%s308 + $0xb0] sm:$0xff]
  %v641 = vld [vmem:[%s308 + $0xc8] sm:$0xff]
  %v642 = vld [vmem:[%s308 + $0xd0] sm:$0xff]
  %v643 = vld [vmem:[%s308 + $0xe8] sm:$0xff]
  %v644 = vld [vmem:[%s308 + $0xf0] sm:$0xff]
  %v645 = vld [vmem:[%s308 + $0x108] sm:$0xff]
  %v646 = vld [vmem:[%s308 + $0x110] sm:$0xff]
  %v647 = vld [vmem:[%s308 + $0x128] sm:$0xff]
  %v648 = vld [vmem:[%s308 + $0x130] sm:$0xff]
  %v649 = vld [vmem:[%s308 + $0x148] sm:$0xff]
  %v650 = vld [vmem:[%s308 + $0x150] sm:$0xff]
  %v651 = vld [vmem:[%s308 + $0x168] sm:$0xff]
  %v652 = vld [vmem:[%s308 + $0x170] sm:$0xff]
  %v653 = vld [vmem:[%s308 + $0x188] sm:$0xff]
  %v654 = vld [vmem:[%s308 + $0x190] sm:$0xff]
  %v655 = vld [vmem:[%s308 + $0x1a8] sm:$0xff]
  %v656 = vld [vmem:[%s308 + $0x1b0] sm:$0xff]
  %v657 = vld [vmem:[%s308 + $0x1c8] sm:$0xff]
  %v658 = vld [vmem:[%s308 + $0x1d0] sm:$0xff]
  %v659 = vld [vmem:[%s308 + $0x1e8] sm:$0xff]
  %v660 = vld [vmem:[%s308 + $0x1f0] sm:$0xff]
  %v661 = vld [vmem:[%s308 + $0x248] sm:$0xff]
  %v662 = vld [vmem:[%s308 + $0x250] sm:$0xff]
  %v663 = vld [vmem:[%s308 + $0x268] sm:$0xff]
  %v664 = vld [vmem:[%s308 + $0x270] sm:$0xff]
  %v665 = vld [vmem:[%s308 + $0x288] sm:$0xff]
  %v666 = vld [vmem:[%s308 + $0x290] sm:$0xff]
  %v667 = vld [vmem:[%s308 + $0x2a8] sm:$0xff]
  %v668 = vld [vmem:[%s308 + $0x2b0] sm:$0xff]
  %v669 = vld [vmem:[%s308 + $0x2c8] sm:$0xff]
  %v670 = vld [vmem:[%s308 + $0x2d0] sm:$0xff]
  %v671 = vld [vmem:[%s308 + $0x2e8] sm:$0xff]
  %v672 = vld [vmem:[%s308 + $0x2f0] sm:$0xff]
  %v673 = vld [vmem:[%s308 + $0x308] sm:$0xff]
  %v674 = vld [vmem:[%s308 + $0x310] sm:$0xff]
  %v675 = vld [vmem:[%s308 + $0x328] sm:$0xff]
  %v676 = vld [vmem:[%s308 + $0x330] sm:$0xff]
  %v677 = vld [vmem:[%s308 + $0x348] sm:$0xff]
  %v678 = vld [vmem:[%s308 + $0x350] sm:$0xff]
  %v679 = vld [vmem:[%s308 + $0x368] sm:$0xff]
  %v680 = vld [vmem:[%s308 + $0x370] sm:$0xff]
  %v681 = vld [vmem:[%s308 + $0x388] sm:$0xff]
  %v682 = vld [vmem:[%s308 + $0x390] sm:$0xff]
  %v683 = vld [vmem:[%s308 + $0x3a8] sm:$0xff]
  %v684 = vld [vmem:[%s308 + $0x3b0] sm:$0xff]
  %v685 = vld [vmem:[%s308 + $0x3c8] sm:$0xff]
  %v686 = vld [vmem:[%s308 + $0x3d0] sm:$0xff]
  %v687 = vld [vmem:[%s308 + $0x3e8] sm:$0xff]
  %v688 = vld [vmem:[%s308 + $0x3f0] sm:$0xff]
  %v689 = vld [vmem:[%s308 + $0x408] sm:$0xff]
  %v690 = vld [vmem:[%s308 + $0x410] sm:$0xff]
  %v691 = vld [vmem:[%s308 + $0x428] sm:$0xff]
  %v692 = vld [vmem:[%s308 + $0x430] sm:$0xff]
  %v693 = vld [vmem:[%s308 + $0x9] sm:$0xff]
  %v694 = vld [vmem:[%s308 + $0x11] sm:$0xff]
  %v695 = vld [vmem:[%s308 + $0x29] sm:$0xff]
  %v696 = vld [vmem:[%s308 + $0x31] sm:$0xff]
  %v697 = vld [vmem:[%s308 + $0x49] sm:$0xff]
  %v698 = vld [vmem:[%s308 + $0x51] sm:$0xff]
  %v699 = vld [vmem:[%s308 + $0x69] sm:$0xff]
  %v700 = vld [vmem:[%s308 + $0x71] sm:$0xff]
  %v701 = vld [vmem:[%s308 + $0x89] sm:$0xff]
  %v702 = vld [vmem:[%s308 + $0x91] sm:$0xff]
  %v703 = vld [vmem:[%s308 + $0xa9] sm:$0xff]
  %v704 = vld [vmem:[%s308 + $0xb1] sm:$0xff]
  %v705 = vld [vmem:[%s308 + $0xc9] sm:$0xff]
  %v706 = vld [vmem:[%s308 + $0xd1] sm:$0xff]
  %v707 = vld [vmem:[%s308 + $0xe9] sm:$0xff]
  %v708 = vld [vmem:[%s308 + $0xf1] sm:$0xff]
  %v709 = vld [vmem:[%s308 + $0x109] sm:$0xff]
  %v710 = vld [vmem:[%s308 + $0x111] sm:$0xff]
  %v711 = vld [vmem:[%s308 + $0x129] sm:$0xff]
  %v712 = vld [vmem:[%s308 + $0x131] sm:$0xff]
  %v713 = vld [vmem:[%s308 + $0x149] sm:$0xff]
  %v714 = vld [vmem:[%s308 + $0x151] sm:$0xff]
  %v715 = vld [vmem:[%s308 + $0x169] sm:$0xff]
  %v716 = vld [vmem:[%s308 + $0x171] sm:$0xff]
  %v717 = vld [vmem:[%s308 + $0x189] sm:$0xff]
  %v718 = vld [vmem:[%s308 + $0x191] sm:$0xff]
  %v719 = vld [vmem:[%s308 + $0x1a9] sm:$0xff]
  %v720 = vld [vmem:[%s308 + $0x1b1] sm:$0xff]
  %v721 = vld [vmem:[%s308 + $0x1c9] sm:$0xff]
  %v722 = vld [vmem:[%s308 + $0x1d1] sm:$0xff]
  %v723 = vld [vmem:[%s308 + $0x1e9] sm:$0xff]
  %v724 = vld [vmem:[%s308 + $0x1f1] sm:$0xff]
  %v725 = vld [vmem:[%s308 + $0x249] sm:$0xff]
  %v726 = vld [vmem:[%s308 + $0x251] sm:$0xff]
  %v727 = vld [vmem:[%s308 + $0x269] sm:$0xff]
  %v728 = vld [vmem:[%s308 + $0x271] sm:$0xff]
  %v729 = vld [vmem:[%s308 + $0x289] sm:$0xff]
  %v730 = vld [vmem:[%s308 + $0x291] sm:$0xff]
  %v731 = vld [vmem:[%s308 + $0x2a9] sm:$0xff]
  %v732 = vld [vmem:[%s308 + $0x2b1] sm:$0xff]
  %v733 = vld [vmem:[%s308 + $0x2c9] sm:$0xff]
  %v734 = vld [vmem:[%s308 + $0x2d1] sm:$0xff]
  %v735 = vld [vmem:[%s308 + $0x2e9] sm:$0xff]
  %v736 = vld [vmem:[%s308 + $0x2f1] sm:$0xff]
  %v737 = vld [vmem:[%s308 + $0x309] sm:$0xff]
  %v738 = vld [vmem:[%s308 + $0x311] sm:$0xff]
  %v739 = vld [vmem:[%s308 + $0x329] sm:$0xff]
  %v740 = vld [vmem:[%s308 + $0x331] sm:$0xff]
  %v741 = vld [vmem:[%s308 + $0x349] sm:$0xff]
  %v742 = vld [vmem:[%s308 + $0x351] sm:$0xff]
  %v743 = vld [vmem:[%s308 + $0x369] sm:$0xff]
  %v744 = vld [vmem:[%s308 + $0x371] sm:$0xff]
  %v745 = vld [vmem:[%s308 + $0x389] sm:$0xff]
  %v746 = vld [vmem:[%s308 + $0x391] sm:$0xff]
  %v747 = vld [vmem:[%s308 + $0x3a9] sm:$0xff]
  %v748 = vld [vmem:[%s308 + $0x3b1] sm:$0xff]
  %v749 = vld [vmem:[%s308 + $0x3c9] sm:$0xff]
  %v750 = vld [vmem:[%s308 + $0x3d1] sm:$0xff]
  %v751 = vld [vmem:[%s308 + $0x3e9] sm:$0xff]
  %v752 = vld [vmem:[%s308 + $0x3f1] sm:$0xff]
  %v753 = vld [vmem:[%s308 + $0x409] sm:$0xff]
  %v754 = vld [vmem:[%s308 + $0x411] sm:$0xff]
  %v755 = vld [vmem:[%s308 + $0x429] sm:$0xff]
  %v756 = vld [vmem:[%s308 + $0x431] sm:$0xff]
  %s757 = scalar_lea.vmem [#allocation2], 64
  %v758 = vld [vmem:[%s757 + $0x7] sm:$0xff]
  %v759 = vld [vmem:[%s757 + $0xf] sm:$0xff]
  %v760 = vld [vmem:[%s757 + $0x27] sm:$0xff]
  %v761 = vld [vmem:[%s757 + $0x2f] sm:$0xff]
  %v762 = vld [vmem:[%s757 + $0x47] sm:$0xff]
  %v763 = vld [vmem:[%s757 + $0x4f] sm:$0xff]
  %v764 = vld [vmem:[%s757 + $0x67] sm:$0xff]
  %v765 = vld [vmem:[%s757 + $0x6f] sm:$0xff]
  %v766 = vld [vmem:[%s757 + $0x87] sm:$0xff]
  %v767 = vld [vmem:[%s757 + $0x8f] sm:$0xff]
  %v768 = vld [vmem:[%s757 + $0xa7] sm:$0xff]
  %v769 = vld [vmem:[%s757 + $0xaf] sm:$0xff]
  %v770 = vld [vmem:[%s757 + $0xc7] sm:$0xff]
  %v771 = vld [vmem:[%s757 + $0xcf] sm:$0xff]
  %v772 = vld [vmem:[%s757 + $0xe7] sm:$0xff]
  %v773 = vld [vmem:[%s757 + $0xef] sm:$0xff]
  %v774 = vld [vmem:[%s757 + $0x107] sm:$0xff]
  %v775 = vld [vmem:[%s757 + $0x10f] sm:$0xff]
  %v776 = vld [vmem:[%s757 + $0x127] sm:$0xff]
  %v777 = vld [vmem:[%s757 + $0x12f] sm:$0xff]
  %v778 = vld [vmem:[%s757 + $0x147] sm:$0xff]
  %v779 = vld [vmem:[%s757 + $0x14f] sm:$0xff]
  %v780 = vld [vmem:[%s757 + $0x167] sm:$0xff]
  %v781 = vld [vmem:[%s757 + $0x16f] sm:$0xff]
  %v782 = vld [vmem:[%s757 + $0x187] sm:$0xff]
  %v783 = vld [vmem:[%s757 + $0x18f] sm:$0xff]
  %v784 = vld [vmem:[%s757 + $0x1a7] sm:$0xff]
  %v785 = vld [vmem:[%s757 + $0x1af] sm:$0xff]
  %v786 = vld [vmem:[%s757 + $0x1c7] sm:$0xff]
  %v787 = vld [vmem:[%s757 + $0x1cf] sm:$0xff]
  %v788 = vld [vmem:[%s757 + $0x1e7] sm:$0xff]
  %v789 = vld [vmem:[%s757 + $0x1ef] sm:$0xff]
  %v790 = vld [vmem:[%s757 + $0x247] sm:$0xff]
  %v791 = vld [vmem:[%s757 + $0x24f] sm:$0xff]
  %v792 = vld [vmem:[%s757 + $0x267] sm:$0xff]
  %v793 = vld [vmem:[%s757 + $0x26f] sm:$0xff]
  %v794 = vld [vmem:[%s757 + $0x287] sm:$0xff]
  %v795 = vld [vmem:[%s757 + $0x28f] sm:$0xff]
  %v796 = vld [vmem:[%s757 + $0x2a7] sm:$0xff]
  %v797 = vld [vmem:[%s757 + $0x2af] sm:$0xff]
  %v798 = vld [vmem:[%s757 + $0x2c7] sm:$0xff]
  %v799 = vld [vmem:[%s757 + $0x2cf] sm:$0xff]
  %v800 = vld [vmem:[%s757 + $0x2e7] sm:$0xff]
  %v801 = vld [vmem:[%s757 + $0x2ef] sm:$0xff]
  %v802 = vld [vmem:[%s757 + $0x307] sm:$0xff]
  %v803 = vld [vmem:[%s757 + $0x30f] sm:$0xff]
  %v804 = vld [vmem:[%s757 + $0x327] sm:$0xff]
  %v805 = vld [vmem:[%s757 + $0x32f] sm:$0xff]
  %v806 = vld [vmem:[%s757 + $0x347] sm:$0xff]
  %v807 = vld [vmem:[%s757 + $0x34f] sm:$0xff]
  %v808 = vld [vmem:[%s757 + $0x367] sm:$0xff]
  %v809 = vld [vmem:[%s757 + $0x36f] sm:$0xff]
  %v810 = vld [vmem:[%s757 + $0x387] sm:$0xff]
  %v811 = vld [vmem:[%s757 + $0x38f] sm:$0xff]
  %v812 = vld [vmem:[%s757 + $0x3a7] sm:$0xff]
  %v813 = vld [vmem:[%s757 + $0x3af] sm:$0xff]
  %v814 = vld [vmem:[%s757 + $0x3c7] sm:$0xff]
  %v815 = vld [vmem:[%s757 + $0x3cf] sm:$0xff]
  %v816 = vld [vmem:[%s757 + $0x3e7] sm:$0xff]
  %v817 = vld [vmem:[%s757 + $0x3ef] sm:$0xff]
  %v818 = vld [vmem:[%s757 + $0x407] sm:$0xff]
  %v819 = vld [vmem:[%s757 + $0x40f] sm:$0xff]
  %v820 = vld [vmem:[%s757 + $0x427] sm:$0xff]
  %v821 = vld [vmem:[%s757 + $0x42f] sm:$0xff]
  %v822 = vld [vmem:[%s757 + $0x8] sm:$0xff]
  %v823 = vld [vmem:[%s757 + $0x10] sm:$0xff]
  %v824 = vld [vmem:[%s757 + $0x28] sm:$0xff]
  %v825 = vld [vmem:[%s757 + $0x30] sm:$0xff]
  %v826 = vld [vmem:[%s757 + $0x48] sm:$0xff]
  %v827 = vld [vmem:[%s757 + $0x50] sm:$0xff]
  %v828 = vld [vmem:[%s757 + $0x68] sm:$0xff]
  %v829 = vld [vmem:[%s757 + $0x70] sm:$0xff]
  %v830 = vld [vmem:[%s757 + $0x88] sm:$0xff]
  %v831 = vld [vmem:[%s757 + $0x90] sm:$0xff]
  %v832 = vld [vmem:[%s757 + $0xa8] sm:$0xff]
  %v833 = vld [vmem:[%s757 + $0xb0] sm:$0xff]
  %v834 = vld [vmem:[%s757 + $0xc8] sm:$0xff]
  %v835 = vld [vmem:[%s757 + $0xd0] sm:$0xff]
  %v836 = vld [vmem:[%s757 + $0xe8] sm:$0xff]
  %v837 = vld [vmem:[%s757 + $0xf0] sm:$0xff]
  %v838 = vld [vmem:[%s757 + $0x108] sm:$0xff]
  %v839 = vld [vmem:[%s757 + $0x110] sm:$0xff]
  %v840 = vld [vmem:[%s757 + $0x128] sm:$0xff]
  %v841 = vld [vmem:[%s757 + $0x130] sm:$0xff]
  %v842 = vld [vmem:[%s757 + $0x148] sm:$0xff]
  %v843 = vld [vmem:[%s757 + $0x150] sm:$0xff]
  %v844 = vld [vmem:[%s757 + $0x168] sm:$0xff]
  %v845 = vld [vmem:[%s757 + $0x170] sm:$0xff]
  %v846 = vld [vmem:[%s757 + $0x188] sm:$0xff]
  %v847 = vld [vmem:[%s757 + $0x190] sm:$0xff]
  %v848 = vld [vmem:[%s757 + $0x1a8] sm:$0xff]
  %v849 = vld [vmem:[%s757 + $0x1b0] sm:$0xff]
  %v850 = vld [vmem:[%s757 + $0x1c8] sm:$0xff]
  %v851 = vld [vmem:[%s757 + $0x1d0] sm:$0xff]
  %v852 = vld [vmem:[%s757 + $0x1e8] sm:$0xff]
  %v853 = vld [vmem:[%s757 + $0x1f0] sm:$0xff]
  %v854 = vld [vmem:[%s757 + $0x248] sm:$0xff]
  %v855 = vld [vmem:[%s757 + $0x250] sm:$0xff]
  %v856 = vld [vmem:[%s757 + $0x268] sm:$0xff]
  %v857 = vld [vmem:[%s757 + $0x270] sm:$0xff]
  %v858 = vld [vmem:[%s757 + $0x288] sm:$0xff]
  %v859 = vld [vmem:[%s757 + $0x290] sm:$0xff]
  %v860 = vld [vmem:[%s757 + $0x2a8] sm:$0xff]
  %v861 = vld [vmem:[%s757 + $0x2b0] sm:$0xff]
  %v862 = vld [vmem:[%s757 + $0x2c8] sm:$0xff]
  %v863 = vld [vmem:[%s757 + $0x2d0] sm:$0xff]
  %v864 = vld [vmem:[%s757 + $0x2e8] sm:$0xff]
  %v865 = vld [vmem:[%s757 + $0x2f0] sm:$0xff]
  %v866 = vld [vmem:[%s757 + $0x308] sm:$0xff]
  %v867 = vld [vmem:[%s757 + $0x310] sm:$0xff]
  %v868 = vld [vmem:[%s757 + $0x328] sm:$0xff]
  %v869 = vld [vmem:[%s757 + $0x330] sm:$0xff]
  %v870 = vld [vmem:[%s757 + $0x348] sm:$0xff]
  %v871 = vld [vmem:[%s757 + $0x350] sm:$0xff]
  %v872 = vld [vmem:[%s757 + $0x368] sm:$0xff]
  %v873 = vld [vmem:[%s757 + $0x370] sm:$0xff]
  %v874 = vld [vmem:[%s757 + $0x388] sm:$0xff]
  %v875 = vld [vmem:[%s757 + $0x390] sm:$0xff]
  %v876 = vld [vmem:[%s757 + $0x3a8] sm:$0xff]
  %v877 = vld [vmem:[%s757 + $0x3b0] sm:$0xff]
  %v878 = vld [vmem:[%s757 + $0x3c8] sm:$0xff]
  %v879 = vld [vmem:[%s757 + $0x3d0] sm:$0xff]
  %v880 = vld [vmem:[%s757 + $0x3e8] sm:$0xff]
  %v881 = vld [vmem:[%s757 + $0x3f0] sm:$0xff]
  %v882 = vld [vmem:[%s757 + $0x408] sm:$0xff]
  %v883 = vld [vmem:[%s757 + $0x410] sm:$0xff]
  %v884 = vld [vmem:[%s757 + $0x428] sm:$0xff]
  %v885 = vld [vmem:[%s757 + $0x430] sm:$0xff]
  %v886 = vld [vmem:[%s757 + $0x9] sm:$0xff]
  %v887 = vld [vmem:[%s757 + $0x11] sm:$0xff]
  %v888 = vld [vmem:[%s757 + $0x29] sm:$0xff]
  %v889 = vld [vmem:[%s757 + $0x31] sm:$0xff]
  %v890 = vld [vmem:[%s757 + $0x49] sm:$0xff]
  %v891 = vld [vmem:[%s757 + $0x51] sm:$0xff]
  %v892 = vld [vmem:[%s757 + $0x69] sm:$0xff]
  %v893 = vld [vmem:[%s757 + $0x71] sm:$0xff]
  %v894 = vld [vmem:[%s757 + $0x89] sm:$0xff]
  %v895 = vld [vmem:[%s757 + $0x91] sm:$0xff]
  %v896 = vld [vmem:[%s757 + $0xa9] sm:$0xff]
  %v897 = vld [vmem:[%s757 + $0xb1] sm:$0xff]
  %v898 = vld [vmem:[%s757 + $0xc9] sm:$0xff]
  %v899 = vld [vmem:[%s757 + $0xd1] sm:$0xff]
  %v900 = vld [vmem:[%s757 + $0xe9] sm:$0xff]
  %v901 = vld [vmem:[%s757 + $0xf1] sm:$0xff]
  %v902 = vld [vmem:[%s757 + $0x109] sm:$0xff]
  %v903 = vld [vmem:[%s757 + $0x111] sm:$0xff]
  %v904 = vld [vmem:[%s757 + $0x129] sm:$0xff]
  %v905 = vld [vmem:[%s757 + $0x131] sm:$0xff]
  %v906 = vld [vmem:[%s757 + $0x149] sm:$0xff]
  %v907 = vld [vmem:[%s757 + $0x151] sm:$0xff]
  %v908 = vld [vmem:[%s757 + $0x169] sm:$0xff]
  %v909 = vld [vmem:[%s757 + $0x171] sm:$0xff]
  %v910 = vld [vmem:[%s757 + $0x189] sm:$0xff]
  %v911 = vld [vmem:[%s757 + $0x191] sm:$0xff]
  %v912 = vld [vmem:[%s757 + $0x1a9] sm:$0xff]
  %v913 = vld [vmem:[%s757 + $0x1b1] sm:$0xff]
  %v914 = vld [vmem:[%s757 + $0x1c9] sm:$0xff]
  %v915 = vld [vmem:[%s757 + $0x1d1] sm:$0xff]
  %v916 = vld [vmem:[%s757 + $0x1e9] sm:$0xff]
  %v917 = vld [vmem:[%s757 + $0x1f1] sm:$0xff]
  %v918 = vld [vmem:[%s757 + $0x249] sm:$0xff]
  %v919 = vld [vmem:[%s757 + $0x251] sm:$0xff]
  %v920 = vld [vmem:[%s757 + $0x269] sm:$0xff]
  %v921 = vld [vmem:[%s757 + $0x271] sm:$0xff]
  %v922 = vld [vmem:[%s757 + $0x289] sm:$0xff]
  %v923 = vld [vmem:[%s757 + $0x291] sm:$0xff]
  %v924 = vld [vmem:[%s757 + $0x2a9] sm:$0xff]
  %v925 = vld [vmem:[%s757 + $0x2b1] sm:$0xff]
  %v926 = vld [vmem:[%s757 + $0x2c9] sm:$0xff]
  %v927 = vld [vmem:[%s757 + $0x2d1] sm:$0xff]
  %v928 = vld [vmem:[%s757 + $0x2e9] sm:$0xff]
  %v929 = vld [vmem:[%s757 + $0x2f1] sm:$0xff]
  %v930 = vld [vmem:[%s757 + $0x309] sm:$0xff]
  %v931 = vld [vmem:[%s757 + $0x311] sm:$0xff]
  %v932 = vld [vmem:[%s757 + $0x329] sm:$0xff]
  %v933 = vld [vmem:[%s757 + $0x331] sm:$0xff]
  %v934 = vld [vmem:[%s757 + $0x349] sm:$0xff]
  %v935 = vld [vmem:[%s757 + $0x351] sm:$0xff]
  %v936 = vld [vmem:[%s757 + $0x369] sm:$0xff]
  %v937 = vld [vmem:[%s757 + $0x371] sm:$0xff]
  %v938 = vld [vmem:[%s757 + $0x389] sm:$0xff]
  %v939 = vld [vmem:[%s757 + $0x391] sm:$0xff]
  %v940 = vld [vmem:[%s757 + $0x3a9] sm:$0xff]
  %v941 = vld [vmem:[%s757 + $0x3b1] sm:$0xff]
  %v942 = vld [vmem:[%s757 + $0x3c9] sm:$0xff]
  %v943 = vld [vmem:[%s757 + $0x3d1] sm:$0xff]
  %v944 = vld [vmem:[%s757 + $0x3e9] sm:$0xff]
  %v945 = vld [vmem:[%s757 + $0x3f1] sm:$0xff]
  %v946 = vld [vmem:[%s757 + $0x409] sm:$0xff]
  %v947 = vld [vmem:[%s757 + $0x411] sm:$0xff]
  %v948 = vld [vmem:[%s757 + $0x429] sm:$0xff]
  %v949 = vld [vmem:[%s757 + $0x431] sm:$0xff]
  %1014 = vrot.lane.b32.xlu0 %v437, 4
  %v1015 = vpop.permute.xlu0 %1014
  %1016 = vrot.lane.b32.xlu0 %v438, 4
  %v1017 = vpop.permute.xlu0 %1016
  %1018 = vrot.lane.b32.xlu0 %v439, 4
  %v1019 = vpop.permute.xlu0 %1018
  %1020 = vrot.lane.b32.xlu0 %v440, 4
  %v1021 = vpop.permute.xlu0 %1020
  %1022 = vrot.lane.b32.xlu0 %v441, 4
  %v1023 = vpop.permute.xlu0 %1022
  %1024 = vrot.lane.b32.xlu0 %v442, 4
  %v1025 = vpop.permute.xlu0 %1024
  %1026 = vrot.lane.b32.xlu0 %v443, 4
  %v1027 = vpop.permute.xlu0 %1026
  %1028 = vrot.lane.b32.xlu0 %v444, 4
  %v1029 = vpop.permute.xlu0 %1028
  %1030 = vrot.lane.b32.xlu0 %v445, 4
  %v1031 = vpop.permute.xlu0 %1030
  %1032 = vrot.lane.b32.xlu0 %v446, 4
  %v1033 = vpop.permute.xlu0 %1032
  %1034 = vrot.lane.b32.xlu0 %v447, 4
  %v1035 = vpop.permute.xlu0 %1034
  %1036 = vrot.lane.b32.xlu0 %v448, 4
  %v1037 = vpop.permute.xlu0 %1036
  %1038 = vrot.lane.b32.xlu0 %v449, 4
  %v1039 = vpop.permute.xlu0 %1038
  %1040 = vrot.lane.b32.xlu0 %v450, 4
  %v1041 = vpop.permute.xlu0 %1040
  %1042 = vrot.lane.b32.xlu0 %v451, 4
  %v1043 = vpop.permute.xlu0 %1042
  %1044 = vrot.lane.b32.xlu0 %v452, 4
  %v1045 = vpop.permute.xlu0 %1044
  %1046 = vrot.lane.b32.xlu0 %v453, 4
  %v1047 = vpop.permute.xlu0 %1046
  %1048 = vrot.lane.b32.xlu0 %v454, 4
  %v1049 = vpop.permute.xlu0 %1048
  %1050 = vrot.lane.b32.xlu0 %v455, 4
  %v1051 = vpop.permute.xlu0 %1050
  %1052 = vrot.lane.b32.xlu0 %v456, 4
  %v1053 = vpop.permute.xlu0 %1052
  %1054 = vrot.lane.b32.xlu0 %v457, 4
  %v1055 = vpop.permute.xlu0 %1054
  %1056 = vrot.lane.b32.xlu0 %v458, 4
  %v1057 = vpop.permute.xlu0 %1056
  %1058 = vrot.lane.b32.xlu0 %v459, 4
  %v1059 = vpop.permute.xlu0 %1058
  %1060 = vrot.lane.b32.xlu0 %v460, 4
  %v1061 = vpop.permute.xlu0 %1060
  %1062 = vrot.lane.b32.xlu0 %v461, 4
  %v1063 = vpop.permute.xlu0 %1062
  %1064 = vrot.lane.b32.xlu0 %v462, 4
  %v1065 = vpop.permute.xlu0 %1064
  %1066 = vrot.lane.b32.xlu0 %v463, 4
  %v1067 = vpop.permute.xlu0 %1066
  %1068 = vrot.lane.b32.xlu0 %v464, 4
  %v1069 = vpop.permute.xlu0 %1068
  %1070 = vrot.lane.b32.xlu0 %v465, 4
  %v1071 = vpop.permute.xlu0 %1070
  %1072 = vrot.lane.b32.xlu0 %v466, 4
  %v1073 = vpop.permute.xlu0 %1072
  %1074 = vrot.lane.b32.xlu0 %v467, 4
  %v1075 = vpop.permute.xlu0 %1074
  %1076 = vrot.lane.b32.xlu0 %v468, 4
  %v1077 = vpop.permute.xlu0 %1076
  %1078 = vrot.lane.b32.xlu0 %v469, 4
  %v1079 = vpop.permute.xlu0 %1078
  %1080 = vrot.lane.b32.xlu0 %v470, 4
  %v1081 = vpop.permute.xlu0 %1080
  %1082 = vrot.lane.b32.xlu0 %v471, 4
  %v1083 = vpop.permute.xlu0 %1082
  %1084 = vrot.lane.b32.xlu0 %v472, 4
  %v1085 = vpop.permute.xlu0 %1084
  %1086 = vrot.lane.b32.xlu0 %v473, 4
  %v1087 = vpop.permute.xlu0 %1086
  %1088 = vrot.lane.b32.xlu0 %v474, 4
  %v1089 = vpop.permute.xlu0 %1088
  %1090 = vrot.lane.b32.xlu0 %v475, 4
  %v1091 = vpop.permute.xlu0 %1090
  %1092 = vrot.lane.b32.xlu0 %v476, 4
  %v1093 = vpop.permute.xlu0 %1092
  %1094 = vrot.lane.b32.xlu0 %v477, 4
  %v1095 = vpop.permute.xlu0 %1094
  %1096 = vrot.lane.b32.xlu0 %v478, 4
  %v1097 = vpop.permute.xlu0 %1096
  %1098 = vrot.lane.b32.xlu0 %v479, 4
  %v1099 = vpop.permute.xlu0 %1098
  %1100 = vrot.lane.b32.xlu0 %v480, 4
  %v1101 = vpop.permute.xlu0 %1100
  %1102 = vrot.lane.b32.xlu0 %v481, 4
  %v1103 = vpop.permute.xlu0 %1102
  %1104 = vrot.lane.b32.xlu0 %v482, 4
  %v1105 = vpop.permute.xlu0 %1104
  %1106 = vrot.lane.b32.xlu0 %v483, 4
  %v1107 = vpop.permute.xlu0 %1106
  %1108 = vrot.lane.b32.xlu0 %v484, 4
  %v1109 = vpop.permute.xlu0 %1108
  %1110 = vrot.lane.b32.xlu0 %v485, 4
  %v1111 = vpop.permute.xlu0 %1110
  %1112 = vrot.lane.b32.xlu0 %v486, 4
  %v1113 = vpop.permute.xlu0 %1112
  %1114 = vrot.lane.b32.xlu0 %v487, 4
  %v1115 = vpop.permute.xlu0 %1114
  %1116 = vrot.lane.b32.xlu0 %v488, 4
  %v1117 = vpop.permute.xlu0 %1116
  %1118 = vrot.lane.b32.xlu0 %v489, 4
  %v1119 = vpop.permute.xlu0 %1118
  %1120 = vrot.lane.b32.xlu0 %v490, 4
  %v1121 = vpop.permute.xlu0 %1120
  %1122 = vrot.lane.b32.xlu0 %v491, 4
  %v1123 = vpop.permute.xlu0 %1122
  %1124 = vrot.lane.b32.xlu0 %v492, 4
  %v1125 = vpop.permute.xlu0 %1124
  %1126 = vrot.lane.b32.xlu0 %v493, 4
  %v1127 = vpop.permute.xlu0 %1126
  %1128 = vrot.lane.b32.xlu0 %v494, 4
  %v1129 = vpop.permute.xlu0 %1128
  %1130 = vrot.lane.b32.xlu0 %v495, 4
  %v1131 = vpop.permute.xlu0 %1130
  %1132 = vrot.lane.b32.xlu0 %v496, 4
  %v1133 = vpop.permute.xlu0 %1132
  %1134 = vrot.lane.b32.xlu0 %v497, 4
  %v1135 = vpop.permute.xlu0 %1134
  %1136 = vrot.lane.b32.xlu0 %v498, 4
  %v1137 = vpop.permute.xlu0 %1136
  %1138 = vrot.lane.b32.xlu0 %v499, 4
  %v1139 = vpop.permute.xlu0 %1138
  %1140 = vrot.lane.b32.xlu0 %v500, 4
  %v1141 = vpop.permute.xlu0 %1140
  %1270 = vrot.lane.b32.xlu0 %v501, 8
  %v1271 = vpop.permute.xlu0 %1270
  %1272 = vrot.lane.b32.xlu0 %v502, 8
  %v1273 = vpop.permute.xlu0 %1272
  %1274 = vrot.lane.b32.xlu0 %v503, 8
  %v1275 = vpop.permute.xlu0 %1274
  %1276 = vrot.lane.b32.xlu0 %v504, 8
  %v1277 = vpop.permute.xlu0 %1276
  %1278 = vrot.lane.b32.xlu0 %v505, 8
  %v1279 = vpop.permute.xlu0 %1278
  %1280 = vrot.lane.b32.xlu0 %v506, 8
  %v1281 = vpop.permute.xlu0 %1280
  %1282 = vrot.lane.b32.xlu0 %v507, 8
  %v1283 = vpop.permute.xlu0 %1282
  %1284 = vrot.lane.b32.xlu0 %v508, 8
  %v1285 = vpop.permute.xlu0 %1284
  %1286 = vrot.lane.b32.xlu0 %v509, 8
  %v1287 = vpop.permute.xlu0 %1286
  %1288 = vrot.lane.b32.xlu0 %v510, 8
  %v1289 = vpop.permute.xlu0 %1288
  %1290 = vrot.lane.b32.xlu0 %v511, 8
  %v1291 = vpop.permute.xlu0 %1290
  %1292 = vrot.lane.b32.xlu0 %v512, 8
  %v1293 = vpop.permute.xlu0 %1292
  %1294 = vrot.lane.b32.xlu0 %v513, 8
  %v1295 = vpop.permute.xlu0 %1294
  %1296 = vrot.lane.b32.xlu0 %v514, 8
  %v1297 = vpop.permute.xlu0 %1296
  %1298 = vrot.lane.b32.xlu0 %v515, 8
  %v1299 = vpop.permute.xlu0 %1298
  %1300 = vrot.lane.b32.xlu0 %v516, 8
  %v1301 = vpop.permute.xlu0 %1300
  %1302 = vrot.lane.b32.xlu0 %v517, 8
  %v1303 = vpop.permute.xlu0 %1302
  %1304 = vrot.lane.b32.xlu0 %v518, 8
  %v1305 = vpop.permute.xlu0 %1304
  %1306 = vrot.lane.b32.xlu0 %v519, 8
  %v1307 = vpop.permute.xlu0 %1306
  %1308 = vrot.lane.b32.xlu0 %v520, 8
  %v1309 = vpop.permute.xlu0 %1308
  %1310 = vrot.lane.b32.xlu0 %v521, 8
  %v1311 = vpop.permute.xlu0 %1310
  %1312 = vrot.lane.b32.xlu0 %v522, 8
  %v1313 = vpop.permute.xlu0 %1312
  %1314 = vrot.lane.b32.xlu0 %v523, 8
  %v1315 = vpop.permute.xlu0 %1314
  %1316 = vrot.lane.b32.xlu0 %v524, 8
  %v1317 = vpop.permute.xlu0 %1316
  %1318 = vrot.lane.b32.xlu0 %v525, 8
  %v1319 = vpop.permute.xlu0 %1318
  %1320 = vrot.lane.b32.xlu0 %v526, 8
  %v1321 = vpop.permute.xlu0 %1320
  %1322 = vrot.lane.b32.xlu0 %v527, 8
  %v1323 = vpop.permute.xlu0 %1322
  %1324 = vrot.lane.b32.xlu0 %v528, 8
  %v1325 = vpop.permute.xlu0 %1324
  %1326 = vrot.lane.b32.xlu0 %v529, 8
  %v1327 = vpop.permute.xlu0 %1326
  %1328 = vrot.lane.b32.xlu0 %v530, 8
  %v1329 = vpop.permute.xlu0 %1328
  %1330 = vrot.lane.b32.xlu0 %v531, 8
  %v1331 = vpop.permute.xlu0 %1330
  %1332 = vrot.lane.b32.xlu0 %v532, 8
  %v1333 = vpop.permute.xlu0 %1332
  %1334 = vrot.lane.b32.xlu0 %v533, 8
  %v1335 = vpop.permute.xlu0 %1334
  %1336 = vrot.lane.b32.xlu0 %v534, 8
  %v1337 = vpop.permute.xlu0 %1336
  %1338 = vrot.lane.b32.xlu0 %v535, 8
  %v1339 = vpop.permute.xlu0 %1338
  %1340 = vrot.lane.b32.xlu0 %v536, 8
  %v1341 = vpop.permute.xlu0 %1340
  %1342 = vrot.lane.b32.xlu0 %v537, 8
  %v1343 = vpop.permute.xlu0 %1342
  %1344 = vrot.lane.b32.xlu0 %v538, 8
  %v1345 = vpop.permute.xlu0 %1344
  %1346 = vrot.lane.b32.xlu0 %v539, 8
  %v1347 = vpop.permute.xlu0 %1346
  %1348 = vrot.lane.b32.xlu0 %v540, 8
  %v1349 = vpop.permute.xlu0 %1348
  %1350 = vrot.lane.b32.xlu0 %v541, 8
  %v1351 = vpop.permute.xlu0 %1350
  %1352 = vrot.lane.b32.xlu0 %v542, 8
  %v1353 = vpop.permute.xlu0 %1352
  %1354 = vrot.lane.b32.xlu0 %v543, 8
  %v1355 = vpop.permute.xlu0 %1354
  %1356 = vrot.lane.b32.xlu0 %v544, 8
  %v1357 = vpop.permute.xlu0 %1356
  %1358 = vrot.lane.b32.xlu0 %v545, 8
  %v1359 = vpop.permute.xlu0 %1358
  %1360 = vrot.lane.b32.xlu0 %v546, 8
  %v1361 = vpop.permute.xlu0 %1360
  %1362 = vrot.lane.b32.xlu0 %v547, 8
  %v1363 = vpop.permute.xlu0 %1362
  %1364 = vrot.lane.b32.xlu0 %v548, 8
  %v1365 = vpop.permute.xlu0 %1364
  %1366 = vrot.lane.b32.xlu0 %v549, 8
  %v1367 = vpop.permute.xlu0 %1366
  %1368 = vrot.lane.b32.xlu0 %v550, 8
  %v1369 = vpop.permute.xlu0 %1368
  %1370 = vrot.lane.b32.xlu0 %v551, 8
  %v1371 = vpop.permute.xlu0 %1370
  %1372 = vrot.lane.b32.xlu0 %v552, 8
  %v1373 = vpop.permute.xlu0 %1372
  %1374 = vrot.lane.b32.xlu0 %v553, 8
  %v1375 = vpop.permute.xlu0 %1374
  %1376 = vrot.lane.b32.xlu0 %v554, 8
  %v1377 = vpop.permute.xlu0 %1376
  %1378 = vrot.lane.b32.xlu0 %v555, 8
  %v1379 = vpop.permute.xlu0 %1378
  %1380 = vrot.lane.b32.xlu0 %v556, 8
  %v1381 = vpop.permute.xlu0 %1380
  %1382 = vrot.lane.b32.xlu0 %v557, 8
  %v1383 = vpop.permute.xlu0 %1382
  %1384 = vrot.lane.b32.xlu0 %v558, 8
  %v1385 = vpop.permute.xlu0 %1384
  %1386 = vrot.lane.b32.xlu0 %v559, 8
  %v1387 = vpop.permute.xlu0 %1386
  %1388 = vrot.lane.b32.xlu0 %v560, 8
  %v1389 = vpop.permute.xlu0 %1388
  %1390 = vrot.lane.b32.xlu0 %v561, 8
  %v1391 = vpop.permute.xlu0 %1390
  %1392 = vrot.lane.b32.xlu0 %v562, 8
  %v1393 = vpop.permute.xlu0 %1392
  %1394 = vrot.lane.b32.xlu0 %v563, 8
  %v1395 = vpop.permute.xlu0 %1394
  %1396 = vrot.lane.b32.xlu0 %v564, 8
  %v1397 = vpop.permute.xlu0 %1396
  %1526 = vrot.lane.b32.xlu0 %v565, 12
  %v1527 = vpop.permute.xlu0 %1526
  %1528 = vrot.lane.b32.xlu0 %v566, 12
  %v1529 = vpop.permute.xlu0 %1528
  %1530 = vrot.lane.b32.xlu0 %v567, 12
  %v1531 = vpop.permute.xlu0 %1530
  %1532 = vrot.lane.b32.xlu0 %v568, 12
  %v1533 = vpop.permute.xlu0 %1532
  %1534 = vrot.lane.b32.xlu0 %v569, 12
  %v1535 = vpop.permute.xlu0 %1534
  %1536 = vrot.lane.b32.xlu0 %v570, 12
  %v1537 = vpop.permute.xlu0 %1536
  %1538 = vrot.lane.b32.xlu0 %v571, 12
  %v1539 = vpop.permute.xlu0 %1538
  %1540 = vrot.lane.b32.xlu0 %v572, 12
  %v1541 = vpop.permute.xlu0 %1540
  %1542 = vrot.lane.b32.xlu0 %v573, 12
  %v1543 = vpop.permute.xlu0 %1542
  %1544 = vrot.lane.b32.xlu0 %v574, 12
  %v1545 = vpop.permute.xlu0 %1544
  %1546 = vrot.lane.b32.xlu0 %v575, 12
  %v1547 = vpop.permute.xlu0 %1546
  %1548 = vrot.lane.b32.xlu0 %v576, 12
  %v1549 = vpop.permute.xlu0 %1548
  %1550 = vrot.lane.b32.xlu0 %v577, 12
  %v1551 = vpop.permute.xlu0 %1550
  %1552 = vrot.lane.b32.xlu0 %v578, 12
  %v1553 = vpop.permute.xlu0 %1552
  %1554 = vrot.lane.b32.xlu0 %v579, 12
  %v1555 = vpop.permute.xlu0 %1554
  %1556 = vrot.lane.b32.xlu0 %v580, 12
  %v1557 = vpop.permute.xlu0 %1556
  %1558 = vrot.lane.b32.xlu0 %v581, 12
  %v1559 = vpop.permute.xlu0 %1558
  %1560 = vrot.lane.b32.xlu0 %v582, 12
  %v1561 = vpop.permute.xlu0 %1560
  %1562 = vrot.lane.b32.xlu0 %v583, 12
  %v1563 = vpop.permute.xlu0 %1562
  %1564 = vrot.lane.b32.xlu0 %v584, 12
  %v1565 = vpop.permute.xlu0 %1564
  %1566 = vrot.lane.b32.xlu0 %v585, 12
  %v1567 = vpop.permute.xlu0 %1566
  %1568 = vrot.lane.b32.xlu0 %v586, 12
  %v1569 = vpop.permute.xlu0 %1568
  %1570 = vrot.lane.b32.xlu0 %v587, 12
  %v1571 = vpop.permute.xlu0 %1570
  %1572 = vrot.lane.b32.xlu0 %v588, 12
  %v1573 = vpop.permute.xlu0 %1572
  %1574 = vrot.lane.b32.xlu0 %v589, 12
  %v1575 = vpop.permute.xlu0 %1574
  %1576 = vrot.lane.b32.xlu0 %v590, 12
  %v1577 = vpop.permute.xlu0 %1576
  %1578 = vrot.lane.b32.xlu0 %v591, 12
  %v1579 = vpop.permute.xlu0 %1578
  %1580 = vrot.lane.b32.xlu0 %v592, 12
  %v1581 = vpop.permute.xlu0 %1580
  %1582 = vrot.lane.b32.xlu0 %v593, 12
  %v1583 = vpop.permute.xlu0 %1582
  %1584 = vrot.lane.b32.xlu0 %v594, 12
  %v1585 = vpop.permute.xlu0 %1584
  %1586 = vrot.lane.b32.xlu0 %v595, 12
  %v1587 = vpop.permute.xlu0 %1586
  %1588 = vrot.lane.b32.xlu0 %v596, 12
  %v1589 = vpop.permute.xlu0 %1588
  %1590 = vrot.lane.b32.xlu0 %v597, 12
  %v1591 = vpop.permute.xlu0 %1590
  %1592 = vrot.lane.b32.xlu0 %v598, 12
  %v1593 = vpop.permute.xlu0 %1592
  %1594 = vrot.lane.b32.xlu0 %v599, 12
  %v1595 = vpop.permute.xlu0 %1594
  %1596 = vrot.lane.b32.xlu0 %v600, 12
  %v1597 = vpop.permute.xlu0 %1596
  %1598 = vrot.lane.b32.xlu0 %v601, 12
  %v1599 = vpop.permute.xlu0 %1598
  %1600 = vrot.lane.b32.xlu0 %v602, 12
  %v1601 = vpop.permute.xlu0 %1600
  %1602 = vrot.lane.b32.xlu0 %v603, 12
  %v1603 = vpop.permute.xlu0 %1602
  %1604 = vrot.lane.b32.xlu0 %v604, 12
  %v1605 = vpop.permute.xlu0 %1604
  %1606 = vrot.lane.b32.xlu0 %v605, 12
  %v1607 = vpop.permute.xlu0 %1606
  %1608 = vrot.lane.b32.xlu0 %v606, 12
  %v1609 = vpop.permute.xlu0 %1608
  %1610 = vrot.lane.b32.xlu0 %v607, 12
  %v1611 = vpop.permute.xlu0 %1610
  %1612 = vrot.lane.b32.xlu0 %v608, 12
  %v1613 = vpop.permute.xlu0 %1612
  %1614 = vrot.lane.b32.xlu0 %v609, 12
  %v1615 = vpop.permute.xlu0 %1614
  %1616 = vrot.lane.b32.xlu0 %v610, 12
  %v1617 = vpop.permute.xlu0 %1616
  %1618 = vrot.lane.b32.xlu0 %v611, 12
  %v1619 = vpop.permute.xlu0 %1618
  %1620 = vrot.lane.b32.xlu0 %v612, 12
  %v1621 = vpop.permute.xlu0 %1620
  %1622 = vrot.lane.b32.xlu0 %v613, 12
  %v1623 = vpop.permute.xlu0 %1622
  %1624 = vrot.lane.b32.xlu0 %v614, 12
  %v1625 = vpop.permute.xlu0 %1624
  %1626 = vrot.lane.b32.xlu0 %v615, 12
  %v1627 = vpop.permute.xlu0 %1626
  %1628 = vrot.lane.b32.xlu0 %v616, 12
  %v1629 = vpop.permute.xlu0 %1628
  %1630 = vrot.lane.b32.xlu0 %v617, 12
  %v1631 = vpop.permute.xlu0 %1630
  %1632 = vrot.lane.b32.xlu0 %v618, 12
  %v1633 = vpop.permute.xlu0 %1632
  %1634 = vrot.lane.b32.xlu0 %v619, 12
  %v1635 = vpop.permute.xlu0 %1634
  %1636 = vrot.lane.b32.xlu0 %v620, 12
  %v1637 = vpop.permute.xlu0 %1636
  %1638 = vrot.lane.b32.xlu0 %v621, 12
  %v1639 = vpop.permute.xlu0 %1638
  %1640 = vrot.lane.b32.xlu0 %v622, 12
  %v1641 = vpop.permute.xlu0 %1640
  %1642 = vrot.lane.b32.xlu0 %v623, 12
  %v1643 = vpop.permute.xlu0 %1642
  %1644 = vrot.lane.b32.xlu0 %v624, 12
  %v1645 = vpop.permute.xlu0 %1644
  %1646 = vrot.lane.b32.xlu0 %v625, 12
  %v1647 = vpop.permute.xlu0 %1646
  %1648 = vrot.lane.b32.xlu0 %v626, 12
  %v1649 = vpop.permute.xlu0 %1648
  %1650 = vrot.lane.b32.xlu0 %v627, 12
  %v1651 = vpop.permute.xlu0 %1650
  %1652 = vrot.lane.b32.xlu0 %v628, 12
  %v1653 = vpop.permute.xlu0 %1652
  %1782 = vrot.lane.b32.xlu0 %v629, 16
  %v1783 = vpop.permute.xlu0 %1782
  %1784 = vrot.lane.b32.xlu0 %v630, 16
  %v1785 = vpop.permute.xlu0 %1784
  %1786 = vrot.lane.b32.xlu0 %v631, 16
  %v1787 = vpop.permute.xlu0 %1786
  %1788 = vrot.lane.b32.xlu0 %v632, 16
  %v1789 = vpop.permute.xlu0 %1788
  %1790 = vrot.lane.b32.xlu0 %v633, 16
  %v1791 = vpop.permute.xlu0 %1790
  %1792 = vrot.lane.b32.xlu0 %v634, 16
  %v1793 = vpop.permute.xlu0 %1792
  %1794 = vrot.lane.b32.xlu0 %v635, 16
  %v1795 = vpop.permute.xlu0 %1794
  %1796 = vrot.lane.b32.xlu0 %v636, 16
  %v1797 = vpop.permute.xlu0 %1796
  %1798 = vrot.lane.b32.xlu0 %v637, 16
  %v1799 = vpop.permute.xlu0 %1798
  %1800 = vrot.lane.b32.xlu0 %v638, 16
  %v1801 = vpop.permute.xlu0 %1800
  %1802 = vrot.lane.b32.xlu0 %v639, 16
  %v1803 = vpop.permute.xlu0 %1802
  %1804 = vrot.lane.b32.xlu0 %v640, 16
  %v1805 = vpop.permute.xlu0 %1804
  %1806 = vrot.lane.b32.xlu0 %v641, 16
  %v1807 = vpop.permute.xlu0 %1806
  %1808 = vrot.lane.b32.xlu0 %v642, 16
  %v1809 = vpop.permute.xlu0 %1808
  %1810 = vrot.lane.b32.xlu0 %v643, 16
  %v1811 = vpop.permute.xlu0 %1810
  %1812 = vrot.lane.b32.xlu0 %v644, 16
  %v1813 = vpop.permute.xlu0 %1812
  %1814 = vrot.lane.b32.xlu0 %v645, 16
  %v1815 = vpop.permute.xlu0 %1814
  %1816 = vrot.lane.b32.xlu0 %v646, 16
  %v1817 = vpop.permute.xlu0 %1816
  %1818 = vrot.lane.b32.xlu0 %v647, 16
  %v1819 = vpop.permute.xlu0 %1818
  %1820 = vrot.lane.b32.xlu0 %v648, 16
  %v1821 = vpop.permute.xlu0 %1820
  %1822 = vrot.lane.b32.xlu0 %v649, 16
  %v1823 = vpop.permute.xlu0 %1822
  %1824 = vrot.lane.b32.xlu0 %v650, 16
  %v1825 = vpop.permute.xlu0 %1824
  %1826 = vrot.lane.b32.xlu0 %v651, 16
  %v1827 = vpop.permute.xlu0 %1826
  %1828 = vrot.lane.b32.xlu0 %v652, 16
  %v1829 = vpop.permute.xlu0 %1828
  %1830 = vrot.lane.b32.xlu0 %v653, 16
  %v1831 = vpop.permute.xlu0 %1830
  %1832 = vrot.lane.b32.xlu0 %v654, 16
  %v1833 = vpop.permute.xlu0 %1832
  %1834 = vrot.lane.b32.xlu0 %v655, 16
  %v1835 = vpop.permute.xlu0 %1834
  %1836 = vrot.lane.b32.xlu0 %v656, 16
  %v1837 = vpop.permute.xlu0 %1836
  %1838 = vrot.lane.b32.xlu0 %v657, 16
  %v1839 = vpop.permute.xlu0 %1838
  %1840 = vrot.lane.b32.xlu0 %v658, 16
  %v1841 = vpop.permute.xlu0 %1840
  %1842 = vrot.lane.b32.xlu0 %v659, 16
  %v1843 = vpop.permute.xlu0 %1842
  %1844 = vrot.lane.b32.xlu0 %v660, 16
  %v1845 = vpop.permute.xlu0 %1844
  %1846 = vrot.lane.b32.xlu0 %v661, 16
  %v1847 = vpop.permute.xlu0 %1846
  %1848 = vrot.lane.b32.xlu0 %v662, 16
  %v1849 = vpop.permute.xlu0 %1848
  %1850 = vrot.lane.b32.xlu0 %v663, 16
  %v1851 = vpop.permute.xlu0 %1850
  %1852 = vrot.lane.b32.xlu0 %v664, 16
  %v1853 = vpop.permute.xlu0 %1852
  %1854 = vrot.lane.b32.xlu0 %v665, 16
  %v1855 = vpop.permute.xlu0 %1854
  %1856 = vrot.lane.b32.xlu0 %v666, 16
  %v1857 = vpop.permute.xlu0 %1856
  %1858 = vrot.lane.b32.xlu0 %v667, 16
  %v1859 = vpop.permute.xlu0 %1858
  %1860 = vrot.lane.b32.xlu0 %v668, 16
  %v1861 = vpop.permute.xlu0 %1860
  %1862 = vrot.lane.b32.xlu0 %v669, 16
  %v1863 = vpop.permute.xlu0 %1862
  %1864 = vrot.lane.b32.xlu0 %v670, 16
  %v1865 = vpop.permute.xlu0 %1864
  %1866 = vrot.lane.b32.xlu0 %v671, 16
  %v1867 = vpop.permute.xlu0 %1866
  %1868 = vrot.lane.b32.xlu0 %v672, 16
  %v1869 = vpop.permute.xlu0 %1868
  %1870 = vrot.lane.b32.xlu0 %v673, 16
  %v1871 = vpop.permute.xlu0 %1870
  %1872 = vrot.lane.b32.xlu0 %v674, 16
  %v1873 = vpop.permute.xlu0 %1872
  %1874 = vrot.lane.b32.xlu0 %v675, 16
  %v1875 = vpop.permute.xlu0 %1874
  %1876 = vrot.lane.b32.xlu0 %v676, 16
  %v1877 = vpop.permute.xlu0 %1876
  %1878 = vrot.lane.b32.xlu0 %v677, 16
  %v1879 = vpop.permute.xlu0 %1878
  %1880 = vrot.lane.b32.xlu0 %v678, 16
  %v1881 = vpop.permute.xlu0 %1880
  %1882 = vrot.lane.b32.xlu0 %v679, 16
  %v1883 = vpop.permute.xlu0 %1882
  %1884 = vrot.lane.b32.xlu0 %v680, 16
  %v1885 = vpop.permute.xlu0 %1884
  %1886 = vrot.lane.b32.xlu0 %v681, 16
  %v1887 = vpop.permute.xlu0 %1886
  %1888 = vrot.lane.b32.xlu0 %v682, 16
  %v1889 = vpop.permute.xlu0 %1888
  %1890 = vrot.lane.b32.xlu0 %v683, 16
  %v1891 = vpop.permute.xlu0 %1890
  %1892 = vrot.lane.b32.xlu0 %v684, 16
  %v1893 = vpop.permute.xlu0 %1892
  %1894 = vrot.lane.b32.xlu0 %v685, 16
  %v1895 = vpop.permute.xlu0 %1894
  %1896 = vrot.lane.b32.xlu0 %v686, 16
  %v1897 = vpop.permute.xlu0 %1896
  %1898 = vrot.lane.b32.xlu0 %v687, 16
  %v1899 = vpop.permute.xlu0 %1898
  %1900 = vrot.lane.b32.xlu0 %v688, 16
  %v1901 = vpop.permute.xlu0 %1900
  %1902 = vrot.lane.b32.xlu0 %v689, 16
  %v1903 = vpop.permute.xlu0 %1902
  %1904 = vrot.lane.b32.xlu0 %v690, 16
  %v1905 = vpop.permute.xlu0 %1904
  %1906 = vrot.lane.b32.xlu0 %v691, 16
  %v1907 = vpop.permute.xlu0 %1906
  %1908 = vrot.lane.b32.xlu0 %v692, 16
  %v1909 = vpop.permute.xlu0 %1908
  %2038 = vrot.lane.b32.xlu0 %v693, 20
  %v2039 = vpop.permute.xlu0 %2038
  %2040 = vrot.lane.b32.xlu0 %v694, 20
  %v2041 = vpop.permute.xlu0 %2040
  %2042 = vrot.lane.b32.xlu0 %v695, 20
  %v2043 = vpop.permute.xlu0 %2042
  %2044 = vrot.lane.b32.xlu0 %v696, 20
  %v2045 = vpop.permute.xlu0 %2044
  %2046 = vrot.lane.b32.xlu0 %v697, 20
  %v2047 = vpop.permute.xlu0 %2046
  %2048 = vrot.lane.b32.xlu0 %v698, 20
  %v2049 = vpop.permute.xlu0 %2048
  %2050 = vrot.lane.b32.xlu0 %v699, 20
  %v2051 = vpop.permute.xlu0 %2050
  %2052 = vrot.lane.b32.xlu0 %v700, 20
  %v2053 = vpop.permute.xlu0 %2052
  %2054 = vrot.lane.b32.xlu0 %v701, 20
  %v2055 = vpop.permute.xlu0 %2054
  %2056 = vrot.lane.b32.xlu0 %v702, 20
  %v2057 = vpop.permute.xlu0 %2056
  %2058 = vrot.lane.b32.xlu0 %v703, 20
  %v2059 = vpop.permute.xlu0 %2058
  %2060 = vrot.lane.b32.xlu0 %v704, 20
  %v2061 = vpop.permute.xlu0 %2060
  %2062 = vrot.lane.b32.xlu0 %v705, 20
  %v2063 = vpop.permute.xlu0 %2062
  %2064 = vrot.lane.b32.xlu0 %v706, 20
  %v2065 = vpop.permute.xlu0 %2064
  %2066 = vrot.lane.b32.xlu0 %v707, 20
  %v2067 = vpop.permute.xlu0 %2066
  %2068 = vrot.lane.b32.xlu0 %v708, 20
  %v2069 = vpop.permute.xlu0 %2068
  %2070 = vrot.lane.b32.xlu0 %v709, 20
  %v2071 = vpop.permute.xlu0 %2070
  %2072 = vrot.lane.b32.xlu0 %v710, 20
  %v2073 = vpop.permute.xlu0 %2072
  %2074 = vrot.lane.b32.xlu0 %v711, 20
  %v2075 = vpop.permute.xlu0 %2074
  %2076 = vrot.lane.b32.xlu0 %v712, 20
  %v2077 = vpop.permute.xlu0 %2076
  %2078 = vrot.lane.b32.xlu0 %v713, 20
  %v2079 = vpop.permute.xlu0 %2078
  %2080 = vrot.lane.b32.xlu0 %v714, 20
  %v2081 = vpop.permute.xlu0 %2080
  %2082 = vrot.lane.b32.xlu0 %v715, 20
  %v2083 = vpop.permute.xlu0 %2082
  %2084 = vrot.lane.b32.xlu0 %v716, 20
  %v2085 = vpop.permute.xlu0 %2084
  %2086 = vrot.lane.b32.xlu0 %v717, 20
  %v2087 = vpop.permute.xlu0 %2086
  %2088 = vrot.lane.b32.xlu0 %v718, 20
  %v2089 = vpop.permute.xlu0 %2088
  %2090 = vrot.lane.b32.xlu0 %v719, 20
  %v2091 = vpop.permute.xlu0 %2090
  %2092 = vrot.lane.b32.xlu0 %v720, 20
  %v2093 = vpop.permute.xlu0 %2092
  %2094 = vrot.lane.b32.xlu0 %v721, 20
  %v2095 = vpop.permute.xlu0 %2094
  %2096 = vrot.lane.b32.xlu0 %v722, 20
  %v2097 = vpop.permute.xlu0 %2096
  %2098 = vrot.lane.b32.xlu0 %v723, 20
  %v2099 = vpop.permute.xlu0 %2098
  %2100 = vrot.lane.b32.xlu0 %v724, 20
  %v2101 = vpop.permute.xlu0 %2100
  %2102 = vrot.lane.b32.xlu0 %v725, 20
  %v2103 = vpop.permute.xlu0 %2102
  %2104 = vrot.lane.b32.xlu0 %v726, 20
  %v2105 = vpop.permute.xlu0 %2104
  %2106 = vrot.lane.b32.xlu0 %v727, 20
  %v2107 = vpop.permute.xlu0 %2106
  %2108 = vrot.lane.b32.xlu0 %v728, 20
  %v2109 = vpop.permute.xlu0 %2108
  %2110 = vrot.lane.b32.xlu0 %v729, 20
  %v2111 = vpop.permute.xlu0 %2110
  %2112 = vrot.lane.b32.xlu0 %v730, 20
  %v2113 = vpop.permute.xlu0 %2112
  %2114 = vrot.lane.b32.xlu0 %v731, 20
  %v2115 = vpop.permute.xlu0 %2114
  %2116 = vrot.lane.b32.xlu0 %v732, 20
  %v2117 = vpop.permute.xlu0 %2116
  %2118 = vrot.lane.b32.xlu0 %v733, 20
  %v2119 = vpop.permute.xlu0 %2118
  %2120 = vrot.lane.b32.xlu0 %v734, 20
  %v2121 = vpop.permute.xlu0 %2120
  %2122 = vrot.lane.b32.xlu0 %v735, 20
  %v2123 = vpop.permute.xlu0 %2122
  %2124 = vrot.lane.b32.xlu0 %v736, 20
  %v2125 = vpop.permute.xlu0 %2124
  %2126 = vrot.lane.b32.xlu0 %v737, 20
  %v2127 = vpop.permute.xlu0 %2126
  %2128 = vrot.lane.b32.xlu0 %v738, 20
  %v2129 = vpop.permute.xlu0 %2128
  %2130 = vrot.lane.b32.xlu0 %v739, 20
  %v2131 = vpop.permute.xlu0 %2130
  %2132 = vrot.lane.b32.xlu0 %v740, 20
  %v2133 = vpop.permute.xlu0 %2132
  %2134 = vrot.lane.b32.xlu0 %v741, 20
  %v2135 = vpop.permute.xlu0 %2134
  %2136 = vrot.lane.b32.xlu0 %v742, 20
  %v2137 = vpop.permute.xlu0 %2136
  %2138 = vrot.lane.b32.xlu0 %v743, 20
  %v2139 = vpop.permute.xlu0 %2138
  %2140 = vrot.lane.b32.xlu0 %v744, 20
  %v2141 = vpop.permute.xlu0 %2140
  %2142 = vrot.lane.b32.xlu0 %v745, 20
  %v2143 = vpop.permute.xlu0 %2142
  %2144 = vrot.lane.b32.xlu0 %v746, 20
  %v2145 = vpop.permute.xlu0 %2144
  %2146 = vrot.lane.b32.xlu0 %v747, 20
  %v2147 = vpop.permute.xlu0 %2146
  %2148 = vrot.lane.b32.xlu0 %v748, 20
  %v2149 = vpop.permute.xlu0 %2148
  %2150 = vrot.lane.b32.xlu0 %v749, 20
  %v2151 = vpop.permute.xlu0 %2150
  %2152 = vrot.lane.b32.xlu0 %v750, 20
  %v2153 = vpop.permute.xlu0 %2152
  %2154 = vrot.lane.b32.xlu0 %v751, 20
  %v2155 = vpop.permute.xlu0 %2154
  %2156 = vrot.lane.b32.xlu0 %v752, 20
  %v2157 = vpop.permute.xlu0 %2156
  %2158 = vrot.lane.b32.xlu0 %v753, 20
  %v2159 = vpop.permute.xlu0 %2158
  %2160 = vrot.lane.b32.xlu0 %v754, 20
  %v2161 = vpop.permute.xlu0 %2160
  %2162 = vrot.lane.b32.xlu0 %v755, 20
  %v2163 = vpop.permute.xlu0 %2162
  %2164 = vrot.lane.b32.xlu0 %v756, 20
  %v2165 = vpop.permute.xlu0 %2164
  %2294 = vrot.lane.b32.xlu0 %v758, 24
  %v2295 = vpop.permute.xlu0 %2294
  %2296 = vrot.lane.b32.xlu0 %v759, 24
  %v2297 = vpop.permute.xlu0 %2296
  %2298 = vrot.lane.b32.xlu0 %v760, 24
  %v2299 = vpop.permute.xlu0 %2298
  %2300 = vrot.lane.b32.xlu0 %v761, 24
  %v2301 = vpop.permute.xlu0 %2300
  %2302 = vrot.lane.b32.xlu0 %v762, 24
  %v2303 = vpop.permute.xlu0 %2302
  %2304 = vrot.lane.b32.xlu0 %v763, 24
  %v2305 = vpop.permute.xlu0 %2304
  %2306 = vrot.lane.b32.xlu0 %v764, 24
  %v2307 = vpop.permute.xlu0 %2306
  %2308 = vrot.lane.b32.xlu0 %v765, 24
  %v2309 = vpop.permute.xlu0 %2308
  %2310 = vrot.lane.b32.xlu0 %v766, 24
  %v2311 = vpop.permute.xlu0 %2310
  %2312 = vrot.lane.b32.xlu0 %v767, 24
  %v2313 = vpop.permute.xlu0 %2312
  %2314 = vrot.lane.b32.xlu0 %v768, 24
  %v2315 = vpop.permute.xlu0 %2314
  %2316 = vrot.lane.b32.xlu0 %v769, 24
  %v2317 = vpop.permute.xlu0 %2316
  %2318 = vrot.lane.b32.xlu0 %v770, 24
  %v2319 = vpop.permute.xlu0 %2318
  %2320 = vrot.lane.b32.xlu0 %v771, 24
  %v2321 = vpop.permute.xlu0 %2320
  %2322 = vrot.lane.b32.xlu0 %v772, 24
  %v2323 = vpop.permute.xlu0 %2322
  %2324 = vrot.lane.b32.xlu0 %v773, 24
  %v2325 = vpop.permute.xlu0 %2324
  %2326 = vrot.lane.b32.xlu0 %v774, 24
  %v2327 = vpop.permute.xlu0 %2326
  %2328 = vrot.lane.b32.xlu0 %v775, 24
  %v2329 = vpop.permute.xlu0 %2328
  %2330 = vrot.lane.b32.xlu0 %v776, 24
  %v2331 = vpop.permute.xlu0 %2330
  %2332 = vrot.lane.b32.xlu0 %v777, 24
  %v2333 = vpop.permute.xlu0 %2332
  %2334 = vrot.lane.b32.xlu0 %v778, 24
  %v2335 = vpop.permute.xlu0 %2334
  %2336 = vrot.lane.b32.xlu0 %v779, 24
  %v2337 = vpop.permute.xlu0 %2336
  %2338 = vrot.lane.b32.xlu0 %v780, 24
  %v2339 = vpop.permute.xlu0 %2338
  %2340 = vrot.lane.b32.xlu0 %v781, 24
  %v2341 = vpop.permute.xlu0 %2340
  %2342 = vrot.lane.b32.xlu0 %v782, 24
  %v2343 = vpop.permute.xlu0 %2342
  %2344 = vrot.lane.b32.xlu0 %v783, 24
  %v2345 = vpop.permute.xlu0 %2344
  %2346 = vrot.lane.b32.xlu0 %v784, 24
  %v2347 = vpop.permute.xlu0 %2346
  %2348 = vrot.lane.b32.xlu0 %v785, 24
  %v2349 = vpop.permute.xlu0 %2348
  %2350 = vrot.lane.b32.xlu0 %v786, 24
  %v2351 = vpop.permute.xlu0 %2350
  %2352 = vrot.lane.b32.xlu0 %v787, 24
  %v2353 = vpop.permute.xlu0 %2352
  %2354 = vrot.lane.b32.xlu0 %v788, 24
  %v2355 = vpop.permute.xlu0 %2354
  %2356 = vrot.lane.b32.xlu0 %v789, 24
  %v2357 = vpop.permute.xlu0 %2356
  %2358 = vrot.lane.b32.xlu0 %v790, 24
  %v2359 = vpop.permute.xlu0 %2358
  %2360 = vrot.lane.b32.xlu0 %v791, 24
  %v2361 = vpop.permute.xlu0 %2360
  %2362 = vrot.lane.b32.xlu0 %v792, 24
  %v2363 = vpop.permute.xlu0 %2362
  %2364 = vrot.lane.b32.xlu0 %v793, 24
  %v2365 = vpop.permute.xlu0 %2364
  %2366 = vrot.lane.b32.xlu0 %v794, 24
  %v2367 = vpop.permute.xlu0 %2366
  %2368 = vrot.lane.b32.xlu0 %v795, 24
  %v2369 = vpop.permute.xlu0 %2368
  %2370 = vrot.lane.b32.xlu0 %v796, 24
  %v2371 = vpop.permute.xlu0 %2370
  %2372 = vrot.lane.b32.xlu0 %v797, 24
  %v2373 = vpop.permute.xlu0 %2372
  %2374 = vrot.lane.b32.xlu0 %v798, 24
  %v2375 = vpop.permute.xlu0 %2374
  %2376 = vrot.lane.b32.xlu0 %v799, 24
  %v2377 = vpop.permute.xlu0 %2376
  %2378 = vrot.lane.b32.xlu0 %v800, 24
  %v2379 = vpop.permute.xlu0 %2378
  %2380 = vrot.lane.b32.xlu0 %v801, 24
  %v2381 = vpop.permute.xlu0 %2380
  %2382 = vrot.lane.b32.xlu0 %v802, 24
  %v2383 = vpop.permute.xlu0 %2382
  %2384 = vrot.lane.b32.xlu0 %v803, 24
  %v2385 = vpop.permute.xlu0 %2384
  %2386 = vrot.lane.b32.xlu0 %v804, 24
  %v2387 = vpop.permute.xlu0 %2386
  %2388 = vrot.lane.b32.xlu0 %v805, 24
  %v2389 = vpop.permute.xlu0 %2388
  %2390 = vrot.lane.b32.xlu0 %v806, 24
  %v2391 = vpop.permute.xlu0 %2390
  %2392 = vrot.lane.b32.xlu0 %v807, 24
  %v2393 = vpop.permute.xlu0 %2392
  %2394 = vrot.lane.b32.xlu0 %v808, 24
  %v2395 = vpop.permute.xlu0 %2394
  %2396 = vrot.lane.b32.xlu0 %v809, 24
  %v2397 = vpop.permute.xlu0 %2396
  %2398 = vrot.lane.b32.xlu0 %v810, 24
  %v2399 = vpop.permute.xlu0 %2398
  %2400 = vrot.lane.b32.xlu0 %v811, 24
  %v2401 = vpop.permute.xlu0 %2400
  %2402 = vrot.lane.b32.xlu0 %v812, 24
  %v2403 = vpop.permute.xlu0 %2402
  %2404 = vrot.lane.b32.xlu0 %v813, 24
  %v2405 = vpop.permute.xlu0 %2404
  %2406 = vrot.lane.b32.xlu0 %v814, 24
  %v2407 = vpop.permute.xlu0 %2406
  %2408 = vrot.lane.b32.xlu0 %v815, 24
  %v2409 = vpop.permute.xlu0 %2408
  %2410 = vrot.lane.b32.xlu0 %v816, 24
  %v2411 = vpop.permute.xlu0 %2410
  %2412 = vrot.lane.b32.xlu0 %v817, 24
  %v2413 = vpop.permute.xlu0 %2412
  %2414 = vrot.lane.b32.xlu0 %v818, 24
  %v2415 = vpop.permute.xlu0 %2414
  %2416 = vrot.lane.b32.xlu0 %v819, 24
  %v2417 = vpop.permute.xlu0 %2416
  %2418 = vrot.lane.b32.xlu0 %v820, 24
  %v2419 = vpop.permute.xlu0 %2418
  %2420 = vrot.lane.b32.xlu0 %v821, 24
  %v2421 = vpop.permute.xlu0 %2420
  %2550 = vrot.lane.b32.xlu0 %v822, 28
  %v2551 = vpop.permute.xlu0 %2550
  %2552 = vrot.lane.b32.xlu0 %v823, 28
  %v2553 = vpop.permute.xlu0 %2552
  %2554 = vrot.lane.b32.xlu0 %v824, 28
  %v2555 = vpop.permute.xlu0 %2554
  %2556 = vrot.lane.b32.xlu0 %v825, 28
  %v2557 = vpop.permute.xlu0 %2556
  %2558 = vrot.lane.b32.xlu0 %v826, 28
  %v2559 = vpop.permute.xlu0 %2558
  %2560 = vrot.lane.b32.xlu0 %v827, 28
  %v2561 = vpop.permute.xlu0 %2560
  %2562 = vrot.lane.b32.xlu0 %v828, 28
  %v2563 = vpop.permute.xlu0 %2562
  %2564 = vrot.lane.b32.xlu0 %v829, 28
  %v2565 = vpop.permute.xlu0 %2564
  %2566 = vrot.lane.b32.xlu0 %v830, 28
  %v2567 = vpop.permute.xlu0 %2566
  %2568 = vrot.lane.b32.xlu0 %v831, 28
  %v2569 = vpop.permute.xlu0 %2568
  %2570 = vrot.lane.b32.xlu0 %v832, 28
  %v2571 = vpop.permute.xlu0 %2570
  %2572 = vrot.lane.b32.xlu0 %v833, 28
  %v2573 = vpop.permute.xlu0 %2572
  %2574 = vrot.lane.b32.xlu0 %v834, 28
  %v2575 = vpop.permute.xlu0 %2574
  %2576 = vrot.lane.b32.xlu0 %v835, 28
  %v2577 = vpop.permute.xlu0 %2576
  %2578 = vrot.lane.b32.xlu0 %v836, 28
  %v2579 = vpop.permute.xlu0 %2578
  %2580 = vrot.lane.b32.xlu0 %v837, 28
  %v2581 = vpop.permute.xlu0 %2580
  %2582 = vrot.lane.b32.xlu0 %v838, 28
  %v2583 = vpop.permute.xlu0 %2582
  %2584 = vrot.lane.b32.xlu0 %v839, 28
  %v2585 = vpop.permute.xlu0 %2584
  %2586 = vrot.lane.b32.xlu0 %v840, 28
  %v2587 = vpop.permute.xlu0 %2586
  %2588 = vrot.lane.b32.xlu0 %v841, 28
  %v2589 = vpop.permute.xlu0 %2588
  %2590 = vrot.lane.b32.xlu0 %v842, 28
  %v2591 = vpop.permute.xlu0 %2590
  %2592 = vrot.lane.b32.xlu0 %v843, 28
  %v2593 = vpop.permute.xlu0 %2592
  %2594 = vrot.lane.b32.xlu0 %v844, 28
  %v2595 = vpop.permute.xlu0 %2594
  %2596 = vrot.lane.b32.xlu0 %v845, 28
  %v2597 = vpop.permute.xlu0 %2596
  %2598 = vrot.lane.b32.xlu0 %v846, 28
  %v2599 = vpop.permute.xlu0 %2598
  %2600 = vrot.lane.b32.xlu0 %v847, 28
  %v2601 = vpop.permute.xlu0 %2600
  %2602 = vrot.lane.b32.xlu0 %v848, 28
  %v2603 = vpop.permute.xlu0 %2602
  %2604 = vrot.lane.b32.xlu0 %v849, 28
  %v2605 = vpop.permute.xlu0 %2604
  %2606 = vrot.lane.b32.xlu0 %v850, 28
  %v2607 = vpop.permute.xlu0 %2606
  %2608 = vrot.lane.b32.xlu0 %v851, 28
  %v2609 = vpop.permute.xlu0 %2608
  %2610 = vrot.lane.b32.xlu0 %v852, 28
  %v2611 = vpop.permute.xlu0 %2610
  %2612 = vrot.lane.b32.xlu0 %v853, 28
  %v2613 = vpop.permute.xlu0 %2612
  %2614 = vrot.lane.b32.xlu0 %v854, 28
  %v2615 = vpop.permute.xlu0 %2614
  %2616 = vrot.lane.b32.xlu0 %v855, 28
  %v2617 = vpop.permute.xlu0 %2616
  %2618 = vrot.lane.b32.xlu0 %v856, 28
  %v2619 = vpop.permute.xlu0 %2618
  %2620 = vrot.lane.b32.xlu0 %v857, 28
  %v2621 = vpop.permute.xlu0 %2620
  %2622 = vrot.lane.b32.xlu0 %v858, 28
  %v2623 = vpop.permute.xlu0 %2622
  %2624 = vrot.lane.b32.xlu0 %v859, 28
  %v2625 = vpop.permute.xlu0 %2624
  %2626 = vrot.lane.b32.xlu0 %v860, 28
  %v2627 = vpop.permute.xlu0 %2626
  %2628 = vrot.lane.b32.xlu0 %v861, 28
  %v2629 = vpop.permute.xlu0 %2628
  %2630 = vrot.lane.b32.xlu0 %v862, 28
  %v2631 = vpop.permute.xlu0 %2630
  %2632 = vrot.lane.b32.xlu0 %v863, 28
  %v2633 = vpop.permute.xlu0 %2632
  %2634 = vrot.lane.b32.xlu0 %v864, 28
  %v2635 = vpop.permute.xlu0 %2634
  %2636 = vrot.lane.b32.xlu0 %v865, 28
  %v2637 = vpop.permute.xlu0 %2636
  %2638 = vrot.lane.b32.xlu0 %v866, 28
  %v2639 = vpop.permute.xlu0 %2638
  %2640 = vrot.lane.b32.xlu0 %v867, 28
  %v2641 = vpop.permute.xlu0 %2640
  %2642 = vrot.lane.b32.xlu0 %v868, 28
  %v2643 = vpop.permute.xlu0 %2642
  %2644 = vrot.lane.b32.xlu0 %v869, 28
  %v2645 = vpop.permute.xlu0 %2644
  %2646 = vrot.lane.b32.xlu0 %v870, 28
  %v2647 = vpop.permute.xlu0 %2646
  %2648 = vrot.lane.b32.xlu0 %v871, 28
  %v2649 = vpop.permute.xlu0 %2648
  %2650 = vrot.lane.b32.xlu0 %v872, 28
  %v2651 = vpop.permute.xlu0 %2650
  %2652 = vrot.lane.b32.xlu0 %v873, 28
  %v2653 = vpop.permute.xlu0 %2652
  %2654 = vrot.lane.b32.xlu0 %v874, 28
  %v2655 = vpop.permute.xlu0 %2654
  %2656 = vrot.lane.b32.xlu0 %v875, 28
  %v2657 = vpop.permute.xlu0 %2656
  %2658 = vrot.lane.b32.xlu0 %v876, 28
  %v2659 = vpop.permute.xlu0 %2658
  %2660 = vrot.lane.b32.xlu0 %v877, 28
  %v2661 = vpop.permute.xlu0 %2660
  %2662 = vrot.lane.b32.xlu0 %v878, 28
  %v2663 = vpop.permute.xlu0 %2662
  %2664 = vrot.lane.b32.xlu0 %v879, 28
  %v2665 = vpop.permute.xlu0 %2664
  %2666 = vrot.lane.b32.xlu0 %v880, 28
  %v2667 = vpop.permute.xlu0 %2666
  %2668 = vrot.lane.b32.xlu0 %v881, 28
  %v2669 = vpop.permute.xlu0 %2668
  %2670 = vrot.lane.b32.xlu0 %v882, 28
  %v2671 = vpop.permute.xlu0 %2670
  %2672 = vrot.lane.b32.xlu0 %v883, 28
  %v2673 = vpop.permute.xlu0 %2672
  %2674 = vrot.lane.b32.xlu0 %v884, 28
  %v2675 = vpop.permute.xlu0 %2674
  %2676 = vrot.lane.b32.xlu0 %v885, 28
  %v2677 = vpop.permute.xlu0 %2676
  %2806 = vrot.lane.b32.xlu0 %v886, 32
  %v2807 = vpop.permute.xlu0 %2806
  %2808 = vrot.lane.b32.xlu0 %v887, 32
  %v2809 = vpop.permute.xlu0 %2808
  %2810 = vrot.lane.b32.xlu0 %v888, 32
  %v2811 = vpop.permute.xlu0 %2810
  %2812 = vrot.lane.b32.xlu0 %v889, 32
  %v2813 = vpop.permute.xlu0 %2812
  %2814 = vrot.lane.b32.xlu0 %v890, 32
  %v2815 = vpop.permute.xlu0 %2814
  %2816 = vrot.lane.b32.xlu0 %v891, 32
  %v2817 = vpop.permute.xlu0 %2816
  %2818 = vrot.lane.b32.xlu0 %v892, 32
  %v2819 = vpop.permute.xlu0 %2818
  %2820 = vrot.lane.b32.xlu0 %v893, 32
  %v2821 = vpop.permute.xlu0 %2820
  %2822 = vrot.lane.b32.xlu0 %v894, 32
  %v2823 = vpop.permute.xlu0 %2822
  %2824 = vrot.lane.b32.xlu0 %v895, 32
  %v2825 = vpop.permute.xlu0 %2824
  %2826 = vrot.lane.b32.xlu0 %v896, 32
  %v2827 = vpop.permute.xlu0 %2826
  %2828 = vrot.lane.b32.xlu0 %v897, 32
  %v2829 = vpop.permute.xlu0 %2828
  %2830 = vrot.lane.b32.xlu0 %v898, 32
  %v2831 = vpop.permute.xlu0 %2830
  %2832 = vrot.lane.b32.xlu0 %v899, 32
  %v2833 = vpop.permute.xlu0 %2832
  %2834 = vrot.lane.b32.xlu0 %v900, 32
  %v2835 = vpop.permute.xlu0 %2834
  %2836 = vrot.lane.b32.xlu0 %v901, 32
  %v2837 = vpop.permute.xlu0 %2836
  %2838 = vrot.lane.b32.xlu0 %v902, 32
  %v2839 = vpop.permute.xlu0 %2838
  %2840 = vrot.lane.b32.xlu0 %v903, 32
  %v2841 = vpop.permute.xlu0 %2840
  %2842 = vrot.lane.b32.xlu0 %v904, 32
  %v2843 = vpop.permute.xlu0 %2842
  %2844 = vrot.lane.b32.xlu0 %v905, 32
  %v2845 = vpop.permute.xlu0 %2844
  %2846 = vrot.lane.b32.xlu0 %v906, 32
  %v2847 = vpop.permute.xlu0 %2846
  %2848 = vrot.lane.b32.xlu0 %v907, 32
  %v2849 = vpop.permute.xlu0 %2848
  %2850 = vrot.lane.b32.xlu0 %v908, 32
  %v2851 = vpop.permute.xlu0 %2850
  %2852 = vrot.lane.b32.xlu0 %v909, 32
  %v2853 = vpop.permute.xlu0 %2852
  %2854 = vrot.lane.b32.xlu0 %v910, 32
  %v2855 = vpop.permute.xlu0 %2854
  %2856 = vrot.lane.b32.xlu0 %v911, 32
  %v2857 = vpop.permute.xlu0 %2856
  %2858 = vrot.lane.b32.xlu0 %v912, 32
  %v2859 = vpop.permute.xlu0 %2858
  %2860 = vrot.lane.b32.xlu0 %v913, 32
  %v2861 = vpop.permute.xlu0 %2860
  %2862 = vrot.lane.b32.xlu0 %v914, 32
  %v2863 = vpop.permute.xlu0 %2862
  %2864 = vrot.lane.b32.xlu0 %v915, 32
  %v2865 = vpop.permute.xlu0 %2864
  %2866 = vrot.lane.b32.xlu0 %v916, 32
  %v2867 = vpop.permute.xlu0 %2866
  %2868 = vrot.lane.b32.xlu0 %v917, 32
  %v2869 = vpop.permute.xlu0 %2868
  %2870 = vrot.lane.b32.xlu0 %v918, 32
  %v2871 = vpop.permute.xlu0 %2870
  %2872 = vrot.lane.b32.xlu0 %v919, 32
  %v2873 = vpop.permute.xlu0 %2872
  %2874 = vrot.lane.b32.xlu0 %v920, 32
  %v2875 = vpop.permute.xlu0 %2874
  %2876 = vrot.lane.b32.xlu0 %v921, 32
  %v2877 = vpop.permute.xlu0 %2876
  %2878 = vrot.lane.b32.xlu0 %v922, 32
  %v2879 = vpop.permute.xlu0 %2878
  %2880 = vrot.lane.b32.xlu0 %v923, 32
  %v2881 = vpop.permute.xlu0 %2880
  %2882 = vrot.lane.b32.xlu0 %v924, 32
  %v2883 = vpop.permute.xlu0 %2882
  %2884 = vrot.lane.b32.xlu0 %v925, 32
  %v2885 = vpop.permute.xlu0 %2884
  %2886 = vrot.lane.b32.xlu0 %v926, 32
  %v2887 = vpop.permute.xlu0 %2886
  %2888 = vrot.lane.b32.xlu0 %v927, 32
  %v2889 = vpop.permute.xlu0 %2888
  %2890 = vrot.lane.b32.xlu0 %v928, 32
  %v2891 = vpop.permute.xlu0 %2890
  %2892 = vrot.lane.b32.xlu0 %v929, 32
  %v2893 = vpop.permute.xlu0 %2892
  %2894 = vrot.lane.b32.xlu0 %v930, 32
  %v2895 = vpop.permute.xlu0 %2894
  %2896 = vrot.lane.b32.xlu0 %v931, 32
  %v2897 = vpop.permute.xlu0 %2896
  %2898 = vrot.lane.b32.xlu0 %v932, 32
  %v2899 = vpop.permute.xlu0 %2898
  %2900 = vrot.lane.b32.xlu0 %v933, 32
  %v2901 = vpop.permute.xlu0 %2900
  %2902 = vrot.lane.b32.xlu0 %v934, 32
  %v2903 = vpop.permute.xlu0 %2902
  %2904 = vrot.lane.b32.xlu0 %v935, 32
  %v2905 = vpop.permute.xlu0 %2904
  %2906 = vrot.lane.b32.xlu0 %v936, 32
  %v2907 = vpop.permute.xlu0 %2906
  %2908 = vrot.lane.b32.xlu0 %v937, 32
  %v2909 = vpop.permute.xlu0 %2908
  %2910 = vrot.lane.b32.xlu0 %v938, 32
  %v2911 = vpop.permute.xlu0 %2910
  %2912 = vrot.lane.b32.xlu0 %v939, 32
  %v2913 = vpop.permute.xlu0 %2912
  %2914 = vrot.lane.b32.xlu0 %v940, 32
  %v2915 = vpop.permute.xlu0 %2914
  %2916 = vrot.lane.b32.xlu0 %v941, 32
  %v2917 = vpop.permute.xlu0 %2916
  %2918 = vrot.lane.b32.xlu0 %v942, 32
  %v2919 = vpop.permute.xlu0 %2918
  %2920 = vrot.lane.b32.xlu0 %v943, 32
  %v2921 = vpop.permute.xlu0 %2920
  %2922 = vrot.lane.b32.xlu0 %v944, 32
  %v2923 = vpop.permute.xlu0 %2922
  %2924 = vrot.lane.b32.xlu0 %v945, 32
  %v2925 = vpop.permute.xlu0 %2924
  %2926 = vrot.lane.b32.xlu0 %v946, 32
  %v2927 = vpop.permute.xlu0 %2926
  %2928 = vrot.lane.b32.xlu0 %v947, 32
  %v2929 = vpop.permute.xlu0 %2928
  %2930 = vrot.lane.b32.xlu0 %v948, 32
  %v2931 = vpop.permute.xlu0 %2930
  %2932 = vrot.lane.b32.xlu0 %v949, 32
  %v2933 = vpop.permute.xlu0 %2932
  %v2998 = vsel %vm162, %v373, %v1015
  %v2999 = vsel %vm162, %v374, %v1017
  %v3000 = vsel %vm162, %v375, %v1019
  %v3001 = vsel %vm162, %v376, %v1021
  %v3002 = vsel %vm162, %v377, %v1023
  %v3003 = vsel %vm162, %v378, %v1025
  %v3004 = vsel %vm162, %v379, %v1027
  %v3005 = vsel %vm162, %v380, %v1029
  %v3006 = vsel %vm162, %v381, %v1031
  %v3007 = vsel %vm162, %v382, %v1033
  %v3008 = vsel %vm162, %v383, %v1035
  %v3009 = vsel %vm162, %v384, %v1037
  %v3010 = vsel %vm162, %v385, %v1039
  %v3011 = vsel %vm162, %v386, %v1041
  %v3012 = vsel %vm162, %v387, %v1043
  %v3013 = vsel %vm162, %v388, %v1045
  %v3014 = vsel %vm162, %v389, %v1047
  %v3015 = vsel %vm162, %v390, %v1049
  %v3016 = vsel %vm162, %v391, %v1051
  %v3017 = vsel %vm162, %v392, %v1053
  %v3018 = vsel %vm162, %v393, %v1055
  %v3019 = vsel %vm162, %v394, %v1057
  %v3020 = vsel %vm162, %v395, %v1059
  %v3021 = vsel %vm162, %v396, %v1061
  %v3022 = vsel %vm162, %v397, %v1063
  %v3023 = vsel %vm162, %v398, %v1065
  %v3024 = vsel %vm162, %v399, %v1067
  %v3025 = vsel %vm162, %v400, %v1069
  %v3026 = vsel %vm162, %v401, %v1071
  %v3027 = vsel %vm162, %v402, %v1073
  %v3028 = vsel %vm162, %v403, %v1075
  %v3029 = vsel %vm162, %v404, %v1077
  %v3030 = vsel %vm162, %v405, %v1079
  %v3031 = vsel %vm162, %v406, %v1081
  %v3032 = vsel %vm162, %v407, %v1083
  %v3033 = vsel %vm162, %v408, %v1085
  %v3034 = vsel %vm162, %v409, %v1087
  %v3035 = vsel %vm162, %v410, %v1089
  %v3036 = vsel %vm162, %v411, %v1091
  %v3037 = vsel %vm162, %v412, %v1093
  %v3038 = vsel %vm162, %v413, %v1095
  %v3039 = vsel %vm162, %v414, %v1097
  %v3040 = vsel %vm162, %v415, %v1099
  %v3041 = vsel %vm162, %v416, %v1101
  %v3042 = vsel %vm162, %v417, %v1103
  %v3043 = vsel %vm162, %v418, %v1105
  %v3044 = vsel %vm162, %v419, %v1107
  %v3045 = vsel %vm162, %v420, %v1109
  %v3046 = vsel %vm162, %v421, %v1111
  %v3047 = vsel %vm162, %v422, %v1113
  %v3048 = vsel %vm162, %v423, %v1115
  %v3049 = vsel %vm162, %v424, %v1117
  %v3050 = vsel %vm162, %v425, %v1119
  %v3051 = vsel %vm162, %v426, %v1121
  %v3052 = vsel %vm162, %v427, %v1123
  %v3053 = vsel %vm162, %v428, %v1125
  %v3054 = vsel %vm162, %v429, %v1127
  %v3055 = vsel %vm162, %v430, %v1129
  %v3056 = vsel %vm162, %v431, %v1131
  %v3057 = vsel %vm162, %v432, %v1133
  %v3058 = vsel %vm162, %v433, %v1135
  %v3059 = vsel %vm162, %v434, %v1137
  %v3060 = vsel %vm162, %v435, %v1139
  %v3061 = vsel %vm162, %v436, %v1141
  %vm3062 = vcmask 64512
  %v3063 = vsel %vm3062, %v2998, %v1271
  %v3064 = vsel %vm3062, %v2999, %v1273
  %v3065 = vsel %vm3062, %v3000, %v1275
  %v3066 = vsel %vm3062, %v3001, %v1277
  %v3067 = vsel %vm3062, %v3002, %v1279
  %v3068 = vsel %vm3062, %v3003, %v1281
  %v3069 = vsel %vm3062, %v3004, %v1283
  %v3070 = vsel %vm3062, %v3005, %v1285
  %v3071 = vsel %vm3062, %v3006, %v1287
  %v3072 = vsel %vm3062, %v3007, %v1289
  %v3073 = vsel %vm3062, %v3008, %v1291
  %v3074 = vsel %vm3062, %v3009, %v1293
  %v3075 = vsel %vm3062, %v3010, %v1295
  %v3076 = vsel %vm3062, %v3011, %v1297
  %v3077 = vsel %vm3062, %v3012, %v1299
  %v3078 = vsel %vm3062, %v3013, %v1301
  %v3079 = vsel %vm3062, %v3014, %v1303
  %v3080 = vsel %vm3062, %v3015, %v1305
  %v3081 = vsel %vm3062, %v3016, %v1307
  %v3082 = vsel %vm3062, %v3017, %v1309
  %v3083 = vsel %vm3062, %v3018, %v1311
  %v3084 = vsel %vm3062, %v3019, %v1313
  %v3085 = vsel %vm3062, %v3020, %v1315
  %v3086 = vsel %vm3062, %v3021, %v1317
  %v3087 = vsel %vm3062, %v3022, %v1319
  %v3088 = vsel %vm3062, %v3023, %v1321
  %v3089 = vsel %vm3062, %v3024, %v1323
  %v3090 = vsel %vm3062, %v3025, %v1325
  %v3091 = vsel %vm3062, %v3026, %v1327
  %v3092 = vsel %vm3062, %v3027, %v1329
  %v3093 = vsel %vm3062, %v3028, %v1331
  %v3094 = vsel %vm3062, %v3029, %v1333
  %v3095 = vsel %vm3062, %v3030, %v1335
  %v3096 = vsel %vm3062, %v3031, %v1337
  %v3097 = vsel %vm3062, %v3032, %v1339
  %v3098 = vsel %vm3062, %v3033, %v1341
  %v3099 = vsel %vm3062, %v3034, %v1343
  %v3100 = vsel %vm3062, %v3035, %v1345
  %v3101 = vsel %vm3062, %v3036, %v1347
  %v3102 = vsel %vm3062, %v3037, %v1349
  %v3103 = vsel %vm3062, %v3038, %v1351
  %v3104 = vsel %vm3062, %v3039, %v1353
  %v3105 = vsel %vm3062, %v3040, %v1355
  %v3106 = vsel %vm3062, %v3041, %v1357
  %v3107 = vsel %vm3062, %v3042, %v1359
  %v3108 = vsel %vm3062, %v3043, %v1361
  %v3109 = vsel %vm3062, %v3044, %v1363
  %v3110 = vsel %vm3062, %v3045, %v1365
  %v3111 = vsel %vm3062, %v3046, %v1367
  %v3112 = vsel %vm3062, %v3047, %v1369
  %v3113 = vsel %vm3062, %v3048, %v1371
  %v3114 = vsel %vm3062, %v3049, %v1373
  %v3115 = vsel %vm3062, %v3050, %v1375
  %v3116 = vsel %vm3062, %v3051, %v1377
  %v3117 = vsel %vm3062, %v3052, %v1379
  %v3118 = vsel %vm3062, %v3053, %v1381
  %v3119 = vsel %vm3062, %v3054, %v1383
  %v3120 = vsel %vm3062, %v3055, %v1385
  %v3121 = vsel %vm3062, %v3056, %v1387
  %v3122 = vsel %vm3062, %v3057, %v1389
  %v3123 = vsel %vm3062, %v3058, %v1391
  %v3124 = vsel %vm3062, %v3059, %v1393
  %v3125 = vsel %vm3062, %v3060, %v1395
  %v3126 = vsel %vm3062, %v3061, %v1397
  %vm3127 = vcmask 97280
  %v3128 = vsel %vm3127, %v3063, %v1527
  %v3129 = vsel %vm3127, %v3064, %v1529
  %v3130 = vsel %vm3127, %v3065, %v1531
  %v3131 = vsel %vm3127, %v3066, %v1533
  %v3132 = vsel %vm3127, %v3067, %v1535
  %v3133 = vsel %vm3127, %v3068, %v1537
  %v3134 = vsel %vm3127, %v3069, %v1539
  %v3135 = vsel %vm3127, %v3070, %v1541
  %v3136 = vsel %vm3127, %v3071, %v1543
  %v3137 = vsel %vm3127, %v3072, %v1545
  %v3138 = vsel %vm3127, %v3073, %v1547
  %v3139 = vsel %vm3127, %v3074, %v1549
  %v3140 = vsel %vm3127, %v3075, %v1551
  %v3141 = vsel %vm3127, %v3076, %v1553
  %v3142 = vsel %vm3127, %v3077, %v1555
  %v3143 = vsel %vm3127, %v3078, %v1557
  %v3144 = vsel %vm3127, %v3079, %v1559
  %v3145 = vsel %vm3127, %v3080, %v1561
  %v3146 = vsel %vm3127, %v3081, %v1563
  %v3147 = vsel %vm3127, %v3082, %v1565
  %v3148 = vsel %vm3127, %v3083, %v1567
  %v3149 = vsel %vm3127, %v3084, %v1569
  %v3150 = vsel %vm3127, %v3085, %v1571
  %v3151 = vsel %vm3127, %v3086, %v1573
  %v3152 = vsel %vm3127, %v3087, %v1575
  %v3153 = vsel %vm3127, %v3088, %v1577
  %v3154 = vsel %vm3127, %v3089, %v1579
  %v3155 = vsel %vm3127, %v3090, %v1581
  %v3156 = vsel %vm3127, %v3091, %v1583
  %v3157 = vsel %vm3127, %v3092, %v1585
  %v3158 = vsel %vm3127, %v3093, %v1587
  %v3159 = vsel %vm3127, %v3094, %v1589
  %v3160 = vsel %vm3127, %v3095, %v1591
  %v3161 = vsel %vm3127, %v3096, %v1593
  %v3162 = vsel %vm3127, %v3097, %v1595
  %v3163 = vsel %vm3127, %v3098, %v1597
  %v3164 = vsel %vm3127, %v3099, %v1599
  %v3165 = vsel %vm3127, %v3100, %v1601
  %v3166 = vsel %vm3127, %v3101, %v1603
  %v3167 = vsel %vm3127, %v3102, %v1605
  %v3168 = vsel %vm3127, %v3103, %v1607
  %v3169 = vsel %vm3127, %v3104, %v1609
  %v3170 = vsel %vm3127, %v3105, %v1611
  %v3171 = vsel %vm3127, %v3106, %v1613
  %v3172 = vsel %vm3127, %v3107, %v1615
  %v3173 = vsel %vm3127, %v3108, %v1617
  %v3174 = vsel %vm3127, %v3109, %v1619
  %v3175 = vsel %vm3127, %v3110, %v1621
  %v3176 = vsel %vm3127, %v3111, %v1623
  %v3177 = vsel %vm3127, %v3112, %v1625
  %v3178 = vsel %vm3127, %v3113, %v1627
  %v3179 = vsel %vm3127, %v3114, %v1629
  %v3180 = vsel %vm3127, %v3115, %v1631
  %v3181 = vsel %vm3127, %v3116, %v1633
  %v3182 = vsel %vm3127, %v3117, %v1635
  %v3183 = vsel %vm3127, %v3118, %v1637
  %v3184 = vsel %vm3127, %v3119, %v1639
  %v3185 = vsel %vm3127, %v3120, %v1641
  %v3186 = vsel %vm3127, %v3121, %v1643
  %v3187 = vsel %vm3127, %v3122, %v1645
  %v3188 = vsel %vm3127, %v3123, %v1647
  %v3189 = vsel %vm3127, %v3124, %v1649
  %v3190 = vsel %vm3127, %v3125, %v1651
  %v3191 = vsel %vm3127, %v3126, %v1653
  %vm3192 = vcmask 130048
  %v3193 = vsel %vm3192, %v3128, %v1783
  %v3194 = vsel %vm3192, %v3129, %v1785
  %v3195 = vsel %vm3192, %v3130, %v1787
  %v3196 = vsel %vm3192, %v3131, %v1789
  %v3197 = vsel %vm3192, %v3132, %v1791
  %v3198 = vsel %vm3192, %v3133, %v1793
  %v3199 = vsel %vm3192, %v3134, %v1795
  %v3200 = vsel %vm3192, %v3135, %v1797
  %v3201 = vsel %vm3192, %v3136, %v1799
  %v3202 = vsel %vm3192, %v3137, %v1801
  %v3203 = vsel %vm3192, %v3138, %v1803
  %v3204 = vsel %vm3192, %v3139, %v1805
  %v3205 = vsel %vm3192, %v3140, %v1807
  %v3206 = vsel %vm3192, %v3141, %v1809
  %v3207 = vsel %vm3192, %v3142, %v1811
  %v3208 = vsel %vm3192, %v3143, %v1813
  %v3209 = vsel %vm3192, %v3144, %v1815
  %v3210 = vsel %vm3192, %v3145, %v1817
  %v3211 = vsel %vm3192, %v3146, %v1819
  %v3212 = vsel %vm3192, %v3147, %v1821
  %v3213 = vsel %vm3192, %v3148, %v1823
  %v3214 = vsel %vm3192, %v3149, %v1825
  %v3215 = vsel %vm3192, %v3150, %v1827
  %v3216 = vsel %vm3192, %v3151, %v1829
  %v3217 = vsel %vm3192, %v3152, %v1831
  %v3218 = vsel %vm3192, %v3153, %v1833
  %v3219 = vsel %vm3192, %v3154, %v1835
  %v3220 = vsel %vm3192, %v3155, %v1837
  %v3221 = vsel %vm3192, %v3156, %v1839
  %v3222 = vsel %vm3192, %v3157, %v1841
  %v3223 = vsel %vm3192, %v3158, %v1843
  %v3224 = vsel %vm3192, %v3159, %v1845
  %v3225 = vsel %vm3192, %v3160, %v1847
  %v3226 = vsel %vm3192, %v3161, %v1849
  %v3227 = vsel %vm3192, %v3162, %v1851
  %v3228 = vsel %vm3192, %v3163, %v1853
  %v3229 = vsel %vm3192, %v3164, %v1855
  %v3230 = vsel %vm3192, %v3165, %v1857
  %v3231 = vsel %vm3192, %v3166, %v1859
  %v3232 = vsel %vm3192, %v3167, %v1861
  %v3233 = vsel %vm3192, %v3168, %v1863
  %v3234 = vsel %vm3192, %v3169, %v1865
  %v3235 = vsel %vm3192, %v3170, %v1867
  %v3236 = vsel %vm3192, %v3171, %v1869
  %v3237 = vsel %vm3192, %v3172, %v1871
  %v3238 = vsel %vm3192, %v3173, %v1873
  %v3239 = vsel %vm3192, %v3174, %v1875
  %v3240 = vsel %vm3192, %v3175, %v1877
  %v3241 = vsel %vm3192, %v3176, %v1879
  %v3242 = vsel %vm3192, %v3177, %v1881
  %v3243 = vsel %vm3192, %v3178, %v1883
  %v3244 = vsel %vm3192, %v3179, %v1885
  %v3245 = vsel %vm3192, %v3180, %v1887
  %v3246 = vsel %vm3192, %v3181, %v1889
  %v3247 = vsel %vm3192, %v3182, %v1891
  %v3248 = vsel %vm3192, %v3183, %v1893
  %v3249 = vsel %vm3192, %v3184, %v1895
  %v3250 = vsel %vm3192, %v3185, %v1897
  %v3251 = vsel %vm3192, %v3186, %v1899
  %v3252 = vsel %vm3192, %v3187, %v1901
  %v3253 = vsel %vm3192, %v3188, %v1903
  %v3254 = vsel %vm3192, %v3189, %v1905
  %v3255 = vsel %vm3192, %v3190, %v1907
  %v3256 = vsel %vm3192, %v3191, %v1909
  %vm3257 = vcmask 162816
  %v3258 = vsel %vm3257, %v3193, %v2039
  %v3259 = vsel %vm3257, %v3194, %v2041
  %v3260 = vsel %vm3257, %v3195, %v2043
  %v3261 = vsel %vm3257, %v3196, %v2045
  %v3262 = vsel %vm3257, %v3197, %v2047
  %v3263 = vsel %vm3257, %v3198, %v2049
  %v3264 = vsel %vm3257, %v3199, %v2051
  %v3265 = vsel %vm3257, %v3200, %v2053
  %v3266 = vsel %vm3257, %v3201, %v2055
  %v3267 = vsel %vm3257, %v3202, %v2057
  %v3268 = vsel %vm3257, %v3203, %v2059
  %v3269 = vsel %vm3257, %v3204, %v2061
  %v3270 = vsel %vm3257, %v3205, %v2063
  %v3271 = vsel %vm3257, %v3206, %v2065
  %v3272 = vsel %vm3257, %v3207, %v2067
  %v3273 = vsel %vm3257, %v3208, %v2069
  %v3274 = vsel %vm3257, %v3209, %v2071
  %v3275 = vsel %vm3257, %v3210, %v2073
  %v3276 = vsel %vm3257, %v3211, %v2075
  %v3277 = vsel %vm3257, %v3212, %v2077
  %v3278 = vsel %vm3257, %v3213, %v2079
  %v3279 = vsel %vm3257, %v3214, %v2081
  %v3280 = vsel %vm3257, %v3215, %v2083
  %v3281 = vsel %vm3257, %v3216, %v2085
  %v3282 = vsel %vm3257, %v3217, %v2087
  %v3283 = vsel %vm3257, %v3218, %v2089
  %v3284 = vsel %vm3257, %v3219, %v2091
  %v3285 = vsel %vm3257, %v3220, %v2093
  %v3286 = vsel %vm3257, %v3221, %v2095
  %v3287 = vsel %vm3257, %v3222, %v2097
  %v3288 = vsel %vm3257, %v3223, %v2099
  %v3289 = vsel %vm3257, %v3224, %v2101
  %v3290 = vsel %vm3257, %v3225, %v2103
  %v3291 = vsel %vm3257, %v3226, %v2105
  %v3292 = vsel %vm3257, %v3227, %v2107
  %v3293 = vsel %vm3257, %v3228, %v2109
  %v3294 = vsel %vm3257, %v3229, %v2111
  %v3295 = vsel %vm3257, %v3230, %v2113
  %v3296 = vsel %vm3257, %v3231, %v2115
  %v3297 = vsel %vm3257, %v3232, %v2117
  %v3298 = vsel %vm3257, %v3233, %v2119
  %v3299 = vsel %vm3257, %v3234, %v2121
  %v3300 = vsel %vm3257, %v3235, %v2123
  %v3301 = vsel %vm3257, %v3236, %v2125
  %v3302 = vsel %vm3257, %v3237, %v2127
  %v3303 = vsel %vm3257, %v3238, %v2129
  %v3304 = vsel %vm3257, %v3239, %v2131
  %v3305 = vsel %vm3257, %v3240, %v2133
  %v3306 = vsel %vm3257, %v3241, %v2135
  %v3307 = vsel %vm3257, %v3242, %v2137
  %v3308 = vsel %vm3257, %v3243, %v2139
  %v3309 = vsel %vm3257, %v3244, %v2141
  %v3310 = vsel %vm3257, %v3245, %v2143
  %v3311 = vsel %vm3257, %v3246, %v2145
  %v3312 = vsel %vm3257, %v3247, %v2147
  %v3313 = vsel %vm3257, %v3248, %v2149
  %v3314 = vsel %vm3257, %v3249, %v2151
  %v3315 = vsel %vm3257, %v3250, %v2153
  %v3316 = vsel %vm3257, %v3251, %v2155
  %v3317 = vsel %vm3257, %v3252, %v2157
  %v3318 = vsel %vm3257, %v3253, %v2159
  %v3319 = vsel %vm3257, %v3254, %v2161
  %v3320 = vsel %vm3257, %v3255, %v2163
  %v3321 = vsel %vm3257, %v3256, %v2165
  %vm3322 = vcmask 195584
  %v3323 = vsel %vm3322, %v3258, %v2295
  %v3324 = vsel %vm3322, %v3259, %v2297
  %v3325 = vsel %vm3322, %v3260, %v2299
  %v3326 = vsel %vm3322, %v3261, %v2301
  %v3327 = vsel %vm3322, %v3262, %v2303
  %v3328 = vsel %vm3322, %v3263, %v2305
  %v3329 = vsel %vm3322, %v3264, %v2307
  %v3330 = vsel %vm3322, %v3265, %v2309
  %v3331 = vsel %vm3322, %v3266, %v2311
  %v3332 = vsel %vm3322, %v3267, %v2313
  %v3333 = vsel %vm3322, %v3268, %v2315
  %v3334 = vsel %vm3322, %v3269, %v2317
  %v3335 = vsel %vm3322, %v3270, %v2319
  %v3336 = vsel %vm3322, %v3271, %v2321
  %v3337 = vsel %vm3322, %v3272, %v2323
  %v3338 = vsel %vm3322, %v3273, %v2325
  %v3339 = vsel %vm3322, %v3274, %v2327
  %v3340 = vsel %vm3322, %v3275, %v2329
  %v3341 = vsel %vm3322, %v3276, %v2331
  %v3342 = vsel %vm3322, %v3277, %v2333
  %v3343 = vsel %vm3322, %v3278, %v2335
  %v3344 = vsel %vm3322, %v3279, %v2337
  %v3345 = vsel %vm3322, %v3280, %v2339
  %v3346 = vsel %vm3322, %v3281, %v2341
  %v3347 = vsel %vm3322, %v3282, %v2343
  %v3348 = vsel %vm3322, %v3283, %v2345
  %v3349 = vsel %vm3322, %v3284, %v2347
  %v3350 = vsel %vm3322, %v3285, %v2349
  %v3351 = vsel %vm3322, %v3286, %v2351
  %v3352 = vsel %vm3322, %v3287, %v2353
  %v3353 = vsel %vm3322, %v3288, %v2355
  %v3354 = vsel %vm3322, %v3289, %v2357
  %v3355 = vsel %vm3322, %v3290, %v2359
  %v3356 = vsel %vm3322, %v3291, %v2361
  %v3357 = vsel %vm3322, %v3292, %v2363
  %v3358 = vsel %vm3322, %v3293, %v2365
  %v3359 = vsel %vm3322, %v3294, %v2367
  %v3360 = vsel %vm3322, %v3295, %v2369
  %v3361 = vsel %vm3322, %v3296, %v2371
  %v3362 = vsel %vm3322, %v3297, %v2373
  %v3363 = vsel %vm3322, %v3298, %v2375
  %v3364 = vsel %vm3322, %v3299, %v2377
  %v3365 = vsel %vm3322, %v3300, %v2379
  %v3366 = vsel %vm3322, %v3301, %v2381
  %v3367 = vsel %vm3322, %v3302, %v2383
  %v3368 = vsel %vm3322, %v3303, %v2385
  %v3369 = vsel %vm3322, %v3304, %v2387
  %v3370 = vsel %vm3322, %v3305, %v2389
  %v3371 = vsel %vm3322, %v3306, %v2391
  %v3372 = vsel %vm3322, %v3307, %v2393
  %v3373 = vsel %vm3322, %v3308, %v2395
  %v3374 = vsel %vm3322, %v3309, %v2397
  %v3375 = vsel %vm3322, %v3310, %v2399
  %v3376 = vsel %vm3322, %v3311, %v2401
  %v3377 = vsel %vm3322, %v3312, %v2403
  %v3378 = vsel %vm3322, %v3313, %v2405
  %v3379 = vsel %vm3322, %v3314, %v2407
  %v3380 = vsel %vm3322, %v3315, %v2409
  %v3381 = vsel %vm3322, %v3316, %v2411
  %v3382 = vsel %vm3322, %v3317, %v2413
  %v3383 = vsel %vm3322, %v3318, %v2415
  %v3384 = vsel %vm3322, %v3319, %v2417
  %v3385 = vsel %vm3322, %v3320, %v2419
  %v3386 = vsel %vm3322, %v3321, %v2421
  %vm3387 = vcmask 228352
  %v3388 = vsel %vm3387, %v3323, %v2551
  %v3389 = vsel %vm3387, %v3324, %v2553
  %v3390 = vsel %vm3387, %v3325, %v2555
  %v3391 = vsel %vm3387, %v3326, %v2557
  %v3392 = vsel %vm3387, %v3327, %v2559
  %v3393 = vsel %vm3387, %v3328, %v2561
  %v3394 = vsel %vm3387, %v3329, %v2563
  %v3395 = vsel %vm3387, %v3330, %v2565
  %v3396 = vsel %vm3387, %v3331, %v2567
  %v3397 = vsel %vm3387, %v3332, %v2569
  %v3398 = vsel %vm3387, %v3333, %v2571
  %v3399 = vsel %vm3387, %v3334, %v2573
  %v3400 = vsel %vm3387, %v3335, %v2575
  %v3401 = vsel %vm3387, %v3336, %v2577
  %v3402 = vsel %vm3387, %v3337, %v2579
  %v3403 = vsel %vm3387, %v3338, %v2581
  %v3404 = vsel %vm3387, %v3339, %v2583
  %v3405 = vsel %vm3387, %v3340, %v2585
  %v3406 = vsel %vm3387, %v3341, %v2587
  %v3407 = vsel %vm3387, %v3342, %v2589
  %v3408 = vsel %vm3387, %v3343, %v2591
  %v3409 = vsel %vm3387, %v3344, %v2593
  %v3410 = vsel %vm3387, %v3345, %v2595
  %v3411 = vsel %vm3387, %v3346, %v2597
  %v3412 = vsel %vm3387, %v3347, %v2599
  %v3413 = vsel %vm3387, %v3348, %v2601
  %v3414 = vsel %vm3387, %v3349, %v2603
  %v3415 = vsel %vm3387, %v3350, %v2605
  %v3416 = vsel %vm3387, %v3351, %v2607
  %v3417 = vsel %vm3387, %v3352, %v2609
  %v3418 = vsel %vm3387, %v3353, %v2611
  %v3419 = vsel %vm3387, %v3354, %v2613
  %v3420 = vsel %vm3387, %v3355, %v2615
  %v3421 = vsel %vm3387, %v3356, %v2617
  %v3422 = vsel %vm3387, %v3357, %v2619
  %v3423 = vsel %vm3387, %v3358, %v2621
  %v3424 = vsel %vm3387, %v3359, %v2623
  %v3425 = vsel %vm3387, %v3360, %v2625
  %v3426 = vsel %vm3387, %v3361, %v2627
  %v3427 = vsel %vm3387, %v3362, %v2629
  %v3428 = vsel %vm3387, %v3363, %v2631
  %v3429 = vsel %vm3387, %v3364, %v2633
  %v3430 = vsel %vm3387, %v3365, %v2635
  %v3431 = vsel %vm3387, %v3366, %v2637
  %v3432 = vsel %vm3387, %v3367, %v2639
  %v3433 = vsel %vm3387, %v3368, %v2641
  %v3434 = vsel %vm3387, %v3369, %v2643
  %v3435 = vsel %vm3387, %v3370, %v2645
  %v3436 = vsel %vm3387, %v3371, %v2647
  %v3437 = vsel %vm3387, %v3372, %v2649
  %v3438 = vsel %vm3387, %v3373, %v2651
  %v3439 = vsel %vm3387, %v3374, %v2653
  %v3440 = vsel %vm3387, %v3375, %v2655
  %v3441 = vsel %vm3387, %v3376, %v2657
  %v3442 = vsel %vm3387, %v3377, %v2659
  %v3443 = vsel %vm3387, %v3378, %v2661
  %v3444 = vsel %vm3387, %v3379, %v2663
  %v3445 = vsel %vm3387, %v3380, %v2665
  %v3446 = vsel %vm3387, %v3381, %v2667
  %v3447 = vsel %vm3387, %v3382, %v2669
  %v3448 = vsel %vm3387, %v3383, %v2671
  %v3449 = vsel %vm3387, %v3384, %v2673
  %v3450 = vsel %vm3387, %v3385, %v2675
  %v3451 = vsel %vm3387, %v3386, %v2677
  %vm3452 = vcmask 261120
  %v3453 = vsel %vm3452, %v3388, %v2807
  %v3454 = vsel %vm3452, %v3389, %v2809
  %v3455 = vsel %vm3452, %v3390, %v2811
  %v3456 = vsel %vm3452, %v3391, %v2813
  %v3457 = vsel %vm3452, %v3392, %v2815
  %v3458 = vsel %vm3452, %v3393, %v2817
  %v3459 = vsel %vm3452, %v3394, %v2819
  %v3460 = vsel %vm3452, %v3395, %v2821
  %v3461 = vsel %vm3452, %v3396, %v2823
  %v3462 = vsel %vm3452, %v3397, %v2825
  %v3463 = vsel %vm3452, %v3398, %v2827
  %v3464 = vsel %vm3452, %v3399, %v2829
  %v3465 = vsel %vm3452, %v3400, %v2831
  %v3466 = vsel %vm3452, %v3401, %v2833
  %v3467 = vsel %vm3452, %v3402, %v2835
  %v3468 = vsel %vm3452, %v3403, %v2837
  %v3469 = vsel %vm3452, %v3404, %v2839
  %v3470 = vsel %vm3452, %v3405, %v2841
  %v3471 = vsel %vm3452, %v3406, %v2843
  %v3472 = vsel %vm3452, %v3407, %v2845
  %v3473 = vsel %vm3452, %v3408, %v2847
  %v3474 = vsel %vm3452, %v3409, %v2849
  %v3475 = vsel %vm3452, %v3410, %v2851
  %v3476 = vsel %vm3452, %v3411, %v2853
  %v3477 = vsel %vm3452, %v3412, %v2855
  %v3478 = vsel %vm3452, %v3413, %v2857
  %v3479 = vsel %vm3452, %v3414, %v2859
  %v3480 = vsel %vm3452, %v3415, %v2861
  %v3481 = vsel %vm3452, %v3416, %v2863
  %v3482 = vsel %vm3452, %v3417, %v2865
  %v3483 = vsel %vm3452, %v3418, %v2867
  %v3484 = vsel %vm3452, %v3419, %v2869
  %v3485 = vsel %vm3452, %v3420, %v2871
  %v3486 = vsel %vm3452, %v3421, %v2873
  %v3487 = vsel %vm3452, %v3422, %v2875
  %v3488 = vsel %vm3452, %v3423, %v2877
  %v3489 = vsel %vm3452, %v3424, %v2879
  %v3490 = vsel %vm3452, %v3425, %v2881
  %v3491 = vsel %vm3452, %v3426, %v2883
  %v3492 = vsel %vm3452, %v3427, %v2885
  %v3493 = vsel %vm3452, %v3428, %v2887
  %v3494 = vsel %vm3452, %v3429, %v2889
  %v3495 = vsel %vm3452, %v3430, %v2891
  %v3496 = vsel %vm3452, %v3431, %v2893
  %v3497 = vsel %vm3452, %v3432, %v2895
  %v3498 = vsel %vm3452, %v3433, %v2897
  %v3499 = vsel %vm3452, %v3434, %v2899
  %v3500 = vsel %vm3452, %v3435, %v2901
  %v3501 = vsel %vm3452, %v3436, %v2903
  %v3502 = vsel %vm3452, %v3437, %v2905
  %v3503 = vsel %vm3452, %v3438, %v2907
  %v3504 = vsel %vm3452, %v3439, %v2909
  %v3505 = vsel %vm3452, %v3440, %v2911
  %v3506 = vsel %vm3452, %v3441, %v2913
  %v3507 = vsel %vm3452, %v3442, %v2915
  %v3508 = vsel %vm3452, %v3443, %v2917
  %v3509 = vsel %vm3452, %v3444, %v2919
  %v3510 = vsel %vm3452, %v3445, %v2921
  %v3511 = vsel %vm3452, %v3446, %v2923
  %v3512 = vsel %vm3452, %v3447, %v2925
  %v3513 = vsel %vm3452, %v3448, %v2927
  %v3514 = vsel %vm3452, %v3449, %v2929
  %v3515 = vsel %vm3452, %v3450, %v2931
  %v3516 = vsel %vm3452, %v3451, %v2933
  %v3517 = vpack.c.bf16 %v3454, %v3453
  %v3518 = vpack.c.bf16 %v3456, %v3455
  %v3519 = vpack.c.bf16 %v3458, %v3457
  %v3520 = vpack.c.bf16 %v3460, %v3459
  %v3521 = vpack.c.bf16 %v3462, %v3461
  %v3522 = vpack.c.bf16 %v3464, %v3463
  %v3523 = vpack.c.bf16 %v3466, %v3465
  %v3524 = vpack.c.bf16 %v3468, %v3467
  %v3525 = vpack.c.bf16 %v3470, %v3469
  %v3526 = vpack.c.bf16 %v3472, %v3471
  %v3527 = vpack.c.bf16 %v3474, %v3473
  %v3528 = vpack.c.bf16 %v3476, %v3475
  %v3529 = vpack.c.bf16 %v3478, %v3477
  %v3530 = vpack.c.bf16 %v3480, %v3479
  %v3531 = vpack.c.bf16 %v3482, %v3481
  %v3532 = vpack.c.bf16 %v3484, %v3483
  %v3533 = vpack.c.bf16 %v3486, %v3485
  %v3534 = vpack.c.bf16 %v3488, %v3487
  %v3535 = vpack.c.bf16 %v3490, %v3489
  %v3536 = vpack.c.bf16 %v3492, %v3491
  %v3537 = vpack.c.bf16 %v3494, %v3493
  %v3538 = vpack.c.bf16 %v3496, %v3495
  %v3539 = vpack.c.bf16 %v3498, %v3497
  %v3540 = vpack.c.bf16 %v3500, %v3499
  %v3541 = vpack.c.bf16 %v3502, %v3501
  %v3542 = vpack.c.bf16 %v3504, %v3503
  %v3543 = vpack.c.bf16 %v3506, %v3505
  %v3544 = vpack.c.bf16 %v3508, %v3507
  %v3545 = vpack.c.bf16 %v3510, %v3509
  %v3546 = vpack.c.bf16 %v3512, %v3511
  %v3547 = vpack.c.bf16 %v3514, %v3513
  %v3548 = vpack.c.bf16 %v3516, %v3515
  %v3549 = vld [vmem:[%s1] sm:$0xf]
  %v3550 = vld [vmem:[%s1 + $0x4] sm:$0xf]
  %v3551 = vld [vmem:[%s1 + $0x8] sm:$0xf]
  %v3552 = vld [vmem:[%s1 + $0xc] sm:$0xf]
  %v3553 = vld [vmem:[%s1 + $0x10] sm:$0x3]
  %v3555 = vperm.slane %v161, 0
  %v3562 = vunpack.c.l.b16 %v3549
  %v3563 = vunpack.c.l.b16 %v3550
  %v3564 = vunpack.c.l.b16 %v3551
  %v3565 = vunpack.c.l.b16 %v3552
  %v3566 = vunpack.c.l.b16 %v3553
  %v3567 = vpack.c.b16 %v3563, %v3562
  %v3568 = vpack.c.b16 %v3565, %v3564
  %v3569 = vpack.c.b16 %v3566, %v3566
  %vm3572 = vcmask 293888
  %v3574 = vsel %vm3572, %v3517, 0
  %v3577 = vsel %vm3572, %v3518, 0
  %v3580 = vsel %vm3572, %v3519, 0
  %v3583 = vsel %vm3572, %v3520, 0
  %v3586 = vsel %vm3572, %v3521, 0
  %v3589 = vsel %vm3572, %v3522, 0
  %v3592 = vsel %vm3572, %v3523, 0
  %v3595 = vsel %vm3572, %v3524, 0
  %v3598 = vsel %vm3572, %v3525, 0
  %v3601 = vsel %vm3572, %v3526, 0
  %v3604 = vsel %vm3572, %v3527, 0
  %v3607 = vsel %vm3572, %v3528, 0
  %v3610 = vsel %vm3572, %v3529, 0
  %v3613 = vsel %vm3572, %v3530, 0
  %v3616 = vsel %vm3572, %v3531, 0
  %v3619 = vsel %vm3572, %v3532, 0
  %v3622 = vsel %vm3572, %v3533, 0
  %v3625 = vsel %vm3572, %v3534, 0
  %v3628 = vsel %vm3572, %v3535, 0
  %v3631 = vsel %vm3572, %v3536, 0
  %v3634 = vsel %vm3572, %v3537, 0
  %v3637 = vsel %vm3572, %v3538, 0
  %v3640 = vsel %vm3572, %v3539, 0
  %v3643 = vsel %vm3572, %v3540, 0
  %v3646 = vsel %vm3572, %v3541, 0
  %v3649 = vsel %vm3572, %v3542, 0
  %v3652 = vsel %vm3572, %v3543, 0
  %v3655 = vsel %vm3572, %v3544, 0
  %v3658 = vsel %vm3572, %v3545, 0
  %v3661 = vsel %vm3572, %v3546, 0
  %v3664 = vsel %vm3572, %v3547, 0
  %v3667 = vsel %vm3572, %v3548, 0
  %vm3669 = vcmask 1041408
  %v3671 = vsel %vm3669, %v3569, 0
  %3673 = vmatpush.bf16.msra.mxu0 0
  %3674 = vmatpush.bf16.msra.mxu0 0
  %3675 = vmatpush.bf16.msra.mxu0 0
  %3676 = vmatpush.bf16.msra.mxu0 0
  %3677 = vmatpush.bf16.msra.mxu0 0
  %3678 = vmatpush.bf16.msra.mxu0 %v3671
  %3679 = vmatpush.bf16.msra.mxu0 %v3568
  %3680 = vmatpush.bf16.msra.mxu0 %v3567
  %3681 = vmatmul.bf16.gmra.mxu0 %v3574
  %v3682 = vpop.f32.mrf.mxu0
  %v3683 = vadd.f32 %v3555, %v3682
  %v3684 = vpop.f32.mrf.mxu0
  %v3685 = vadd.f32 %v3555, %v3684
  %3686 = vmatmul.bf16.gmra.mxu0 %v3577
  %v3687 = vpop.f32.mrf.mxu0
  %v3688 = vadd.f32 %v3555, %v3687
  %v3689 = vpop.f32.mrf.mxu0
  %v3690 = vadd.f32 %v3555, %v3689
  %3691 = vmatmul.bf16.gmra.mxu0 %v3580
  %v3692 = vpop.f32.mrf.mxu0
  %v3693 = vadd.f32 %v3555, %v3692
  %v3694 = vpop.f32.mrf.mxu0
  %v3695 = vadd.f32 %v3555, %v3694
  %3696 = vmatmul.bf16.gmra.mxu0 %v3583
  %v3697 = vpop.f32.mrf.mxu0
  %v3698 = vadd.f32 %v3555, %v3697
  %v3699 = vpop.f32.mrf.mxu0
  %v3700 = vadd.f32 %v3555, %v3699
  %3701 = vmatmul.bf16.gmra.mxu0 %v3586
  %v3702 = vpop.f32.mrf.mxu0
  %v3703 = vadd.f32 %v3555, %v3702
  %v3704 = vpop.f32.mrf.mxu0
  %v3705 = vadd.f32 %v3555, %v3704
  %3706 = vmatmul.bf16.gmra.mxu0 %v3589
  %v3707 = vpop.f32.mrf.mxu0
  %v3708 = vadd.f32 %v3555, %v3707
  %v3709 = vpop.f32.mrf.mxu0
  %v3710 = vadd.f32 %v3555, %v3709
  %3711 = vmatmul.bf16.gmra.mxu0 %v3592
  %v3712 = vpop.f32.mrf.mxu0
  %v3713 = vadd.f32 %v3555, %v3712
  %v3714 = vpop.f32.mrf.mxu0
  %v3715 = vadd.f32 %v3555, %v3714
  %3716 = vmatmul.bf16.gmra.mxu0 %v3595
  %v3717 = vpop.f32.mrf.mxu0
  %v3718 = vadd.f32 %v3555, %v3717
  %v3719 = vpop.f32.mrf.mxu0
  %v3720 = vadd.f32 %v3555, %v3719
  %3721 = vmatmul.bf16.gmra.mxu0 %v3598
  %v3722 = vpop.f32.mrf.mxu0
  %v3723 = vadd.f32 %v3555, %v3722
  %v3724 = vpop.f32.mrf.mxu0
  %v3725 = vadd.f32 %v3555, %v3724
  %3726 = vmatmul.bf16.gmra.mxu0 %v3601
  %v3727 = vpop.f32.mrf.mxu0
  %v3728 = vadd.f32 %v3555, %v3727
  %v3729 = vpop.f32.mrf.mxu0
  %v3730 = vadd.f32 %v3555, %v3729
  %3731 = vmatmul.bf16.gmra.mxu0 %v3604
  %v3732 = vpop.f32.mrf.mxu0
  %v3733 = vadd.f32 %v3555, %v3732
  %v3734 = vpop.f32.mrf.mxu0
  %v3735 = vadd.f32 %v3555, %v3734
  %3736 = vmatmul.bf16.gmra.mxu0 %v3607
  %v3737 = vpop.f32.mrf.mxu0
  %v3738 = vadd.f32 %v3555, %v3737
  %v3739 = vpop.f32.mrf.mxu0
  %v3740 = vadd.f32 %v3555, %v3739
  %3741 = vmatmul.bf16.gmra.mxu0 %v3610
  %v3742 = vpop.f32.mrf.mxu0
  %v3743 = vadd.f32 %v3555, %v3742
  %v3744 = vpop.f32.mrf.mxu0
  %v3745 = vadd.f32 %v3555, %v3744
  %3746 = vmatmul.bf16.gmra.mxu0 %v3613
  %v3747 = vpop.f32.mrf.mxu0
  %v3748 = vadd.f32 %v3555, %v3747
  %v3749 = vpop.f32.mrf.mxu0
  %v3750 = vadd.f32 %v3555, %v3749
  %3751 = vmatmul.bf16.gmra.mxu0 %v3616
  %v3752 = vpop.f32.mrf.mxu0
  %v3753 = vadd.f32 %v3555, %v3752
  %v3754 = vpop.f32.mrf.mxu0
  %v3755 = vadd.f32 %v3555, %v3754
  %3756 = vmatmul.bf16.gmra.mxu0 %v3619
  %v3757 = vpop.f32.mrf.mxu0
  %v3758 = vadd.f32 %v3555, %v3757
  %v3759 = vpop.f32.mrf.mxu0
  %v3760 = vadd.f32 %v3555, %v3759
  %3761 = vmatmul.bf16.gmra.mxu0 %v3622
  %v3762 = vpop.f32.mrf.mxu0
  %v3763 = vadd.f32 %v3555, %v3762
  %v3764 = vpop.f32.mrf.mxu0
  %v3765 = vadd.f32 %v3555, %v3764
  %3766 = vmatmul.bf16.gmra.mxu0 %v3625
  %v3767 = vpop.f32.mrf.mxu0
  %v3768 = vadd.f32 %v3555, %v3767
  %v3769 = vpop.f32.mrf.mxu0
  %v3770 = vadd.f32 %v3555, %v3769
  %3771 = vmatmul.bf16.gmra.mxu0 %v3628
  %v3772 = vpop.f32.mrf.mxu0
  %v3773 = vadd.f32 %v3555, %v3772
  %v3774 = vpop.f32.mrf.mxu0
  %v3775 = vadd.f32 %v3555, %v3774
  %3776 = vmatmul.bf16.gmra.mxu0 %v3631
  %v3777 = vpop.f32.mrf.mxu0
  %v3778 = vadd.f32 %v3555, %v3777
  %v3779 = vpop.f32.mrf.mxu0
  %v3780 = vadd.f32 %v3555, %v3779
  %3781 = vmatmul.bf16.gmra.mxu0 %v3634
  %v3782 = vpop.f32.mrf.mxu0
  %v3783 = vadd.f32 %v3555, %v3782
  %v3784 = vpop.f32.mrf.mxu0
  %v3785 = vadd.f32 %v3555, %v3784
  %3786 = vmatmul.bf16.gmra.mxu0 %v3637
  %v3787 = vpop.f32.mrf.mxu0
  %v3788 = vadd.f32 %v3555, %v3787
  %v3789 = vpop.f32.mrf.mxu0
  %v3790 = vadd.f32 %v3555, %v3789
  %3791 = vmatmul.bf16.gmra.mxu0 %v3640
  %v3792 = vpop.f32.mrf.mxu0
  %v3793 = vadd.f32 %v3555, %v3792
  %v3794 = vpop.f32.mrf.mxu0
  %v3795 = vadd.f32 %v3555, %v3794
  %3796 = vmatmul.bf16.gmra.mxu0 %v3643
  %v3797 = vpop.f32.mrf.mxu0
  %v3798 = vadd.f32 %v3555, %v3797
  %v3799 = vpop.f32.mrf.mxu0
  %v3800 = vadd.f32 %v3555, %v3799
  %3801 = vmatmul.bf16.gmra.mxu0 %v3646
  %v3802 = vpop.f32.mrf.mxu0
  %v3803 = vadd.f32 %v3555, %v3802
  %v3804 = vpop.f32.mrf.mxu0
  %v3805 = vadd.f32 %v3555, %v3804
  %3806 = vmatmul.bf16.gmra.mxu0 %v3649
  %v3807 = vpop.f32.mrf.mxu0
  %v3808 = vadd.f32 %v3555, %v3807
  %v3809 = vpop.f32.mrf.mxu0
  %v3810 = vadd.f32 %v3555, %v3809
  %3811 = vmatmul.bf16.gmra.mxu0 %v3652
  %v3812 = vpop.f32.mrf.mxu0
  %v3813 = vadd.f32 %v3555, %v3812
  %v3814 = vpop.f32.mrf.mxu0
  %v3815 = vadd.f32 %v3555, %v3814
  %3816 = vmatmul.bf16.gmra.mxu0 %v3655
  %v3817 = vpop.f32.mrf.mxu0
  %v3818 = vadd.f32 %v3555, %v3817
  %v3819 = vpop.f32.mrf.mxu0
  %v3820 = vadd.f32 %v3555, %v3819
  %3821 = vmatmul.bf16.gmra.mxu0 %v3658
  %v3822 = vpop.f32.mrf.mxu0
  %v3823 = vadd.f32 %v3555, %v3822
  %v3824 = vpop.f32.mrf.mxu0
  %v3825 = vadd.f32 %v3555, %v3824
  %3826 = vmatmul.bf16.gmra.mxu0 %v3661
  %v3827 = vpop.f32.mrf.mxu0
  %v3828 = vadd.f32 %v3555, %v3827
  %v3829 = vpop.f32.mrf.mxu0
  %v3830 = vadd.f32 %v3555, %v3829
  %3831 = vmatmul.bf16.gmra.mxu0 %v3664
  %v3832 = vpop.f32.mrf.mxu0
  %v3833 = vadd.f32 %v3555, %v3832
  %v3834 = vpop.f32.mrf.mxu0
  %v3835 = vadd.f32 %v3555, %v3834
  %3836 = vmatmul.bf16.gmra.mxu0 %v3667
  %v3837 = vpop.f32.mrf.mxu0
  %v3838 = vadd.f32 %v3555, %v3837
  %v3839 = vpop.f32.mrf.mxu0
  %v3840 = vadd.f32 %v3555, %v3839
  %3841 = vdwg.mxu0
  %v3842 = vld [vmem:[%s3] sm:$0x1]
  %v3843 = vld [vmem:[%s4] sm:$0x1]
  %v3844 = vsel %vm3062, %v3683, 0.0
  %v3845 = vsel %vm3062, %v3685, 0.0
  %v3846 = vadd.f32 %v3844, %v3845
  %v3847 = vsel %vm3062, %v3688, 0.0
  %v3848 = vadd.f32 %v3846, %v3847
  %v3849 = vsel %vm3062, %v3690, 0.0
  %v3850 = vadd.f32 %v3848, %v3849
  %v3851 = vsel %vm3062, %v3693, 0.0
  %v3852 = vadd.f32 %v3850, %v3851
  %v3853 = vsel %vm3062, %v3695, 0.0
  %v3854 = vadd.f32 %v3852, %v3853
  %v3855 = vsel %vm3062, %v3698, 0.0
  %v3856 = vadd.f32 %v3854, %v3855
  %v3857 = vsel %vm3062, %v3700, 0.0
  %v3858 = vadd.f32 %v3856, %v3857
  %v3859 = vsel %vm3062, %v3703, 0.0
  %v3860 = vadd.f32 %v3858, %v3859
  %v3861 = vsel %vm3062, %v3705, 0.0
  %v3862 = vadd.f32 %v3860, %v3861
  %v3863 = vsel %vm3062, %v3708, 0.0
  %v3864 = vadd.f32 %v3862, %v3863
  %v3865 = vsel %vm3062, %v3710, 0.0
  %v3866 = vadd.f32 %v3864, %v3865
  %v3867 = vsel %vm3062, %v3713, 0.0
  %v3868 = vadd.f32 %v3866, %v3867
  %v3869 = vsel %vm3062, %v3715, 0.0
  %v3870 = vadd.f32 %v3868, %v3869
  %v3871 = vsel %vm3062, %v3718, 0.0
  %v3872 = vadd.f32 %v3870, %v3871
  %v3873 = vsel %vm3062, %v3720, 0.0
  %v3874 = vadd.f32 %v3872, %v3873
  %v3875 = vsel %vm3062, %v3723, 0.0
  %v3876 = vadd.f32 %v3874, %v3875
  %v3877 = vsel %vm3062, %v3725, 0.0
  %v3878 = vadd.f32 %v3876, %v3877
  %v3879 = vsel %vm3062, %v3728, 0.0
  %v3880 = vadd.f32 %v3878, %v3879
  %v3881 = vsel %vm3062, %v3730, 0.0
  %v3882 = vadd.f32 %v3880, %v3881
  %v3883 = vsel %vm3062, %v3733, 0.0
  %v3884 = vadd.f32 %v3882, %v3883
  %v3885 = vsel %vm3062, %v3735, 0.0
  %v3886 = vadd.f32 %v3884, %v3885
  %v3887 = vsel %vm3062, %v3738, 0.0
  %v3888 = vadd.f32 %v3886, %v3887
  %v3889 = vsel %vm3062, %v3740, 0.0
  %v3890 = vadd.f32 %v3888, %v3889
  %v3891 = vsel %vm3062, %v3743, 0.0
  %v3892 = vadd.f32 %v3890, %v3891
  %v3893 = vsel %vm3062, %v3745, 0.0
  %v3894 = vadd.f32 %v3892, %v3893
  %v3895 = vsel %vm3062, %v3748, 0.0
  %v3896 = vadd.f32 %v3894, %v3895
  %v3897 = vsel %vm3062, %v3750, 0.0
  %v3898 = vadd.f32 %v3896, %v3897
  %v3899 = vsel %vm3062, %v3753, 0.0
  %v3900 = vadd.f32 %v3898, %v3899
  %v3901 = vsel %vm3062, %v3755, 0.0
  %v3902 = vadd.f32 %v3900, %v3901
  %v3903 = vsel %vm3062, %v3758, 0.0
  %v3904 = vadd.f32 %v3902, %v3903
  %v3905 = vsel %vm3062, %v3760, 0.0
  %v3906 = vadd.f32 %v3904, %v3905
  %v3907 = vsel %vm3062, %v3763, 0.0
  %v3908 = vadd.f32 %v3906, %v3907
  %v3909 = vsel %vm3062, %v3765, 0.0
  %v3910 = vadd.f32 %v3908, %v3909
  %v3911 = vsel %vm3062, %v3768, 0.0
  %v3912 = vadd.f32 %v3910, %v3911
  %v3913 = vsel %vm3062, %v3770, 0.0
  %v3914 = vadd.f32 %v3912, %v3913
  %v3915 = vsel %vm3062, %v3773, 0.0
  %v3916 = vadd.f32 %v3914, %v3915
  %v3917 = vsel %vm3062, %v3775, 0.0
  %v3918 = vadd.f32 %v3916, %v3917
  %v3919 = vsel %vm3062, %v3778, 0.0
  %v3920 = vadd.f32 %v3918, %v3919
  %v3921 = vsel %vm3062, %v3780, 0.0
  %v3922 = vadd.f32 %v3920, %v3921
  %v3923 = vsel %vm3062, %v3783, 0.0
  %v3924 = vadd.f32 %v3922, %v3923
  %v3925 = vsel %vm3062, %v3785, 0.0
  %v3926 = vadd.f32 %v3924, %v3925
  %v3927 = vsel %vm3062, %v3788, 0.0
  %v3928 = vadd.f32 %v3926, %v3927
  %v3929 = vsel %vm3062, %v3790, 0.0
  %v3930 = vadd.f32 %v3928, %v3929
  %v3931 = vsel %vm3062, %v3793, 0.0
  %v3932 = vadd.f32 %v3930, %v3931
  %v3933 = vsel %vm3062, %v3795, 0.0
  %v3934 = vadd.f32 %v3932, %v3933
  %v3935 = vsel %vm3062, %v3798, 0.0
  %v3936 = vadd.f32 %v3934, %v3935
  %v3937 = vsel %vm3062, %v3800, 0.0
  %v3938 = vadd.f32 %v3936, %v3937
  %v3939 = vsel %vm3062, %v3803, 0.0
  %v3940 = vadd.f32 %v3938, %v3939
  %v3941 = vsel %vm3062, %v3805, 0.0
  %v3942 = vadd.f32 %v3940, %v3941
  %v3943 = vsel %vm3062, %v3808, 0.0
  %v3944 = vadd.f32 %v3942, %v3943
  %v3945 = vsel %vm3062, %v3810, 0.0
  %v3946 = vadd.f32 %v3944, %v3945
  %v3947 = vsel %vm3062, %v3813, 0.0
  %v3948 = vadd.f32 %v3946, %v3947
  %v3949 = vsel %vm3062, %v3815, 0.0
  %v3950 = vadd.f32 %v3948, %v3949
  %v3951 = vsel %vm3062, %v3818, 0.0
  %v3952 = vadd.f32 %v3950, %v3951
  %v3953 = vsel %vm3062, %v3820, 0.0
  %v3954 = vadd.f32 %v3952, %v3953
  %v3955 = vsel %vm3062, %v3823, 0.0
  %v3956 = vadd.f32 %v3954, %v3955
  %v3957 = vsel %vm3062, %v3825, 0.0
  %v3958 = vadd.f32 %v3956, %v3957
  %v3959 = vsel %vm3062, %v3828, 0.0
  %v3960 = vadd.f32 %v3958, %v3959
  %v3961 = vsel %vm3062, %v3830, 0.0
  %v3962 = vadd.f32 %v3960, %v3961
  %v3963 = vsel %vm3062, %v3833, 0.0
  %v3964 = vadd.f32 %v3962, %v3963
  %v3965 = vsel %vm3062, %v3835, 0.0
  %v3966 = vadd.f32 %v3964, %v3965
  %v3967 = vsel %vm3062, %v3838, 0.0
  %v3968 = vadd.f32 %v3966, %v3967
  %v3969 = vsel %vm3062, %v3840, 0.0
  %v3970 = vadd.f32 %v3968, %v3969
  %v3971 = vrot.slane %v3970, 4
  %v3972 = vadd.f32 %v3970, %v3971
  %v3973 = vrot.slane %v3972, 2
  %v3974 = vadd.f32 %v3972, %v3973
  %v3975 = vrot.slane %v3974, 1
  %v3976 = vadd.f32 %v3974, %v3975
  %v3977 = vmul.f32 %v3976, 0.001953125
  %v3978 = vsub.f32 %v3683, %v3977
  %v3979 = vsub.f32 %v3685, %v3977
  %v3980 = vsub.f32 %v3688, %v3977
  %v3981 = vsub.f32 %v3690, %v3977
  %v3982 = vsub.f32 %v3693, %v3977
  %v3983 = vsub.f32 %v3695, %v3977
  %v3984 = vsub.f32 %v3698, %v3977
  %v3985 = vsub.f32 %v3700, %v3977
  %v3986 = vsub.f32 %v3703, %v3977
  %v3987 = vsub.f32 %v3705, %v3977
  %v3988 = vsub.f32 %v3708, %v3977
  %v3989 = vsub.f32 %v3710, %v3977
  %v3990 = vsub.f32 %v3713, %v3977
  %v3991 = vsub.f32 %v3715, %v3977
  %v3992 = vsub.f32 %v3718, %v3977
  %v3993 = vsub.f32 %v3720, %v3977
  %v3994 = vsub.f32 %v3723, %v3977
  %v3995 = vsub.f32 %v3725, %v3977
  %v3996 = vsub.f32 %v3728, %v3977
  %v3997 = vsub.f32 %v3730, %v3977
  %v3998 = vsub.f32 %v3733, %v3977
  %v3999 = vsub.f32 %v3735, %v3977
  %v4000 = vsub.f32 %v3738, %v3977
  %v4001 = vsub.f32 %v3740, %v3977
  %v4002 = vsub.f32 %v3743, %v3977
  %v4003 = vsub.f32 %v3745, %v3977
  %v4004 = vsub.f32 %v3748, %v3977
  %v4005 = vsub.f32 %v3750, %v3977
  %v4006 = vsub.f32 %v3753, %v3977
  %v4007 = vsub.f32 %v3755, %v3977
  %v4008 = vsub.f32 %v3758, %v3977
  %v4009 = vsub.f32 %v3760, %v3977
  %v4010 = vsub.f32 %v3763, %v3977
  %v4011 = vsub.f32 %v3765, %v3977
  %v4012 = vsub.f32 %v3768, %v3977
  %v4013 = vsub.f32 %v3770, %v3977
  %v4014 = vsub.f32 %v3773, %v3977
  %v4015 = vsub.f32 %v3775, %v3977
  %v4016 = vsub.f32 %v3778, %v3977
  %v4017 = vsub.f32 %v3780, %v3977
  %v4018 = vsub.f32 %v3783, %v3977
  %v4019 = vsub.f32 %v3785, %v3977
  %v4020 = vsub.f32 %v3788, %v3977
  %v4021 = vsub.f32 %v3790, %v3977
  %v4022 = vsub.f32 %v3793, %v3977
  %v4023 = vsub.f32 %v3795, %v3977
  %v4024 = vsub.f32 %v3798, %v3977
  %v4025 = vsub.f32 %v3800, %v3977
  %v4026 = vsub.f32 %v3803, %v3977
  %v4027 = vsub.f32 %v3805, %v3977
  %v4028 = vsub.f32 %v3808, %v3977
  %v4029 = vsub.f32 %v3810, %v3977
  %v4030 = vsub.f32 %v3813, %v3977
  %v4031 = vsub.f32 %v3815, %v3977
  %v4032 = vsub.f32 %v3818, %v3977
  %v4033 = vsub.f32 %v3820, %v3977
  %v4034 = vsub.f32 %v3823, %v3977
  %v4035 = vsub.f32 %v3825, %v3977
  %v4036 = vsub.f32 %v3828, %v3977
  %v4037 = vsub.f32 %v3830, %v3977
  %v4038 = vsub.f32 %v3833, %v3977
  %v4039 = vsub.f32 %v3835, %v3977
  %v4040 = vsub.f32 %v3838, %v3977
  %v4041 = vsub.f32 %v3840, %v3977
  %v4042 = vmul.f32 %v3978, %v3978
  %v4043 = vmul.f32 %v3979, %v3979
  %v4044 = vmul.f32 %v3980, %v3980
  %v4045 = vmul.f32 %v3981, %v3981
  %v4046 = vmul.f32 %v3982, %v3982
  %v4047 = vmul.f32 %v3983, %v3983
  %v4048 = vmul.f32 %v3984, %v3984
  %v4049 = vmul.f32 %v3985, %v3985
  %v4050 = vmul.f32 %v3986, %v3986
  %v4051 = vmul.f32 %v3987, %v3987
  %v4052 = vmul.f32 %v3988, %v3988
  %v4053 = vmul.f32 %v3989, %v3989
  %v4054 = vmul.f32 %v3990, %v3990
  %v4055 = vmul.f32 %v3991, %v3991
  %v4056 = vmul.f32 %v3992, %v3992
  %v4057 = vmul.f32 %v3993, %v3993
  %v4058 = vmul.f32 %v3994, %v3994
  %v4059 = vmul.f32 %v3995, %v3995
  %v4060 = vmul.f32 %v3996, %v3996
  %v4061 = vmul.f32 %v3997, %v3997
  %v4062 = vmul.f32 %v3998, %v3998
  %v4063 = vmul.f32 %v3999, %v3999
  %v4064 = vmul.f32 %v4000, %v4000
  %v4065 = vmul.f32 %v4001, %v4001
  %v4066 = vmul.f32 %v4002, %v4002
  %v4067 = vmul.f32 %v4003, %v4003
  %v4068 = vmul.f32 %v4004, %v4004
  %v4069 = vmul.f32 %v4005, %v4005
  %v4070 = vmul.f32 %v4006, %v4006
  %v4071 = vmul.f32 %v4007, %v4007
  %v4072 = vmul.f32 %v4008, %v4008
  %v4073 = vmul.f32 %v4009, %v4009
  %v4074 = vmul.f32 %v4010, %v4010
  %v4075 = vmul.f32 %v4011, %v4011
  %v4076 = vmul.f32 %v4012, %v4012
  %v4077 = vmul.f32 %v4013, %v4013
  %v4078 = vmul.f32 %v4014, %v4014
  %v4079 = vmul.f32 %v4015, %v4015
  %v4080 = vmul.f32 %v4016, %v4016
  %v4081 = vmul.f32 %v4017, %v4017
  %v4082 = vmul.f32 %v4018, %v4018
  %v4083 = vmul.f32 %v4019, %v4019
  %v4084 = vmul.f32 %v4020, %v4020
  %v4085 = vmul.f32 %v4021, %v4021
  %v4086 = vmul.f32 %v4022, %v4022
  %v4087 = vmul.f32 %v4023, %v4023
  %v4088 = vmul.f32 %v4024, %v4024
  %v4089 = vmul.f32 %v4025, %v4025
  %v4090 = vmul.f32 %v4026, %v4026
  %v4091 = vmul.f32 %v4027, %v4027
  %v4092 = vmul.f32 %v4028, %v4028
  %v4093 = vmul.f32 %v4029, %v4029
  %v4094 = vmul.f32 %v4030, %v4030
  %v4095 = vmul.f32 %v4031, %v4031
  %v4096 = vmul.f32 %v4032, %v4032
  %v4097 = vmul.f32 %v4033, %v4033
  %v4098 = vmul.f32 %v4034, %v4034
  %v4099 = vmul.f32 %v4035, %v4035
  %v4100 = vmul.f32 %v4036, %v4036
  %v4101 = vmul.f32 %v4037, %v4037
  %v4102 = vmul.f32 %v4038, %v4038
  %v4103 = vmul.f32 %v4039, %v4039
  %v4104 = vmul.f32 %v4040, %v4040
  %v4105 = vmul.f32 %v4041, %v4041
  %v4106 = vsel %vm3062, %v4042, 0.0
  %v4107 = vsel %vm3062, %v4043, 0.0
  %v4108 = vadd.f32 %v4106, %v4107
  %v4109 = vsel %vm3062, %v4044, 0.0
  %v4110 = vadd.f32 %v4108, %v4109
  %v4111 = vsel %vm3062, %v4045, 0.0
  %v4112 = vadd.f32 %v4110, %v4111
  %v4113 = vsel %vm3062, %v4046, 0.0
  %v4114 = vadd.f32 %v4112, %v4113
  %v4115 = vsel %vm3062, %v4047, 0.0
  %v4116 = vadd.f32 %v4114, %v4115
  %v4117 = vsel %vm3062, %v4048, 0.0
  %v4118 = vadd.f32 %v4116, %v4117
  %v4119 = vsel %vm3062, %v4049, 0.0
  %v4120 = vadd.f32 %v4118, %v4119
  %v4121 = vsel %vm3062, %v4050, 0.0
  %v4122 = vadd.f32 %v4120, %v4121
  %v4123 = vsel %vm3062, %v4051, 0.0
  %v4124 = vadd.f32 %v4122, %v4123
  %v4125 = vsel %vm3062, %v4052, 0.0
  %v4126 = vadd.f32 %v4124, %v4125
  %v4127 = vsel %vm3062, %v4053, 0.0
  %v4128 = vadd.f32 %v4126, %v4127
  %v4129 = vsel %vm3062, %v4054, 0.0
  %v4130 = vadd.f32 %v4128, %v4129
  %v4131 = vsel %vm3062, %v4055, 0.0
  %v4132 = vadd.f32 %v4130, %v4131
  %v4133 = vsel %vm3062, %v4056, 0.0
  %v4134 = vadd.f32 %v4132, %v4133
  %v4135 = vsel %vm3062, %v4057, 0.0
  %v4136 = vadd.f32 %v4134, %v4135
  %v4137 = vsel %vm3062, %v4058, 0.0
  %v4138 = vadd.f32 %v4136, %v4137
  %v4139 = vsel %vm3062, %v4059, 0.0
  %v4140 = vadd.f32 %v4138, %v4139
  %v4141 = vsel %vm3062, %v4060, 0.0
  %v4142 = vadd.f32 %v4140, %v4141
  %v4143 = vsel %vm3062, %v4061, 0.0
  %v4144 = vadd.f32 %v4142, %v4143
  %v4145 = vsel %vm3062, %v4062, 0.0
  %v4146 = vadd.f32 %v4144, %v4145
  %v4147 = vsel %vm3062, %v4063, 0.0
  %v4148 = vadd.f32 %v4146, %v4147
  %v4149 = vsel %vm3062, %v4064, 0.0
  %v4150 = vadd.f32 %v4148, %v4149
  %v4151 = vsel %vm3062, %v4065, 0.0
  %v4152 = vadd.f32 %v4150, %v4151
  %v4153 = vsel %vm3062, %v4066, 0.0
  %v4154 = vadd.f32 %v4152, %v4153
  %v4155 = vsel %vm3062, %v4067, 0.0
  %v4156 = vadd.f32 %v4154, %v4155
  %v4157 = vsel %vm3062, %v4068, 0.0
  %v4158 = vadd.f32 %v4156, %v4157
  %v4159 = vsel %vm3062, %v4069, 0.0
  %v4160 = vadd.f32 %v4158, %v4159
  %v4161 = vsel %vm3062, %v4070, 0.0
  %v4162 = vadd.f32 %v4160, %v4161
  %v4163 = vsel %vm3062, %v4071, 0.0
  %v4164 = vadd.f32 %v4162, %v4163
  %v4165 = vsel %vm3062, %v4072, 0.0
  %v4166 = vadd.f32 %v4164, %v4165
  %v4167 = vsel %vm3062, %v4073, 0.0
  %v4168 = vadd.f32 %v4166, %v4167
  %v4169 = vsel %vm3062, %v4074, 0.0
  %v4170 = vadd.f32 %v4168, %v4169
  %v4171 = vsel %vm3062, %v4075, 0.0
  %v4172 = vadd.f32 %v4170, %v4171
  %v4173 = vsel %vm3062, %v4076, 0.0
  %v4174 = vadd.f32 %v4172, %v4173
  %v4175 = vsel %vm3062, %v4077, 0.0
  %v4176 = vadd.f32 %v4174, %v4175
  %v4177 = vsel %vm3062, %v4078, 0.0
  %v4178 = vadd.f32 %v4176, %v4177
  %v4179 = vsel %vm3062, %v4079, 0.0
  %v4180 = vadd.f32 %v4178, %v4179
  %v4181 = vsel %vm3062, %v4080, 0.0
  %v4182 = vadd.f32 %v4180, %v4181
  %v4183 = vsel %vm3062, %v4081, 0.0
  %v4184 = vadd.f32 %v4182, %v4183
  %v4185 = vsel %vm3062, %v4082, 0.0
  %v4186 = vadd.f32 %v4184, %v4185
  %v4187 = vsel %vm3062, %v4083, 0.0
  %v4188 = vadd.f32 %v4186, %v4187
  %v4189 = vsel %vm3062, %v4084, 0.0
  %v4190 = vadd.f32 %v4188, %v4189
  %v4191 = vsel %vm3062, %v4085, 0.0
  %v4192 = vadd.f32 %v4190, %v4191
  %v4193 = vsel %vm3062, %v4086, 0.0
  %v4194 = vadd.f32 %v4192, %v4193
  %v4195 = vsel %vm3062, %v4087, 0.0
  %v4196 = vadd.f32 %v4194, %v4195
  %v4197 = vsel %vm3062, %v4088, 0.0
  %v4198 = vadd.f32 %v4196, %v4197
  %v4199 = vsel %vm3062, %v4089, 0.0
  %v4200 = vadd.f32 %v4198, %v4199
  %v4201 = vsel %vm3062, %v4090, 0.0
  %v4202 = vadd.f32 %v4200, %v4201
  %v4203 = vsel %vm3062, %v4091, 0.0
  %v4204 = vadd.f32 %v4202, %v4203
  %v4205 = vsel %vm3062, %v4092, 0.0
  %v4206 = vadd.f32 %v4204, %v4205
  %v4207 = vsel %vm3062, %v4093, 0.0
  %v4208 = vadd.f32 %v4206, %v4207
  %v4209 = vsel %vm3062, %v4094, 0.0
  %v4210 = vadd.f32 %v4208, %v4209
  %v4211 = vsel %vm3062, %v4095, 0.0
  %v4212 = vadd.f32 %v4210, %v4211
  %v4213 = vsel %vm3062, %v4096, 0.0
  %v4214 = vadd.f32 %v4212, %v4213
  %v4215 = vsel %vm3062, %v4097, 0.0
  %v4216 = vadd.f32 %v4214, %v4215
  %v4217 = vsel %vm3062, %v4098, 0.0
  %v4218 = vadd.f32 %v4216, %v4217
  %v4219 = vsel %vm3062, %v4099, 0.0
  %v4220 = vadd.f32 %v4218, %v4219
  %v4221 = vsel %vm3062, %v4100, 0.0
  %v4222 = vadd.f32 %v4220, %v4221
  %v4223 = vsel %vm3062, %v4101, 0.0
  %v4224 = vadd.f32 %v4222, %v4223
  %v4225 = vsel %vm3062, %v4102, 0.0
  %v4226 = vadd.f32 %v4224, %v4225
  %v4227 = vsel %vm3062, %v4103, 0.0
  %v4228 = vadd.f32 %v4226, %v4227
  %v4229 = vsel %vm3062, %v4104, 0.0
  %v4230 = vadd.f32 %v4228, %v4229
  %v4231 = vsel %vm3062, %v4105, 0.0
  %v4232 = vadd.f32 %v4230, %v4231
  %v4233 = vrot.slane %v4232, 4
  %v4234 = vadd.f32 %v4232, %v4233
  %v4235 = vrot.slane %v4234, 2
  %v4236 = vadd.f32 %v4234, %v4235
  %v4237 = vrot.slane %v4236, 1
  %v4238 = vadd.f32 %v4236, %v4237
  %v4239 = vmul.f32 %v4238, 0.001953125
  %v4240 = vadd.f32 %v4239, 1e-05
  %v4241 = vrsqrt.pop %v4240
  %v4242 = vmul.f32 %v4241, %v4240
  %v4243 = vmul.f32 %v4242, %v4241
  %v4244 = vmul.f32 0.5, %v4243
  %v4245 = vsub.f32 1.5, %v4244
  %v4246 = vmul.f32 %v4241, %v4245
  %vm4247 = vweird.f32 %v4240
  %vm4248 = vweird.f32 %v4241
  %vm4249 = vmor %vm4247, %vm4248
  %v4250 = vsel %vm4249, %v4241, %v4246
  %v4251 = vmul.f32 %v4250, %v3842
  %v4252 = vperm.slane %v4251, 0
  %v4253 = vmul.f32 %v3978, %v4252
  %v4254 = vmul.f32 %v3979, %v4252
  %v4255 = vmul.f32 %v3980, %v4252
  %v4256 = vmul.f32 %v3981, %v4252
  %v4257 = vmul.f32 %v3982, %v4252
  %v4258 = vmul.f32 %v3983, %v4252
  %v4259 = vmul.f32 %v3984, %v4252
  %v4260 = vmul.f32 %v3985, %v4252
  %v4261 = vmul.f32 %v3986, %v4252
  %v4262 = vmul.f32 %v3987, %v4252
  %v4263 = vmul.f32 %v3988, %v4252
  %v4264 = vmul.f32 %v3989, %v4252
  %v4265 = vmul.f32 %v3990, %v4252
  %v4266 = vmul.f32 %v3991, %v4252
  %v4267 = vmul.f32 %v3992, %v4252
  %v4268 = vmul.f32 %v3993, %v4252
  %v4269 = vmul.f32 %v3994, %v4252
  %v4270 = vmul.f32 %v3995, %v4252
  %v4271 = vmul.f32 %v3996, %v4252
  %v4272 = vmul.f32 %v3997, %v4252
  %v4273 = vmul.f32 %v3998, %v4252
  %v4274 = vmul.f32 %v3999, %v4252
  %v4275 = vmul.f32 %v4000, %v4252
  %v4276 = vmul.f32 %v4001, %v4252
  %v4277 = vmul.f32 %v4002, %v4252
  %v4278 = vmul.f32 %v4003, %v4252
  %v4279 = vmul.f32 %v4004, %v4252
  %v4280 = vmul.f32 %v4005, %v4252
  %v4281 = vmul.f32 %v4006, %v4252
  %v4282 = vmul.f32 %v4007, %v4252
  %v4283 = vmul.f32 %v4008, %v4252
  %v4284 = vmul.f32 %v4009, %v4252
  %v4285 = vmul.f32 %v4010, %v4252
  %v4286 = vmul.f32 %v4011, %v4252
  %v4287 = vmul.f32 %v4012, %v4252
  %v4288 = vmul.f32 %v4013, %v4252
  %v4289 = vmul.f32 %v4014, %v4252
  %v4290 = vmul.f32 %v4015, %v4252
  %v4291 = vmul.f32 %v4016, %v4252
  %v4292 = vmul.f32 %v4017, %v4252
  %v4293 = vmul.f32 %v4018, %v4252
  %v4294 = vmul.f32 %v4019, %v4252
  %v4295 = vmul.f32 %v4020, %v4252
  %v4296 = vmul.f32 %v4021, %v4252
  %v4297 = vmul.f32 %v4022, %v4252
  %v4298 = vmul.f32 %v4023, %v4252
  %v4299 = vmul.f32 %v4024, %v4252
  %v4300 = vmul.f32 %v4025, %v4252
  %v4301 = vmul.f32 %v4026, %v4252
  %v4302 = vmul.f32 %v4027, %v4252
  %v4303 = vmul.f32 %v4028, %v4252
  %v4304 = vmul.f32 %v4029, %v4252
  %v4305 = vmul.f32 %v4030, %v4252
  %v4306 = vmul.f32 %v4031, %v4252
  %v4307 = vmul.f32 %v4032, %v4252
  %v4308 = vmul.f32 %v4033, %v4252
  %v4309 = vmul.f32 %v4034, %v4252
  %v4310 = vmul.f32 %v4035, %v4252
  %v4311 = vmul.f32 %v4036, %v4252
  %v4312 = vmul.f32 %v4037, %v4252
  %v4313 = vmul.f32 %v4038, %v4252
  %v4314 = vmul.f32 %v4039, %v4252
  %v4315 = vmul.f32 %v4040, %v4252
  %v4316 = vmul.f32 %v4041, %v4252
  %v4318 = vperm.slane %v3843, 0
  %v4320 = vadd.f32 %v4253, %v4318
  %v4321 = vadd.f32 %v4254, %v4318
  %v4322 = vadd.f32 %v4255, %v4318
  %v4323 = vadd.f32 %v4256, %v4318
  %v4324 = vadd.f32 %v4257, %v4318
  %v4325 = vadd.f32 %v4258, %v4318
  %v4326 = vadd.f32 %v4259, %v4318
  %v4327 = vadd.f32 %v4260, %v4318
  %v4328 = vadd.f32 %v4261, %v4318
  %v4329 = vadd.f32 %v4262, %v4318
  %v4330 = vadd.f32 %v4263, %v4318
  %v4331 = vadd.f32 %v4264, %v4318
  %v4332 = vadd.f32 %v4265, %v4318
  %v4333 = vadd.f32 %v4266, %v4318
  %v4334 = vadd.f32 %v4267, %v4318
  %v4335 = vadd.f32 %v4268, %v4318
  %v4336 = vadd.f32 %v4269, %v4318
  %v4337 = vadd.f32 %v4270, %v4318
  %v4338 = vadd.f32 %v4271, %v4318
  %v4339 = vadd.f32 %v4272, %v4318
  %v4340 = vadd.f32 %v4273, %v4318
  %v4341 = vadd.f32 %v4274, %v4318
  %v4342 = vadd.f32 %v4275, %v4318
  %v4343 = vadd.f32 %v4276, %v4318
  %v4344 = vadd.f32 %v4277, %v4318
  %v4345 = vadd.f32 %v4278, %v4318
  %v4346 = vadd.f32 %v4279, %v4318
  %v4347 = vadd.f32 %v4280, %v4318
  %v4348 = vadd.f32 %v4281, %v4318
  %v4349 = vadd.f32 %v4282, %v4318
  %v4350 = vadd.f32 %v4283, %v4318
  %v4351 = vadd.f32 %v4284, %v4318
  %v4352 = vadd.f32 %v4285, %v4318
  %v4353 = vadd.f32 %v4286, %v4318
  %v4354 = vadd.f32 %v4287, %v4318
  %v4355 = vadd.f32 %v4288, %v4318
  %v4356 = vadd.f32 %v4289, %v4318
  %v4357 = vadd.f32 %v4290, %v4318
  %v4358 = vadd.f32 %v4291, %v4318
  %v4359 = vadd.f32 %v4292, %v4318
  %v4360 = vadd.f32 %v4293, %v4318
  %v4361 = vadd.f32 %v4294, %v4318
  %v4362 = vadd.f32 %v4295, %v4318
  %v4363 = vadd.f32 %v4296, %v4318
  %v4364 = vadd.f32 %v4297, %v4318
  %v4365 = vadd.f32 %v4298, %v4318
  %v4366 = vadd.f32 %v4299, %v4318
  %v4367 = vadd.f32 %v4300, %v4318
  %v4368 = vadd.f32 %v4301, %v4318
  %v4369 = vadd.f32 %v4302, %v4318
  %v4370 = vadd.f32 %v4303, %v4318
  %v4371 = vadd.f32 %v4304, %v4318
  %v4372 = vadd.f32 %v4305, %v4318
  %v4373 = vadd.f32 %v4306, %v4318
  %v4374 = vadd.f32 %v4307, %v4318
  %v4375 = vadd.f32 %v4308, %v4318
  %v4376 = vadd.f32 %v4309, %v4318
  %v4377 = vadd.f32 %v4310, %v4318
  %v4378 = vadd.f32 %v4311, %v4318
  %v4379 = vadd.f32 %v4312, %v4318
  %v4380 = vadd.f32 %v4313, %v4318
  %v4381 = vadd.f32 %v4314, %v4318
  %v4382 = vadd.f32 %v4315, %v4318
  %v4383 = vadd.f32 %v4316, %v4318
  %v4384 = vmax.f32 %v4320, 0.0
  %v4385 = vmax.f32 %v4321, 0.0
  %v4386 = vmax.f32 %v4322, 0.0
  %v4387 = vmax.f32 %v4323, 0.0
  %v4388 = vmax.f32 %v4324, 0.0
  %v4389 = vmax.f32 %v4325, 0.0
  %v4390 = vmax.f32 %v4326, 0.0
  %v4391 = vmax.f32 %v4327, 0.0
  %v4392 = vmax.f32 %v4328, 0.0
  %v4393 = vmax.f32 %v4329, 0.0
  %v4394 = vmax.f32 %v4330, 0.0
  %v4395 = vmax.f32 %v4331, 0.0
  %v4396 = vmax.f32 %v4332, 0.0
  %v4397 = vmax.f32 %v4333, 0.0
  %v4398 = vmax.f32 %v4334, 0.0
  %v4399 = vmax.f32 %v4335, 0.0
  %v4400 = vmax.f32 %v4336, 0.0
  %v4401 = vmax.f32 %v4337, 0.0
  %v4402 = vmax.f32 %v4338, 0.0
  %v4403 = vmax.f32 %v4339, 0.0
  %v4404 = vmax.f32 %v4340, 0.0
  %v4405 = vmax.f32 %v4341, 0.0
  %v4406 = vmax.f32 %v4342, 0.0
  %v4407 = vmax.f32 %v4343, 0.0
  %v4408 = vmax.f32 %v4344, 0.0
  %v4409 = vmax.f32 %v4345, 0.0
  %v4410 = vmax.f32 %v4346, 0.0
  %v4411 = vmax.f32 %v4347, 0.0
  %v4412 = vmax.f32 %v4348, 0.0
  %v4413 = vmax.f32 %v4349, 0.0
  %v4414 = vmax.f32 %v4350, 0.0
  %v4415 = vmax.f32 %v4351, 0.0
  %v4416 = vmax.f32 %v4352, 0.0
  %v4417 = vmax.f32 %v4353, 0.0
  %v4418 = vmax.f32 %v4354, 0.0
  %v4419 = vmax.f32 %v4355, 0.0
  %v4420 = vmax.f32 %v4356, 0.0
  %v4421 = vmax.f32 %v4357, 0.0
  %v4422 = vmax.f32 %v4358, 0.0
  %v4423 = vmax.f32 %v4359, 0.0
  %v4424 = vmax.f32 %v4360, 0.0
  %v4425 = vmax.f32 %v4361, 0.0
  %v4426 = vmax.f32 %v4362, 0.0
  %v4427 = vmax.f32 %v4363, 0.0
  %v4428 = vmax.f32 %v4364, 0.0
  %v4429 = vmax.f32 %v4365, 0.0
  %v4430 = vmax.f32 %v4366, 0.0
  %v4431 = vmax.f32 %v4367, 0.0
  %v4432 = vmax.f32 %v4368, 0.0
  %v4433 = vmax.f32 %v4369, 0.0
  %v4434 = vmax.f32 %v4370, 0.0
  %v4435 = vmax.f32 %v4371, 0.0
  %v4436 = vmax.f32 %v4372, 0.0
  %v4437 = vmax.f32 %v4373, 0.0
  %v4438 = vmax.f32 %v4374, 0.0
  %v4439 = vmax.f32 %v4375, 0.0
  %v4440 = vmax.f32 %v4376, 0.0
  %v4441 = vmax.f32 %v4377, 0.0
  %v4442 = vmax.f32 %v4378, 0.0
  %v4443 = vmax.f32 %v4379, 0.0
  %v4444 = vmax.f32 %v4380, 0.0
  %v4445 = vmax.f32 %v4381, 0.0
  %v4446 = vmax.f32 %v4382, 0.0
  %v4447 = vmax.f32 %v4383, 0.0
  %v4448 = vld [vmem:[%s6] sm:$0x1]
  %4449 = vst.msk [vmem:[#allocation3] sm:$0xff] %vm3062, 0.0
  %4450 = vst.msk [vmem:[#allocation3 + $0x8] sm:$0xff] %vm3062, 0.0
  %4451 = vst.msk [vmem:[#allocation3 + $0x10] sm:$0xff] %vm3062, 0.0
  %vm4452 = vcmask 57344
  %4453 = vst.msk [vmem:[#allocation3 + $0x18] sm:$0x1] %vm4452, 0.0
  %4454 = vst.msk [vmem:[#allocation3 + $0x20] sm:$0xff] %vm3062, 0.0
  %4455 = vst.msk [vmem:[#allocation3 + $0x28] sm:$0xff] %vm3062, 0.0
  %4456 = vst.msk [vmem:[#allocation3 + $0x30] sm:$0xff] %vm3062, 0.0
  %4457 = vst.msk [vmem:[#allocation3 + $0x38] sm:$0x1] %vm4452, 0.0
  %4458 = vst.msk [vmem:[#allocation3 + $0x40] sm:$0xff] %vm3062, 0.0
  %4459 = vst.msk [vmem:[#allocation3 + $0x48] sm:$0xff] %vm3062, 0.0
  %4460 = vst.msk [vmem:[#allocation3 + $0x50] sm:$0xff] %vm3062, 0.0
  %4461 = vst.msk [vmem:[#allocation3 + $0x58] sm:$0x1] %vm4452, 0.0
  %4462 = vst.msk [vmem:[#allocation3 + $0x60] sm:$0xff] %vm3062, 0.0
  %4463 = vst.msk [vmem:[#allocation3 + $0x68] sm:$0xff] %vm3062, 0.0
  %4464 = vst.msk [vmem:[#allocation3 + $0x70] sm:$0xff] %vm3062, 0.0
  %4465 = vst.msk [vmem:[#allocation3 + $0x78] sm:$0x1] %vm4452, 0.0
  %4466 = vst.msk [vmem:[#allocation3 + $0x80] sm:$0xff] %vm3062, 0.0
  %4467 = vst.msk [vmem:[#allocation3 + $0x88] sm:$0xff] %vm3062, 0.0
  %4468 = vst.msk [vmem:[#allocation3 + $0x90] sm:$0xff] %vm3062, 0.0
  %4469 = vst.msk [vmem:[#allocation3 + $0x98] sm:$0x1] %vm4452, 0.0
  %4470 = vst.msk [vmem:[#allocation3 + $0xa0] sm:$0xff] %vm3062, 0.0
  %4471 = vst.msk [vmem:[#allocation3 + $0xa8] sm:$0xff] %vm3062, 0.0
  %4472 = vst.msk [vmem:[#allocation3 + $0xb0] sm:$0xff] %vm3062, 0.0
  %4473 = vst.msk [vmem:[#allocation3 + $0xb8] sm:$0x1] %vm4452, 0.0
  %4474 = vst.msk [vmem:[#allocation3 + $0xc0] sm:$0xff] %vm3062, 0.0
  %4475 = vst.msk [vmem:[#allocation3 + $0xc8] sm:$0xff] %vm3062, 0.0
  %4476 = vst.msk [vmem:[#allocation3 + $0xd0] sm:$0xff] %vm3062, 0.0
  %4477 = vst.msk [vmem:[#allocation3 + $0xd8] sm:$0x1] %vm4452, 0.0
  %4478 = vst.msk [vmem:[#allocation3 + $0xe0] sm:$0xff] %vm3062, 0.0
  %4479 = vst.msk [vmem:[#allocation3 + $0xe8] sm:$0xff] %vm3062, 0.0
  %4480 = vst.msk [vmem:[#allocation3 + $0xf0] sm:$0xff] %vm3062, 0.0
  %4481 = vst.msk [vmem:[#allocation3 + $0xf8] sm:$0x1] %vm4452, 0.0
  %4482 = vst.msk [vmem:[#allocation3 + $0x100] sm:$0xff] %vm3062, 0.0
  %4483 = vst.msk [vmem:[#allocation3 + $0x108] sm:$0xff] %vm3062, 0.0
  %4484 = vst.msk [vmem:[#allocation3 + $0x110] sm:$0xff] %vm3062, 0.0
  %4485 = vst.msk [vmem:[#allocation3 + $0x118] sm:$0x1] %vm4452, 0.0
  %4486 = vst.msk [vmem:[#allocation3 + $0x120] sm:$0xff] %vm3062, 0.0
  %4487 = vst.msk [vmem:[#allocation3 + $0x128] sm:$0xff] %vm3062, 0.0
  %4488 = vst.msk [vmem:[#allocation3 + $0x130] sm:$0xff] %vm3062, 0.0
  %4489 = vst.msk [vmem:[#allocation3 + $0x138] sm:$0x1] %vm4452, 0.0
  %4490 = vst.msk [vmem:[#allocation3 + $0x140] sm:$0xff] %vm3062, 0.0
  %4491 = vst.msk [vmem:[#allocation3 + $0x148] sm:$0xff] %vm3062, 0.0
  %4492 = vst.msk [vmem:[#allocation3 + $0x150] sm:$0xff] %vm3062, 0.0
  %4493 = vst.msk [vmem:[#allocation3 + $0x158] sm:$0x1] %vm4452, 0.0
  %4494 = vst.msk [vmem:[#allocation3 + $0x160] sm:$0xff] %vm3062, 0.0
  %4495 = vst.msk [vmem:[#allocation3 + $0x168] sm:$0xff] %vm3062, 0.0
  %4496 = vst.msk [vmem:[#allocation3 + $0x170] sm:$0xff] %vm3062, 0.0
  %4497 = vst.msk [vmem:[#allocation3 + $0x178] sm:$0x1] %vm4452, 0.0
  %4498 = vst.msk [vmem:[#allocation3 + $0x180] sm:$0xff] %vm3062, 0.0
  %4499 = vst.msk [vmem:[#allocation3 + $0x188] sm:$0xff] %vm3062, 0.0
  %4500 = vst.msk [vmem:[#allocation3 + $0x190] sm:$0xff] %vm3062, 0.0
  %4501 = vst.msk [vmem:[#allocation3 + $0x198] sm:$0x1] %vm4452, 0.0
  %4502 = vst.msk [vmem:[#allocation3 + $0x1a0] sm:$0xff] %vm3062, 0.0
  %4503 = vst.msk [vmem:[#allocation3 + $0x1a8] sm:$0xff] %vm3062, 0.0
  %4504 = vst.msk [vmem:[#allocation3 + $0x1b0] sm:$0xff] %vm3062, 0.0
  %4505 = vst.msk [vmem:[#allocation3 + $0x1b8] sm:$0x1] %vm4452, 0.0
  %4506 = vst.msk [vmem:[#allocation3 + $0x1c0] sm:$0xff] %vm3062, 0.0
  %4507 = vst.msk [vmem:[#allocation3 + $0x1c8] sm:$0xff] %vm3062, 0.0
  %4508 = vst.msk [vmem:[#allocation3 + $0x1d0] sm:$0xff] %vm3062, 0.0
  %4509 = vst.msk [vmem:[#allocation3 + $0x1d8] sm:$0x1] %vm4452, 0.0
  %4510 = vst.msk [vmem:[#allocation3 + $0x1e0] sm:$0xff] %vm3062, 0.0
  %4511 = vst.msk [vmem:[#allocation3 + $0x1e8] sm:$0xff] %vm3062, 0.0
  %4512 = vst.msk [vmem:[#allocation3 + $0x1f0] sm:$0xff] %vm3062, 0.0
  %4513 = vst.msk [vmem:[#allocation3 + $0x1f8] sm:$0x1] %vm4452, 0.0
  %4514 = vst.msk [vmem:[#allocation3 + $0x200] sm:$0xff] %vm3062, 0.0
  %4515 = vst.msk [vmem:[#allocation3 + $0x208] sm:$0xff] %vm3062, 0.0
  %4516 = vst.msk [vmem:[#allocation3 + $0x210] sm:$0xff] %vm3062, 0.0
  %4517 = vst.msk [vmem:[#allocation3 + $0x218] sm:$0x1] %vm4452, 0.0
  %4518 = vst.msk [vmem:[#allocation3 + $0x220] sm:$0xff] %vm3062, 0.0
  %4519 = vst.msk [vmem:[#allocation3 + $0x228] sm:$0xff] %vm3062, 0.0
  %4520 = vst.msk [vmem:[#allocation3 + $0x230] sm:$0xff] %vm3062, 0.0
  %4521 = vst.msk [vmem:[#allocation3 + $0x238] sm:$0x1] %vm4452, 0.0
  %4522 = vst.msk [vmem:[#allocation3 + $0x240] sm:$0xff] %vm3062, 0.0
  %4523 = vst.msk [vmem:[#allocation3 + $0x248] sm:$0xff] %vm3062, 0.0
  %4524 = vst.msk [vmem:[#allocation3 + $0x250] sm:$0xff] %vm3062, 0.0
  %4525 = vst.msk [vmem:[#allocation3 + $0x258] sm:$0x1] %vm4452, 0.0
  %4526 = vst.msk [vmem:[#allocation3 + $0x260] sm:$0xff] %vm3062, 0.0
  %4527 = vst.msk [vmem:[#allocation3 + $0x268] sm:$0xff] %vm3062, 0.0
  %4528 = vst.msk [vmem:[#allocation3 + $0x270] sm:$0xff] %vm3062, 0.0
  %4529 = vst.msk [vmem:[#allocation3 + $0x278] sm:$0x1] %vm4452, 0.0
  %4530 = vst.msk [vmem:[#allocation3 + $0x280] sm:$0xff] %vm3062, 0.0
  %4531 = vst.msk [vmem:[#allocation3 + $0x288] sm:$0xff] %vm3062, 0.0
  %4532 = vst.msk [vmem:[#allocation3 + $0x290] sm:$0xff] %vm3062, 0.0
  %4533 = vst.msk [vmem:[#allocation3 + $0x298] sm:$0x1] %vm4452, 0.0
  %4534 = vst.msk [vmem:[#allocation3 + $0x2a0] sm:$0xff] %vm3062, 0.0
  %4535 = vst.msk [vmem:[#allocation3 + $0x2a8] sm:$0xff] %vm3062, 0.0
  %4536 = vst.msk [vmem:[#allocation3 + $0x2b0] sm:$0xff] %vm3062, 0.0
  %4537 = vst.msk [vmem:[#allocation3 + $0x2b8] sm:$0x1] %vm4452, 0.0
  %4538 = vst.msk [vmem:[#allocation3 + $0x2c0] sm:$0xff] %vm3062, 0.0
  %4539 = vst.msk [vmem:[#allocation3 + $0x2c8] sm:$0xff] %vm3062, 0.0
  %4540 = vst.msk [vmem:[#allocation3 + $0x2d0] sm:$0xff] %vm3062, 0.0
  %4541 = vst.msk [vmem:[#allocation3 + $0x2d8] sm:$0x1] %vm4452, 0.0
  %4542 = vst.msk [vmem:[#allocation3 + $0x2e0] sm:$0xff] %vm3062, 0.0
  %4543 = vst.msk [vmem:[#allocation3 + $0x2e8] sm:$0xff] %vm3062, 0.0
  %4544 = vst.msk [vmem:[#allocation3 + $0x2f0] sm:$0xff] %vm3062, 0.0
  %4545 = vst.msk [vmem:[#allocation3 + $0x2f8] sm:$0x1] %vm4452, 0.0
  %4546 = vst.msk [vmem:[#allocation3 + $0x300] sm:$0xff] %vm3062, 0.0
  %4547 = vst.msk [vmem:[#allocation3 + $0x308] sm:$0xff] %vm3062, 0.0
  %4548 = vst.msk [vmem:[#allocation3 + $0x310] sm:$0xff] %vm3062, 0.0
  %4549 = vst.msk [vmem:[#allocation3 + $0x318] sm:$0x1] %vm4452, 0.0
  %4550 = vst.msk [vmem:[#allocation3 + $0x320] sm:$0xff] %vm3062, 0.0
  %4551 = vst.msk [vmem:[#allocation3 + $0x328] sm:$0xff] %vm3062, 0.0
  %4552 = vst.msk [vmem:[#allocation3 + $0x330] sm:$0xff] %vm3062, 0.0
  %4553 = vst.msk [vmem:[#allocation3 + $0x338] sm:$0x1] %vm4452, 0.0
  %4554 = vst.msk [vmem:[#allocation3 + $0x340] sm:$0xff] %vm3062, 0.0
  %4555 = vst.msk [vmem:[#allocation3 + $0x348] sm:$0xff] %vm3062, 0.0
  %4556 = vst.msk [vmem:[#allocation3 + $0x350] sm:$0xff] %vm3062, 0.0
  %4557 = vst.msk [vmem:[#allocation3 + $0x358] sm:$0x1] %vm4452, 0.0
  %4558 = vst.msk [vmem:[#allocation3 + $0x360] sm:$0xff] %vm3062, 0.0
  %4559 = vst.msk [vmem:[#allocation3 + $0x368] sm:$0xff] %vm3062, 0.0
  %4560 = vst.msk [vmem:[#allocation3 + $0x370] sm:$0xff] %vm3062, 0.0
  %4561 = vst.msk [vmem:[#allocation3 + $0x378] sm:$0x1] %vm4452, 0.0
  %4562 = vst.msk [vmem:[#allocation3 + $0x380] sm:$0xff] %vm3062, 0.0
  %4563 = vst.msk [vmem:[#allocation3 + $0x388] sm:$0xff] %vm3062, 0.0
  %4564 = vst.msk [vmem:[#allocation3 + $0x390] sm:$0xff] %vm3062, 0.0
  %4565 = vst.msk [vmem:[#allocation3 + $0x398] sm:$0x1] %vm4452, 0.0
  %4566 = vst.msk [vmem:[#allocation3 + $0x3a0] sm:$0xff] %vm3062, 0.0
  %4567 = vst.msk [vmem:[#allocation3 + $0x3a8] sm:$0xff] %vm3062, 0.0
  %4568 = vst.msk [vmem:[#allocation3 + $0x3b0] sm:$0xff] %vm3062, 0.0
  %4569 = vst.msk [vmem:[#allocation3 + $0x3b8] sm:$0x1] %vm4452, 0.0
  %4570 = vst.msk [vmem:[#allocation3 + $0x3c0] sm:$0xff] %vm3062, 0.0
  %4571 = vst.msk [vmem:[#allocation3 + $0x3c8] sm:$0xff] %vm3062, 0.0
  %4572 = vst.msk [vmem:[#allocation3 + $0x3d0] sm:$0xff] %vm3062, 0.0
  %4573 = vst.msk [vmem:[#allocation3 + $0x3d8] sm:$0x1] %vm4452, 0.0
  %4574 = vst.msk [vmem:[#allocation3 + $0x3e0] sm:$0xff] %vm3062, 0.0
  %4575 = vst.msk [vmem:[#allocation3 + $0x3e8] sm:$0xff] %vm3062, 0.0
  %4576 = vst.msk [vmem:[#allocation3 + $0x3f0] sm:$0xff] %vm3062, 0.0
  %4577 = vst.msk [vmem:[#allocation3 + $0x3f8] sm:$0x1] %vm4452, 0.0
  %4578 = vst.msk [vmem:[#allocation3 + $0x400] sm:$0xff] %vm3062, 0.0
  %4579 = vst.msk [vmem:[#allocation3 + $0x408] sm:$0xff] %vm3062, 0.0
  %4580 = vst.msk [vmem:[#allocation3 + $0x410] sm:$0xff] %vm3062, 0.0
  %4581 = vst.msk [vmem:[#allocation3 + $0x418] sm:$0x1] %vm4452, 0.0
  %4582 = vst.msk [vmem:[#allocation3 + $0x420] sm:$0xff] %vm3062, 0.0
  %4583 = vst.msk [vmem:[#allocation3 + $0x428] sm:$0xff] %vm3062, 0.0
  %4584 = vst.msk [vmem:[#allocation3 + $0x430] sm:$0xff] %vm3062, 0.0
  %4585 = vst.msk [vmem:[#allocation3 + $0x438] sm:$0x1] %vm4452, 0.0
  %4586 = vst.msk [vmem:[#allocation3 + $0x440] sm:$0xff] %vm3062, 0.0
  %4587 = vst.msk [vmem:[#allocation3 + $0x448] sm:$0xff] %vm3062, 0.0
  %4588 = vst.msk [vmem:[#allocation3 + $0x450] sm:$0xff] %vm3062, 0.0
  %4589 = vst.msk [vmem:[#allocation3 + $0x458] sm:$0x1] %vm4452, 0.0
  %4590 = vst.msk [vmem:[#allocation3 + $0x460] sm:$0xff] %vm3062, 0.0
  %4591 = vst.msk [vmem:[#allocation3 + $0x468] sm:$0xff] %vm3062, 0.0
  %4592 = vst.msk [vmem:[#allocation3 + $0x470] sm:$0xff] %vm3062, 0.0
  %4593 = vst.msk [vmem:[#allocation3 + $0x478] sm:$0x1] %vm4452, 0.0
  %s4594 = scalar_lea.vmem [#allocation3], 32
  %4595 = vst.msk [vmem:[%s4594 + $0x8] sm:$0xff] %vm3062, %v4384
  %4596 = vst.msk [vmem:[%s4594 + $0x10] sm:$0xff] %vm3062, %v4385
  %4597 = vst.msk [vmem:[%s4594 + $0x28] sm:$0xff] %vm3062, %v4386
  %4598 = vst.msk [vmem:[%s4594 + $0x30] sm:$0xff] %vm3062, %v4387
  %4599 = vst.msk [vmem:[%s4594 + $0x48] sm:$0xff] %vm3062, %v4388
  %4600 = vst.msk [vmem:[%s4594 + $0x50] sm:$0xff] %vm3062, %v4389
  %4601 = vst.msk [vmem:[%s4594 + $0x68] sm:$0xff] %vm3062, %v4390
  %4602 = vst.msk [vmem:[%s4594 + $0x70] sm:$0xff] %vm3062, %v4391
  %4603 = vst.msk [vmem:[%s4594 + $0x88] sm:$0xff] %vm3062, %v4392
  %4604 = vst.msk [vmem:[%s4594 + $0x90] sm:$0xff] %vm3062, %v4393
  %4605 = vst.msk [vmem:[%s4594 + $0xa8] sm:$0xff] %vm3062, %v4394
  %4606 = vst.msk [vmem:[%s4594 + $0xb0] sm:$0xff] %vm3062, %v4395
  %4607 = vst.msk [vmem:[%s4594 + $0xc8] sm:$0xff] %vm3062, %v4396
  %4608 = vst.msk [vmem:[%s4594 + $0xd0] sm:$0xff] %vm3062, %v4397
  %4609 = vst.msk [vmem:[%s4594 + $0xe8] sm:$0xff] %vm3062, %v4398
  %4610 = vst.msk [vmem:[%s4594 + $0xf0] sm:$0xff] %vm3062, %v4399
  %4611 = vst.msk [vmem:[%s4594 + $0x108] sm:$0xff] %vm3062, %v4400
  %4612 = vst.msk [vmem:[%s4594 + $0x110] sm:$0xff] %vm3062, %v4401
  %4613 = vst.msk [vmem:[%s4594 + $0x128] sm:$0xff] %vm3062, %v4402
  %4614 = vst.msk [vmem:[%s4594 + $0x130] sm:$0xff] %vm3062, %v4403
  %4615 = vst.msk [vmem:[%s4594 + $0x148] sm:$0xff] %vm3062, %v4404
  %4616 = vst.msk [vmem:[%s4594 + $0x150] sm:$0xff] %vm3062, %v4405
  %4617 = vst.msk [vmem:[%s4594 + $0x168] sm:$0xff] %vm3062, %v4406
  %4618 = vst.msk [vmem:[%s4594 + $0x170] sm:$0xff] %vm3062, %v4407
  %4619 = vst.msk [vmem:[%s4594 + $0x188] sm:$0xff] %vm3062, %v4408
  %4620 = vst.msk [vmem:[%s4594 + $0x190] sm:$0xff] %vm3062, %v4409
  %4621 = vst.msk [vmem:[%s4594 + $0x1a8] sm:$0xff] %vm3062, %v4410
  %4622 = vst.msk [vmem:[%s4594 + $0x1b0] sm:$0xff] %vm3062, %v4411
  %4623 = vst.msk [vmem:[%s4594 + $0x1c8] sm:$0xff] %vm3062, %v4412
  %4624 = vst.msk [vmem:[%s4594 + $0x1d0] sm:$0xff] %vm3062, %v4413
  %4625 = vst.msk [vmem:[%s4594 + $0x1e8] sm:$0xff] %vm3062, %v4414
  %4626 = vst.msk [vmem:[%s4594 + $0x1f0] sm:$0xff] %vm3062, %v4415
  %4627 = vst.msk [vmem:[%s4594 + $0x248] sm:$0xff] %vm3062, %v4416
  %4628 = vst.msk [vmem:[%s4594 + $0x250] sm:$0xff] %vm3062, %v4417
  %4629 = vst.msk [vmem:[%s4594 + $0x268] sm:$0xff] %vm3062, %v4418
  %4630 = vst.msk [vmem:[%s4594 + $0x270] sm:$0xff] %vm3062, %v4419
  %4631 = vst.msk [vmem:[%s4594 + $0x288] sm:$0xff] %vm3062, %v4420
  %4632 = vst.msk [vmem:[%s4594 + $0x290] sm:$0xff] %vm3062, %v4421
  %4633 = vst.msk [vmem:[%s4594 + $0x2a8] sm:$0xff] %vm3062, %v4422
  %4634 = vst.msk [vmem:[%s4594 + $0x2b0] sm:$0xff] %vm3062, %v4423
  %4635 = vst.msk [vmem:[%s4594 + $0x2c8] sm:$0xff] %vm3062, %v4424
  %4636 = vst.msk [vmem:[%s4594 + $0x2d0] sm:$0xff] %vm3062, %v4425
  %4637 = vst.msk [vmem:[%s4594 + $0x2e8] sm:$0xff] %vm3062, %v4426
  %4638 = vst.msk [vmem:[%s4594 + $0x2f0] sm:$0xff] %vm3062, %v4427
  %4639 = vst.msk [vmem:[%s4594 + $0x308] sm:$0xff] %vm3062, %v4428
  %4640 = vst.msk [vmem:[%s4594 + $0x310] sm:$0xff] %vm3062, %v4429
  %4641 = vst.msk [vmem:[%s4594 + $0x328] sm:$0xff] %vm3062, %v4430
  %4642 = vst.msk [vmem:[%s4594 + $0x330] sm:$0xff] %vm3062, %v4431
  %4643 = vst.msk [vmem:[%s4594 + $0x348] sm:$0xff] %vm3062, %v4432
  %4644 = vst.msk [vmem:[%s4594 + $0x350] sm:$0xff] %vm3062, %v4433
  %4645 = vst.msk [vmem:[%s4594 + $0x368] sm:$0xff] %vm3062, %v4434
  %4646 = vst.msk [vmem:[%s4594 + $0x370] sm:$0xff] %vm3062, %v4435
  %4647 = vst.msk [vmem:[%s4594 + $0x388] sm:$0xff] %vm3062, %v4436
  %4648 = vst.msk [vmem:[%s4594 + $0x390] sm:$0xff] %vm3062, %v4437
  %4649 = vst.msk [vmem:[%s4594 + $0x3a8] sm:$0xff] %vm3062, %v4438
  %4650 = vst.msk [vmem:[%s4594 + $0x3b0] sm:$0xff] %vm3062, %v4439
  %4651 = vst.msk [vmem:[%s4594 + $0x3c8] sm:$0xff] %vm3062, %v4440
  %4652 = vst.msk [vmem:[%s4594 + $0x3d0] sm:$0xff] %vm3062, %v4441
  %4653 = vst.msk [vmem:[%s4594 + $0x3e8] sm:$0xff] %vm3062, %v4442
  %4654 = vst.msk [vmem:[%s4594 + $0x3f0] sm:$0xff] %vm3062, %v4443
  %4655 = vst.msk [vmem:[%s4594 + $0x408] sm:$0xff] %vm3062, %v4444
  %4656 = vst.msk [vmem:[%s4594 + $0x410] sm:$0xff] %vm3062, %v4445
  %4657 = vst.msk [vmem:[%s4594 + $0x428] sm:$0xff] %vm3062, %v4446
  %4658 = vst.msk [vmem:[%s4594 + $0x430] sm:$0xff] %vm3062, %v4447
  %v4659 = vld [vmem:[#allocation3 + $0x7] sm:$0xff]
  %v4660 = vld [vmem:[#allocation3 + $0xf] sm:$0xff]
  %v4661 = vld [vmem:[#allocation3 + $0x27] sm:$0xff]
  %v4662 = vld [vmem:[#allocation3 + $0x2f] sm:$0xff]
  %v4663 = vld [vmem:[#allocation3 + $0x47] sm:$0xff]
  %v4664 = vld [vmem:[#allocation3 + $0x4f] sm:$0xff]
  %v4665 = vld [vmem:[#allocation3 + $0x67] sm:$0xff]
  %v4666 = vld [vmem:[#allocation3 + $0x6f] sm:$0xff]
  %v4667 = vld [vmem:[#allocation3 + $0x87] sm:$0xff]
  %v4668 = vld [vmem:[#allocation3 + $0x8f] sm:$0xff]
  %v4669 = vld [vmem:[#allocation3 + $0xa7] sm:$0xff]
  %v4670 = vld [vmem:[#allocation3 + $0xaf] sm:$0xff]
  %v4671 = vld [vmem:[#allocation3 + $0xc7] sm:$0xff]
  %v4672 = vld [vmem:[#allocation3 + $0xcf] sm:$0xff]
  %v4673 = vld [vmem:[#allocation3 + $0xe7] sm:$0xff]
  %v4674 = vld [vmem:[#allocation3 + $0xef] sm:$0xff]
  %v4675 = vld [vmem:[#allocation3 + $0x107] sm:$0xff]
  %v4676 = vld [vmem:[#allocation3 + $0x10f] sm:$0xff]
  %v4677 = vld [vmem:[#allocation3 + $0x127] sm:$0xff]
  %v4678 = vld [vmem:[#allocation3 + $0x12f] sm:$0xff]
  %v4679 = vld [vmem:[#allocation3 + $0x147] sm:$0xff]
  %v4680 = vld [vmem:[#allocation3 + $0x14f] sm:$0xff]
  %v4681 = vld [vmem:[#allocation3 + $0x167] sm:$0xff]
  %v4682 = vld [vmem:[#allocation3 + $0x16f] sm:$0xff]
  %v4683 = vld [vmem:[#allocation3 + $0x187] sm:$0xff]
  %v4684 = vld [vmem:[#allocation3 + $0x18f] sm:$0xff]
  %v4685 = vld [vmem:[#allocation3 + $0x1a7] sm:$0xff]
  %v4686 = vld [vmem:[#allocation3 + $0x1af] sm:$0xff]
  %v4687 = vld [vmem:[#allocation3 + $0x1c7] sm:$0xff]
  %v4688 = vld [vmem:[#allocation3 + $0x1cf] sm:$0xff]
  %v4689 = vld [vmem:[#allocation3 + $0x1e7] sm:$0xff]
  %v4690 = vld [vmem:[#allocation3 + $0x1ef] sm:$0xff]
  %v4691 = vld [vmem:[#allocation3 + $0x247] sm:$0xff]
  %v4692 = vld [vmem:[#allocation3 + $0x24f] sm:$0xff]
  %v4693 = vld [vmem:[#allocation3 + $0x267] sm:$0xff]
  %v4694 = vld [vmem:[#allocation3 + $0x26f] sm:$0xff]
  %v4695 = vld [vmem:[#allocation3 + $0x287] sm:$0xff]
  %v4696 = vld [vmem:[#allocation3 + $0x28f] sm:$0xff]
  %v4697 = vld [vmem:[#allocation3 + $0x2a7] sm:$0xff]
  %v4698 = vld [vmem:[#allocation3 + $0x2af] sm:$0xff]
  %v4699 = vld [vmem:[#allocation3 + $0x2c7] sm:$0xff]
  %v4700 = vld [vmem:[#allocation3 + $0x2cf] sm:$0xff]
  %v4701 = vld [vmem:[#allocation3 + $0x2e7] sm:$0xff]
  %v4702 = vld [vmem:[#allocation3 + $0x2ef] sm:$0xff]
  %v4703 = vld [vmem:[#allocation3 + $0x307] sm:$0xff]
  %v4704 = vld [vmem:[#allocation3 + $0x30f] sm:$0xff]
  %v4705 = vld [vmem:[#allocation3 + $0x327] sm:$0xff]
  %v4706 = vld [vmem:[#allocation3 + $0x32f] sm:$0xff]
  %v4707 = vld [vmem:[#allocation3 + $0x347] sm:$0xff]
  %v4708 = vld [vmem:[#allocation3 + $0x34f] sm:$0xff]
  %v4709 = vld [vmem:[#allocation3 + $0x367] sm:$0xff]
  %v4710 = vld [vmem:[#allocation3 + $0x36f] sm:$0xff]
  %v4711 = vld [vmem:[#allocation3 + $0x387] sm:$0xff]
  %v4712 = vld [vmem:[#allocation3 + $0x38f] sm:$0xff]
  %v4713 = vld [vmem:[#allocation3 + $0x3a7] sm:$0xff]
  %v4714 = vld [vmem:[#allocation3 + $0x3af] sm:$0xff]
  %v4715 = vld [vmem:[#allocation3 + $0x3c7] sm:$0xff]
  %v4716 = vld [vmem:[#allocation3 + $0x3cf] sm:$0xff]
  %v4717 = vld [vmem:[#allocation3 + $0x3e7] sm:$0xff]
  %v4718 = vld [vmem:[#allocation3 + $0x3ef] sm:$0xff]
  %v4719 = vld [vmem:[#allocation3 + $0x407] sm:$0xff]
  %v4720 = vld [vmem:[#allocation3 + $0x40f] sm:$0xff]
  %v4721 = vld [vmem:[#allocation3 + $0x427] sm:$0xff]
  %v4722 = vld [vmem:[#allocation3 + $0x42f] sm:$0xff]
  %v4723 = vld [vmem:[#allocation3 + $0x8] sm:$0xff]
  %v4724 = vld [vmem:[#allocation3 + $0x10] sm:$0xff]
  %v4725 = vld [vmem:[#allocation3 + $0x28] sm:$0xff]
  %v4726 = vld [vmem:[#allocation3 + $0x30] sm:$0xff]
  %v4727 = vld [vmem:[#allocation3 + $0x48] sm:$0xff]
  %v4728 = vld [vmem:[#allocation3 + $0x50] sm:$0xff]
  %v4729 = vld [vmem:[#allocation3 + $0x68] sm:$0xff]
  %v4730 = vld [vmem:[#allocation3 + $0x70] sm:$0xff]
  %v4731 = vld [vmem:[#allocation3 + $0x88] sm:$0xff]
  %v4732 = vld [vmem:[#allocation3 + $0x90] sm:$0xff]
  %v4733 = vld [vmem:[#allocation3 + $0xa8] sm:$0xff]
  %v4734 = vld [vmem:[#allocation3 + $0xb0] sm:$0xff]
  %v4735 = vld [vmem:[#allocation3 + $0xc8] sm:$0xff]
  %v4736 = vld [vmem:[#allocation3 + $0xd0] sm:$0xff]
  %v4737 = vld [vmem:[#allocation3 + $0xe8] sm:$0xff]
  %v4738 = vld [vmem:[#allocation3 + $0xf0] sm:$0xff]
  %v4739 = vld [vmem:[#allocation3 + $0x108] sm:$0xff]
  %v4740 = vld [vmem:[#allocation3 + $0x110] sm:$0xff]
  %v4741 = vld [vmem:[#allocation3 + $0x128] sm:$0xff]
  %v4742 = vld [vmem:[#allocation3 + $0x130] sm:$0xff]
  %v4743 = vld [vmem:[#allocation3 + $0x148] sm:$0xff]
  %v4744 = vld [vmem:[#allocation3 + $0x150] sm:$0xff]
  %v4745 = vld [vmem:[#allocation3 + $0x168] sm:$0xff]
  %v4746 = vld [vmem:[#allocation3 + $0x170] sm:$0xff]
  %v4747 = vld [vmem:[#allocation3 + $0x188] sm:$0xff]
  %v4748 = vld [vmem:[#allocation3 + $0x190] sm:$0xff]
  %v4749 = vld [vmem:[#allocation3 + $0x1a8] sm:$0xff]
  %v4750 = vld [vmem:[#allocation3 + $0x1b0] sm:$0xff]
  %v4751 = vld [vmem:[#allocation3 + $0x1c8] sm:$0xff]
  %v4752 = vld [vmem:[#allocation3 + $0x1d0] sm:$0xff]
  %v4753 = vld [vmem:[#allocation3 + $0x1e8] sm:$0xff]
  %v4754 = vld [vmem:[#allocation3 + $0x1f0] sm:$0xff]
  %v4755 = vld [vmem:[#allocation3 + $0x248] sm:$0xff]
  %v4756 = vld [vmem:[#allocation3 + $0x250] sm:$0xff]
  %v4757 = vld [vmem:[#allocation3 + $0x268] sm:$0xff]
  %v4758 = vld [vmem:[#allocation3 + $0x270] sm:$0xff]
  %v4759 = vld [vmem:[#allocation3 + $0x288] sm:$0xff]
  %v4760 = vld [vmem:[#allocation3 + $0x290] sm:$0xff]
  %v4761 = vld [vmem:[#allocation3 + $0x2a8] sm:$0xff]
  %v4762 = vld [vmem:[#allocation3 + $0x2b0] sm:$0xff]
  %v4763 = vld [vmem:[#allocation3 + $0x2c8] sm:$0xff]
  %v4764 = vld [vmem:[#allocation3 + $0x2d0] sm:$0xff]
  %v4765 = vld [vmem:[#allocation3 + $0x2e8] sm:$0xff]
  %v4766 = vld [vmem:[#allocation3 + $0x2f0] sm:$0xff]
  %v4767 = vld [vmem:[#allocation3 + $0x308] sm:$0xff]
  %v4768 = vld [vmem:[#allocation3 + $0x310] sm:$0xff]
  %v4769 = vld [vmem:[#allocation3 + $0x328] sm:$0xff]
  %v4770 = vld [vmem:[#allocation3 + $0x330] sm:$0xff]
  %v4771 = vld [vmem:[#allocation3 + $0x348] sm:$0xff]
  %v4772 = vld [vmem:[#allocation3 + $0x350] sm:$0xff]
  %v4773 = vld [vmem:[#allocation3 + $0x368] sm:$0xff]
  %v4774 = vld [vmem:[#allocation3 + $0x370] sm:$0xff]
  %v4775 = vld [vmem:[#allocation3 + $0x388] sm:$0xff]
  %v4776 = vld [vmem:[#allocation3 + $0x390] sm:$0xff]
  %v4777 = vld [vmem:[#allocation3 + $0x3a8] sm:$0xff]
  %v4778 = vld [vmem:[#allocation3 + $0x3b0] sm:$0xff]
  %v4779 = vld [vmem:[#allocation3 + $0x3c8] sm:$0xff]
  %v4780 = vld [vmem:[#allocation3 + $0x3d0] sm:$0xff]
  %v4781 = vld [vmem:[#allocation3 + $0x3e8] sm:$0xff]
  %v4782 = vld [vmem:[#allocation3 + $0x3f0] sm:$0xff]
  %v4783 = vld [vmem:[#allocation3 + $0x408] sm:$0xff]
  %v4784 = vld [vmem:[#allocation3 + $0x410] sm:$0xff]
  %v4785 = vld [vmem:[#allocation3 + $0x428] sm:$0xff]
  %v4786 = vld [vmem:[#allocation3 + $0x430] sm:$0xff]
  %v4787 = vld [vmem:[#allocation3 + $0x9] sm:$0xff]
  %v4788 = vld [vmem:[#allocation3 + $0x11] sm:$0xff]
  %v4789 = vld [vmem:[#allocation3 + $0x29] sm:$0xff]
  %v4790 = vld [vmem:[#allocation3 + $0x31] sm:$0xff]
  %v4791 = vld [vmem:[#allocation3 + $0x49] sm:$0xff]
  %v4792 = vld [vmem:[#allocation3 + $0x51] sm:$0xff]
  %v4793 = vld [vmem:[#allocation3 + $0x69] sm:$0xff]
  %v4794 = vld [vmem:[#allocation3 + $0x71] sm:$0xff]
  %v4795 = vld [vmem:[#allocation3 + $0x89] sm:$0xff]
  %v4796 = vld [vmem:[#allocation3 + $0x91] sm:$0xff]
  %v4797 = vld [vmem:[#allocation3 + $0xa9] sm:$0xff]
  %v4798 = vld [vmem:[#allocation3 + $0xb1] sm:$0xff]
  %v4799 = vld [vmem:[#allocation3 + $0xc9] sm:$0xff]
  %v4800 = vld [vmem:[#allocation3 + $0xd1] sm:$0xff]
  %v4801 = vld [vmem:[#allocation3 + $0xe9] sm:$0xff]
  %v4802 = vld [vmem:[#allocation3 + $0xf1] sm:$0xff]
  %v4803 = vld [vmem:[#allocation3 + $0x109] sm:$0xff]
  %v4804 = vld [vmem:[#allocation3 + $0x111] sm:$0xff]
  %v4805 = vld [vmem:[#allocation3 + $0x129] sm:$0xff]
  %v4806 = vld [vmem:[#allocation3 + $0x131] sm:$0xff]
  %v4807 = vld [vmem:[#allocation3 + $0x149] sm:$0xff]
  %v4808 = vld [vmem:[#allocation3 + $0x151] sm:$0xff]
  %v4809 = vld [vmem:[#allocation3 + $0x169] sm:$0xff]
  %v4810 = vld [vmem:[#allocation3 + $0x171] sm:$0xff]
  %v4811 = vld [vmem:[#allocation3 + $0x189] sm:$0xff]
  %v4812 = vld [vmem:[#allocation3 + $0x191] sm:$0xff]
  %v4813 = vld [vmem:[#allocation3 + $0x1a9] sm:$0xff]
  %v4814 = vld [vmem:[#allocation3 + $0x1b1] sm:$0xff]
  %v4815 = vld [vmem:[#allocation3 + $0x1c9] sm:$0xff]
  %v4816 = vld [vmem:[#allocation3 + $0x1d1] sm:$0xff]
  %v4817 = vld [vmem:[#allocation3 + $0x1e9] sm:$0xff]
  %v4818 = vld [vmem:[#allocation3 + $0x1f1] sm:$0xff]
  %v4819 = vld [vmem:[#allocation3 + $0x249] sm:$0xff]
  %v4820 = vld [vmem:[#allocation3 + $0x251] sm:$0xff]
  %v4821 = vld [vmem:[#allocation3 + $0x269] sm:$0xff]
  %v4822 = vld [vmem:[#allocation3 + $0x271] sm:$0xff]
  %v4823 = vld [vmem:[#allocation3 + $0x289] sm:$0xff]
  %v4824 = vld [vmem:[#allocation3 + $0x291] sm:$0xff]
  %v4825 = vld [vmem:[#allocation3 + $0x2a9] sm:$0xff]
  %v4826 = vld [vmem:[#allocation3 + $0x2b1] sm:$0xff]
  %v4827 = vld [vmem:[#allocation3 + $0x2c9] sm:$0xff]
  %v4828 = vld [vmem:[#allocation3 + $0x2d1] sm:$0xff]
  %v4829 = vld [vmem:[#allocation3 + $0x2e9] sm:$0xff]
  %v4830 = vld [vmem:[#allocation3 + $0x2f1] sm:$0xff]
  %v4831 = vld [vmem:[#allocation3 + $0x309] sm:$0xff]
  %v4832 = vld [vmem:[#allocation3 + $0x311] sm:$0xff]
  %v4833 = vld [vmem:[#allocation3 + $0x329] sm:$0xff]
  %v4834 = vld [vmem:[#allocation3 + $0x331] sm:$0xff]
  %v4835 = vld [vmem:[#allocation3 + $0x349] sm:$0xff]
  %v4836 = vld [vmem:[#allocation3 + $0x351] sm:$0xff]
  %v4837 = vld [vmem:[#allocation3 + $0x369] sm:$0xff]
  %v4838 = vld [vmem:[#allocation3 + $0x371] sm:$0xff]
  %v4839 = vld [vmem:[#allocation3 + $0x389] sm:$0xff]
  %v4840 = vld [vmem:[#allocation3 + $0x391] sm:$0xff]
  %v4841 = vld [vmem:[#allocation3 + $0x3a9] sm:$0xff]
  %v4842 = vld [vmem:[#allocation3 + $0x3b1] sm:$0xff]
  %v4843 = vld [vmem:[#allocation3 + $0x3c9] sm:$0xff]
  %v4844 = vld [vmem:[#allocation3 + $0x3d1] sm:$0xff]
  %v4845 = vld [vmem:[#allocation3 + $0x3e9] sm:$0xff]
  %v4846 = vld [vmem:[#allocation3 + $0x3f1] sm:$0xff]
  %v4847 = vld [vmem:[#allocation3 + $0x409] sm:$0xff]
  %v4848 = vld [vmem:[#allocation3 + $0x411] sm:$0xff]
  %v4849 = vld [vmem:[#allocation3 + $0x429] sm:$0xff]
  %v4850 = vld [vmem:[#allocation3 + $0x431] sm:$0xff]
  %v4851 = vld [vmem:[%s4594 + $0x7] sm:$0xff]
  %v4852 = vld [vmem:[%s4594 + $0xf] sm:$0xff]
  %v4853 = vld [vmem:[%s4594 + $0x27] sm:$0xff]
  %v4854 = vld [vmem:[%s4594 + $0x2f] sm:$0xff]
  %v4855 = vld [vmem:[%s4594 + $0x47] sm:$0xff]
  %v4856 = vld [vmem:[%s4594 + $0x4f] sm:$0xff]
  %v4857 = vld [vmem:[%s4594 + $0x67] sm:$0xff]
  %v4858 = vld [vmem:[%s4594 + $0x6f] sm:$0xff]
  %v4859 = vld [vmem:[%s4594 + $0x87] sm:$0xff]
  %v4860 = vld [vmem:[%s4594 + $0x8f] sm:$0xff]
  %v4861 = vld [vmem:[%s4594 + $0xa7] sm:$0xff]
  %v4862 = vld [vmem:[%s4594 + $0xaf] sm:$0xff]
  %v4863 = vld [vmem:[%s4594 + $0xc7] sm:$0xff]
  %v4864 = vld [vmem:[%s4594 + $0xcf] sm:$0xff]
  %v4865 = vld [vmem:[%s4594 + $0xe7] sm:$0xff]
  %v4866 = vld [vmem:[%s4594 + $0xef] sm:$0xff]
  %v4867 = vld [vmem:[%s4594 + $0x107] sm:$0xff]
  %v4868 = vld [vmem:[%s4594 + $0x10f] sm:$0xff]
  %v4869 = vld [vmem:[%s4594 + $0x127] sm:$0xff]
  %v4870 = vld [vmem:[%s4594 + $0x12f] sm:$0xff]
  %v4871 = vld [vmem:[%s4594 + $0x147] sm:$0xff]
  %v4872 = vld [vmem:[%s4594 + $0x14f] sm:$0xff]
  %v4873 = vld [vmem:[%s4594 + $0x167] sm:$0xff]
  %v4874 = vld [vmem:[%s4594 + $0x16f] sm:$0xff]
  %v4875 = vld [vmem:[%s4594 + $0x187] sm:$0xff]
  %v4876 = vld [vmem:[%s4594 + $0x18f] sm:$0xff]
  %v4877 = vld [vmem:[%s4594 + $0x1a7] sm:$0xff]
  %v4878 = vld [vmem:[%s4594 + $0x1af] sm:$0xff]
  %v4879 = vld [vmem:[%s4594 + $0x1c7] sm:$0xff]
  %v4880 = vld [vmem:[%s4594 + $0x1cf] sm:$0xff]
  %v4881 = vld [vmem:[%s4594 + $0x1e7] sm:$0xff]
  %v4882 = vld [vmem:[%s4594 + $0x1ef] sm:$0xff]
  %v4883 = vld [vmem:[%s4594 + $0x247] sm:$0xff]
  %v4884 = vld [vmem:[%s4594 + $0x24f] sm:$0xff]
  %v4885 = vld [vmem:[%s4594 + $0x267] sm:$0xff]
  %v4886 = vld [vmem:[%s4594 + $0x26f] sm:$0xff]
  %v4887 = vld [vmem:[%s4594 + $0x287] sm:$0xff]
  %v4888 = vld [vmem:[%s4594 + $0x28f] sm:$0xff]
  %v4889 = vld [vmem:[%s4594 + $0x2a7] sm:$0xff]
  %v4890 = vld [vmem:[%s4594 + $0x2af] sm:$0xff]
  %v4891 = vld [vmem:[%s4594 + $0x2c7] sm:$0xff]
  %v4892 = vld [vmem:[%s4594 + $0x2cf] sm:$0xff]
  %v4893 = vld [vmem:[%s4594 + $0x2e7] sm:$0xff]
  %v4894 = vld [vmem:[%s4594 + $0x2ef] sm:$0xff]
  %v4895 = vld [vmem:[%s4594 + $0x307] sm:$0xff]
  %v4896 = vld [vmem:[%s4594 + $0x30f] sm:$0xff]
  %v4897 = vld [vmem:[%s4594 + $0x327] sm:$0xff]
  %v4898 = vld [vmem:[%s4594 + $0x32f] sm:$0xff]
  %v4899 = vld [vmem:[%s4594 + $0x347] sm:$0xff]
  %v4900 = vld [vmem:[%s4594 + $0x34f] sm:$0xff]
  %v4901 = vld [vmem:[%s4594 + $0x367] sm:$0xff]
  %v4902 = vld [vmem:[%s4594 + $0x36f] sm:$0xff]
  %v4903 = vld [vmem:[%s4594 + $0x387] sm:$0xff]
  %v4904 = vld [vmem:[%s4594 + $0x38f] sm:$0xff]
  %v4905 = vld [vmem:[%s4594 + $0x3a7] sm:$0xff]
  %v4906 = vld [vmem:[%s4594 + $0x3af] sm:$0xff]
  %v4907 = vld [vmem:[%s4594 + $0x3c7] sm:$0xff]
  %v4908 = vld [vmem:[%s4594 + $0x3cf] sm:$0xff]
  %v4909 = vld [vmem:[%s4594 + $0x3e7] sm:$0xff]
  %v4910 = vld [vmem:[%s4594 + $0x3ef] sm:$0xff]
  %v4911 = vld [vmem:[%s4594 + $0x407] sm:$0xff]
  %v4912 = vld [vmem:[%s4594 + $0x40f] sm:$0xff]
  %v4913 = vld [vmem:[%s4594 + $0x427] sm:$0xff]
  %v4914 = vld [vmem:[%s4594 + $0x42f] sm:$0xff]
  %v4915 = vld [vmem:[%s4594 + $0x8] sm:$0xff]
  %v4916 = vld [vmem:[%s4594 + $0x10] sm:$0xff]
  %v4917 = vld [vmem:[%s4594 + $0x28] sm:$0xff]
  %v4918 = vld [vmem:[%s4594 + $0x30] sm:$0xff]
  %v4919 = vld [vmem:[%s4594 + $0x48] sm:$0xff]
  %v4920 = vld [vmem:[%s4594 + $0x50] sm:$0xff]
  %v4921 = vld [vmem:[%s4594 + $0x68] sm:$0xff]
  %v4922 = vld [vmem:[%s4594 + $0x70] sm:$0xff]
  %v4923 = vld [vmem:[%s4594 + $0x88] sm:$0xff]
  %v4924 = vld [vmem:[%s4594 + $0x90] sm:$0xff]
  %v4925 = vld [vmem:[%s4594 + $0xa8] sm:$0xff]
  %v4926 = vld [vmem:[%s4594 + $0xb0] sm:$0xff]
  %v4927 = vld [vmem:[%s4594 + $0xc8] sm:$0xff]
  %v4928 = vld [vmem:[%s4594 + $0xd0] sm:$0xff]
  %v4929 = vld [vmem:[%s4594 + $0xe8] sm:$0xff]
  %v4930 = vld [vmem:[%s4594 + $0xf0] sm:$0xff]
  %v4931 = vld [vmem:[%s4594 + $0x108] sm:$0xff]
  %v4932 = vld [vmem:[%s4594 + $0x110] sm:$0xff]
  %v4933 = vld [vmem:[%s4594 + $0x128] sm:$0xff]
  %v4934 = vld [vmem:[%s4594 + $0x130] sm:$0xff]
  %v4935 = vld [vmem:[%s4594 + $0x148] sm:$0xff]
  %v4936 = vld [vmem:[%s4594 + $0x150] sm:$0xff]
  %v4937 = vld [vmem:[%s4594 + $0x168] sm:$0xff]
  %v4938 = vld [vmem:[%s4594 + $0x170] sm:$0xff]
  %v4939 = vld [vmem:[%s4594 + $0x188] sm:$0xff]
  %v4940 = vld [vmem:[%s4594 + $0x190] sm:$0xff]
  %v4941 = vld [vmem:[%s4594 + $0x1a8] sm:$0xff]
  %v4942 = vld [vmem:[%s4594 + $0x1b0] sm:$0xff]
  %v4943 = vld [vmem:[%s4594 + $0x1c8] sm:$0xff]
  %v4944 = vld [vmem:[%s4594 + $0x1d0] sm:$0xff]
  %v4945 = vld [vmem:[%s4594 + $0x1e8] sm:$0xff]
  %v4946 = vld [vmem:[%s4594 + $0x1f0] sm:$0xff]
  %v4947 = vld [vmem:[%s4594 + $0x248] sm:$0xff]
  %v4948 = vld [vmem:[%s4594 + $0x250] sm:$0xff]
  %v4949 = vld [vmem:[%s4594 + $0x268] sm:$0xff]
  %v4950 = vld [vmem:[%s4594 + $0x270] sm:$0xff]
  %v4951 = vld [vmem:[%s4594 + $0x288] sm:$0xff]
  %v4952 = vld [vmem:[%s4594 + $0x290] sm:$0xff]
  %v4953 = vld [vmem:[%s4594 + $0x2a8] sm:$0xff]
  %v4954 = vld [vmem:[%s4594 + $0x2b0] sm:$0xff]
  %v4955 = vld [vmem:[%s4594 + $0x2c8] sm:$0xff]
  %v4956 = vld [vmem:[%s4594 + $0x2d0] sm:$0xff]
  %v4957 = vld [vmem:[%s4594 + $0x2e8] sm:$0xff]
  %v4958 = vld [vmem:[%s4594 + $0x2f0] sm:$0xff]
  %v4959 = vld [vmem:[%s4594 + $0x308] sm:$0xff]
  %v4960 = vld [vmem:[%s4594 + $0x310] sm:$0xff]
  %v4961 = vld [vmem:[%s4594 + $0x328] sm:$0xff]
  %v4962 = vld [vmem:[%s4594 + $0x330] sm:$0xff]
  %v4963 = vld [vmem:[%s4594 + $0x348] sm:$0xff]
  %v4964 = vld [vmem:[%s4594 + $0x350] sm:$0xff]
  %v4965 = vld [vmem:[%s4594 + $0x368] sm:$0xff]
  %v4966 = vld [vmem:[%s4594 + $0x370] sm:$0xff]
  %v4967 = vld [vmem:[%s4594 + $0x388] sm:$0xff]
  %v4968 = vld [vmem:[%s4594 + $0x390] sm:$0xff]
  %v4969 = vld [vmem:[%s4594 + $0x3a8] sm:$0xff]
  %v4970 = vld [vmem:[%s4594 + $0x3b0] sm:$0xff]
  %v4971 = vld [vmem:[%s4594 + $0x3c8] sm:$0xff]
  %v4972 = vld [vmem:[%s4594 + $0x3d0] sm:$0xff]
  %v4973 = vld [vmem:[%s4594 + $0x3e8] sm:$0xff]
  %v4974 = vld [vmem:[%s4594 + $0x3f0] sm:$0xff]
  %v4975 = vld [vmem:[%s4594 + $0x408] sm:$0xff]
  %v4976 = vld [vmem:[%s4594 + $0x410] sm:$0xff]
  %v4977 = vld [vmem:[%s4594 + $0x428] sm:$0xff]
  %v4978 = vld [vmem:[%s4594 + $0x430] sm:$0xff]
  %v4979 = vld [vmem:[%s4594 + $0x9] sm:$0xff]
  %v4980 = vld [vmem:[%s4594 + $0x11] sm:$0xff]
  %v4981 = vld [vmem:[%s4594 + $0x29] sm:$0xff]
  %v4982 = vld [vmem:[%s4594 + $0x31] sm:$0xff]
  %v4983 = vld [vmem:[%s4594 + $0x49] sm:$0xff]
  %v4984 = vld [vmem:[%s4594 + $0x51] sm:$0xff]
  %v4985 = vld [vmem:[%s4594 + $0x69] sm:$0xff]
  %v4986 = vld [vmem:[%s4594 + $0x71] sm:$0xff]
  %v4987 = vld [vmem:[%s4594 + $0x89] sm:$0xff]
  %v4988 = vld [vmem:[%s4594 + $0x91] sm:$0xff]
  %v4989 = vld [vmem:[%s4594 + $0xa9] sm:$0xff]
  %v4990 = vld [vmem:[%s4594 + $0xb1] sm:$0xff]
  %v4991 = vld [vmem:[%s4594 + $0xc9] sm:$0xff]
  %v4992 = vld [vmem:[%s4594 + $0xd1] sm:$0xff]
  %v4993 = vld [vmem:[%s4594 + $0xe9] sm:$0xff]
  %v4994 = vld [vmem:[%s4594 + $0xf1] sm:$0xff]
  %v4995 = vld [vmem:[%s4594 + $0x109] sm:$0xff]
  %v4996 = vld [vmem:[%s4594 + $0x111] sm:$0xff]
  %v4997 = vld [vmem:[%s4594 + $0x129] sm:$0xff]
  %v4998 = vld [vmem:[%s4594 + $0x131] sm:$0xff]
  %v4999 = vld [vmem:[%s4594 + $0x149] sm:$0xff]
  %v5000 = vld [vmem:[%s4594 + $0x151] sm:$0xff]
  %v5001 = vld [vmem:[%s4594 + $0x169] sm:$0xff]
  %v5002 = vld [vmem:[%s4594 + $0x171] sm:$0xff]
  %v5003 = vld [vmem:[%s4594 + $0x189] sm:$0xff]
  %v5004 = vld [vmem:[%s4594 + $0x191] sm:$0xff]
  %v5005 = vld [vmem:[%s4594 + $0x1a9] sm:$0xff]
  %v5006 = vld [vmem:[%s4594 + $0x1b1] sm:$0xff]
  %v5007 = vld [vmem:[%s4594 + $0x1c9] sm:$0xff]
  %v5008 = vld [vmem:[%s4594 + $0x1d1] sm:$0xff]
  %v5009 = vld [vmem:[%s4594 + $0x1e9] sm:$0xff]
  %v5010 = vld [vmem:[%s4594 + $0x1f1] sm:$0xff]
  %v5011 = vld [vmem:[%s4594 + $0x249] sm:$0xff]
  %v5012 = vld [vmem:[%s4594 + $0x251] sm:$0xff]
  %v5013 = vld [vmem:[%s4594 + $0x269] sm:$0xff]
  %v5014 = vld [vmem:[%s4594 + $0x271] sm:$0xff]
  %v5015 = vld [vmem:[%s4594 + $0x289] sm:$0xff]
  %v5016 = vld [vmem:[%s4594 + $0x291] sm:$0xff]
  %v5017 = vld [vmem:[%s4594 + $0x2a9] sm:$0xff]
  %v5018 = vld [vmem:[%s4594 + $0x2b1] sm:$0xff]
  %v5019 = vld [vmem:[%s4594 + $0x2c9] sm:$0xff]
  %v5020 = vld [vmem:[%s4594 + $0x2d1] sm:$0xff]
  %v5021 = vld [vmem:[%s4594 + $0x2e9] sm:$0xff]
  %v5022 = vld [vmem:[%s4594 + $0x2f1] sm:$0xff]
  %v5023 = vld [vmem:[%s4594 + $0x309] sm:$0xff]
  %v5024 = vld [vmem:[%s4594 + $0x311] sm:$0xff]
  %v5025 = vld [vmem:[%s4594 + $0x329] sm:$0xff]
  %v5026 = vld [vmem:[%s4594 + $0x331] sm:$0xff]
  %v5027 = vld [vmem:[%s4594 + $0x349] sm:$0xff]
  %v5028 = vld [vmem:[%s4594 + $0x351] sm:$0xff]
  %v5029 = vld [vmem:[%s4594 + $0x369] sm:$0xff]
  %v5030 = vld [vmem:[%s4594 + $0x371] sm:$0xff]
  %v5031 = vld [vmem:[%s4594 + $0x389] sm:$0xff]
  %v5032 = vld [vmem:[%s4594 + $0x391] sm:$0xff]
  %v5033 = vld [vmem:[%s4594 + $0x3a9] sm:$0xff]
  %v5034 = vld [vmem:[%s4594 + $0x3b1] sm:$0xff]
  %v5035 = vld [vmem:[%s4594 + $0x3c9] sm:$0xff]
  %v5036 = vld [vmem:[%s4594 + $0x3d1] sm:$0xff]
  %v5037 = vld [vmem:[%s4594 + $0x3e9] sm:$0xff]
  %v5038 = vld [vmem:[%s4594 + $0x3f1] sm:$0xff]
  %v5039 = vld [vmem:[%s4594 + $0x409] sm:$0xff]
  %v5040 = vld [vmem:[%s4594 + $0x411] sm:$0xff]
  %v5041 = vld [vmem:[%s4594 + $0x429] sm:$0xff]
  %v5042 = vld [vmem:[%s4594 + $0x431] sm:$0xff]
  %s5043 = scalar_lea.vmem [#allocation3], 64
  %v5044 = vld [vmem:[%s5043 + $0x7] sm:$0xff]
  %v5045 = vld [vmem:[%s5043 + $0xf] sm:$0xff]
  %v5046 = vld [vmem:[%s5043 + $0x27] sm:$0xff]
  %v5047 = vld [vmem:[%s5043 + $0x2f] sm:$0xff]
  %v5048 = vld [vmem:[%s5043 + $0x47] sm:$0xff]
  %v5049 = vld [vmem:[%s5043 + $0x4f] sm:$0xff]
  %v5050 = vld [vmem:[%s5043 + $0x67] sm:$0xff]
  %v5051 = vld [vmem:[%s5043 + $0x6f] sm:$0xff]
  %v5052 = vld [vmem:[%s5043 + $0x87] sm:$0xff]
  %v5053 = vld [vmem:[%s5043 + $0x8f] sm:$0xff]
  %v5054 = vld [vmem:[%s5043 + $0xa7] sm:$0xff]
  %v5055 = vld [vmem:[%s5043 + $0xaf] sm:$0xff]
  %v5056 = vld [vmem:[%s5043 + $0xc7] sm:$0xff]
  %v5057 = vld [vmem:[%s5043 + $0xcf] sm:$0xff]
  %v5058 = vld [vmem:[%s5043 + $0xe7] sm:$0xff]
  %v5059 = vld [vmem:[%s5043 + $0xef] sm:$0xff]
  %v5060 = vld [vmem:[%s5043 + $0x107] sm:$0xff]
  %v5061 = vld [vmem:[%s5043 + $0x10f] sm:$0xff]
  %v5062 = vld [vmem:[%s5043 + $0x127] sm:$0xff]
  %v5063 = vld [vmem:[%s5043 + $0x12f] sm:$0xff]
  %v5064 = vld [vmem:[%s5043 + $0x147] sm:$0xff]
  %v5065 = vld [vmem:[%s5043 + $0x14f] sm:$0xff]
  %v5066 = vld [vmem:[%s5043 + $0x167] sm:$0xff]
  %v5067 = vld [vmem:[%s5043 + $0x16f] sm:$0xff]
  %v5068 = vld [vmem:[%s5043 + $0x187] sm:$0xff]
  %v5069 = vld [vmem:[%s5043 + $0x18f] sm:$0xff]
  %v5070 = vld [vmem:[%s5043 + $0x1a7] sm:$0xff]
  %v5071 = vld [vmem:[%s5043 + $0x1af] sm:$0xff]
  %v5072 = vld [vmem:[%s5043 + $0x1c7] sm:$0xff]
  %v5073 = vld [vmem:[%s5043 + $0x1cf] sm:$0xff]
  %v5074 = vld [vmem:[%s5043 + $0x1e7] sm:$0xff]
  %v5075 = vld [vmem:[%s5043 + $0x1ef] sm:$0xff]
  %v5076 = vld [vmem:[%s5043 + $0x247] sm:$0xff]
  %v5077 = vld [vmem:[%s5043 + $0x24f] sm:$0xff]
  %v5078 = vld [vmem:[%s5043 + $0x267] sm:$0xff]
  %v5079 = vld [vmem:[%s5043 + $0x26f] sm:$0xff]
  %v5080 = vld [vmem:[%s5043 + $0x287] sm:$0xff]
  %v5081 = vld [vmem:[%s5043 + $0x28f] sm:$0xff]
  %v5082 = vld [vmem:[%s5043 + $0x2a7] sm:$0xff]
  %v5083 = vld [vmem:[%s5043 + $0x2af] sm:$0xff]
  %v5084 = vld [vmem:[%s5043 + $0x2c7] sm:$0xff]
  %v5085 = vld [vmem:[%s5043 + $0x2cf] sm:$0xff]
  %v5086 = vld [vmem:[%s5043 + $0x2e7] sm:$0xff]
  %v5087 = vld [vmem:[%s5043 + $0x2ef] sm:$0xff]
  %v5088 = vld [vmem:[%s5043 + $0x307] sm:$0xff]
  %v5089 = vld [vmem:[%s5043 + $0x30f] sm:$0xff]
  %v5090 = vld [vmem:[%s5043 + $0x327] sm:$0xff]
  %v5091 = vld [vmem:[%s5043 + $0x32f] sm:$0xff]
  %v5092 = vld [vmem:[%s5043 + $0x347] sm:$0xff]
  %v5093 = vld [vmem:[%s5043 + $0x34f] sm:$0xff]
  %v5094 = vld [vmem:[%s5043 + $0x367] sm:$0xff]
  %v5095 = vld [vmem:[%s5043 + $0x36f] sm:$0xff]
  %v5096 = vld [vmem:[%s5043 + $0x387] sm:$0xff]
  %v5097 = vld [vmem:[%s5043 + $0x38f] sm:$0xff]
  %v5098 = vld [vmem:[%s5043 + $0x3a7] sm:$0xff]
  %v5099 = vld [vmem:[%s5043 + $0x3af] sm:$0xff]
  %v5100 = vld [vmem:[%s5043 + $0x3c7] sm:$0xff]
  %v5101 = vld [vmem:[%s5043 + $0x3cf] sm:$0xff]
  %v5102 = vld [vmem:[%s5043 + $0x3e7] sm:$0xff]
  %v5103 = vld [vmem:[%s5043 + $0x3ef] sm:$0xff]
  %v5104 = vld [vmem:[%s5043 + $0x407] sm:$0xff]
  %v5105 = vld [vmem:[%s5043 + $0x40f] sm:$0xff]
  %v5106 = vld [vmem:[%s5043 + $0x427] sm:$0xff]
  %v5107 = vld [vmem:[%s5043 + $0x42f] sm:$0xff]
  %v5108 = vld [vmem:[%s5043 + $0x8] sm:$0xff]
  %v5109 = vld [vmem:[%s5043 + $0x10] sm:$0xff]
  %v5110 = vld [vmem:[%s5043 + $0x28] sm:$0xff]
  %v5111 = vld [vmem:[%s5043 + $0x30] sm:$0xff]
  %v5112 = vld [vmem:[%s5043 + $0x48] sm:$0xff]
  %v5113 = vld [vmem:[%s5043 + $0x50] sm:$0xff]
  %v5114 = vld [vmem:[%s5043 + $0x68] sm:$0xff]
  %v5115 = vld [vmem:[%s5043 + $0x70] sm:$0xff]
  %v5116 = vld [vmem:[%s5043 + $0x88] sm:$0xff]
  %v5117 = vld [vmem:[%s5043 + $0x90] sm:$0xff]
  %v5118 = vld [vmem:[%s5043 + $0xa8] sm:$0xff]
  %v5119 = vld [vmem:[%s5043 + $0xb0] sm:$0xff]
  %v5120 = vld [vmem:[%s5043 + $0xc8] sm:$0xff]
  %v5121 = vld [vmem:[%s5043 + $0xd0] sm:$0xff]
  %v5122 = vld [vmem:[%s5043 + $0xe8] sm:$0xff]
  %v5123 = vld [vmem:[%s5043 + $0xf0] sm:$0xff]
  %v5124 = vld [vmem:[%s5043 + $0x108] sm:$0xff]
  %v5125 = vld [vmem:[%s5043 + $0x110] sm:$0xff]
  %v5126 = vld [vmem:[%s5043 + $0x128] sm:$0xff]
  %v5127 = vld [vmem:[%s5043 + $0x130] sm:$0xff]
  %v5128 = vld [vmem:[%s5043 + $0x148] sm:$0xff]
  %v5129 = vld [vmem:[%s5043 + $0x150] sm:$0xff]
  %v5130 = vld [vmem:[%s5043 + $0x168] sm:$0xff]
  %v5131 = vld [vmem:[%s5043 + $0x170] sm:$0xff]
  %v5132 = vld [vmem:[%s5043 + $0x188] sm:$0xff]
  %v5133 = vld [vmem:[%s5043 + $0x190] sm:$0xff]
  %v5134 = vld [vmem:[%s5043 + $0x1a8] sm:$0xff]
  %v5135 = vld [vmem:[%s5043 + $0x1b0] sm:$0xff]
  %v5136 = vld [vmem:[%s5043 + $0x1c8] sm:$0xff]
  %v5137 = vld [vmem:[%s5043 + $0x1d0] sm:$0xff]
  %v5138 = vld [vmem:[%s5043 + $0x1e8] sm:$0xff]
  %v5139 = vld [vmem:[%s5043 + $0x1f0] sm:$0xff]
  %v5140 = vld [vmem:[%s5043 + $0x248] sm:$0xff]
  %v5141 = vld [vmem:[%s5043 + $0x250] sm:$0xff]
  %v5142 = vld [vmem:[%s5043 + $0x268] sm:$0xff]
  %v5143 = vld [vmem:[%s5043 + $0x270] sm:$0xff]
  %v5144 = vld [vmem:[%s5043 + $0x288] sm:$0xff]
  %v5145 = vld [vmem:[%s5043 + $0x290] sm:$0xff]
  %v5146 = vld [vmem:[%s5043 + $0x2a8] sm:$0xff]
  %v5147 = vld [vmem:[%s5043 + $0x2b0] sm:$0xff]
  %v5148 = vld [vmem:[%s5043 + $0x2c8] sm:$0xff]
  %v5149 = vld [vmem:[%s5043 + $0x2d0] sm:$0xff]
  %v5150 = vld [vmem:[%s5043 + $0x2e8] sm:$0xff]
  %v5151 = vld [vmem:[%s5043 + $0x2f0] sm:$0xff]
  %v5152 = vld [vmem:[%s5043 + $0x308] sm:$0xff]
  %v5153 = vld [vmem:[%s5043 + $0x310] sm:$0xff]
  %v5154 = vld [vmem:[%s5043 + $0x328] sm:$0xff]
  %v5155 = vld [vmem:[%s5043 + $0x330] sm:$0xff]
  %v5156 = vld [vmem:[%s5043 + $0x348] sm:$0xff]
  %v5157 = vld [vmem:[%s5043 + $0x350] sm:$0xff]
  %v5158 = vld [vmem:[%s5043 + $0x368] sm:$0xff]
  %v5159 = vld [vmem:[%s5043 + $0x370] sm:$0xff]
  %v5160 = vld [vmem:[%s5043 + $0x388] sm:$0xff]
  %v5161 = vld [vmem:[%s5043 + $0x390] sm:$0xff]
  %v5162 = vld [vmem:[%s5043 + $0x3a8] sm:$0xff]
  %v5163 = vld [vmem:[%s5043 + $0x3b0] sm:$0xff]
  %v5164 = vld [vmem:[%s5043 + $0x3c8] sm:$0xff]
  %v5165 = vld [vmem:[%s5043 + $0x3d0] sm:$0xff]
  %v5166 = vld [vmem:[%s5043 + $0x3e8] sm:$0xff]
  %v5167 = vld [vmem:[%s5043 + $0x3f0] sm:$0xff]
  %v5168 = vld [vmem:[%s5043 + $0x408] sm:$0xff]
  %v5169 = vld [vmem:[%s5043 + $0x410] sm:$0xff]
  %v5170 = vld [vmem:[%s5043 + $0x428] sm:$0xff]
  %v5171 = vld [vmem:[%s5043 + $0x430] sm:$0xff]
  %v5172 = vld [vmem:[%s5043 + $0x9] sm:$0xff]
  %v5173 = vld [vmem:[%s5043 + $0x11] sm:$0xff]
  %v5174 = vld [vmem:[%s5043 + $0x29] sm:$0xff]
  %v5175 = vld [vmem:[%s5043 + $0x31] sm:$0xff]
  %v5176 = vld [vmem:[%s5043 + $0x49] sm:$0xff]
  %v5177 = vld [vmem:[%s5043 + $0x51] sm:$0xff]
  %v5178 = vld [vmem:[%s5043 + $0x69] sm:$0xff]
  %v5179 = vld [vmem:[%s5043 + $0x71] sm:$0xff]
  %v5180 = vld [vmem:[%s5043 + $0x89] sm:$0xff]
  %v5181 = vld [vmem:[%s5043 + $0x91] sm:$0xff]
  %v5182 = vld [vmem:[%s5043 + $0xa9] sm:$0xff]
  %v5183 = vld [vmem:[%s5043 + $0xb1] sm:$0xff]
  %v5184 = vld [vmem:[%s5043 + $0xc9] sm:$0xff]
  %v5185 = vld [vmem:[%s5043 + $0xd1] sm:$0xff]
  %v5186 = vld [vmem:[%s5043 + $0xe9] sm:$0xff]
  %v5187 = vld [vmem:[%s5043 + $0xf1] sm:$0xff]
  %v5188 = vld [vmem:[%s5043 + $0x109] sm:$0xff]
  %v5189 = vld [vmem:[%s5043 + $0x111] sm:$0xff]
  %v5190 = vld [vmem:[%s5043 + $0x129] sm:$0xff]
  %v5191 = vld [vmem:[%s5043 + $0x131] sm:$0xff]
  %v5192 = vld [vmem:[%s5043 + $0x149] sm:$0xff]
  %v5193 = vld [vmem:[%s5043 + $0x151] sm:$0xff]
  %v5194 = vld [vmem:[%s5043 + $0x169] sm:$0xff]
  %v5195 = vld [vmem:[%s5043 + $0x171] sm:$0xff]
  %v5196 = vld [vmem:[%s5043 + $0x189] sm:$0xff]
  %v5197 = vld [vmem:[%s5043 + $0x191] sm:$0xff]
  %v5198 = vld [vmem:[%s5043 + $0x1a9] sm:$0xff]
  %v5199 = vld [vmem:[%s5043 + $0x1b1] sm:$0xff]
  %v5200 = vld [vmem:[%s5043 + $0x1c9] sm:$0xff]
  %v5201 = vld [vmem:[%s5043 + $0x1d1] sm:$0xff]
  %v5202 = vld [vmem:[%s5043 + $0x1e9] sm:$0xff]
  %v5203 = vld [vmem:[%s5043 + $0x1f1] sm:$0xff]
  %v5204 = vld [vmem:[%s5043 + $0x249] sm:$0xff]
  %v5205 = vld [vmem:[%s5043 + $0x251] sm:$0xff]
  %v5206 = vld [vmem:[%s5043 + $0x269] sm:$0xff]
  %v5207 = vld [vmem:[%s5043 + $0x271] sm:$0xff]
  %v5208 = vld [vmem:[%s5043 + $0x289] sm:$0xff]
  %v5209 = vld [vmem:[%s5043 + $0x291] sm:$0xff]
  %v5210 = vld [vmem:[%s5043 + $0x2a9] sm:$0xff]
  %v5211 = vld [vmem:[%s5043 + $0x2b1] sm:$0xff]
  %v5212 = vld [vmem:[%s5043 + $0x2c9] sm:$0xff]
  %v5213 = vld [vmem:[%s5043 + $0x2d1] sm:$0xff]
  %v5214 = vld [vmem:[%s5043 + $0x2e9] sm:$0xff]
  %v5215 = vld [vmem:[%s5043 + $0x2f1] sm:$0xff]
  %v5216 = vld [vmem:[%s5043 + $0x309] sm:$0xff]
  %v5217 = vld [vmem:[%s5043 + $0x311] sm:$0xff]
  %v5218 = vld [vmem:[%s5043 + $0x329] sm:$0xff]
  %v5219 = vld [vmem:[%s5043 + $0x331] sm:$0xff]
  %v5220 = vld [vmem:[%s5043 + $0x349] sm:$0xff]
  %v5221 = vld [vmem:[%s5043 + $0x351] sm:$0xff]
  %v5222 = vld [vmem:[%s5043 + $0x369] sm:$0xff]
  %v5223 = vld [vmem:[%s5043 + $0x371] sm:$0xff]
  %v5224 = vld [vmem:[%s5043 + $0x389] sm:$0xff]
  %v5225 = vld [vmem:[%s5043 + $0x391] sm:$0xff]
  %v5226 = vld [vmem:[%s5043 + $0x3a9] sm:$0xff]
  %v5227 = vld [vmem:[%s5043 + $0x3b1] sm:$0xff]
  %v5228 = vld [vmem:[%s5043 + $0x3c9] sm:$0xff]
  %v5229 = vld [vmem:[%s5043 + $0x3d1] sm:$0xff]
  %v5230 = vld [vmem:[%s5043 + $0x3e9] sm:$0xff]
  %v5231 = vld [vmem:[%s5043 + $0x3f1] sm:$0xff]
  %v5232 = vld [vmem:[%s5043 + $0x409] sm:$0xff]
  %v5233 = vld [vmem:[%s5043 + $0x411] sm:$0xff]
  %v5234 = vld [vmem:[%s5043 + $0x429] sm:$0xff]
  %v5235 = vld [vmem:[%s5043 + $0x431] sm:$0xff]
  %5300 = vrot.lane.b32.xlu0 %v4723, 8
  %v5301 = vpop.permute.xlu0 %5300
  %5302 = vrot.lane.b32.xlu0 %v4724, 8
  %v5303 = vpop.permute.xlu0 %5302
  %5304 = vrot.lane.b32.xlu0 %v4725, 8
  %v5305 = vpop.permute.xlu0 %5304
  %5306 = vrot.lane.b32.xlu0 %v4726, 8
  %v5307 = vpop.permute.xlu0 %5306
  %5308 = vrot.lane.b32.xlu0 %v4727, 8
  %v5309 = vpop.permute.xlu0 %5308
  %5310 = vrot.lane.b32.xlu0 %v4728, 8
  %v5311 = vpop.permute.xlu0 %5310
  %5312 = vrot.lane.b32.xlu0 %v4729, 8
  %v5313 = vpop.permute.xlu0 %5312
  %5314 = vrot.lane.b32.xlu0 %v4730, 8
  %v5315 = vpop.permute.xlu0 %5314
  %5316 = vrot.lane.b32.xlu0 %v4731, 8
  %v5317 = vpop.permute.xlu0 %5316
  %5318 = vrot.lane.b32.xlu0 %v4732, 8
  %v5319 = vpop.permute.xlu0 %5318
  %5320 = vrot.lane.b32.xlu0 %v4733, 8
  %v5321 = vpop.permute.xlu0 %5320
  %5322 = vrot.lane.b32.xlu0 %v4734, 8
  %v5323 = vpop.permute.xlu0 %5322
  %5324 = vrot.lane.b32.xlu0 %v4735, 8
  %v5325 = vpop.permute.xlu0 %5324
  %5326 = vrot.lane.b32.xlu0 %v4736, 8
  %v5327 = vpop.permute.xlu0 %5326
  %5328 = vrot.lane.b32.xlu0 %v4737, 8
  %v5329 = vpop.permute.xlu0 %5328
  %5330 = vrot.lane.b32.xlu0 %v4738, 8
  %v5331 = vpop.permute.xlu0 %5330
  %5332 = vrot.lane.b32.xlu0 %v4739, 8
  %v5333 = vpop.permute.xlu0 %5332
  %5334 = vrot.lane.b32.xlu0 %v4740, 8
  %v5335 = vpop.permute.xlu0 %5334
  %5336 = vrot.lane.b32.xlu0 %v4741, 8
  %v5337 = vpop.permute.xlu0 %5336
  %5338 = vrot.lane.b32.xlu0 %v4742, 8
  %v5339 = vpop.permute.xlu0 %5338
  %5340 = vrot.lane.b32.xlu0 %v4743, 8
  %v5341 = vpop.permute.xlu0 %5340
  %5342 = vrot.lane.b32.xlu0 %v4744, 8
  %v5343 = vpop.permute.xlu0 %5342
  %5344 = vrot.lane.b32.xlu0 %v4745, 8
  %v5345 = vpop.permute.xlu0 %5344
  %5346 = vrot.lane.b32.xlu0 %v4746, 8
  %v5347 = vpop.permute.xlu0 %5346
  %5348 = vrot.lane.b32.xlu0 %v4747, 8
  %v5349 = vpop.permute.xlu0 %5348
  %5350 = vrot.lane.b32.xlu0 %v4748, 8
  %v5351 = vpop.permute.xlu0 %5350
  %5352 = vrot.lane.b32.xlu0 %v4749, 8
  %v5353 = vpop.permute.xlu0 %5352
  %5354 = vrot.lane.b32.xlu0 %v4750, 8
  %v5355 = vpop.permute.xlu0 %5354
  %5356 = vrot.lane.b32.xlu0 %v4751, 8
  %v5357 = vpop.permute.xlu0 %5356
  %5358 = vrot.lane.b32.xlu0 %v4752, 8
  %v5359 = vpop.permute.xlu0 %5358
  %5360 = vrot.lane.b32.xlu0 %v4753, 8
  %v5361 = vpop.permute.xlu0 %5360
  %5362 = vrot.lane.b32.xlu0 %v4754, 8
  %v5363 = vpop.permute.xlu0 %5362
  %5364 = vrot.lane.b32.xlu0 %v4755, 8
  %v5365 = vpop.permute.xlu0 %5364
  %5366 = vrot.lane.b32.xlu0 %v4756, 8
  %v5367 = vpop.permute.xlu0 %5366
  %5368 = vrot.lane.b32.xlu0 %v4757, 8
  %v5369 = vpop.permute.xlu0 %5368
  %5370 = vrot.lane.b32.xlu0 %v4758, 8
  %v5371 = vpop.permute.xlu0 %5370
  %5372 = vrot.lane.b32.xlu0 %v4759, 8
  %v5373 = vpop.permute.xlu0 %5372
  %5374 = vrot.lane.b32.xlu0 %v4760, 8
  %v5375 = vpop.permute.xlu0 %5374
  %5376 = vrot.lane.b32.xlu0 %v4761, 8
  %v5377 = vpop.permute.xlu0 %5376
  %5378 = vrot.lane.b32.xlu0 %v4762, 8
  %v5379 = vpop.permute.xlu0 %5378
  %5380 = vrot.lane.b32.xlu0 %v4763, 8
  %v5381 = vpop.permute.xlu0 %5380
  %5382 = vrot.lane.b32.xlu0 %v4764, 8
  %v5383 = vpop.permute.xlu0 %5382
  %5384 = vrot.lane.b32.xlu0 %v4765, 8
  %v5385 = vpop.permute.xlu0 %5384
  %5386 = vrot.lane.b32.xlu0 %v4766, 8
  %v5387 = vpop.permute.xlu0 %5386
  %5388 = vrot.lane.b32.xlu0 %v4767, 8
  %v5389 = vpop.permute.xlu0 %5388
  %5390 = vrot.lane.b32.xlu0 %v4768, 8
  %v5391 = vpop.permute.xlu0 %5390
  %5392 = vrot.lane.b32.xlu0 %v4769, 8
  %v5393 = vpop.permute.xlu0 %5392
  %5394 = vrot.lane.b32.xlu0 %v4770, 8
  %v5395 = vpop.permute.xlu0 %5394
  %5396 = vrot.lane.b32.xlu0 %v4771, 8
  %v5397 = vpop.permute.xlu0 %5396
  %5398 = vrot.lane.b32.xlu0 %v4772, 8
  %v5399 = vpop.permute.xlu0 %5398
  %5400 = vrot.lane.b32.xlu0 %v4773, 8
  %v5401 = vpop.permute.xlu0 %5400
  %5402 = vrot.lane.b32.xlu0 %v4774, 8
  %v5403 = vpop.permute.xlu0 %5402
  %5404 = vrot.lane.b32.xlu0 %v4775, 8
  %v5405 = vpop.permute.xlu0 %5404
  %5406 = vrot.lane.b32.xlu0 %v4776, 8
  %v5407 = vpop.permute.xlu0 %5406
  %5408 = vrot.lane.b32.xlu0 %v4777, 8
  %v5409 = vpop.permute.xlu0 %5408
  %5410 = vrot.lane.b32.xlu0 %v4778, 8
  %v5411 = vpop.permute.xlu0 %5410
  %5412 = vrot.lane.b32.xlu0 %v4779, 8
  %v5413 = vpop.permute.xlu0 %5412
  %5414 = vrot.lane.b32.xlu0 %v4780, 8
  %v5415 = vpop.permute.xlu0 %5414
  %5416 = vrot.lane.b32.xlu0 %v4781, 8
  %v5417 = vpop.permute.xlu0 %5416
  %5418 = vrot.lane.b32.xlu0 %v4782, 8
  %v5419 = vpop.permute.xlu0 %5418
  %5420 = vrot.lane.b32.xlu0 %v4783, 8
  %v5421 = vpop.permute.xlu0 %5420
  %5422 = vrot.lane.b32.xlu0 %v4784, 8
  %v5423 = vpop.permute.xlu0 %5422
  %5424 = vrot.lane.b32.xlu0 %v4785, 8
  %v5425 = vpop.permute.xlu0 %5424
  %5426 = vrot.lane.b32.xlu0 %v4786, 8
  %v5427 = vpop.permute.xlu0 %5426
  %5556 = vrot.lane.b32.xlu0 %v4787, 16
  %v5557 = vpop.permute.xlu0 %5556
  %5558 = vrot.lane.b32.xlu0 %v4788, 16
  %v5559 = vpop.permute.xlu0 %5558
  %5560 = vrot.lane.b32.xlu0 %v4789, 16
  %v5561 = vpop.permute.xlu0 %5560
  %5562 = vrot.lane.b32.xlu0 %v4790, 16
  %v5563 = vpop.permute.xlu0 %5562
  %5564 = vrot.lane.b32.xlu0 %v4791, 16
  %v5565 = vpop.permute.xlu0 %5564
  %5566 = vrot.lane.b32.xlu0 %v4792, 16
  %v5567 = vpop.permute.xlu0 %5566
  %5568 = vrot.lane.b32.xlu0 %v4793, 16
  %v5569 = vpop.permute.xlu0 %5568
  %5570 = vrot.lane.b32.xlu0 %v4794, 16
  %v5571 = vpop.permute.xlu0 %5570
  %5572 = vrot.lane.b32.xlu0 %v4795, 16
  %v5573 = vpop.permute.xlu0 %5572
  %5574 = vrot.lane.b32.xlu0 %v4796, 16
  %v5575 = vpop.permute.xlu0 %5574
  %5576 = vrot.lane.b32.xlu0 %v4797, 16
  %v5577 = vpop.permute.xlu0 %5576
  %5578 = vrot.lane.b32.xlu0 %v4798, 16
  %v5579 = vpop.permute.xlu0 %5578
  %5580 = vrot.lane.b32.xlu0 %v4799, 16
  %v5581 = vpop.permute.xlu0 %5580
  %5582 = vrot.lane.b32.xlu0 %v4800, 16
  %v5583 = vpop.permute.xlu0 %5582
  %5584 = vrot.lane.b32.xlu0 %v4801, 16
  %v5585 = vpop.permute.xlu0 %5584
  %5586 = vrot.lane.b32.xlu0 %v4802, 16
  %v5587 = vpop.permute.xlu0 %5586
  %5588 = vrot.lane.b32.xlu0 %v4803, 16
  %v5589 = vpop.permute.xlu0 %5588
  %5590 = vrot.lane.b32.xlu0 %v4804, 16
  %v5591 = vpop.permute.xlu0 %5590
  %5592 = vrot.lane.b32.xlu0 %v4805, 16
  %v5593 = vpop.permute.xlu0 %5592
  %5594 = vrot.lane.b32.xlu0 %v4806, 16
  %v5595 = vpop.permute.xlu0 %5594
  %5596 = vrot.lane.b32.xlu0 %v4807, 16
  %v5597 = vpop.permute.xlu0 %5596
  %5598 = vrot.lane.b32.xlu0 %v4808, 16
  %v5599 = vpop.permute.xlu0 %5598
  %5600 = vrot.lane.b32.xlu0 %v4809, 16
  %v5601 = vpop.permute.xlu0 %5600
  %5602 = vrot.lane.b32.xlu0 %v4810, 16
  %v5603 = vpop.permute.xlu0 %5602
  %5604 = vrot.lane.b32.xlu0 %v4811, 16
  %v5605 = vpop.permute.xlu0 %5604
  %5606 = vrot.lane.b32.xlu0 %v4812, 16
  %v5607 = vpop.permute.xlu0 %5606
  %5608 = vrot.lane.b32.xlu0 %v4813, 16
  %v5609 = vpop.permute.xlu0 %5608
  %5610 = vrot.lane.b32.xlu0 %v4814, 16
  %v5611 = vpop.permute.xlu0 %5610
  %5612 = vrot.lane.b32.xlu0 %v4815, 16
  %v5613 = vpop.permute.xlu0 %5612
  %5614 = vrot.lane.b32.xlu0 %v4816, 16
  %v5615 = vpop.permute.xlu0 %5614
  %5616 = vrot.lane.b32.xlu0 %v4817, 16
  %v5617 = vpop.permute.xlu0 %5616
  %5618 = vrot.lane.b32.xlu0 %v4818, 16
  %v5619 = vpop.permute.xlu0 %5618
  %5620 = vrot.lane.b32.xlu0 %v4819, 16
  %v5621 = vpop.permute.xlu0 %5620
  %5622 = vrot.lane.b32.xlu0 %v4820, 16
  %v5623 = vpop.permute.xlu0 %5622
  %5624 = vrot.lane.b32.xlu0 %v4821, 16
  %v5625 = vpop.permute.xlu0 %5624
  %5626 = vrot.lane.b32.xlu0 %v4822, 16
  %v5627 = vpop.permute.xlu0 %5626
  %5628 = vrot.lane.b32.xlu0 %v4823, 16
  %v5629 = vpop.permute.xlu0 %5628
  %5630 = vrot.lane.b32.xlu0 %v4824, 16
  %v5631 = vpop.permute.xlu0 %5630
  %5632 = vrot.lane.b32.xlu0 %v4825, 16
  %v5633 = vpop.permute.xlu0 %5632
  %5634 = vrot.lane.b32.xlu0 %v4826, 16
  %v5635 = vpop.permute.xlu0 %5634
  %5636 = vrot.lane.b32.xlu0 %v4827, 16
  %v5637 = vpop.permute.xlu0 %5636
  %5638 = vrot.lane.b32.xlu0 %v4828, 16
  %v5639 = vpop.permute.xlu0 %5638
  %5640 = vrot.lane.b32.xlu0 %v4829, 16
  %v5641 = vpop.permute.xlu0 %5640
  %5642 = vrot.lane.b32.xlu0 %v4830, 16
  %v5643 = vpop.permute.xlu0 %5642
  %5644 = vrot.lane.b32.xlu0 %v4831, 16
  %v5645 = vpop.permute.xlu0 %5644
  %5646 = vrot.lane.b32.xlu0 %v4832, 16
  %v5647 = vpop.permute.xlu0 %5646
  %5648 = vrot.lane.b32.xlu0 %v4833, 16
  %v5649 = vpop.permute.xlu0 %5648
  %5650 = vrot.lane.b32.xlu0 %v4834, 16
  %v5651 = vpop.permute.xlu0 %5650
  %5652 = vrot.lane.b32.xlu0 %v4835, 16
  %v5653 = vpop.permute.xlu0 %5652
  %5654 = vrot.lane.b32.xlu0 %v4836, 16
  %v5655 = vpop.permute.xlu0 %5654
  %5656 = vrot.lane.b32.xlu0 %v4837, 16
  %v5657 = vpop.permute.xlu0 %5656
  %5658 = vrot.lane.b32.xlu0 %v4838, 16
  %v5659 = vpop.permute.xlu0 %5658
  %5660 = vrot.lane.b32.xlu0 %v4839, 16
  %v5661 = vpop.permute.xlu0 %5660
  %5662 = vrot.lane.b32.xlu0 %v4840, 16
  %v5663 = vpop.permute.xlu0 %5662
  %5664 = vrot.lane.b32.xlu0 %v4841, 16
  %v5665 = vpop.permute.xlu0 %5664
  %5666 = vrot.lane.b32.xlu0 %v4842, 16
  %v5667 = vpop.permute.xlu0 %5666
  %5668 = vrot.lane.b32.xlu0 %v4843, 16
  %v5669 = vpop.permute.xlu0 %5668
  %5670 = vrot.lane.b32.xlu0 %v4844, 16
  %v5671 = vpop.permute.xlu0 %5670
  %5672 = vrot.lane.b32.xlu0 %v4845, 16
  %v5673 = vpop.permute.xlu0 %5672
  %5674 = vrot.lane.b32.xlu0 %v4846, 16
  %v5675 = vpop.permute.xlu0 %5674
  %5676 = vrot.lane.b32.xlu0 %v4847, 16
  %v5677 = vpop.permute.xlu0 %5676
  %5678 = vrot.lane.b32.xlu0 %v4848, 16
  %v5679 = vpop.permute.xlu0 %5678
  %5680 = vrot.lane.b32.xlu0 %v4849, 16
  %v5681 = vpop.permute.xlu0 %5680
  %5682 = vrot.lane.b32.xlu0 %v4850, 16
  %v5683 = vpop.permute.xlu0 %5682
  %5812 = vrot.lane.b32.xlu0 %v4851, 24
  %v5813 = vpop.permute.xlu0 %5812
  %5814 = vrot.lane.b32.xlu0 %v4852, 24
  %v5815 = vpop.permute.xlu0 %5814
  %5816 = vrot.lane.b32.xlu0 %v4853, 24
  %v5817 = vpop.permute.xlu0 %5816
  %5818 = vrot.lane.b32.xlu0 %v4854, 24
  %v5819 = vpop.permute.xlu0 %5818
  %5820 = vrot.lane.b32.xlu0 %v4855, 24
  %v5821 = vpop.permute.xlu0 %5820
  %5822 = vrot.lane.b32.xlu0 %v4856, 24
  %v5823 = vpop.permute.xlu0 %5822
  %5824 = vrot.lane.b32.xlu0 %v4857, 24
  %v5825 = vpop.permute.xlu0 %5824
  %5826 = vrot.lane.b32.xlu0 %v4858, 24
  %v5827 = vpop.permute.xlu0 %5826
  %5828 = vrot.lane.b32.xlu0 %v4859, 24
  %v5829 = vpop.permute.xlu0 %5828
  %5830 = vrot.lane.b32.xlu0 %v4860, 24
  %v5831 = vpop.permute.xlu0 %5830
  %5832 = vrot.lane.b32.xlu0 %v4861, 24
  %v5833 = vpop.permute.xlu0 %5832
  %5834 = vrot.lane.b32.xlu0 %v4862, 24
  %v5835 = vpop.permute.xlu0 %5834
  %5836 = vrot.lane.b32.xlu0 %v4863, 24
  %v5837 = vpop.permute.xlu0 %5836
  %5838 = vrot.lane.b32.xlu0 %v4864, 24
  %v5839 = vpop.permute.xlu0 %5838
  %5840 = vrot.lane.b32.xlu0 %v4865, 24
  %v5841 = vpop.permute.xlu0 %5840
  %5842 = vrot.lane.b32.xlu0 %v4866, 24
  %v5843 = vpop.permute.xlu0 %5842
  %5844 = vrot.lane.b32.xlu0 %v4867, 24
  %v5845 = vpop.permute.xlu0 %5844
  %5846 = vrot.lane.b32.xlu0 %v4868, 24
  %v5847 = vpop.permute.xlu0 %5846
  %5848 = vrot.lane.b32.xlu0 %v4869, 24
  %v5849 = vpop.permute.xlu0 %5848
  %5850 = vrot.lane.b32.xlu0 %v4870, 24
  %v5851 = vpop.permute.xlu0 %5850
  %5852 = vrot.lane.b32.xlu0 %v4871, 24
  %v5853 = vpop.permute.xlu0 %5852
  %5854 = vrot.lane.b32.xlu0 %v4872, 24
  %v5855 = vpop.permute.xlu0 %5854
  %5856 = vrot.lane.b32.xlu0 %v4873, 24
  %v5857 = vpop.permute.xlu0 %5856
  %5858 = vrot.lane.b32.xlu0 %v4874, 24
  %v5859 = vpop.permute.xlu0 %5858
  %5860 = vrot.lane.b32.xlu0 %v4875, 24
  %v5861 = vpop.permute.xlu0 %5860
  %5862 = vrot.lane.b32.xlu0 %v4876, 24
  %v5863 = vpop.permute.xlu0 %5862
  %5864 = vrot.lane.b32.xlu0 %v4877, 24
  %v5865 = vpop.permute.xlu0 %5864
  %5866 = vrot.lane.b32.xlu0 %v4878, 24
  %v5867 = vpop.permute.xlu0 %5866
  %5868 = vrot.lane.b32.xlu0 %v4879, 24
  %v5869 = vpop.permute.xlu0 %5868
  %5870 = vrot.lane.b32.xlu0 %v4880, 24
  %v5871 = vpop.permute.xlu0 %5870
  %5872 = vrot.lane.b32.xlu0 %v4881, 24
  %v5873 = vpop.permute.xlu0 %5872
  %5874 = vrot.lane.b32.xlu0 %v4882, 24
  %v5875 = vpop.permute.xlu0 %5874
  %5876 = vrot.lane.b32.xlu0 %v4883, 24
  %v5877 = vpop.permute.xlu0 %5876
  %5878 = vrot.lane.b32.xlu0 %v4884, 24
  %v5879 = vpop.permute.xlu0 %5878
  %5880 = vrot.lane.b32.xlu0 %v4885, 24
  %v5881 = vpop.permute.xlu0 %5880
  %5882 = vrot.lane.b32.xlu0 %v4886, 24
  %v5883 = vpop.permute.xlu0 %5882
  %5884 = vrot.lane.b32.xlu0 %v4887, 24
  %v5885 = vpop.permute.xlu0 %5884
  %5886 = vrot.lane.b32.xlu0 %v4888, 24
  %v5887 = vpop.permute.xlu0 %5886
  %5888 = vrot.lane.b32.xlu0 %v4889, 24
  %v5889 = vpop.permute.xlu0 %5888
  %5890 = vrot.lane.b32.xlu0 %v4890, 24
  %v5891 = vpop.permute.xlu0 %5890
  %5892 = vrot.lane.b32.xlu0 %v4891, 24
  %v5893 = vpop.permute.xlu0 %5892
  %5894 = vrot.lane.b32.xlu0 %v4892, 24
  %v5895 = vpop.permute.xlu0 %5894
  %5896 = vrot.lane.b32.xlu0 %v4893, 24
  %v5897 = vpop.permute.xlu0 %5896
  %5898 = vrot.lane.b32.xlu0 %v4894, 24
  %v5899 = vpop.permute.xlu0 %5898
  %5900 = vrot.lane.b32.xlu0 %v4895, 24
  %v5901 = vpop.permute.xlu0 %5900
  %5902 = vrot.lane.b32.xlu0 %v4896, 24
  %v5903 = vpop.permute.xlu0 %5902
  %5904 = vrot.lane.b32.xlu0 %v4897, 24
  %v5905 = vpop.permute.xlu0 %5904
  %5906 = vrot.lane.b32.xlu0 %v4898, 24
  %v5907 = vpop.permute.xlu0 %5906
  %5908 = vrot.lane.b32.xlu0 %v4899, 24
  %v5909 = vpop.permute.xlu0 %5908
  %5910 = vrot.lane.b32.xlu0 %v4900, 24
  %v5911 = vpop.permute.xlu0 %5910
  %5912 = vrot.lane.b32.xlu0 %v4901, 24
  %v5913 = vpop.permute.xlu0 %5912
  %5914 = vrot.lane.b32.xlu0 %v4902, 24
  %v5915 = vpop.permute.xlu0 %5914
  %5916 = vrot.lane.b32.xlu0 %v4903, 24
  %v5917 = vpop.permute.xlu0 %5916
  %5918 = vrot.lane.b32.xlu0 %v4904, 24
  %v5919 = vpop.permute.xlu0 %5918
  %5920 = vrot.lane.b32.xlu0 %v4905, 24
  %v5921 = vpop.permute.xlu0 %5920
  %5922 = vrot.lane.b32.xlu0 %v4906, 24
  %v5923 = vpop.permute.xlu0 %5922
  %5924 = vrot.lane.b32.xlu0 %v4907, 24
  %v5925 = vpop.permute.xlu0 %5924
  %5926 = vrot.lane.b32.xlu0 %v4908, 24
  %v5927 = vpop.permute.xlu0 %5926
  %5928 = vrot.lane.b32.xlu0 %v4909, 24
  %v5929 = vpop.permute.xlu0 %5928
  %5930 = vrot.lane.b32.xlu0 %v4910, 24
  %v5931 = vpop.permute.xlu0 %5930
  %5932 = vrot.lane.b32.xlu0 %v4911, 24
  %v5933 = vpop.permute.xlu0 %5932
  %5934 = vrot.lane.b32.xlu0 %v4912, 24
  %v5935 = vpop.permute.xlu0 %5934
  %5936 = vrot.lane.b32.xlu0 %v4913, 24
  %v5937 = vpop.permute.xlu0 %5936
  %5938 = vrot.lane.b32.xlu0 %v4914, 24
  %v5939 = vpop.permute.xlu0 %5938
  %6068 = vrot.lane.b32.xlu0 %v4915, 32
  %v6069 = vpop.permute.xlu0 %6068
  %6070 = vrot.lane.b32.xlu0 %v4916, 32
  %v6071 = vpop.permute.xlu0 %6070
  %6072 = vrot.lane.b32.xlu0 %v4917, 32
  %v6073 = vpop.permute.xlu0 %6072
  %6074 = vrot.lane.b32.xlu0 %v4918, 32
  %v6075 = vpop.permute.xlu0 %6074
  %6076 = vrot.lane.b32.xlu0 %v4919, 32
  %v6077 = vpop.permute.xlu0 %6076
  %6078 = vrot.lane.b32.xlu0 %v4920, 32
  %v6079 = vpop.permute.xlu0 %6078
  %6080 = vrot.lane.b32.xlu0 %v4921, 32
  %v6081 = vpop.permute.xlu0 %6080
  %6082 = vrot.lane.b32.xlu0 %v4922, 32
  %v6083 = vpop.permute.xlu0 %6082
  %6084 = vrot.lane.b32.xlu0 %v4923, 32
  %v6085 = vpop.permute.xlu0 %6084
  %6086 = vrot.lane.b32.xlu0 %v4924, 32
  %v6087 = vpop.permute.xlu0 %6086
  %6088 = vrot.lane.b32.xlu0 %v4925, 32
  %v6089 = vpop.permute.xlu0 %6088
  %6090 = vrot.lane.b32.xlu0 %v4926, 32
  %v6091 = vpop.permute.xlu0 %6090
  %6092 = vrot.lane.b32.xlu0 %v4927, 32
  %v6093 = vpop.permute.xlu0 %6092
  %6094 = vrot.lane.b32.xlu0 %v4928, 32
  %v6095 = vpop.permute.xlu0 %6094
  %6096 = vrot.lane.b32.xlu0 %v4929, 32
  %v6097 = vpop.permute.xlu0 %6096
  %6098 = vrot.lane.b32.xlu0 %v4930, 32
  %v6099 = vpop.permute.xlu0 %6098
  %6100 = vrot.lane.b32.xlu0 %v4931, 32
  %v6101 = vpop.permute.xlu0 %6100
  %6102 = vrot.lane.b32.xlu0 %v4932, 32
  %v6103 = vpop.permute.xlu0 %6102
  %6104 = vrot.lane.b32.xlu0 %v4933, 32
  %v6105 = vpop.permute.xlu0 %6104
  %6106 = vrot.lane.b32.xlu0 %v4934, 32
  %v6107 = vpop.permute.xlu0 %6106
  %6108 = vrot.lane.b32.xlu0 %v4935, 32
  %v6109 = vpop.permute.xlu0 %6108
  %6110 = vrot.lane.b32.xlu0 %v4936, 32
  %v6111 = vpop.permute.xlu0 %6110
  %6112 = vrot.lane.b32.xlu0 %v4937, 32
  %v6113 = vpop.permute.xlu0 %6112
  %6114 = vrot.lane.b32.xlu0 %v4938, 32
  %v6115 = vpop.permute.xlu0 %6114
  %6116 = vrot.lane.b32.xlu0 %v4939, 32
  %v6117 = vpop.permute.xlu0 %6116
  %6118 = vrot.lane.b32.xlu0 %v4940, 32
  %v6119 = vpop.permute.xlu0 %6118
  %6120 = vrot.lane.b32.xlu0 %v4941, 32
  %v6121 = vpop.permute.xlu0 %6120
  %6122 = vrot.lane.b32.xlu0 %v4942, 32
  %v6123 = vpop.permute.xlu0 %6122
  %6124 = vrot.lane.b32.xlu0 %v4943, 32
  %v6125 = vpop.permute.xlu0 %6124
  %6126 = vrot.lane.b32.xlu0 %v4944, 32
  %v6127 = vpop.permute.xlu0 %6126
  %6128 = vrot.lane.b32.xlu0 %v4945, 32
  %v6129 = vpop.permute.xlu0 %6128
  %6130 = vrot.lane.b32.xlu0 %v4946, 32
  %v6131 = vpop.permute.xlu0 %6130
  %6132 = vrot.lane.b32.xlu0 %v4947, 32
  %v6133 = vpop.permute.xlu0 %6132
  %6134 = vrot.lane.b32.xlu0 %v4948, 32
  %v6135 = vpop.permute.xlu0 %6134
  %6136 = vrot.lane.b32.xlu0 %v4949, 32
  %v6137 = vpop.permute.xlu0 %6136
  %6138 = vrot.lane.b32.xlu0 %v4950, 32
  %v6139 = vpop.permute.xlu0 %6138
  %6140 = vrot.lane.b32.xlu0 %v4951, 32
  %v6141 = vpop.permute.xlu0 %6140
  %6142 = vrot.lane.b32.xlu0 %v4952, 32
  %v6143 = vpop.permute.xlu0 %6142
  %6144 = vrot.lane.b32.xlu0 %v4953, 32
  %v6145 = vpop.permute.xlu0 %6144
  %6146 = vrot.lane.b32.xlu0 %v4954, 32
  %v6147 = vpop.permute.xlu0 %6146
  %6148 = vrot.lane.b32.xlu0 %v4955, 32
  %v6149 = vpop.permute.xlu0 %6148
  %6150 = vrot.lane.b32.xlu0 %v4956, 32
  %v6151 = vpop.permute.xlu0 %6150
  %6152 = vrot.lane.b32.xlu0 %v4957, 32
  %v6153 = vpop.permute.xlu0 %6152
  %6154 = vrot.lane.b32.xlu0 %v4958, 32
  %v6155 = vpop.permute.xlu0 %6154
  %6156 = vrot.lane.b32.xlu0 %v4959, 32
  %v6157 = vpop.permute.xlu0 %6156
  %6158 = vrot.lane.b32.xlu0 %v4960, 32
  %v6159 = vpop.permute.xlu0 %6158
  %6160 = vrot.lane.b32.xlu0 %v4961, 32
  %v6161 = vpop.permute.xlu0 %6160
  %6162 = vrot.lane.b32.xlu0 %v4962, 32
  %v6163 = vpop.permute.xlu0 %6162
  %6164 = vrot.lane.b32.xlu0 %v4963, 32
  %v6165 = vpop.permute.xlu0 %6164
  %6166 = vrot.lane.b32.xlu0 %v4964, 32
  %v6167 = vpop.permute.xlu0 %6166
  %6168 = vrot.lane.b32.xlu0 %v4965, 32
  %v6169 = vpop.permute.xlu0 %6168
  %6170 = vrot.lane.b32.xlu0 %v4966, 32
  %v6171 = vpop.permute.xlu0 %6170
  %6172 = vrot.lane.b32.xlu0 %v4967, 32
  %v6173 = vpop.permute.xlu0 %6172
  %6174 = vrot.lane.b32.xlu0 %v4968, 32
  %v6175 = vpop.permute.xlu0 %6174
  %6176 = vrot.lane.b32.xlu0 %v4969, 32
  %v6177 = vpop.permute.xlu0 %6176
  %6178 = vrot.lane.b32.xlu0 %v4970, 32
  %v6179 = vpop.permute.xlu0 %6178
  %6180 = vrot.lane.b32.xlu0 %v4971, 32
  %v6181 = vpop.permute.xlu0 %6180
  %6182 = vrot.lane.b32.xlu0 %v4972, 32
  %v6183 = vpop.permute.xlu0 %6182
  %6184 = vrot.lane.b32.xlu0 %v4973, 32
  %v6185 = vpop.permute.xlu0 %6184
  %6186 = vrot.lane.b32.xlu0 %v4974, 32
  %v6187 = vpop.permute.xlu0 %6186
  %6188 = vrot.lane.b32.xlu0 %v4975, 32
  %v6189 = vpop.permute.xlu0 %6188
  %6190 = vrot.lane.b32.xlu0 %v4976, 32
  %v6191 = vpop.permute.xlu0 %6190
  %6192 = vrot.lane.b32.xlu0 %v4977, 32
  %v6193 = vpop.permute.xlu0 %6192
  %6194 = vrot.lane.b32.xlu0 %v4978, 32
  %v6195 = vpop.permute.xlu0 %6194
  %6324 = vrot.lane.b32.xlu0 %v4979, 40
  %v6325 = vpop.permute.xlu0 %6324
  %6326 = vrot.lane.b32.xlu0 %v4980, 40
  %v6327 = vpop.permute.xlu0 %6326
  %6328 = vrot.lane.b32.xlu0 %v4981, 40
  %v6329 = vpop.permute.xlu0 %6328
  %6330 = vrot.lane.b32.xlu0 %v4982, 40
  %v6331 = vpop.permute.xlu0 %6330
  %6332 = vrot.lane.b32.xlu0 %v4983, 40
  %v6333 = vpop.permute.xlu0 %6332
  %6334 = vrot.lane.b32.xlu0 %v4984, 40
  %v6335 = vpop.permute.xlu0 %6334
  %6336 = vrot.lane.b32.xlu0 %v4985, 40
  %v6337 = vpop.permute.xlu0 %6336
  %6338 = vrot.lane.b32.xlu0 %v4986, 40
  %v6339 = vpop.permute.xlu0 %6338
  %6340 = vrot.lane.b32.xlu0 %v4987, 40
  %v6341 = vpop.permute.xlu0 %6340
  %6342 = vrot.lane.b32.xlu0 %v4988, 40
  %v6343 = vpop.permute.xlu0 %6342
  %6344 = vrot.lane.b32.xlu0 %v4989, 40
  %v6345 = vpop.permute.xlu0 %6344
  %6346 = vrot.lane.b32.xlu0 %v4990, 40
  %v6347 = vpop.permute.xlu0 %6346
  %6348 = vrot.lane.b32.xlu0 %v4991, 40
  %v6349 = vpop.permute.xlu0 %6348
  %6350 = vrot.lane.b32.xlu0 %v4992, 40
  %v6351 = vpop.permute.xlu0 %6350
  %6352 = vrot.lane.b32.xlu0 %v4993, 40
  %v6353 = vpop.permute.xlu0 %6352
  %6354 = vrot.lane.b32.xlu0 %v4994, 40
  %v6355 = vpop.permute.xlu0 %6354
  %6356 = vrot.lane.b32.xlu0 %v4995, 40
  %v6357 = vpop.permute.xlu0 %6356
  %6358 = vrot.lane.b32.xlu0 %v4996, 40
  %v6359 = vpop.permute.xlu0 %6358
  %6360 = vrot.lane.b32.xlu0 %v4997, 40
  %v6361 = vpop.permute.xlu0 %6360
  %6362 = vrot.lane.b32.xlu0 %v4998, 40
  %v6363 = vpop.permute.xlu0 %6362
  %6364 = vrot.lane.b32.xlu0 %v4999, 40
  %v6365 = vpop.permute.xlu0 %6364
  %6366 = vrot.lane.b32.xlu0 %v5000, 40
  %v6367 = vpop.permute.xlu0 %6366
  %6368 = vrot.lane.b32.xlu0 %v5001, 40
  %v6369 = vpop.permute.xlu0 %6368
  %6370 = vrot.lane.b32.xlu0 %v5002, 40
  %v6371 = vpop.permute.xlu0 %6370
  %6372 = vrot.lane.b32.xlu0 %v5003, 40
  %v6373 = vpop.permute.xlu0 %6372
  %6374 = vrot.lane.b32.xlu0 %v5004, 40
  %v6375 = vpop.permute.xlu0 %6374
  %6376 = vrot.lane.b32.xlu0 %v5005, 40
  %v6377 = vpop.permute.xlu0 %6376
  %6378 = vrot.lane.b32.xlu0 %v5006, 40
  %v6379 = vpop.permute.xlu0 %6378
  %6380 = vrot.lane.b32.xlu0 %v5007, 40
  %v6381 = vpop.permute.xlu0 %6380
  %6382 = vrot.lane.b32.xlu0 %v5008, 40
  %v6383 = vpop.permute.xlu0 %6382
  %6384 = vrot.lane.b32.xlu0 %v5009, 40
  %v6385 = vpop.permute.xlu0 %6384
  %6386 = vrot.lane.b32.xlu0 %v5010, 40
  %v6387 = vpop.permute.xlu0 %6386
  %6388 = vrot.lane.b32.xlu0 %v5011, 40
  %v6389 = vpop.permute.xlu0 %6388
  %6390 = vrot.lane.b32.xlu0 %v5012, 40
  %v6391 = vpop.permute.xlu0 %6390
  %6392 = vrot.lane.b32.xlu0 %v5013, 40
  %v6393 = vpop.permute.xlu0 %6392
  %6394 = vrot.lane.b32.xlu0 %v5014, 40
  %v6395 = vpop.permute.xlu0 %6394
  %6396 = vrot.lane.b32.xlu0 %v5015, 40
  %v6397 = vpop.permute.xlu0 %6396
  %6398 = vrot.lane.b32.xlu0 %v5016, 40
  %v6399 = vpop.permute.xlu0 %6398
  %6400 = vrot.lane.b32.xlu0 %v5017, 40
  %v6401 = vpop.permute.xlu0 %6400
  %6402 = vrot.lane.b32.xlu0 %v5018, 40
  %v6403 = vpop.permute.xlu0 %6402
  %6404 = vrot.lane.b32.xlu0 %v5019, 40
  %v6405 = vpop.permute.xlu0 %6404
  %6406 = vrot.lane.b32.xlu0 %v5020, 40
  %v6407 = vpop.permute.xlu0 %6406
  %6408 = vrot.lane.b32.xlu0 %v5021, 40
  %v6409 = vpop.permute.xlu0 %6408
  %6410 = vrot.lane.b32.xlu0 %v5022, 40
  %v6411 = vpop.permute.xlu0 %6410
  %6412 = vrot.lane.b32.xlu0 %v5023, 40
  %v6413 = vpop.permute.xlu0 %6412
  %6414 = vrot.lane.b32.xlu0 %v5024, 40
  %v6415 = vpop.permute.xlu0 %6414
  %6416 = vrot.lane.b32.xlu0 %v5025, 40
  %v6417 = vpop.permute.xlu0 %6416
  %6418 = vrot.lane.b32.xlu0 %v5026, 40
  %v6419 = vpop.permute.xlu0 %6418
  %6420 = vrot.lane.b32.xlu0 %v5027, 40
  %v6421 = vpop.permute.xlu0 %6420
  %6422 = vrot.lane.b32.xlu0 %v5028, 40
  %v6423 = vpop.permute.xlu0 %6422
  %6424 = vrot.lane.b32.xlu0 %v5029, 40
  %v6425 = vpop.permute.xlu0 %6424
  %6426 = vrot.lane.b32.xlu0 %v5030, 40
  %v6427 = vpop.permute.xlu0 %6426
  %6428 = vrot.lane.b32.xlu0 %v5031, 40
  %v6429 = vpop.permute.xlu0 %6428
  %6430 = vrot.lane.b32.xlu0 %v5032, 40
  %v6431 = vpop.permute.xlu0 %6430
  %6432 = vrot.lane.b32.xlu0 %v5033, 40
  %v6433 = vpop.permute.xlu0 %6432
  %6434 = vrot.lane.b32.xlu0 %v5034, 40
  %v6435 = vpop.permute.xlu0 %6434
  %6436 = vrot.lane.b32.xlu0 %v5035, 40
  %v6437 = vpop.permute.xlu0 %6436
  %6438 = vrot.lane.b32.xlu0 %v5036, 40
  %v6439 = vpop.permute.xlu0 %6438
  %6440 = vrot.lane.b32.xlu0 %v5037, 40
  %v6441 = vpop.permute.xlu0 %6440
  %6442 = vrot.lane.b32.xlu0 %v5038, 40
  %v6443 = vpop.permute.xlu0 %6442
  %6444 = vrot.lane.b32.xlu0 %v5039, 40
  %v6445 = vpop.permute.xlu0 %6444
  %6446 = vrot.lane.b32.xlu0 %v5040, 40
  %v6447 = vpop.permute.xlu0 %6446
  %6448 = vrot.lane.b32.xlu0 %v5041, 40
  %v6449 = vpop.permute.xlu0 %6448
  %6450 = vrot.lane.b32.xlu0 %v5042, 40
  %v6451 = vpop.permute.xlu0 %6450
  %6580 = vrot.lane.b32.xlu0 %v5044, 48
  %v6581 = vpop.permute.xlu0 %6580
  %6582 = vrot.lane.b32.xlu0 %v5045, 48
  %v6583 = vpop.permute.xlu0 %6582
  %6584 = vrot.lane.b32.xlu0 %v5046, 48
  %v6585 = vpop.permute.xlu0 %6584
  %6586 = vrot.lane.b32.xlu0 %v5047, 48
  %v6587 = vpop.permute.xlu0 %6586
  %6588 = vrot.lane.b32.xlu0 %v5048, 48
  %v6589 = vpop.permute.xlu0 %6588
  %6590 = vrot.lane.b32.xlu0 %v5049, 48
  %v6591 = vpop.permute.xlu0 %6590
  %6592 = vrot.lane.b32.xlu0 %v5050, 48
  %v6593 = vpop.permute.xlu0 %6592
  %6594 = vrot.lane.b32.xlu0 %v5051, 48
  %v6595 = vpop.permute.xlu0 %6594
  %6596 = vrot.lane.b32.xlu0 %v5052, 48
  %v6597 = vpop.permute.xlu0 %6596
  %6598 = vrot.lane.b32.xlu0 %v5053, 48
  %v6599 = vpop.permute.xlu0 %6598
  %6600 = vrot.lane.b32.xlu0 %v5054, 48
  %v6601 = vpop.permute.xlu0 %6600
  %6602 = vrot.lane.b32.xlu0 %v5055, 48
  %v6603 = vpop.permute.xlu0 %6602
  %6604 = vrot.lane.b32.xlu0 %v5056, 48
  %v6605 = vpop.permute.xlu0 %6604
  %6606 = vrot.lane.b32.xlu0 %v5057, 48
  %v6607 = vpop.permute.xlu0 %6606
  %6608 = vrot.lane.b32.xlu0 %v5058, 48
  %v6609 = vpop.permute.xlu0 %6608
  %6610 = vrot.lane.b32.xlu0 %v5059, 48
  %v6611 = vpop.permute.xlu0 %6610
  %6612 = vrot.lane.b32.xlu0 %v5060, 48
  %v6613 = vpop.permute.xlu0 %6612
  %6614 = vrot.lane.b32.xlu0 %v5061, 48
  %v6615 = vpop.permute.xlu0 %6614
  %6616 = vrot.lane.b32.xlu0 %v5062, 48
  %v6617 = vpop.permute.xlu0 %6616
  %6618 = vrot.lane.b32.xlu0 %v5063, 48
  %v6619 = vpop.permute.xlu0 %6618
  %6620 = vrot.lane.b32.xlu0 %v5064, 48
  %v6621 = vpop.permute.xlu0 %6620
  %6622 = vrot.lane.b32.xlu0 %v5065, 48
  %v6623 = vpop.permute.xlu0 %6622
  %6624 = vrot.lane.b32.xlu0 %v5066, 48
  %v6625 = vpop.permute.xlu0 %6624
  %6626 = vrot.lane.b32.xlu0 %v5067, 48
  %v6627 = vpop.permute.xlu0 %6626
  %6628 = vrot.lane.b32.xlu0 %v5068, 48
  %v6629 = vpop.permute.xlu0 %6628
  %6630 = vrot.lane.b32.xlu0 %v5069, 48
  %v6631 = vpop.permute.xlu0 %6630
  %6632 = vrot.lane.b32.xlu0 %v5070, 48
  %v6633 = vpop.permute.xlu0 %6632
  %6634 = vrot.lane.b32.xlu0 %v5071, 48
  %v6635 = vpop.permute.xlu0 %6634
  %6636 = vrot.lane.b32.xlu0 %v5072, 48
  %v6637 = vpop.permute.xlu0 %6636
  %6638 = vrot.lane.b32.xlu0 %v5073, 48
  %v6639 = vpop.permute.xlu0 %6638
  %6640 = vrot.lane.b32.xlu0 %v5074, 48
  %v6641 = vpop.permute.xlu0 %6640
  %6642 = vrot.lane.b32.xlu0 %v5075, 48
  %v6643 = vpop.permute.xlu0 %6642
  %6644 = vrot.lane.b32.xlu0 %v5076, 48
  %v6645 = vpop.permute.xlu0 %6644
  %6646 = vrot.lane.b32.xlu0 %v5077, 48
  %v6647 = vpop.permute.xlu0 %6646
  %6648 = vrot.lane.b32.xlu0 %v5078, 48
  %v6649 = vpop.permute.xlu0 %6648
  %6650 = vrot.lane.b32.xlu0 %v5079, 48
  %v6651 = vpop.permute.xlu0 %6650
  %6652 = vrot.lane.b32.xlu0 %v5080, 48
  %v6653 = vpop.permute.xlu0 %6652
  %6654 = vrot.lane.b32.xlu0 %v5081, 48
  %v6655 = vpop.permute.xlu0 %6654
  %6656 = vrot.lane.b32.xlu0 %v5082, 48
  %v6657 = vpop.permute.xlu0 %6656
  %6658 = vrot.lane.b32.xlu0 %v5083, 48
  %v6659 = vpop.permute.xlu0 %6658
  %6660 = vrot.lane.b32.xlu0 %v5084, 48
  %v6661 = vpop.permute.xlu0 %6660
  %6662 = vrot.lane.b32.xlu0 %v5085, 48
  %v6663 = vpop.permute.xlu0 %6662
  %6664 = vrot.lane.b32.xlu0 %v5086, 48
  %v6665 = vpop.permute.xlu0 %6664
  %6666 = vrot.lane.b32.xlu0 %v5087, 48
  %v6667 = vpop.permute.xlu0 %6666
  %6668 = vrot.lane.b32.xlu0 %v5088, 48
  %v6669 = vpop.permute.xlu0 %6668
  %6670 = vrot.lane.b32.xlu0 %v5089, 48
  %v6671 = vpop.permute.xlu0 %6670
  %6672 = vrot.lane.b32.xlu0 %v5090, 48
  %v6673 = vpop.permute.xlu0 %6672
  %6674 = vrot.lane.b32.xlu0 %v5091, 48
  %v6675 = vpop.permute.xlu0 %6674
  %6676 = vrot.lane.b32.xlu0 %v5092, 48
  %v6677 = vpop.permute.xlu0 %6676
  %6678 = vrot.lane.b32.xlu0 %v5093, 48
  %v6679 = vpop.permute.xlu0 %6678
  %6680 = vrot.lane.b32.xlu0 %v5094, 48
  %v6681 = vpop.permute.xlu0 %6680
  %6682 = vrot.lane.b32.xlu0 %v5095, 48
  %v6683 = vpop.permute.xlu0 %6682
  %6684 = vrot.lane.b32.xlu0 %v5096, 48
  %v6685 = vpop.permute.xlu0 %6684
  %6686 = vrot.lane.b32.xlu0 %v5097, 48
  %v6687 = vpop.permute.xlu0 %6686
  %6688 = vrot.lane.b32.xlu0 %v5098, 48
  %v6689 = vpop.permute.xlu0 %6688
  %6690 = vrot.lane.b32.xlu0 %v5099, 48
  %v6691 = vpop.permute.xlu0 %6690
  %6692 = vrot.lane.b32.xlu0 %v5100, 48
  %v6693 = vpop.permute.xlu0 %6692
  %6694 = vrot.lane.b32.xlu0 %v5101, 48
  %v6695 = vpop.permute.xlu0 %6694
  %6696 = vrot.lane.b32.xlu0 %v5102, 48
  %v6697 = vpop.permute.xlu0 %6696
  %6698 = vrot.lane.b32.xlu0 %v5103, 48
  %v6699 = vpop.permute.xlu0 %6698
  %6700 = vrot.lane.b32.xlu0 %v5104, 48
  %v6701 = vpop.permute.xlu0 %6700
  %6702 = vrot.lane.b32.xlu0 %v5105, 48
  %v6703 = vpop.permute.xlu0 %6702
  %6704 = vrot.lane.b32.xlu0 %v5106, 48
  %v6705 = vpop.permute.xlu0 %6704
  %6706 = vrot.lane.b32.xlu0 %v5107, 48
  %v6707 = vpop.permute.xlu0 %6706
  %6836 = vrot.lane.b32.xlu0 %v5108, 56
  %v6837 = vpop.permute.xlu0 %6836
  %6838 = vrot.lane.b32.xlu0 %v5109, 56
  %v6839 = vpop.permute.xlu0 %6838
  %6840 = vrot.lane.b32.xlu0 %v5110, 56
  %v6841 = vpop.permute.xlu0 %6840
  %6842 = vrot.lane.b32.xlu0 %v5111, 56
  %v6843 = vpop.permute.xlu0 %6842
  %6844 = vrot.lane.b32.xlu0 %v5112, 56
  %v6845 = vpop.permute.xlu0 %6844
  %6846 = vrot.lane.b32.xlu0 %v5113, 56
  %v6847 = vpop.permute.xlu0 %6846
  %6848 = vrot.lane.b32.xlu0 %v5114, 56
  %v6849 = vpop.permute.xlu0 %6848
  %6850 = vrot.lane.b32.xlu0 %v5115, 56
  %v6851 = vpop.permute.xlu0 %6850
  %6852 = vrot.lane.b32.xlu0 %v5116, 56
  %v6853 = vpop.permute.xlu0 %6852
  %6854 = vrot.lane.b32.xlu0 %v5117, 56
  %v6855 = vpop.permute.xlu0 %6854
  %6856 = vrot.lane.b32.xlu0 %v5118, 56
  %v6857 = vpop.permute.xlu0 %6856
  %6858 = vrot.lane.b32.xlu0 %v5119, 56
  %v6859 = vpop.permute.xlu0 %6858
  %6860 = vrot.lane.b32.xlu0 %v5120, 56
  %v6861 = vpop.permute.xlu0 %6860
  %6862 = vrot.lane.b32.xlu0 %v5121, 56
  %v6863 = vpop.permute.xlu0 %6862
  %6864 = vrot.lane.b32.xlu0 %v5122, 56
  %v6865 = vpop.permute.xlu0 %6864
  %6866 = vrot.lane.b32.xlu0 %v5123, 56
  %v6867 = vpop.permute.xlu0 %6866
  %6868 = vrot.lane.b32.xlu0 %v5124, 56
  %v6869 = vpop.permute.xlu0 %6868
  %6870 = vrot.lane.b32.xlu0 %v5125, 56
  %v6871 = vpop.permute.xlu0 %6870
  %6872 = vrot.lane.b32.xlu0 %v5126, 56
  %v6873 = vpop.permute.xlu0 %6872
  %6874 = vrot.lane.b32.xlu0 %v5127, 56
  %v6875 = vpop.permute.xlu0 %6874
  %6876 = vrot.lane.b32.xlu0 %v5128, 56
  %v6877 = vpop.permute.xlu0 %6876
  %6878 = vrot.lane.b32.xlu0 %v5129, 56
  %v6879 = vpop.permute.xlu0 %6878
  %6880 = vrot.lane.b32.xlu0 %v5130, 56
  %v6881 = vpop.permute.xlu0 %6880
  %6882 = vrot.lane.b32.xlu0 %v5131, 56
  %v6883 = vpop.permute.xlu0 %6882
  %6884 = vrot.lane.b32.xlu0 %v5132, 56
  %v6885 = vpop.permute.xlu0 %6884
  %6886 = vrot.lane.b32.xlu0 %v5133, 56
  %v6887 = vpop.permute.xlu0 %6886
  %6888 = vrot.lane.b32.xlu0 %v5134, 56
  %v6889 = vpop.permute.xlu0 %6888
  %6890 = vrot.lane.b32.xlu0 %v5135, 56
  %v6891 = vpop.permute.xlu0 %6890
  %6892 = vrot.lane.b32.xlu0 %v5136, 56
  %v6893 = vpop.permute.xlu0 %6892
  %6894 = vrot.lane.b32.xlu0 %v5137, 56
  %v6895 = vpop.permute.xlu0 %6894
  %6896 = vrot.lane.b32.xlu0 %v5138, 56
  %v6897 = vpop.permute.xlu0 %6896
  %6898 = vrot.lane.b32.xlu0 %v5139, 56
  %v6899 = vpop.permute.xlu0 %6898
  %6900 = vrot.lane.b32.xlu0 %v5140, 56
  %v6901 = vpop.permute.xlu0 %6900
  %6902 = vrot.lane.b32.xlu0 %v5141, 56
  %v6903 = vpop.permute.xlu0 %6902
  %6904 = vrot.lane.b32.xlu0 %v5142, 56
  %v6905 = vpop.permute.xlu0 %6904
  %6906 = vrot.lane.b32.xlu0 %v5143, 56
  %v6907 = vpop.permute.xlu0 %6906
  %6908 = vrot.lane.b32.xlu0 %v5144, 56
  %v6909 = vpop.permute.xlu0 %6908
  %6910 = vrot.lane.b32.xlu0 %v5145, 56
  %v6911 = vpop.permute.xlu0 %6910
  %6912 = vrot.lane.b32.xlu0 %v5146, 56
  %v6913 = vpop.permute.xlu0 %6912
  %6914 = vrot.lane.b32.xlu0 %v5147, 56
  %v6915 = vpop.permute.xlu0 %6914
  %6916 = vrot.lane.b32.xlu0 %v5148, 56
  %v6917 = vpop.permute.xlu0 %6916
  %6918 = vrot.lane.b32.xlu0 %v5149, 56
  %v6919 = vpop.permute.xlu0 %6918
  %6920 = vrot.lane.b32.xlu0 %v5150, 56
  %v6921 = vpop.permute.xlu0 %6920
  %6922 = vrot.lane.b32.xlu0 %v5151, 56
  %v6923 = vpop.permute.xlu0 %6922
  %6924 = vrot.lane.b32.xlu0 %v5152, 56
  %v6925 = vpop.permute.xlu0 %6924
  %6926 = vrot.lane.b32.xlu0 %v5153, 56
  %v6927 = vpop.permute.xlu0 %6926
  %6928 = vrot.lane.b32.xlu0 %v5154, 56
  %v6929 = vpop.permute.xlu0 %6928
  %6930 = vrot.lane.b32.xlu0 %v5155, 56
  %v6931 = vpop.permute.xlu0 %6930
  %6932 = vrot.lane.b32.xlu0 %v5156, 56
  %v6933 = vpop.permute.xlu0 %6932
  %6934 = vrot.lane.b32.xlu0 %v5157, 56
  %v6935 = vpop.permute.xlu0 %6934
  %6936 = vrot.lane.b32.xlu0 %v5158, 56
  %v6937 = vpop.permute.xlu0 %6936
  %6938 = vrot.lane.b32.xlu0 %v5159, 56
  %v6939 = vpop.permute.xlu0 %6938
  %6940 = vrot.lane.b32.xlu0 %v5160, 56
  %v6941 = vpop.permute.xlu0 %6940
  %6942 = vrot.lane.b32.xlu0 %v5161, 56
  %v6943 = vpop.permute.xlu0 %6942
  %6944 = vrot.lane.b32.xlu0 %v5162, 56
  %v6945 = vpop.permute.xlu0 %6944
  %6946 = vrot.lane.b32.xlu0 %v5163, 56
  %v6947 = vpop.permute.xlu0 %6946
  %6948 = vrot.lane.b32.xlu0 %v5164, 56
  %v6949 = vpop.permute.xlu0 %6948
  %6950 = vrot.lane.b32.xlu0 %v5165, 56
  %v6951 = vpop.permute.xlu0 %6950
  %6952 = vrot.lane.b32.xlu0 %v5166, 56
  %v6953 = vpop.permute.xlu0 %6952
  %6954 = vrot.lane.b32.xlu0 %v5167, 56
  %v6955 = vpop.permute.xlu0 %6954
  %6956 = vrot.lane.b32.xlu0 %v5168, 56
  %v6957 = vpop.permute.xlu0 %6956
  %6958 = vrot.lane.b32.xlu0 %v5169, 56
  %v6959 = vpop.permute.xlu0 %6958
  %6960 = vrot.lane.b32.xlu0 %v5170, 56
  %v6961 = vpop.permute.xlu0 %6960
  %6962 = vrot.lane.b32.xlu0 %v5171, 56
  %v6963 = vpop.permute.xlu0 %6962
  %7092 = vrot.lane.b32.xlu0 %v5172, 64
  %v7093 = vpop.permute.xlu0 %7092
  %7094 = vrot.lane.b32.xlu0 %v5173, 64
  %v7095 = vpop.permute.xlu0 %7094
  %7096 = vrot.lane.b32.xlu0 %v5174, 64
  %v7097 = vpop.permute.xlu0 %7096
  %7098 = vrot.lane.b32.xlu0 %v5175, 64
  %v7099 = vpop.permute.xlu0 %7098
  %7100 = vrot.lane.b32.xlu0 %v5176, 64
  %v7101 = vpop.permute.xlu0 %7100
  %7102 = vrot.lane.b32.xlu0 %v5177, 64
  %v7103 = vpop.permute.xlu0 %7102
  %7104 = vrot.lane.b32.xlu0 %v5178, 64
  %v7105 = vpop.permute.xlu0 %7104
  %7106 = vrot.lane.b32.xlu0 %v5179, 64
  %v7107 = vpop.permute.xlu0 %7106
  %7108 = vrot.lane.b32.xlu0 %v5180, 64
  %v7109 = vpop.permute.xlu0 %7108
  %7110 = vrot.lane.b32.xlu0 %v5181, 64
  %v7111 = vpop.permute.xlu0 %7110
  %7112 = vrot.lane.b32.xlu0 %v5182, 64
  %v7113 = vpop.permute.xlu0 %7112
  %7114 = vrot.lane.b32.xlu0 %v5183, 64
  %v7115 = vpop.permute.xlu0 %7114
  %7116 = vrot.lane.b32.xlu0 %v5184, 64
  %v7117 = vpop.permute.xlu0 %7116
  %7118 = vrot.lane.b32.xlu0 %v5185, 64
  %v7119 = vpop.permute.xlu0 %7118
  %7120 = vrot.lane.b32.xlu0 %v5186, 64
  %v7121 = vpop.permute.xlu0 %7120
  %7122 = vrot.lane.b32.xlu0 %v5187, 64
  %v7123 = vpop.permute.xlu0 %7122
  %7124 = vrot.lane.b32.xlu0 %v5188, 64
  %v7125 = vpop.permute.xlu0 %7124
  %7126 = vrot.lane.b32.xlu0 %v5189, 64
  %v7127 = vpop.permute.xlu0 %7126
  %7128 = vrot.lane.b32.xlu0 %v5190, 64
  %v7129 = vpop.permute.xlu0 %7128
  %7130 = vrot.lane.b32.xlu0 %v5191, 64
  %v7131 = vpop.permute.xlu0 %7130
  %7132 = vrot.lane.b32.xlu0 %v5192, 64
  %v7133 = vpop.permute.xlu0 %7132
  %7134 = vrot.lane.b32.xlu0 %v5193, 64
  %v7135 = vpop.permute.xlu0 %7134
  %7136 = vrot.lane.b32.xlu0 %v5194, 64
  %v7137 = vpop.permute.xlu0 %7136
  %7138 = vrot.lane.b32.xlu0 %v5195, 64
  %v7139 = vpop.permute.xlu0 %7138
  %7140 = vrot.lane.b32.xlu0 %v5196, 64
  %v7141 = vpop.permute.xlu0 %7140
  %7142 = vrot.lane.b32.xlu0 %v5197, 64
  %v7143 = vpop.permute.xlu0 %7142
  %7144 = vrot.lane.b32.xlu0 %v5198, 64
  %v7145 = vpop.permute.xlu0 %7144
  %7146 = vrot.lane.b32.xlu0 %v5199, 64
  %v7147 = vpop.permute.xlu0 %7146
  %7148 = vrot.lane.b32.xlu0 %v5200, 64
  %v7149 = vpop.permute.xlu0 %7148
  %7150 = vrot.lane.b32.xlu0 %v5201, 64
  %v7151 = vpop.permute.xlu0 %7150
  %7152 = vrot.lane.b32.xlu0 %v5202, 64
  %v7153 = vpop.permute.xlu0 %7152
  %7154 = vrot.lane.b32.xlu0 %v5203, 64
  %v7155 = vpop.permute.xlu0 %7154
  %7156 = vrot.lane.b32.xlu0 %v5204, 64
  %v7157 = vpop.permute.xlu0 %7156
  %7158 = vrot.lane.b32.xlu0 %v5205, 64
  %v7159 = vpop.permute.xlu0 %7158
  %7160 = vrot.lane.b32.xlu0 %v5206, 64
  %v7161 = vpop.permute.xlu0 %7160
  %7162 = vrot.lane.b32.xlu0 %v5207, 64
  %v7163 = vpop.permute.xlu0 %7162
  %7164 = vrot.lane.b32.xlu0 %v5208, 64
  %v7165 = vpop.permute.xlu0 %7164
  %7166 = vrot.lane.b32.xlu0 %v5209, 64
  %v7167 = vpop.permute.xlu0 %7166
  %7168 = vrot.lane.b32.xlu0 %v5210, 64
  %v7169 = vpop.permute.xlu0 %7168
  %7170 = vrot.lane.b32.xlu0 %v5211, 64
  %v7171 = vpop.permute.xlu0 %7170
  %7172 = vrot.lane.b32.xlu0 %v5212, 64
  %v7173 = vpop.permute.xlu0 %7172
  %7174 = vrot.lane.b32.xlu0 %v5213, 64
  %v7175 = vpop.permute.xlu0 %7174
  %7176 = vrot.lane.b32.xlu0 %v5214, 64
  %v7177 = vpop.permute.xlu0 %7176
  %7178 = vrot.lane.b32.xlu0 %v5215, 64
  %v7179 = vpop.permute.xlu0 %7178
  %7180 = vrot.lane.b32.xlu0 %v5216, 64
  %v7181 = vpop.permute.xlu0 %7180
  %7182 = vrot.lane.b32.xlu0 %v5217, 64
  %v7183 = vpop.permute.xlu0 %7182
  %7184 = vrot.lane.b32.xlu0 %v5218, 64
  %v7185 = vpop.permute.xlu0 %7184
  %7186 = vrot.lane.b32.xlu0 %v5219, 64
  %v7187 = vpop.permute.xlu0 %7186
  %7188 = vrot.lane.b32.xlu0 %v5220, 64
  %v7189 = vpop.permute.xlu0 %7188
  %7190 = vrot.lane.b32.xlu0 %v5221, 64
  %v7191 = vpop.permute.xlu0 %7190
  %7192 = vrot.lane.b32.xlu0 %v5222, 64
  %v7193 = vpop.permute.xlu0 %7192
  %7194 = vrot.lane.b32.xlu0 %v5223, 64
  %v7195 = vpop.permute.xlu0 %7194
  %7196 = vrot.lane.b32.xlu0 %v5224, 64
  %v7197 = vpop.permute.xlu0 %7196
  %7198 = vrot.lane.b32.xlu0 %v5225, 64
  %v7199 = vpop.permute.xlu0 %7198
  %7200 = vrot.lane.b32.xlu0 %v5226, 64
  %v7201 = vpop.permute.xlu0 %7200
  %7202 = vrot.lane.b32.xlu0 %v5227, 64
  %v7203 = vpop.permute.xlu0 %7202
  %7204 = vrot.lane.b32.xlu0 %v5228, 64
  %v7205 = vpop.permute.xlu0 %7204
  %7206 = vrot.lane.b32.xlu0 %v5229, 64
  %v7207 = vpop.permute.xlu0 %7206
  %7208 = vrot.lane.b32.xlu0 %v5230, 64
  %v7209 = vpop.permute.xlu0 %7208
  %7210 = vrot.lane.b32.xlu0 %v5231, 64
  %v7211 = vpop.permute.xlu0 %7210
  %7212 = vrot.lane.b32.xlu0 %v5232, 64
  %v7213 = vpop.permute.xlu0 %7212
  %7214 = vrot.lane.b32.xlu0 %v5233, 64
  %v7215 = vpop.permute.xlu0 %7214
  %7216 = vrot.lane.b32.xlu0 %v5234, 64
  %v7217 = vpop.permute.xlu0 %7216
  %7218 = vrot.lane.b32.xlu0 %v5235, 64
  %v7219 = vpop.permute.xlu0 %7218
  %v7284 = vsel %vm3062, %v4659, %v5301
  %v7285 = vsel %vm3062, %v4660, %v5303
  %v7286 = vsel %vm3062, %v4661, %v5305
  %v7287 = vsel %vm3062, %v4662, %v5307
  %v7288 = vsel %vm3062, %v4663, %v5309
  %v7289 = vsel %vm3062, %v4664, %v5311
  %v7290 = vsel %vm3062, %v4665, %v5313
  %v7291 = vsel %vm3062, %v4666, %v5315
  %v7292 = vsel %vm3062, %v4667, %v5317
  %v7293 = vsel %vm3062, %v4668, %v5319
  %v7294 = vsel %vm3062, %v4669, %v5321
  %v7295 = vsel %vm3062, %v4670, %v5323
  %v7296 = vsel %vm3062, %v4671, %v5325
  %v7297 = vsel %vm3062, %v4672, %v5327
  %v7298 = vsel %vm3062, %v4673, %v5329
  %v7299 = vsel %vm3062, %v4674, %v5331
  %v7300 = vsel %vm3062, %v4675, %v5333
  %v7301 = vsel %vm3062, %v4676, %v5335
  %v7302 = vsel %vm3062, %v4677, %v5337
  %v7303 = vsel %vm3062, %v4678, %v5339
  %v7304 = vsel %vm3062, %v4679, %v5341
  %v7305 = vsel %vm3062, %v4680, %v5343
  %v7306 = vsel %vm3062, %v4681, %v5345
  %v7307 = vsel %vm3062, %v4682, %v5347
  %v7308 = vsel %vm3062, %v4683, %v5349
  %v7309 = vsel %vm3062, %v4684, %v5351
  %v7310 = vsel %vm3062, %v4685, %v5353
  %v7311 = vsel %vm3062, %v4686, %v5355
  %v7312 = vsel %vm3062, %v4687, %v5357
  %v7313 = vsel %vm3062, %v4688, %v5359
  %v7314 = vsel %vm3062, %v4689, %v5361
  %v7315 = vsel %vm3062, %v4690, %v5363
  %v7316 = vsel %vm3062, %v4691, %v5365
  %v7317 = vsel %vm3062, %v4692, %v5367
  %v7318 = vsel %vm3062, %v4693, %v5369
  %v7319 = vsel %vm3062, %v4694, %v5371
  %v7320 = vsel %vm3062, %v4695, %v5373
  %v7321 = vsel %vm3062, %v4696, %v5375
  %v7322 = vsel %vm3062, %v4697, %v5377
  %v7323 = vsel %vm3062, %v4698, %v5379
  %v7324 = vsel %vm3062, %v4699, %v5381
  %v7325 = vsel %vm3062, %v4700, %v5383
  %v7326 = vsel %vm3062, %v4701, %v5385
  %v7327 = vsel %vm3062, %v4702, %v5387
  %v7328 = vsel %vm3062, %v4703, %v5389
  %v7329 = vsel %vm3062, %v4704, %v5391
  %v7330 = vsel %vm3062, %v4705, %v5393
  %v7331 = vsel %vm3062, %v4706, %v5395
  %v7332 = vsel %vm3062, %v4707, %v5397
  %v7333 = vsel %vm3062, %v4708, %v5399
  %v7334 = vsel %vm3062, %v4709, %v5401
  %v7335 = vsel %vm3062, %v4710, %v5403
  %v7336 = vsel %vm3062, %v4711, %v5405
  %v7337 = vsel %vm3062, %v4712, %v5407
  %v7338 = vsel %vm3062, %v4713, %v5409
  %v7339 = vsel %vm3062, %v4714, %v5411
  %v7340 = vsel %vm3062, %v4715, %v5413
  %v7341 = vsel %vm3062, %v4716, %v5415
  %v7342 = vsel %vm3062, %v4717, %v5417
  %v7343 = vsel %vm3062, %v4718, %v5419
  %v7344 = vsel %vm3062, %v4719, %v5421
  %v7345 = vsel %vm3062, %v4720, %v5423
  %v7346 = vsel %vm3062, %v4721, %v5425
  %v7347 = vsel %vm3062, %v4722, %v5427
  %v7348 = vsel %vm3192, %v7284, %v5557
  %v7349 = vsel %vm3192, %v7285, %v5559
  %v7350 = vsel %vm3192, %v7286, %v5561
  %v7351 = vsel %vm3192, %v7287, %v5563
  %v7352 = vsel %vm3192, %v7288, %v5565
  %v7353 = vsel %vm3192, %v7289, %v5567
  %v7354 = vsel %vm3192, %v7290, %v5569
  %v7355 = vsel %vm3192, %v7291, %v5571
  %v7356 = vsel %vm3192, %v7292, %v5573
  %v7357 = vsel %vm3192, %v7293, %v5575
  %v7358 = vsel %vm3192, %v7294, %v5577
  %v7359 = vsel %vm3192, %v7295, %v5579
  %v7360 = vsel %vm3192, %v7296, %v5581
  %v7361 = vsel %vm3192, %v7297, %v5583
  %v7362 = vsel %vm3192, %v7298, %v5585
  %v7363 = vsel %vm3192, %v7299, %v5587
  %v7364 = vsel %vm3192, %v7300, %v5589
  %v7365 = vsel %vm3192, %v7301, %v5591
  %v7366 = vsel %vm3192, %v7302, %v5593
  %v7367 = vsel %vm3192, %v7303, %v5595
  %v7368 = vsel %vm3192, %v7304, %v5597
  %v7369 = vsel %vm3192, %v7305, %v5599
  %v7370 = vsel %vm3192, %v7306, %v5601
  %v7371 = vsel %vm3192, %v7307, %v5603
  %v7372 = vsel %vm3192, %v7308, %v5605
  %v7373 = vsel %vm3192, %v7309, %v5607
  %v7374 = vsel %vm3192, %v7310, %v5609
  %v7375 = vsel %vm3192, %v7311, %v5611
  %v7376 = vsel %vm3192, %v7312, %v5613
  %v7377 = vsel %vm3192, %v7313, %v5615
  %v7378 = vsel %vm3192, %v7314, %v5617
  %v7379 = vsel %vm3192, %v7315, %v5619
  %v7380 = vsel %vm3192, %v7316, %v5621
  %v7381 = vsel %vm3192, %v7317, %v5623
  %v7382 = vsel %vm3192, %v7318, %v5625
  %v7383 = vsel %vm3192, %v7319, %v5627
  %v7384 = vsel %vm3192, %v7320, %v5629
  %v7385 = vsel %vm3192, %v7321, %v5631
  %v7386 = vsel %vm3192, %v7322, %v5633
  %v7387 = vsel %vm3192, %v7323, %v5635
  %v7388 = vsel %vm3192, %v7324, %v5637
  %v7389 = vsel %vm3192, %v7325, %v5639
  %v7390 = vsel %vm3192, %v7326, %v5641
  %v7391 = vsel %vm3192, %v7327, %v5643
  %v7392 = vsel %vm3192, %v7328, %v5645
  %v7393 = vsel %vm3192, %v7329, %v5647
  %v7394 = vsel %vm3192, %v7330, %v5649
  %v7395 = vsel %vm3192, %v7331, %v5651
  %v7396 = vsel %vm3192, %v7332, %v5653
  %v7397 = vsel %vm3192, %v7333, %v5655
  %v7398 = vsel %vm3192, %v7334, %v5657
  %v7399 = vsel %vm3192, %v7335, %v5659
  %v7400 = vsel %vm3192, %v7336, %v5661
  %v7401 = vsel %vm3192, %v7337, %v5663
  %v7402 = vsel %vm3192, %v7338, %v5665
  %v7403 = vsel %vm3192, %v7339, %v5667
  %v7404 = vsel %vm3192, %v7340, %v5669
  %v7405 = vsel %vm3192, %v7341, %v5671
  %v7406 = vsel %vm3192, %v7342, %v5673
  %v7407 = vsel %vm3192, %v7343, %v5675
  %v7408 = vsel %vm3192, %v7344, %v5677
  %v7409 = vsel %vm3192, %v7345, %v5679
  %v7410 = vsel %vm3192, %v7346, %v5681
  %v7411 = vsel %vm3192, %v7347, %v5683
  %v7412 = vsel %vm3322, %v7348, %v5813
  %v7413 = vsel %vm3322, %v7349, %v5815
  %v7414 = vsel %vm3322, %v7350, %v5817
  %v7415 = vsel %vm3322, %v7351, %v5819
  %v7416 = vsel %vm3322, %v7352, %v5821
  %v7417 = vsel %vm3322, %v7353, %v5823
  %v7418 = vsel %vm3322, %v7354, %v5825
  %v7419 = vsel %vm3322, %v7355, %v5827
  %v7420 = vsel %vm3322, %v7356, %v5829
  %v7421 = vsel %vm3322, %v7357, %v5831
  %v7422 = vsel %vm3322, %v7358, %v5833
  %v7423 = vsel %vm3322, %v7359, %v5835
  %v7424 = vsel %vm3322, %v7360, %v5837
  %v7425 = vsel %vm3322, %v7361, %v5839
  %v7426 = vsel %vm3322, %v7362, %v5841
  %v7427 = vsel %vm3322, %v7363, %v5843
  %v7428 = vsel %vm3322, %v7364, %v5845
  %v7429 = vsel %vm3322, %v7365, %v5847
  %v7430 = vsel %vm3322, %v7366, %v5849
  %v7431 = vsel %vm3322, %v7367, %v5851
  %v7432 = vsel %vm3322, %v7368, %v5853
  %v7433 = vsel %vm3322, %v7369, %v5855
  %v7434 = vsel %vm3322, %v7370, %v5857
  %v7435 = vsel %vm3322, %v7371, %v5859
  %v7436 = vsel %vm3322, %v7372, %v5861
  %v7437 = vsel %vm3322, %v7373, %v5863
  %v7438 = vsel %vm3322, %v7374, %v5865
  %v7439 = vsel %vm3322, %v7375, %v5867
  %v7440 = vsel %vm3322, %v7376, %v5869
  %v7441 = vsel %vm3322, %v7377, %v5871
  %v7442 = vsel %vm3322, %v7378, %v5873
  %v7443 = vsel %vm3322, %v7379, %v5875
  %v7444 = vsel %vm3322, %v7380, %v5877
  %v7445 = vsel %vm3322, %v7381, %v5879
  %v7446 = vsel %vm3322, %v7382, %v5881
  %v7447 = vsel %vm3322, %v7383, %v5883
  %v7448 = vsel %vm3322, %v7384, %v5885
  %v7449 = vsel %vm3322, %v7385, %v5887
  %v7450 = vsel %vm3322, %v7386, %v5889
  %v7451 = vsel %vm3322, %v7387, %v5891
  %v7452 = vsel %vm3322, %v7388, %v5893
  %v7453 = vsel %vm3322, %v7389, %v5895
  %v7454 = vsel %vm3322, %v7390, %v5897
  %v7455 = vsel %vm3322, %v7391, %v5899
  %v7456 = vsel %vm3322, %v7392, %v5901
  %v7457 = vsel %vm3322, %v7393, %v5903
  %v7458 = vsel %vm3322, %v7394, %v5905
  %v7459 = vsel %vm3322, %v7395, %v5907
  %v7460 = vsel %vm3322, %v7396, %v5909
  %v7461 = vsel %vm3322, %v7397, %v5911
  %v7462 = vsel %vm3322, %v7398, %v5913
  %v7463 = vsel %vm3322, %v7399, %v5915
  %v7464 = vsel %vm3322, %v7400, %v5917
  %v7465 = vsel %vm3322, %v7401, %v5919
  %v7466 = vsel %vm3322, %v7402, %v5921
  %v7467 = vsel %vm3322, %v7403, %v5923
  %v7468 = vsel %vm3322, %v7404, %v5925
  %v7469 = vsel %vm3322, %v7405, %v5927
  %v7470 = vsel %vm3322, %v7406, %v5929
  %v7471 = vsel %vm3322, %v7407, %v5931
  %v7472 = vsel %vm3322, %v7408, %v5933
  %v7473 = vsel %vm3322, %v7409, %v5935
  %v7474 = vsel %vm3322, %v7410, %v5937
  %v7475 = vsel %vm3322, %v7411, %v5939
  %v7476 = vsel %vm3452, %v7412, %v6069
  %v7477 = vsel %vm3452, %v7413, %v6071
  %v7478 = vsel %vm3452, %v7414, %v6073
  %v7479 = vsel %vm3452, %v7415, %v6075
  %v7480 = vsel %vm3452, %v7416, %v6077
  %v7481 = vsel %vm3452, %v7417, %v6079
  %v7482 = vsel %vm3452, %v7418, %v6081
  %v7483 = vsel %vm3452, %v7419, %v6083
  %v7484 = vsel %vm3452, %v7420, %v6085
  %v7485 = vsel %vm3452, %v7421, %v6087
  %v7486 = vsel %vm3452, %v7422, %v6089
  %v7487 = vsel %vm3452, %v7423, %v6091
  %v7488 = vsel %vm3452, %v7424, %v6093
  %v7489 = vsel %vm3452, %v7425, %v6095
  %v7490 = vsel %vm3452, %v7426, %v6097
  %v7491 = vsel %vm3452, %v7427, %v6099
  %v7492 = vsel %vm3452, %v7428, %v6101
  %v7493 = vsel %vm3452, %v7429, %v6103
  %v7494 = vsel %vm3452, %v7430, %v6105
  %v7495 = vsel %vm3452, %v7431, %v6107
  %v7496 = vsel %vm3452, %v7432, %v6109
  %v7497 = vsel %vm3452, %v7433, %v6111
  %v7498 = vsel %vm3452, %v7434, %v6113
  %v7499 = vsel %vm3452, %v7435, %v6115
  %v7500 = vsel %vm3452, %v7436, %v6117
  %v7501 = vsel %vm3452, %v7437, %v6119
  %v7502 = vsel %vm3452, %v7438, %v6121
  %v7503 = vsel %vm3452, %v7439, %v6123
  %v7504 = vsel %vm3452, %v7440, %v6125
  %v7505 = vsel %vm3452, %v7441, %v6127
  %v7506 = vsel %vm3452, %v7442, %v6129
  %v7507 = vsel %vm3452, %v7443, %v6131
  %v7508 = vsel %vm3452, %v7444, %v6133
  %v7509 = vsel %vm3452, %v7445, %v6135
  %v7510 = vsel %vm3452, %v7446, %v6137
  %v7511 = vsel %vm3452, %v7447, %v6139
  %v7512 = vsel %vm3452, %v7448, %v6141
  %v7513 = vsel %vm3452, %v7449, %v6143
  %v7514 = vsel %vm3452, %v7450, %v6145
  %v7515 = vsel %vm3452, %v7451, %v6147
  %v7516 = vsel %vm3452, %v7452, %v6149
  %v7517 = vsel %vm3452, %v7453, %v6151
  %v7518 = vsel %vm3452, %v7454, %v6153
  %v7519 = vsel %vm3452, %v7455, %v6155
  %v7520 = vsel %vm3452, %v7456, %v6157
  %v7521 = vsel %vm3452, %v7457, %v6159
  %v7522 = vsel %vm3452, %v7458, %v6161
  %v7523 = vsel %vm3452, %v7459, %v6163
  %v7524 = vsel %vm3452, %v7460, %v6165
  %v7525 = vsel %vm3452, %v7461, %v6167
  %v7526 = vsel %vm3452, %v7462, %v6169
  %v7527 = vsel %vm3452, %v7463, %v6171
  %v7528 = vsel %vm3452, %v7464, %v6173
  %v7529 = vsel %vm3452, %v7465, %v6175
  %v7530 = vsel %vm3452, %v7466, %v6177
  %v7531 = vsel %vm3452, %v7467, %v6179
  %v7532 = vsel %vm3452, %v7468, %v6181
  %v7533 = vsel %vm3452, %v7469, %v6183
  %v7534 = vsel %vm3452, %v7470, %v6185
  %v7535 = vsel %vm3452, %v7471, %v6187
  %v7536 = vsel %vm3452, %v7472, %v6189
  %v7537 = vsel %vm3452, %v7473, %v6191
  %v7538 = vsel %vm3452, %v7474, %v6193
  %v7539 = vsel %vm3452, %v7475, %v6195
  %vm7540 = vcmask 326656
  %v7541 = vsel %vm7540, %v7476, %v6325
  %v7542 = vsel %vm7540, %v7477, %v6327
  %v7543 = vsel %vm7540, %v7478, %v6329
  %v7544 = vsel %vm7540, %v7479, %v6331
  %v7545 = vsel %vm7540, %v7480, %v6333
  %v7546 = vsel %vm7540, %v7481, %v6335
  %v7547 = vsel %vm7540, %v7482, %v6337
  %v7548 = vsel %vm7540, %v7483, %v6339
  %v7549 = vsel %vm7540, %v7484, %v6341
  %v7550 = vsel %vm7540, %v7485, %v6343
  %v7551 = vsel %vm7540, %v7486, %v6345
  %v7552 = vsel %vm7540, %v7487, %v6347
  %v7553 = vsel %vm7540, %v7488, %v6349
  %v7554 = vsel %vm7540, %v7489, %v6351
  %v7555 = vsel %vm7540, %v7490, %v6353
  %v7556 = vsel %vm7540, %v7491, %v6355
  %v7557 = vsel %vm7540, %v7492, %v6357
  %v7558 = vsel %vm7540, %v7493, %v6359
  %v7559 = vsel %vm7540, %v7494, %v6361
  %v7560 = vsel %vm7540, %v7495, %v6363
  %v7561 = vsel %vm7540, %v7496, %v6365
  %v7562 = vsel %vm7540, %v7497, %v6367
  %v7563 = vsel %vm7540, %v7498, %v6369
  %v7564 = vsel %vm7540, %v7499, %v6371
  %v7565 = vsel %vm7540, %v7500, %v6373
  %v7566 = vsel %vm7540, %v7501, %v6375
  %v7567 = vsel %vm7540, %v7502, %v6377
  %v7568 = vsel %vm7540, %v7503, %v6379
  %v7569 = vsel %vm7540, %v7504, %v6381
  %v7570 = vsel %vm7540, %v7505, %v6383
  %v7571 = vsel %vm7540, %v7506, %v6385
  %v7572 = vsel %vm7540, %v7507, %v6387
  %v7573 = vsel %vm7540, %v7508, %v6389
  %v7574 = vsel %vm7540, %v7509, %v6391
  %v7575 = vsel %vm7540, %v7510, %v6393
  %v7576 = vsel %vm7540, %v7511, %v6395
  %v7577 = vsel %vm7540, %v7512, %v6397
  %v7578 = vsel %vm7540, %v7513, %v6399
  %v7579 = vsel %vm7540, %v7514, %v6401
  %v7580 = vsel %vm7540, %v7515, %v6403
  %v7581 = vsel %vm7540, %v7516, %v6405
  %v7582 = vsel %vm7540, %v7517, %v6407
  %v7583 = vsel %vm7540, %v7518, %v6409
  %v7584 = vsel %vm7540, %v7519, %v6411
  %v7585 = vsel %vm7540, %v7520, %v6413
  %v7586 = vsel %vm7540, %v7521, %v6415
  %v7587 = vsel %vm7540, %v7522, %v6417
  %v7588 = vsel %vm7540, %v7523, %v6419
  %v7589 = vsel %vm7540, %v7524, %v6421
  %v7590 = vsel %vm7540, %v7525, %v6423
  %v7591 = vsel %vm7540, %v7526, %v6425
  %v7592 = vsel %vm7540, %v7527, %v6427
  %v7593 = vsel %vm7540, %v7528, %v6429
  %v7594 = vsel %vm7540, %v7529, %v6431
  %v7595 = vsel %vm7540, %v7530, %v6433
  %v7596 = vsel %vm7540, %v7531, %v6435
  %v7597 = vsel %vm7540, %v7532, %v6437
  %v7598 = vsel %vm7540, %v7533, %v6439
  %v7599 = vsel %vm7540, %v7534, %v6441
  %v7600 = vsel %vm7540, %v7535, %v6443
  %v7601 = vsel %vm7540, %v7536, %v6445
  %v7602 = vsel %vm7540, %v7537, %v6447
  %v7603 = vsel %vm7540, %v7538, %v6449
  %v7604 = vsel %vm7540, %v7539, %v6451
  %vm7605 = vcmask 392192
  %v7606 = vsel %vm7605, %v7541, %v6581
  %v7607 = vsel %vm7605, %v7542, %v6583
  %v7608 = vsel %vm7605, %v7543, %v6585
  %v7609 = vsel %vm7605, %v7544, %v6587
  %v7610 = vsel %vm7605, %v7545, %v6589
  %v7611 = vsel %vm7605, %v7546, %v6591
  %v7612 = vsel %vm7605, %v7547, %v6593
  %v7613 = vsel %vm7605, %v7548, %v6595
  %v7614 = vsel %vm7605, %v7549, %v6597
  %v7615 = vsel %vm7605, %v7550, %v6599
  %v7616 = vsel %vm7605, %v7551, %v6601
  %v7617 = vsel %vm7605, %v7552, %v6603
  %v7618 = vsel %vm7605, %v7553, %v6605
  %v7619 = vsel %vm7605, %v7554, %v6607
  %v7620 = vsel %vm7605, %v7555, %v6609
  %v7621 = vsel %vm7605, %v7556, %v6611
  %v7622 = vsel %vm7605, %v7557, %v6613
  %v7623 = vsel %vm7605, %v7558, %v6615
  %v7624 = vsel %vm7605, %v7559, %v6617
  %v7625 = vsel %vm7605, %v7560, %v6619
  %v7626 = vsel %vm7605, %v7561, %v6621
  %v7627 = vsel %vm7605, %v7562, %v6623
  %v7628 = vsel %vm7605, %v7563, %v6625
  %v7629 = vsel %vm7605, %v7564, %v6627
  %v7630 = vsel %vm7605, %v7565, %v6629
  %v7631 = vsel %vm7605, %v7566, %v6631
  %v7632 = vsel %vm7605, %v7567, %v6633
  %v7633 = vsel %vm7605, %v7568, %v6635
  %v7634 = vsel %vm7605, %v7569, %v6637
  %v7635 = vsel %vm7605, %v7570, %v6639
  %v7636 = vsel %vm7605, %v7571, %v6641
  %v7637 = vsel %vm7605, %v7572, %v6643
  %v7638 = vsel %vm7605, %v7573, %v6645
  %v7639 = vsel %vm7605, %v7574, %v6647
  %v7640 = vsel %vm7605, %v7575, %v6649
  %v7641 = vsel %vm7605, %v7576, %v6651
  %v7642 = vsel %vm7605, %v7577, %v6653
  %v7643 = vsel %vm7605, %v7578, %v6655
  %v7644 = vsel %vm7605, %v7579, %v6657
  %v7645 = vsel %vm7605, %v7580, %v6659
  %v7646 = vsel %vm7605, %v7581, %v6661
  %v7647 = vsel %vm7605, %v7582, %v6663
  %v7648 = vsel %vm7605, %v7583, %v6665
  %v7649 = vsel %vm7605, %v7584, %v6667
  %v7650 = vsel %vm7605, %v7585, %v6669
  %v7651 = vsel %vm7605, %v7586, %v6671
  %v7652 = vsel %vm7605, %v7587, %v6673
  %v7653 = vsel %vm7605, %v7588, %v6675
  %v7654 = vsel %vm7605, %v7589, %v6677
  %v7655 = vsel %vm7605, %v7590, %v6679
  %v7656 = vsel %vm7605, %v7591, %v6681
  %v7657 = vsel %vm7605, %v7592, %v6683
  %v7658 = vsel %vm7605, %v7593, %v6685
  %v7659 = vsel %vm7605, %v7594, %v6687
  %v7660 = vsel %vm7605, %v7595, %v6689
  %v7661 = vsel %vm7605, %v7596, %v6691
  %v7662 = vsel %vm7605, %v7597, %v6693
  %v7663 = vsel %vm7605, %v7598, %v6695
  %v7664 = vsel %vm7605, %v7599, %v6697
  %v7665 = vsel %vm7605, %v7600, %v6699
  %v7666 = vsel %vm7605, %v7601, %v6701
  %v7667 = vsel %vm7605, %v7602, %v6703
  %v7668 = vsel %vm7605, %v7603, %v6705
  %v7669 = vsel %vm7605, %v7604, %v6707
  %vm7670 = vcmask 457728
  %v7671 = vsel %vm7670, %v7606, %v6837
  %v7672 = vsel %vm7670, %v7607, %v6839
  %v7673 = vsel %vm7670, %v7608, %v6841
  %v7674 = vsel %vm7670, %v7609, %v6843
  %v7675 = vsel %vm7670, %v7610, %v6845
  %v7676 = vsel %vm7670, %v7611, %v6847
  %v7677 = vsel %vm7670, %v7612, %v6849
  %v7678 = vsel %vm7670, %v7613, %v6851
  %v7679 = vsel %vm7670, %v7614, %v6853
  %v7680 = vsel %vm7670, %v7615, %v6855
  %v7681 = vsel %vm7670, %v7616, %v6857
  %v7682 = vsel %vm7670, %v7617, %v6859
  %v7683 = vsel %vm7670, %v7618, %v6861
  %v7684 = vsel %vm7670, %v7619, %v6863
  %v7685 = vsel %vm7670, %v7620, %v6865
  %v7686 = vsel %vm7670, %v7621, %v6867
  %v7687 = vsel %vm7670, %v7622, %v6869
  %v7688 = vsel %vm7670, %v7623, %v6871
  %v7689 = vsel %vm7670, %v7624, %v6873
  %v7690 = vsel %vm7670, %v7625, %v6875
  %v7691 = vsel %vm7670, %v7626, %v6877
  %v7692 = vsel %vm7670, %v7627, %v6879
  %v7693 = vsel %vm7670, %v7628, %v6881
  %v7694 = vsel %vm7670, %v7629, %v6883
  %v7695 = vsel %vm7670, %v7630, %v6885
  %v7696 = vsel %vm7670, %v7631, %v6887
  %v7697 = vsel %vm7670, %v7632, %v6889
  %v7698 = vsel %vm7670, %v7633, %v6891
  %v7699 = vsel %vm7670, %v7634, %v6893
  %v7700 = vsel %vm7670, %v7635, %v6895
  %v7701 = vsel %vm7670, %v7636, %v6897
  %v7702 = vsel %vm7670, %v7637, %v6899
  %v7703 = vsel %vm7670, %v7638, %v6901
  %v7704 = vsel %vm7670, %v7639, %v6903
  %v7705 = vsel %vm7670, %v7640, %v6905
  %v7706 = vsel %vm7670, %v7641, %v6907
  %v7707 = vsel %vm7670, %v7642, %v6909
  %v7708 = vsel %vm7670, %v7643, %v6911
  %v7709 = vsel %vm7670, %v7644, %v6913
  %v7710 = vsel %vm7670, %v7645, %v6915
  %v7711 = vsel %vm7670, %v7646, %v6917
  %v7712 = vsel %vm7670, %v7647, %v6919
  %v7713 = vsel %vm7670, %v7648, %v6921
  %v7714 = vsel %vm7670, %v7649, %v6923
  %v7715 = vsel %vm7670, %v7650, %v6925
  %v7716 = vsel %vm7670, %v7651, %v6927
  %v7717 = vsel %vm7670, %v7652, %v6929
  %v7718 = vsel %vm7670, %v7653, %v6931
  %v7719 = vsel %vm7670, %v7654, %v6933
  %v7720 = vsel %vm7670, %v7655, %v6935
  %v7721 = vsel %vm7670, %v7656, %v6937
  %v7722 = vsel %vm7670, %v7657, %v6939
  %v7723 = vsel %vm7670, %v7658, %v6941
  %v7724 = vsel %vm7670, %v7659, %v6943
  %v7725 = vsel %vm7670, %v7660, %v6945
  %v7726 = vsel %vm7670, %v7661, %v6947
  %v7727 = vsel %vm7670, %v7662, %v6949
  %v7728 = vsel %vm7670, %v7663, %v6951
  %v7729 = vsel %vm7670, %v7664, %v6953
  %v7730 = vsel %vm7670, %v7665, %v6955
  %v7731 = vsel %vm7670, %v7666, %v6957
  %v7732 = vsel %vm7670, %v7667, %v6959
  %v7733 = vsel %vm7670, %v7668, %v6961
  %v7734 = vsel %vm7670, %v7669, %v6963
  %vm7735 = vcmask 523264
  %v7736 = vsel %vm7735, %v7671, %v7093
  %v7737 = vsel %vm7735, %v7672, %v7095
  %v7738 = vsel %vm7735, %v7673, %v7097
  %v7739 = vsel %vm7735, %v7674, %v7099
  %v7740 = vsel %vm7735, %v7675, %v7101
  %v7741 = vsel %vm7735, %v7676, %v7103
  %v7742 = vsel %vm7735, %v7677, %v7105
  %v7743 = vsel %vm7735, %v7678, %v7107
  %v7744 = vsel %vm7735, %v7679, %v7109
  %v7745 = vsel %vm7735, %v7680, %v7111
  %v7746 = vsel %vm7735, %v7681, %v7113
  %v7747 = vsel %vm7735, %v7682, %v7115
  %v7748 = vsel %vm7735, %v7683, %v7117
  %v7749 = vsel %vm7735, %v7684, %v7119
  %v7750 = vsel %vm7735, %v7685, %v7121
  %v7751 = vsel %vm7735, %v7686, %v7123
  %v7752 = vsel %vm7735, %v7687, %v7125
  %v7753 = vsel %vm7735, %v7688, %v7127
  %v7754 = vsel %vm7735, %v7689, %v7129
  %v7755 = vsel %vm7735, %v7690, %v7131
  %v7756 = vsel %vm7735, %v7691, %v7133
  %v7757 = vsel %vm7735, %v7692, %v7135
  %v7758 = vsel %vm7735, %v7693, %v7137
  %v7759 = vsel %vm7735, %v7694, %v7139
  %v7760 = vsel %vm7735, %v7695, %v7141
  %v7761 = vsel %vm7735, %v7696, %v7143
  %v7762 = vsel %vm7735, %v7697, %v7145
  %v7763 = vsel %vm7735, %v7698, %v7147
  %v7764 = vsel %vm7735, %v7699, %v7149
  %v7765 = vsel %vm7735, %v7700, %v7151
  %v7766 = vsel %vm7735, %v7701, %v7153
  %v7767 = vsel %vm7735, %v7702, %v7155
  %v7768 = vsel %vm7735, %v7703, %v7157
  %v7769 = vsel %vm7735, %v7704, %v7159
  %v7770 = vsel %vm7735, %v7705, %v7161
  %v7771 = vsel %vm7735, %v7706, %v7163
  %v7772 = vsel %vm7735, %v7707, %v7165
  %v7773 = vsel %vm7735, %v7708, %v7167
  %v7774 = vsel %vm7735, %v7709, %v7169
  %v7775 = vsel %vm7735, %v7710, %v7171
  %v7776 = vsel %vm7735, %v7711, %v7173
  %v7777 = vsel %vm7735, %v7712, %v7175
  %v7778 = vsel %vm7735, %v7713, %v7177
  %v7779 = vsel %vm7735, %v7714, %v7179
  %v7780 = vsel %vm7735, %v7715, %v7181
  %v7781 = vsel %vm7735, %v7716, %v7183
  %v7782 = vsel %vm7735, %v7717, %v7185
  %v7783 = vsel %vm7735, %v7718, %v7187
  %v7784 = vsel %vm7735, %v7719, %v7189
  %v7785 = vsel %vm7735, %v7720, %v7191
  %v7786 = vsel %vm7735, %v7721, %v7193
  %v7787 = vsel %vm7735, %v7722, %v7195
  %v7788 = vsel %vm7735, %v7723, %v7197
  %v7789 = vsel %vm7735, %v7724, %v7199
  %v7790 = vsel %vm7735, %v7725, %v7201
  %v7791 = vsel %vm7735, %v7726, %v7203
  %v7792 = vsel %vm7735, %v7727, %v7205
  %v7793 = vsel %vm7735, %v7728, %v7207
  %v7794 = vsel %vm7735, %v7729, %v7209
  %v7795 = vsel %vm7735, %v7730, %v7211
  %v7796 = vsel %vm7735, %v7731, %v7213
  %v7797 = vsel %vm7735, %v7732, %v7215
  %v7798 = vsel %vm7735, %v7733, %v7217
  %v7799 = vsel %vm7735, %v7734, %v7219
  %v7800 = vpack.c.bf16 %v7737, %v7736
  %v7801 = vpack.c.bf16 %v7739, %v7738
  %v7802 = vpack.c.bf16 %v7741, %v7740
  %v7803 = vpack.c.bf16 %v7743, %v7742
  %v7804 = vpack.c.bf16 %v7745, %v7744
  %v7805 = vpack.c.bf16 %v7747, %v7746
  %v7806 = vpack.c.bf16 %v7749, %v7748
  %v7807 = vpack.c.bf16 %v7751, %v7750
  %v7808 = vpack.c.bf16 %v7753, %v7752
  %v7809 = vpack.c.bf16 %v7755, %v7754
  %v7810 = vpack.c.bf16 %v7757, %v7756
  %v7811 = vpack.c.bf16 %v7759, %v7758
  %v7812 = vpack.c.bf16 %v7761, %v7760
  %v7813 = vpack.c.bf16 %v7763, %v7762
  %v7814 = vpack.c.bf16 %v7765, %v7764
  %v7815 = vpack.c.bf16 %v7767, %v7766
  %v7816 = vpack.c.bf16 %v7769, %v7768
  %v7817 = vpack.c.bf16 %v7771, %v7770
  %v7818 = vpack.c.bf16 %v7773, %v7772
  %v7819 = vpack.c.bf16 %v7775, %v7774
  %v7820 = vpack.c.bf16 %v7777, %v7776
  %v7821 = vpack.c.bf16 %v7779, %v7778
  %v7822 = vpack.c.bf16 %v7781, %v7780
  %v7823 = vpack.c.bf16 %v7783, %v7782
  %v7824 = vpack.c.bf16 %v7785, %v7784
  %v7825 = vpack.c.bf16 %v7787, %v7786
  %v7826 = vpack.c.bf16 %v7789, %v7788
  %v7827 = vpack.c.bf16 %v7791, %v7790
  %v7828 = vpack.c.bf16 %v7793, %v7792
  %v7829 = vpack.c.bf16 %v7795, %v7794
  %v7830 = vpack.c.bf16 %v7797, %v7796
  %v7831 = vpack.c.bf16 %v7799, %v7798
  %v7832 = vld [vmem:[%s5] sm:$0xf]
  %v7833 = vld [vmem:[%s5 + $0x4] sm:$0xf]
  %v7834 = vld [vmem:[%s5 + $0x8] sm:$0xf]
  %v7835 = vld [vmem:[%s5 + $0xc] sm:$0xf]
  %v7836 = vld [vmem:[%s5 + $0x10] sm:$0xf]
  %v7837 = vld [vmem:[%s5 + $0x14] sm:$0xf]
  %v7838 = vld [vmem:[%s5 + $0x18] sm:$0xf]
  %v7839 = vld [vmem:[%s5 + $0x1c] sm:$0xf]
  %v7840 = vld [vmem:[%s5 + $0x20] sm:$0xf]
  %v7842 = vperm.slane %v4448, 0
  %v7853 = vunpack.c.l.b16 %v7832
  %v7854 = vunpack.c.l.b16 %v7833
  %v7855 = vunpack.c.l.b16 %v7834
  %v7856 = vunpack.c.l.b16 %v7835
  %v7857 = vunpack.c.l.b16 %v7836
  %v7858 = vunpack.c.l.b16 %v7837
  %v7859 = vunpack.c.l.b16 %v7838
  %v7860 = vunpack.c.l.b16 %v7839
  %v7861 = vunpack.c.l.b16 %v7840
  %v7862 = vpack.c.b16 %v7854, %v7853
  %v7863 = vpack.c.b16 %v7856, %v7855
  %v7864 = vpack.c.b16 %v7858, %v7857
  %v7865 = vpack.c.b16 %v7860, %v7859
  %v7866 = vpack.c.b16 %v7861, %v7861
  %vm7871 = vcmask 588800
  %v7873 = vsel %vm7871, %v7800, 0
  %v7876 = vsel %vm7871, %v7801, 0
  %v7879 = vsel %vm7871, %v7802, 0
  %v7882 = vsel %vm7871, %v7803, 0
  %v7885 = vsel %vm7871, %v7804, 0
  %v7888 = vsel %vm7871, %v7805, 0
  %v7891 = vsel %vm7871, %v7806, 0
  %v7894 = vsel %vm7871, %v7807, 0
  %v7897 = vsel %vm7871, %v7808, 0
  %v7900 = vsel %vm7871, %v7809, 0
  %v7903 = vsel %vm7871, %v7810, 0
  %v7906 = vsel %vm7871, %v7811, 0
  %v7909 = vsel %vm7871, %v7812, 0
  %v7912 = vsel %vm7871, %v7813, 0
  %v7915 = vsel %vm7871, %v7814, 0
  %v7918 = vsel %vm7871, %v7815, 0
  %v7921 = vsel %vm7871, %v7816, 0
  %v7924 = vsel %vm7871, %v7817, 0
  %v7927 = vsel %vm7871, %v7818, 0
  %v7930 = vsel %vm7871, %v7819, 0
  %v7933 = vsel %vm7871, %v7820, 0
  %v7936 = vsel %vm7871, %v7821, 0
  %v7939 = vsel %vm7871, %v7822, 0
  %v7942 = vsel %vm7871, %v7823, 0
  %v7945 = vsel %vm7871, %v7824, 0
  %v7948 = vsel %vm7871, %v7825, 0
  %v7951 = vsel %vm7871, %v7826, 0
  %v7954 = vsel %vm7871, %v7827, 0
  %v7957 = vsel %vm7871, %v7828, 0
  %v7960 = vsel %vm7871, %v7829, 0
  %v7963 = vsel %vm7871, %v7830, 0
  %v7966 = vsel %vm7871, %v7831, 0
  %vm7968 = vcmask 1043456
  %v7970 = vsel %vm7968, %v7866, 0
  %7972 = vmatpush.bf16.msra.mxu0 0
  %7973 = vmatpush.bf16.msra.mxu0 0
  %7974 = vmatpush.bf16.msra.mxu0 0
  %7975 = vmatpush.bf16.msra.mxu0 %v7970
  %7976 = vmatpush.bf16.msra.mxu0 %v7865
  %7977 = vmatpush.bf16.msra.mxu0 %v7864
  %7978 = vmatpush.bf16.msra.mxu0 %v7863
  %7979 = vmatpush.bf16.msra.mxu0 %v7862
  %7980 = vmatmul.bf16.gmra.mxu0 %v7873
  %v7981 = vpop.f32.mrf.mxu0
  %v7982 = vadd.f32 %v7842, %v7981
  %v7983 = vpop.f32.mrf.mxu0
  %v7984 = vadd.f32 %v7842, %v7983
  %7985 = vmatmul.bf16.gmra.mxu0 %v7876
  %v7986 = vpop.f32.mrf.mxu0
  %v7987 = vadd.f32 %v7842, %v7986
  %v7988 = vpop.f32.mrf.mxu0
  %v7989 = vadd.f32 %v7842, %v7988
  %7990 = vmatmul.bf16.gmra.mxu0 %v7879
  %v7991 = vpop.f32.mrf.mxu0
  %v7992 = vadd.f32 %v7842, %v7991
  %v7993 = vpop.f32.mrf.mxu0
  %v7994 = vadd.f32 %v7842, %v7993
  %7995 = vmatmul.bf16.gmra.mxu0 %v7882
  %v7996 = vpop.f32.mrf.mxu0
  %v7997 = vadd.f32 %v7842, %v7996
  %v7998 = vpop.f32.mrf.mxu0
  %v7999 = vadd.f32 %v7842, %v7998
  %8000 = vmatmul.bf16.gmra.mxu0 %v7885
  %v8001 = vpop.f32.mrf.mxu0
  %v8002 = vadd.f32 %v7842, %v8001
  %v8003 = vpop.f32.mrf.mxu0
  %v8004 = vadd.f32 %v7842, %v8003
  %8005 = vmatmul.bf16.gmra.mxu0 %v7888
  %v8006 = vpop.f32.mrf.mxu0
  %v8007 = vadd.f32 %v7842, %v8006
  %v8008 = vpop.f32.mrf.mxu0
  %v8009 = vadd.f32 %v7842, %v8008
  %8010 = vmatmul.bf16.gmra.mxu0 %v7891
  %v8011 = vpop.f32.mrf.mxu0
  %v8012 = vadd.f32 %v7842, %v8011
  %v8013 = vpop.f32.mrf.mxu0
  %v8014 = vadd.f32 %v7842, %v8013
  %8015 = vmatmul.bf16.gmra.mxu0 %v7894
  %v8016 = vpop.f32.mrf.mxu0
  %v8017 = vadd.f32 %v7842, %v8016
  %v8018 = vpop.f32.mrf.mxu0
  %v8019 = vadd.f32 %v7842, %v8018
  %8020 = vmatmul.bf16.gmra.mxu0 %v7897
  %v8021 = vpop.f32.mrf.mxu0
  %v8022 = vadd.f32 %v7842, %v8021
  %v8023 = vpop.f32.mrf.mxu0
  %v8024 = vadd.f32 %v7842, %v8023
  %8025 = vmatmul.bf16.gmra.mxu0 %v7900
  %v8026 = vpop.f32.mrf.mxu0
  %v8027 = vadd.f32 %v7842, %v8026
  %v8028 = vpop.f32.mrf.mxu0
  %v8029 = vadd.f32 %v7842, %v8028
  %8030 = vmatmul.bf16.gmra.mxu0 %v7903
  %v8031 = vpop.f32.mrf.mxu0
  %v8032 = vadd.f32 %v7842, %v8031
  %v8033 = vpop.f32.mrf.mxu0
  %v8034 = vadd.f32 %v7842, %v8033
  %8035 = vmatmul.bf16.gmra.mxu0 %v7906
  %v8036 = vpop.f32.mrf.mxu0
  %v8037 = vadd.f32 %v7842, %v8036
  %v8038 = vpop.f32.mrf.mxu0
  %v8039 = vadd.f32 %v7842, %v8038
  %8040 = vmatmul.bf16.gmra.mxu0 %v7909
  %v8041 = vpop.f32.mrf.mxu0
  %v8042 = vadd.f32 %v7842, %v8041
  %v8043 = vpop.f32.mrf.mxu0
  %v8044 = vadd.f32 %v7842, %v8043
  %8045 = vmatmul.bf16.gmra.mxu0 %v7912
  %v8046 = vpop.f32.mrf.mxu0
  %v8047 = vadd.f32 %v7842, %v8046
  %v8048 = vpop.f32.mrf.mxu0
  %v8049 = vadd.f32 %v7842, %v8048
  %8050 = vmatmul.bf16.gmra.mxu0 %v7915
  %v8051 = vpop.f32.mrf.mxu0
  %v8052 = vadd.f32 %v7842, %v8051
  %v8053 = vpop.f32.mrf.mxu0
  %v8054 = vadd.f32 %v7842, %v8053
  %8055 = vmatmul.bf16.gmra.mxu0 %v7918
  %v8056 = vpop.f32.mrf.mxu0
  %v8057 = vadd.f32 %v7842, %v8056
  %v8058 = vpop.f32.mrf.mxu0
  %v8059 = vadd.f32 %v7842, %v8058
  %8060 = vmatmul.bf16.gmra.mxu0 %v7921
  %v8061 = vpop.f32.mrf.mxu0
  %v8062 = vadd.f32 %v7842, %v8061
  %v8063 = vpop.f32.mrf.mxu0
  %v8064 = vadd.f32 %v7842, %v8063
  %8065 = vmatmul.bf16.gmra.mxu0 %v7924
  %v8066 = vpop.f32.mrf.mxu0
  %v8067 = vadd.f32 %v7842, %v8066
  %v8068 = vpop.f32.mrf.mxu0
  %v8069 = vadd.f32 %v7842, %v8068
  %8070 = vmatmul.bf16.gmra.mxu0 %v7927
  %v8071 = vpop.f32.mrf.mxu0
  %v8072 = vadd.f32 %v7842, %v8071
  %v8073 = vpop.f32.mrf.mxu0
  %v8074 = vadd.f32 %v7842, %v8073
  %8075 = vmatmul.bf16.gmra.mxu0 %v7930
  %v8076 = vpop.f32.mrf.mxu0
  %v8077 = vadd.f32 %v7842, %v8076
  %v8078 = vpop.f32.mrf.mxu0
  %v8079 = vadd.f32 %v7842, %v8078
  %8080 = vmatmul.bf16.gmra.mxu0 %v7933
  %v8081 = vpop.f32.mrf.mxu0
  %v8082 = vadd.f32 %v7842, %v8081
  %v8083 = vpop.f32.mrf.mxu0
  %v8084 = vadd.f32 %v7842, %v8083
  %8085 = vmatmul.bf16.gmra.mxu0 %v7936
  %v8086 = vpop.f32.mrf.mxu0
  %v8087 = vadd.f32 %v7842, %v8086
  %v8088 = vpop.f32.mrf.mxu0
  %v8089 = vadd.f32 %v7842, %v8088
  %8090 = vmatmul.bf16.gmra.mxu0 %v7939
  %v8091 = vpop.f32.mrf.mxu0
  %v8092 = vadd.f32 %v7842, %v8091
  %v8093 = vpop.f32.mrf.mxu0
  %v8094 = vadd.f32 %v7842, %v8093
  %8095 = vmatmul.bf16.gmra.mxu0 %v7942
  %v8096 = vpop.f32.mrf.mxu0
  %v8097 = vadd.f32 %v7842, %v8096
  %v8098 = vpop.f32.mrf.mxu0
  %v8099 = vadd.f32 %v7842, %v8098
  %8100 = vmatmul.bf16.gmra.mxu0 %v7945
  %v8101 = vpop.f32.mrf.mxu0
  %v8102 = vadd.f32 %v7842, %v8101
  %v8103 = vpop.f32.mrf.mxu0
  %v8104 = vadd.f32 %v7842, %v8103
  %8105 = vmatmul.bf16.gmra.mxu0 %v7948
  %v8106 = vpop.f32.mrf.mxu0
  %v8107 = vadd.f32 %v7842, %v8106
  %v8108 = vpop.f32.mrf.mxu0
  %v8109 = vadd.f32 %v7842, %v8108
  %8110 = vmatmul.bf16.gmra.mxu0 %v7951
  %v8111 = vpop.f32.mrf.mxu0
  %v8112 = vadd.f32 %v7842, %v8111
  %v8113 = vpop.f32.mrf.mxu0
  %v8114 = vadd.f32 %v7842, %v8113
  %8115 = vmatmul.bf16.gmra.mxu0 %v7954
  %v8116 = vpop.f32.mrf.mxu0
  %v8117 = vadd.f32 %v7842, %v8116
  %v8118 = vpop.f32.mrf.mxu0
  %v8119 = vadd.f32 %v7842, %v8118
  %8120 = vmatmul.bf16.gmra.mxu0 %v7957
  %v8121 = vpop.f32.mrf.mxu0
  %v8122 = vadd.f32 %v7842, %v8121
  %v8123 = vpop.f32.mrf.mxu0
  %v8124 = vadd.f32 %v7842, %v8123
  %8125 = vmatmul.bf16.gmra.mxu0 %v7960
  %v8126 = vpop.f32.mrf.mxu0
  %v8127 = vadd.f32 %v7842, %v8126
  %v8128 = vpop.f32.mrf.mxu0
  %v8129 = vadd.f32 %v7842, %v8128
  %8130 = vmatmul.bf16.gmra.mxu0 %v7963
  %v8131 = vpop.f32.mrf.mxu0
  %v8132 = vadd.f32 %v7842, %v8131
  %v8133 = vpop.f32.mrf.mxu0
  %v8134 = vadd.f32 %v7842, %v8133
  %8135 = vmatmul.bf16.gmra.mxu0 %v7966
  %v8136 = vpop.f32.mrf.mxu0
  %v8137 = vadd.f32 %v7842, %v8136
  %v8138 = vpop.f32.mrf.mxu0
  %v8139 = vadd.f32 %v7842, %v8138
  %8140 = vdwg.mxu0
  %v8141 = vld [vmem:[%s7] sm:$0x1]
  %v8142 = vld [vmem:[%s8] sm:$0x1]
  %v8143 = vsel %vm3062, %v7982, 0.0
  %v8144 = vsel %vm3062, %v7984, 0.0
  %v8145 = vadd.f32 %v8143, %v8144
  %v8146 = vsel %vm3062, %v7987, 0.0
  %v8147 = vadd.f32 %v8145, %v8146
  %v8148 = vsel %vm3062, %v7989, 0.0
  %v8149 = vadd.f32 %v8147, %v8148
  %v8150 = vsel %vm3062, %v7992, 0.0
  %v8151 = vadd.f32 %v8149, %v8150
  %v8152 = vsel %vm3062, %v7994, 0.0
  %v8153 = vadd.f32 %v8151, %v8152
  %v8154 = vsel %vm3062, %v7997, 0.0
  %v8155 = vadd.f32 %v8153, %v8154
  %v8156 = vsel %vm3062, %v7999, 0.0
  %v8157 = vadd.f32 %v8155, %v8156
  %v8158 = vsel %vm3062, %v8002, 0.0
  %v8159 = vadd.f32 %v8157, %v8158
  %v8160 = vsel %vm3062, %v8004, 0.0
  %v8161 = vadd.f32 %v8159, %v8160
  %v8162 = vsel %vm3062, %v8007, 0.0
  %v8163 = vadd.f32 %v8161, %v8162
  %v8164 = vsel %vm3062, %v8009, 0.0
  %v8165 = vadd.f32 %v8163, %v8164
  %v8166 = vsel %vm3062, %v8012, 0.0
  %v8167 = vadd.f32 %v8165, %v8166
  %v8168 = vsel %vm3062, %v8014, 0.0
  %v8169 = vadd.f32 %v8167, %v8168
  %v8170 = vsel %vm3062, %v8017, 0.0
  %v8171 = vadd.f32 %v8169, %v8170
  %v8172 = vsel %vm3062, %v8019, 0.0
  %v8173 = vadd.f32 %v8171, %v8172
  %v8174 = vsel %vm3062, %v8022, 0.0
  %v8175 = vadd.f32 %v8173, %v8174
  %v8176 = vsel %vm3062, %v8024, 0.0
  %v8177 = vadd.f32 %v8175, %v8176
  %v8178 = vsel %vm3062, %v8027, 0.0
  %v8179 = vadd.f32 %v8177, %v8178
  %v8180 = vsel %vm3062, %v8029, 0.0
  %v8181 = vadd.f32 %v8179, %v8180
  %v8182 = vsel %vm3062, %v8032, 0.0
  %v8183 = vadd.f32 %v8181, %v8182
  %v8184 = vsel %vm3062, %v8034, 0.0
  %v8185 = vadd.f32 %v8183, %v8184
  %v8186 = vsel %vm3062, %v8037, 0.0
  %v8187 = vadd.f32 %v8185, %v8186
  %v8188 = vsel %vm3062, %v8039, 0.0
  %v8189 = vadd.f32 %v8187, %v8188
  %v8190 = vsel %vm3062, %v8042, 0.0
  %v8191 = vadd.f32 %v8189, %v8190
  %v8192 = vsel %vm3062, %v8044, 0.0
  %v8193 = vadd.f32 %v8191, %v8192
  %v8194 = vsel %vm3062, %v8047, 0.0
  %v8195 = vadd.f32 %v8193, %v8194
  %v8196 = vsel %vm3062, %v8049, 0.0
  %v8197 = vadd.f32 %v8195, %v8196
  %v8198 = vsel %vm3062, %v8052, 0.0
  %v8199 = vadd.f32 %v8197, %v8198
  %v8200 = vsel %vm3062, %v8054, 0.0
  %v8201 = vadd.f32 %v8199, %v8200
  %v8202 = vsel %vm3062, %v8057, 0.0
  %v8203 = vadd.f32 %v8201, %v8202
  %v8204 = vsel %vm3062, %v8059, 0.0
  %v8205 = vadd.f32 %v8203, %v8204
  %v8206 = vsel %vm3062, %v8062, 0.0
  %v8207 = vadd.f32 %v8205, %v8206
  %v8208 = vsel %vm3062, %v8064, 0.0
  %v8209 = vadd.f32 %v8207, %v8208
  %v8210 = vsel %vm3062, %v8067, 0.0
  %v8211 = vadd.f32 %v8209, %v8210
  %v8212 = vsel %vm3062, %v8069, 0.0
  %v8213 = vadd.f32 %v8211, %v8212
  %v8214 = vsel %vm3062, %v8072, 0.0
  %v8215 = vadd.f32 %v8213, %v8214
  %v8216 = vsel %vm3062, %v8074, 0.0
  %v8217 = vadd.f32 %v8215, %v8216
  %v8218 = vsel %vm3062, %v8077, 0.0
  %v8219 = vadd.f32 %v8217, %v8218
  %v8220 = vsel %vm3062, %v8079, 0.0
  %v8221 = vadd.f32 %v8219, %v8220
  %v8222 = vsel %vm3062, %v8082, 0.0
  %v8223 = vadd.f32 %v8221, %v8222
  %v8224 = vsel %vm3062, %v8084, 0.0
  %v8225 = vadd.f32 %v8223, %v8224
  %v8226 = vsel %vm3062, %v8087, 0.0
  %v8227 = vadd.f32 %v8225, %v8226
  %v8228 = vsel %vm3062, %v8089, 0.0
  %v8229 = vadd.f32 %v8227, %v8228
  %v8230 = vsel %vm3062, %v8092, 0.0
  %v8231 = vadd.f32 %v8229, %v8230
  %v8232 = vsel %vm3062, %v8094, 0.0
  %v8233 = vadd.f32 %v8231, %v8232
  %v8234 = vsel %vm3062, %v8097, 0.0
  %v8235 = vadd.f32 %v8233, %v8234
  %v8236 = vsel %vm3062, %v8099, 0.0
  %v8237 = vadd.f32 %v8235, %v8236
  %v8238 = vsel %vm3062, %v8102, 0.0
  %v8239 = vadd.f32 %v8237, %v8238
  %v8240 = vsel %vm3062, %v8104, 0.0
  %v8241 = vadd.f32 %v8239, %v8240
  %v8242 = vsel %vm3062, %v8107, 0.0
  %v8243 = vadd.f32 %v8241, %v8242
  %v8244 = vsel %vm3062, %v8109, 0.0
  %v8245 = vadd.f32 %v8243, %v8244
  %v8246 = vsel %vm3062, %v8112, 0.0
  %v8247 = vadd.f32 %v8245, %v8246
  %v8248 = vsel %vm3062, %v8114, 0.0
  %v8249 = vadd.f32 %v8247, %v8248
  %v8250 = vsel %vm3062, %v8117, 0.0
  %v8251 = vadd.f32 %v8249, %v8250
  %v8252 = vsel %vm3062, %v8119, 0.0
  %v8253 = vadd.f32 %v8251, %v8252
  %v8254 = vsel %vm3062, %v8122, 0.0
  %v8255 = vadd.f32 %v8253, %v8254
  %v8256 = vsel %vm3062, %v8124, 0.0
  %v8257 = vadd.f32 %v8255, %v8256
  %v8258 = vsel %vm3062, %v8127, 0.0
  %v8259 = vadd.f32 %v8257, %v8258
  %v8260 = vsel %vm3062, %v8129, 0.0
  %v8261 = vadd.f32 %v8259, %v8260
  %v8262 = vsel %vm3062, %v8132, 0.0
  %v8263 = vadd.f32 %v8261, %v8262
  %v8264 = vsel %vm3062, %v8134, 0.0
  %v8265 = vadd.f32 %v8263, %v8264
  %v8266 = vsel %vm3062, %v8137, 0.0
  %v8267 = vadd.f32 %v8265, %v8266
  %v8268 = vsel %vm3062, %v8139, 0.0
  %v8269 = vadd.f32 %v8267, %v8268
  %v8270 = vrot.slane %v8269, 4
  %v8271 = vadd.f32 %v8269, %v8270
  %v8272 = vrot.slane %v8271, 2
  %v8273 = vadd.f32 %v8271, %v8272
  %v8274 = vrot.slane %v8273, 1
  %v8275 = vadd.f32 %v8273, %v8274
  %v8276 = vmul.f32 %v8275, 0.001953125
  %v8277 = vsub.f32 %v7982, %v8276
  %v8278 = vsub.f32 %v7984, %v8276
  %v8279 = vsub.f32 %v7987, %v8276
  %v8280 = vsub.f32 %v7989, %v8276
  %v8281 = vsub.f32 %v7992, %v8276
  %v8282 = vsub.f32 %v7994, %v8276
  %v8283 = vsub.f32 %v7997, %v8276
  %v8284 = vsub.f32 %v7999, %v8276
  %v8285 = vsub.f32 %v8002, %v8276
  %v8286 = vsub.f32 %v8004, %v8276
  %v8287 = vsub.f32 %v8007, %v8276
  %v8288 = vsub.f32 %v8009, %v8276
  %v8289 = vsub.f32 %v8012, %v8276
  %v8290 = vsub.f32 %v8014, %v8276
  %v8291 = vsub.f32 %v8017, %v8276
  %v8292 = vsub.f32 %v8019, %v8276
  %v8293 = vsub.f32 %v8022, %v8276
  %v8294 = vsub.f32 %v8024, %v8276
  %v8295 = vsub.f32 %v8027, %v8276
  %v8296 = vsub.f32 %v8029, %v8276
  %v8297 = vsub.f32 %v8032, %v8276
  %v8298 = vsub.f32 %v8034, %v8276
  %v8299 = vsub.f32 %v8037, %v8276
  %v8300 = vsub.f32 %v8039, %v8276
  %v8301 = vsub.f32 %v8042, %v8276
  %v8302 = vsub.f32 %v8044, %v8276
  %v8303 = vsub.f32 %v8047, %v8276
  %v8304 = vsub.f32 %v8049, %v8276
  %v8305 = vsub.f32 %v8052, %v8276
  %v8306 = vsub.f32 %v8054, %v8276
  %v8307 = vsub.f32 %v8057, %v8276
  %v8308 = vsub.f32 %v8059, %v8276
  %v8309 = vsub.f32 %v8062, %v8276
  %v8310 = vsub.f32 %v8064, %v8276
  %v8311 = vsub.f32 %v8067, %v8276
  %v8312 = vsub.f32 %v8069, %v8276
  %v8313 = vsub.f32 %v8072, %v8276
  %v8314 = vsub.f32 %v8074, %v8276
  %v8315 = vsub.f32 %v8077, %v8276
  %v8316 = vsub.f32 %v8079, %v8276
  %v8317 = vsub.f32 %v8082, %v8276
  %v8318 = vsub.f32 %v8084, %v8276
  %v8319 = vsub.f32 %v8087, %v8276
  %v8320 = vsub.f32 %v8089, %v8276
  %v8321 = vsub.f32 %v8092, %v8276
  %v8322 = vsub.f32 %v8094, %v8276
  %v8323 = vsub.f32 %v8097, %v8276
  %v8324 = vsub.f32 %v8099, %v8276
  %v8325 = vsub.f32 %v8102, %v8276
  %v8326 = vsub.f32 %v8104, %v8276
  %v8327 = vsub.f32 %v8107, %v8276
  %v8328 = vsub.f32 %v8109, %v8276
  %v8329 = vsub.f32 %v8112, %v8276
  %v8330 = vsub.f32 %v8114, %v8276
  %v8331 = vsub.f32 %v8117, %v8276
  %v8332 = vsub.f32 %v8119, %v8276
  %v8333 = vsub.f32 %v8122, %v8276
  %v8334 = vsub.f32 %v8124, %v8276
  %v8335 = vsub.f32 %v8127, %v8276
  %v8336 = vsub.f32 %v8129, %v8276
  %v8337 = vsub.f32 %v8132, %v8276
  %v8338 = vsub.f32 %v8134, %v8276
  %v8339 = vsub.f32 %v8137, %v8276
  %v8340 = vsub.f32 %v8139, %v8276
  %v8341 = vmul.f32 %v8277, %v8277
  %v8342 = vmul.f32 %v8278, %v8278
  %v8343 = vmul.f32 %v8279, %v8279
  %v8344 = vmul.f32 %v8280, %v8280
  %v8345 = vmul.f32 %v8281, %v8281
  %v8346 = vmul.f32 %v8282, %v8282
  %v8347 = vmul.f32 %v8283, %v8283
  %v8348 = vmul.f32 %v8284, %v8284
  %v8349 = vmul.f32 %v8285, %v8285
  %v8350 = vmul.f32 %v8286, %v8286
  %v8351 = vmul.f32 %v8287, %v8287
  %v8352 = vmul.f32 %v8288, %v8288
  %v8353 = vmul.f32 %v8289, %v8289
  %v8354 = vmul.f32 %v8290, %v8290
  %v8355 = vmul.f32 %v8291, %v8291
  %v8356 = vmul.f32 %v8292, %v8292
  %v8357 = vmul.f32 %v8293, %v8293
  %v8358 = vmul.f32 %v8294, %v8294
  %v8359 = vmul.f32 %v8295, %v8295
  %v8360 = vmul.f32 %v8296, %v8296
  %v8361 = vmul.f32 %v8297, %v8297
  %v8362 = vmul.f32 %v8298, %v8298
  %v8363 = vmul.f32 %v8299, %v8299
  %v8364 = vmul.f32 %v8300, %v8300
  %v8365 = vmul.f32 %v8301, %v8301
  %v8366 = vmul.f32 %v8302, %v8302
  %v8367 = vmul.f32 %v8303, %v8303
  %v8368 = vmul.f32 %v8304, %v8304
  %v8369 = vmul.f32 %v8305, %v8305
  %v8370 = vmul.f32 %v8306, %v8306
  %v8371 = vmul.f32 %v8307, %v8307
  %v8372 = vmul.f32 %v8308, %v8308
  %v8373 = vmul.f32 %v8309, %v8309
  %v8374 = vmul.f32 %v8310, %v8310
  %v8375 = vmul.f32 %v8311, %v8311
  %v8376 = vmul.f32 %v8312, %v8312
  %v8377 = vmul.f32 %v8313, %v8313
  %v8378 = vmul.f32 %v8314, %v8314
  %v8379 = vmul.f32 %v8315, %v8315
  %v8380 = vmul.f32 %v8316, %v8316
  %v8381 = vmul.f32 %v8317, %v8317
  %v8382 = vmul.f32 %v8318, %v8318
  %v8383 = vmul.f32 %v8319, %v8319
  %v8384 = vmul.f32 %v8320, %v8320
  %v8385 = vmul.f32 %v8321, %v8321
  %v8386 = vmul.f32 %v8322, %v8322
  %v8387 = vmul.f32 %v8323, %v8323
  %v8388 = vmul.f32 %v8324, %v8324
  %v8389 = vmul.f32 %v8325, %v8325
  %v8390 = vmul.f32 %v8326, %v8326
  %v8391 = vmul.f32 %v8327, %v8327
  %v8392 = vmul.f32 %v8328, %v8328
  %v8393 = vmul.f32 %v8329, %v8329
  %v8394 = vmul.f32 %v8330, %v8330
  %v8395 = vmul.f32 %v8331, %v8331
  %v8396 = vmul.f32 %v8332, %v8332
  %v8397 = vmul.f32 %v8333, %v8333
  %v8398 = vmul.f32 %v8334, %v8334
  %v8399 = vmul.f32 %v8335, %v8335
  %v8400 = vmul.f32 %v8336, %v8336
  %v8401 = vmul.f32 %v8337, %v8337
  %v8402 = vmul.f32 %v8338, %v8338
  %v8403 = vmul.f32 %v8339, %v8339
  %v8404 = vmul.f32 %v8340, %v8340
  %v8405 = vsel %vm3062, %v8341, 0.0
  %v8406 = vsel %vm3062, %v8342, 0.0
  %v8407 = vadd.f32 %v8405, %v8406
  %v8408 = vsel %vm3062, %v8343, 0.0
  %v8409 = vadd.f32 %v8407, %v8408
  %v8410 = vsel %vm3062, %v8344, 0.0
  %v8411 = vadd.f32 %v8409, %v8410
  %v8412 = vsel %vm3062, %v8345, 0.0
  %v8413 = vadd.f32 %v8411, %v8412
  %v8414 = vsel %vm3062, %v8346, 0.0
  %v8415 = vadd.f32 %v8413, %v8414
  %v8416 = vsel %vm3062, %v8347, 0.0
  %v8417 = vadd.f32 %v8415, %v8416
  %v8418 = vsel %vm3062, %v8348, 0.0
  %v8419 = vadd.f32 %v8417, %v8418
  %v8420 = vsel %vm3062, %v8349, 0.0
  %v8421 = vadd.f32 %v8419, %v8420
  %v8422 = vsel %vm3062, %v8350, 0.0
  %v8423 = vadd.f32 %v8421, %v8422
  %v8424 = vsel %vm3062, %v8351, 0.0
  %v8425 = vadd.f32 %v8423, %v8424
  %v8426 = vsel %vm3062, %v8352, 0.0
  %v8427 = vadd.f32 %v8425, %v8426
  %v8428 = vsel %vm3062, %v8353, 0.0
  %v8429 = vadd.f32 %v8427, %v8428
  %v8430 = vsel %vm3062, %v8354, 0.0
  %v8431 = vadd.f32 %v8429, %v8430
  %v8432 = vsel %vm3062, %v8355, 0.0
  %v8433 = vadd.f32 %v8431, %v8432
  %v8434 = vsel %vm3062, %v8356, 0.0
  %v8435 = vadd.f32 %v8433, %v8434
  %v8436 = vsel %vm3062, %v8357, 0.0
  %v8437 = vadd.f32 %v8435, %v8436
  %v8438 = vsel %vm3062, %v8358, 0.0
  %v8439 = vadd.f32 %v8437, %v8438
  %v8440 = vsel %vm3062, %v8359, 0.0
  %v8441 = vadd.f32 %v8439, %v8440
  %v8442 = vsel %vm3062, %v8360, 0.0
  %v8443 = vadd.f32 %v8441, %v8442
  %v8444 = vsel %vm3062, %v8361, 0.0
  %v8445 = vadd.f32 %v8443, %v8444
  %v8446 = vsel %vm3062, %v8362, 0.0
  %v8447 = vadd.f32 %v8445, %v8446
  %v8448 = vsel %vm3062, %v8363, 0.0
  %v8449 = vadd.f32 %v8447, %v8448
  %v8450 = vsel %vm3062, %v8364, 0.0
  %v8451 = vadd.f32 %v8449, %v8450
  %v8452 = vsel %vm3062, %v8365, 0.0
  %v8453 = vadd.f32 %v8451, %v8452
  %v8454 = vsel %vm3062, %v8366, 0.0
  %v8455 = vadd.f32 %v8453, %v8454
  %v8456 = vsel %vm3062, %v8367, 0.0
  %v8457 = vadd.f32 %v8455, %v8456
  %v8458 = vsel %vm3062, %v8368, 0.0
  %v8459 = vadd.f32 %v8457, %v8458
  %v8460 = vsel %vm3062, %v8369, 0.0
  %v8461 = vadd.f32 %v8459, %v8460
  %v8462 = vsel %vm3062, %v8370, 0.0
  %v8463 = vadd.f32 %v8461, %v8462
  %v8464 = vsel %vm3062, %v8371, 0.0
  %v8465 = vadd.f32 %v8463, %v8464
  %v8466 = vsel %vm3062, %v8372, 0.0
  %v8467 = vadd.f32 %v8465, %v8466
  %v8468 = vsel %vm3062, %v8373, 0.0
  %v8469 = vadd.f32 %v8467, %v8468
  %v8470 = vsel %vm3062, %v8374, 0.0
  %v8471 = vadd.f32 %v8469, %v8470
  %v8472 = vsel %vm3062, %v8375, 0.0
  %v8473 = vadd.f32 %v8471, %v8472
  %v8474 = vsel %vm3062, %v8376, 0.0
  %v8475 = vadd.f32 %v8473, %v8474
  %v8476 = vsel %vm3062, %v8377, 0.0
  %v8477 = vadd.f32 %v8475, %v8476
  %v8478 = vsel %vm3062, %v8378, 0.0
  %v8479 = vadd.f32 %v8477, %v8478
  %v8480 = vsel %vm3062, %v8379, 0.0
  %v8481 = vadd.f32 %v8479, %v8480
  %v8482 = vsel %vm3062, %v8380, 0.0
  %v8483 = vadd.f32 %v8481, %v8482
  %v8484 = vsel %vm3062, %v8381, 0.0
  %v8485 = vadd.f32 %v8483, %v8484
  %v8486 = vsel %vm3062, %v8382, 0.0
  %v8487 = vadd.f32 %v8485, %v8486
  %v8488 = vsel %vm3062, %v8383, 0.0
  %v8489 = vadd.f32 %v8487, %v8488
  %v8490 = vsel %vm3062, %v8384, 0.0
  %v8491 = vadd.f32 %v8489, %v8490
  %v8492 = vsel %vm3062, %v8385, 0.0
  %v8493 = vadd.f32 %v8491, %v8492
  %v8494 = vsel %vm3062, %v8386, 0.0
  %v8495 = vadd.f32 %v8493, %v8494
  %v8496 = vsel %vm3062, %v8387, 0.0
  %v8497 = vadd.f32 %v8495, %v8496
  %v8498 = vsel %vm3062, %v8388, 0.0
  %v8499 = vadd.f32 %v8497, %v8498
  %v8500 = vsel %vm3062, %v8389, 0.0
  %v8501 = vadd.f32 %v8499, %v8500
  %v8502 = vsel %vm3062, %v8390, 0.0
  %v8503 = vadd.f32 %v8501, %v8502
  %v8504 = vsel %vm3062, %v8391, 0.0
  %v8505 = vadd.f32 %v8503, %v8504
  %v8506 = vsel %vm3062, %v8392, 0.0
  %v8507 = vadd.f32 %v8505, %v8506
  %v8508 = vsel %vm3062, %v8393, 0.0
  %v8509 = vadd.f32 %v8507, %v8508
  %v8510 = vsel %vm3062, %v8394, 0.0
  %v8511 = vadd.f32 %v8509, %v8510
  %v8512 = vsel %vm3062, %v8395, 0.0
  %v8513 = vadd.f32 %v8511, %v8512
  %v8514 = vsel %vm3062, %v8396, 0.0
  %v8515 = vadd.f32 %v8513, %v8514
  %v8516 = vsel %vm3062, %v8397, 0.0
  %v8517 = vadd.f32 %v8515, %v8516
  %v8518 = vsel %vm3062, %v8398, 0.0
  %v8519 = vadd.f32 %v8517, %v8518
  %v8520 = vsel %vm3062, %v8399, 0.0
  %v8521 = vadd.f32 %v8519, %v8520
  %v8522 = vsel %vm3062, %v8400, 0.0
  %v8523 = vadd.f32 %v8521, %v8522
  %v8524 = vsel %vm3062, %v8401, 0.0
  %v8525 = vadd.f32 %v8523, %v8524
  %v8526 = vsel %vm3062, %v8402, 0.0
  %v8527 = vadd.f32 %v8525, %v8526
  %v8528 = vsel %vm3062, %v8403, 0.0
  %v8529 = vadd.f32 %v8527, %v8528
  %v8530 = vsel %vm3062, %v8404, 0.0
  %v8531 = vadd.f32 %v8529, %v8530
  %v8532 = vrot.slane %v8531, 4
  %v8533 = vadd.f32 %v8531, %v8532
  %v8534 = vrot.slane %v8533, 2
  %v8535 = vadd.f32 %v8533, %v8534
  %v8536 = vrot.slane %v8535, 1
  %v8537 = vadd.f32 %v8535, %v8536
  %v8538 = vmul.f32 %v8537, 0.001953125
  %v8539 = vadd.f32 %v8538, 1e-05
  %v8540 = vrsqrt.pop %v8539
  %v8541 = vmul.f32 %v8540, %v8539
  %v8542 = vmul.f32 %v8541, %v8540
  %v8543 = vmul.f32 0.5, %v8542
  %v8544 = vsub.f32 1.5, %v8543
  %v8545 = vmul.f32 %v8540, %v8544
  %vm8546 = vweird.f32 %v8539
  %vm8547 = vweird.f32 %v8540
  %vm8548 = vmor %vm8546, %vm8547
  %v8549 = vsel %vm8548, %v8540, %v8545
  %v8550 = vmul.f32 %v8549, %v8141
  %v8551 = vperm.slane %v8550, 0
  %v8552 = vmul.f32 %v8277, %v8551
  %v8553 = vmul.f32 %v8278, %v8551
  %v8554 = vmul.f32 %v8279, %v8551
  %v8555 = vmul.f32 %v8280, %v8551
  %v8556 = vmul.f32 %v8281, %v8551
  %v8557 = vmul.f32 %v8282, %v8551
  %v8558 = vmul.f32 %v8283, %v8551
  %v8559 = vmul.f32 %v8284, %v8551
  %v8560 = vmul.f32 %v8285, %v8551
  %v8561 = vmul.f32 %v8286, %v8551
  %v8562 = vmul.f32 %v8287, %v8551
  %v8563 = vmul.f32 %v8288, %v8551
  %v8564 = vmul.f32 %v8289, %v8551
  %v8565 = vmul.f32 %v8290, %v8551
  %v8566 = vmul.f32 %v8291, %v8551
  %v8567 = vmul.f32 %v8292, %v8551
  %v8568 = vmul.f32 %v8293, %v8551
  %v8569 = vmul.f32 %v8294, %v8551
  %v8570 = vmul.f32 %v8295, %v8551
  %v8571 = vmul.f32 %v8296, %v8551
  %v8572 = vmul.f32 %v8297, %v8551
  %v8573 = vmul.f32 %v8298, %v8551
  %v8574 = vmul.f32 %v8299, %v8551
  %v8575 = vmul.f32 %v8300, %v8551
  %v8576 = vmul.f32 %v8301, %v8551
  %v8577 = vmul.f32 %v8302, %v8551
  %v8578 = vmul.f32 %v8303, %v8551
  %v8579 = vmul.f32 %v8304, %v8551
  %v8580 = vmul.f32 %v8305, %v8551
  %v8581 = vmul.f32 %v8306, %v8551
  %v8582 = vmul.f32 %v8307, %v8551
  %v8583 = vmul.f32 %v8308, %v8551
  %v8584 = vmul.f32 %v8309, %v8551
  %v8585 = vmul.f32 %v8310, %v8551
  %v8586 = vmul.f32 %v8311, %v8551
  %v8587 = vmul.f32 %v8312, %v8551
  %v8588 = vmul.f32 %v8313, %v8551
  %v8589 = vmul.f32 %v8314, %v8551
  %v8590 = vmul.f32 %v8315, %v8551
  %v8591 = vmul.f32 %v8316, %v8551
  %v8592 = vmul.f32 %v8317, %v8551
  %v8593 = vmul.f32 %v8318, %v8551
  %v8594 = vmul.f32 %v8319, %v8551
  %v8595 = vmul.f32 %v8320, %v8551
  %v8596 = vmul.f32 %v8321, %v8551
  %v8597 = vmul.f32 %v8322, %v8551
  %v8598 = vmul.f32 %v8323, %v8551
  %v8599 = vmul.f32 %v8324, %v8551
  %v8600 = vmul.f32 %v8325, %v8551
  %v8601 = vmul.f32 %v8326, %v8551
  %v8602 = vmul.f32 %v8327, %v8551
  %v8603 = vmul.f32 %v8328, %v8551
  %v8604 = vmul.f32 %v8329, %v8551
  %v8605 = vmul.f32 %v8330, %v8551
  %v8606 = vmul.f32 %v8331, %v8551
  %v8607 = vmul.f32 %v8332, %v8551
  %v8608 = vmul.f32 %v8333, %v8551
  %v8609 = vmul.f32 %v8334, %v8551
  %v8610 = vmul.f32 %v8335, %v8551
  %v8611 = vmul.f32 %v8336, %v8551
  %v8612 = vmul.f32 %v8337, %v8551
  %v8613 = vmul.f32 %v8338, %v8551
  %v8614 = vmul.f32 %v8339, %v8551
  %v8615 = vmul.f32 %v8340, %v8551
  %v8617 = vperm.slane %v8142, 0
  %v8619 = vadd.f32 %v8552, %v8617
  %v8620 = vadd.f32 %v8553, %v8617
  %v8621 = vadd.f32 %v8554, %v8617
  %v8622 = vadd.f32 %v8555, %v8617
  %v8623 = vadd.f32 %v8556, %v8617
  %v8624 = vadd.f32 %v8557, %v8617
  %v8625 = vadd.f32 %v8558, %v8617
  %v8626 = vadd.f32 %v8559, %v8617
  %v8627 = vadd.f32 %v8560, %v8617
  %v8628 = vadd.f32 %v8561, %v8617
  %v8629 = vadd.f32 %v8562, %v8617
  %v8630 = vadd.f32 %v8563, %v8617
  %v8631 = vadd.f32 %v8564, %v8617
  %v8632 = vadd.f32 %v8565, %v8617
  %v8633 = vadd.f32 %v8566, %v8617
  %v8634 = vadd.f32 %v8567, %v8617
  %v8635 = vadd.f32 %v8568, %v8617
  %v8636 = vadd.f32 %v8569, %v8617
  %v8637 = vadd.f32 %v8570, %v8617
  %v8638 = vadd.f32 %v8571, %v8617
  %v8639 = vadd.f32 %v8572, %v8617
  %v8640 = vadd.f32 %v8573, %v8617
  %v8641 = vadd.f32 %v8574, %v8617
  %v8642 = vadd.f32 %v8575, %v8617
  %v8643 = vadd.f32 %v8576, %v8617
  %v8644 = vadd.f32 %v8577, %v8617
  %v8645 = vadd.f32 %v8578, %v8617
  %v8646 = vadd.f32 %v8579, %v8617
  %v8647 = vadd.f32 %v8580, %v8617
  %v8648 = vadd.f32 %v8581, %v8617
  %v8649 = vadd.f32 %v8582, %v8617
  %v8650 = vadd.f32 %v8583, %v8617
  %v8651 = vadd.f32 %v8584, %v8617
  %v8652 = vadd.f32 %v8585, %v8617
  %v8653 = vadd.f32 %v8586, %v8617
  %v8654 = vadd.f32 %v8587, %v8617
  %v8655 = vadd.f32 %v8588, %v8617
  %v8656 = vadd.f32 %v8589, %v8617
  %v8657 = vadd.f32 %v8590, %v8617
  %v8658 = vadd.f32 %v8591, %v8617
  %v8659 = vadd.f32 %v8592, %v8617
  %v8660 = vadd.f32 %v8593, %v8617
  %v8661 = vadd.f32 %v8594, %v8617
  %v8662 = vadd.f32 %v8595, %v8617
  %v8663 = vadd.f32 %v8596, %v8617
  %v8664 = vadd.f32 %v8597, %v8617
  %v8665 = vadd.f32 %v8598, %v8617
  %v8666 = vadd.f32 %v8599, %v8617
  %v8667 = vadd.f32 %v8600, %v8617
  %v8668 = vadd.f32 %v8601, %v8617
  %v8669 = vadd.f32 %v8602, %v8617
  %v8670 = vadd.f32 %v8603, %v8617
  %v8671 = vadd.f32 %v8604, %v8617
  %v8672 = vadd.f32 %v8605, %v8617
  %v8673 = vadd.f32 %v8606, %v8617
  %v8674 = vadd.f32 %v8607, %v8617
  %v8675 = vadd.f32 %v8608, %v8617
  %v8676 = vadd.f32 %v8609, %v8617
  %v8677 = vadd.f32 %v8610, %v8617
  %v8678 = vadd.f32 %v8611, %v8617
  %v8679 = vadd.f32 %v8612, %v8617
  %v8680 = vadd.f32 %v8613, %v8617
  %v8681 = vadd.f32 %v8614, %v8617
  %v8682 = vadd.f32 %v8615, %v8617
  %v8683 = vmax.f32 %v8619, 0.0
  %v8684 = vmax.f32 %v8620, 0.0
  %v8685 = vmax.f32 %v8621, 0.0
  %v8686 = vmax.f32 %v8622, 0.0
  %v8687 = vmax.f32 %v8623, 0.0
  %v8688 = vmax.f32 %v8624, 0.0
  %v8689 = vmax.f32 %v8625, 0.0
  %v8690 = vmax.f32 %v8626, 0.0
  %v8691 = vmax.f32 %v8627, 0.0
  %v8692 = vmax.f32 %v8628, 0.0
  %v8693 = vmax.f32 %v8629, 0.0
  %v8694 = vmax.f32 %v8630, 0.0
  %v8695 = vmax.f32 %v8631, 0.0
  %v8696 = vmax.f32 %v8632, 0.0
  %v8697 = vmax.f32 %v8633, 0.0
  %v8698 = vmax.f32 %v8634, 0.0
  %v8699 = vmax.f32 %v8635, 0.0
  %v8700 = vmax.f32 %v8636, 0.0
  %v8701 = vmax.f32 %v8637, 0.0
  %v8702 = vmax.f32 %v8638, 0.0
  %v8703 = vmax.f32 %v8639, 0.0
  %v8704 = vmax.f32 %v8640, 0.0
  %v8705 = vmax.f32 %v8641, 0.0
  %v8706 = vmax.f32 %v8642, 0.0
  %v8707 = vmax.f32 %v8643, 0.0
  %v8708 = vmax.f32 %v8644, 0.0
  %v8709 = vmax.f32 %v8645, 0.0
  %v8710 = vmax.f32 %v8646, 0.0
  %v8711 = vmax.f32 %v8647, 0.0
  %v8712 = vmax.f32 %v8648, 0.0
  %v8713 = vmax.f32 %v8649, 0.0
  %v8714 = vmax.f32 %v8650, 0.0
  %v8715 = vmax.f32 %v8651, 0.0
  %v8716 = vmax.f32 %v8652, 0.0
  %v8717 = vmax.f32 %v8653, 0.0
  %v8718 = vmax.f32 %v8654, 0.0
  %v8719 = vmax.f32 %v8655, 0.0
  %v8720 = vmax.f32 %v8656, 0.0
  %v8721 = vmax.f32 %v8657, 0.0
  %v8722 = vmax.f32 %v8658, 0.0
  %v8723 = vmax.f32 %v8659, 0.0
  %v8724 = vmax.f32 %v8660, 0.0
  %v8725 = vmax.f32 %v8661, 0.0
  %v8726 = vmax.f32 %v8662, 0.0
  %v8727 = vmax.f32 %v8663, 0.0
  %v8728 = vmax.f32 %v8664, 0.0
  %v8729 = vmax.f32 %v8665, 0.0
  %v8730 = vmax.f32 %v8666, 0.0
  %v8731 = vmax.f32 %v8667, 0.0
  %v8732 = vmax.f32 %v8668, 0.0
  %v8733 = vmax.f32 %v8669, 0.0
  %v8734 = vmax.f32 %v8670, 0.0
  %v8735 = vmax.f32 %v8671, 0.0
  %v8736 = vmax.f32 %v8672, 0.0
  %v8737 = vmax.f32 %v8673, 0.0
  %v8738 = vmax.f32 %v8674, 0.0
  %v8739 = vmax.f32 %v8675, 0.0
  %v8740 = vmax.f32 %v8676, 0.0
  %v8741 = vmax.f32 %v8677, 0.0
  %v8742 = vmax.f32 %v8678, 0.0
  %v8743 = vmax.f32 %v8679, 0.0
  %v8744 = vmax.f32 %v8680, 0.0
  %v8745 = vmax.f32 %v8681, 0.0
  %v8746 = vmax.f32 %v8682, 0.0
  %v8747 = vpack.c.bf16 %v8683, %v8683
  %v8748 = vpack.c.bf16 %v8684, %v8684
  %v8749 = vpack.c.bf16 %v8685, %v8685
  %v8750 = vpack.c.bf16 %v8686, %v8686
  %v8751 = vpack.c.bf16 %v8687, %v8687
  %v8752 = vpack.c.bf16 %v8688, %v8688
  %v8753 = vpack.c.bf16 %v8689, %v8689
  %v8754 = vpack.c.bf16 %v8690, %v8690
  %v8755 = vpack.c.bf16 %v8691, %v8691
  %v8756 = vpack.c.bf16 %v8692, %v8692
  %v8757 = vpack.c.bf16 %v8693, %v8693
  %v8758 = vpack.c.bf16 %v8694, %v8694
  %v8759 = vpack.c.bf16 %v8695, %v8695
  %v8760 = vpack.c.bf16 %v8696, %v8696
  %v8761 = vpack.c.bf16 %v8697, %v8697
  %v8762 = vpack.c.bf16 %v8698, %v8698
  %v8763 = vpack.c.bf16 %v8699, %v8699
  %v8764 = vpack.c.bf16 %v8700, %v8700
  %v8765 = vpack.c.bf16 %v8701, %v8701
  %v8766 = vpack.c.bf16 %v8702, %v8702
  %v8767 = vpack.c.bf16 %v8703, %v8703
  %v8768 = vpack.c.bf16 %v8704, %v8704
  %v8769 = vpack.c.bf16 %v8705, %v8705
  %v8770 = vpack.c.bf16 %v8706, %v8706
  %v8771 = vpack.c.bf16 %v8707, %v8707
  %v8772 = vpack.c.bf16 %v8708, %v8708
  %v8773 = vpack.c.bf16 %v8709, %v8709
  %v8774 = vpack.c.bf16 %v8710, %v8710
  %v8775 = vpack.c.bf16 %v8711, %v8711
  %v8776 = vpack.c.bf16 %v8712, %v8712
  %v8777 = vpack.c.bf16 %v8713, %v8713
  %v8778 = vpack.c.bf16 %v8714, %v8714
  %v8779 = vpack.c.bf16 %v8715, %v8715
  %v8780 = vpack.c.bf16 %v8716, %v8716
  %v8781 = vpack.c.bf16 %v8717, %v8717
  %v8782 = vpack.c.bf16 %v8718, %v8718
  %v8783 = vpack.c.bf16 %v8719, %v8719
  %v8784 = vpack.c.bf16 %v8720, %v8720
  %v8785 = vpack.c.bf16 %v8721, %v8721
  %v8786 = vpack.c.bf16 %v8722, %v8722
  %v8787 = vpack.c.bf16 %v8723, %v8723
  %v8788 = vpack.c.bf16 %v8724, %v8724
  %v8789 = vpack.c.bf16 %v8725, %v8725
  %v8790 = vpack.c.bf16 %v8726, %v8726
  %v8791 = vpack.c.bf16 %v8727, %v8727
  %v8792 = vpack.c.bf16 %v8728, %v8728
  %v8793 = vpack.c.bf16 %v8729, %v8729
  %v8794 = vpack.c.bf16 %v8730, %v8730
  %v8795 = vpack.c.bf16 %v8731, %v8731
  %v8796 = vpack.c.bf16 %v8732, %v8732
  %v8797 = vpack.c.bf16 %v8733, %v8733
  %v8798 = vpack.c.bf16 %v8734, %v8734
  %v8799 = vpack.c.bf16 %v8735, %v8735
  %v8800 = vpack.c.bf16 %v8736, %v8736
  %v8801 = vpack.c.bf16 %v8737, %v8737
  %v8802 = vpack.c.bf16 %v8738, %v8738
  %v8803 = vpack.c.bf16 %v8739, %v8739
  %v8804 = vpack.c.bf16 %v8740, %v8740
  %v8805 = vpack.c.bf16 %v8741, %v8741
  %v8806 = vpack.c.bf16 %v8742, %v8742
  %v8807 = vpack.c.bf16 %v8743, %v8743
  %v8808 = vpack.c.bf16 %v8744, %v8744
  %v8809 = vpack.c.bf16 %v8745, %v8745
  %v8810 = vpack.c.bf16 %v8746, %v8746
  %vm8811 = vcmask 60416
  %8812 = vst.msk [vmem:[%s9] sm:$0xf] %vm8811, %v8747
  %8813 = vst.msk [vmem:[%s9 + $0x4] sm:$0xf] %vm8811, %v8748
  %8814 = vst.msk [vmem:[%s9 + $0x8] sm:$0xf] %vm8811, %v8749
  %8815 = vst.msk [vmem:[%s9 + $0xc] sm:$0xf] %vm8811, %v8750
  %8816 = vst.msk [vmem:[%s9 + $0x10] sm:$0xf] %vm8811, %v8751
  %8817 = vst.msk [vmem:[%s9 + $0x14] sm:$0xf] %vm8811, %v8752
  %8818 = vst.msk [vmem:[%s9 + $0x18] sm:$0xf] %vm8811, %v8753
  %8819 = vst.msk [vmem:[%s9 + $0x1c] sm:$0xf] %vm8811, %v8754
  %8820 = vst.msk [vmem:[%s9 + $0x20] sm:$0xf] %vm8811, %v8755
  %8821 = vst.msk [vmem:[%s9 + $0x24] sm:$0xf] %vm8811, %v8756
  %8822 = vst.msk [vmem:[%s9 + $0x28] sm:$0xf] %vm8811, %v8757
  %8823 = vst.msk [vmem:[%s9 + $0x2c] sm:$0xf] %vm8811, %v8758
  %8824 = vst.msk [vmem:[%s9 + $0x30] sm:$0xf] %vm8811, %v8759
  %8825 = vst.msk [vmem:[%s9 + $0x34] sm:$0xf] %vm8811, %v8760
  %8826 = vst.msk [vmem:[%s9 + $0x38] sm:$0xf] %vm8811, %v8761
  %8827 = vst.msk [vmem:[%s9 + $0x3c] sm:$0xf] %vm8811, %v8762
  %8828 = vst.msk [vmem:[%s9 + $0x40] sm:$0xf] %vm8811, %v8763
  %8829 = vst.msk [vmem:[%s9 + $0x44] sm:$0xf] %vm8811, %v8764
  %8830 = vst.msk [vmem:[%s9 + $0x48] sm:$0xf] %vm8811, %v8765
  %8831 = vst.msk [vmem:[%s9 + $0x4c] sm:$0xf] %vm8811, %v8766
  %8832 = vst.msk [vmem:[%s9 + $0x50] sm:$0xf] %vm8811, %v8767
  %8833 = vst.msk [vmem:[%s9 + $0x54] sm:$0xf] %vm8811, %v8768
  %8834 = vst.msk [vmem:[%s9 + $0x58] sm:$0xf] %vm8811, %v8769
  %8835 = vst.msk [vmem:[%s9 + $0x5c] sm:$0xf] %vm8811, %v8770
  %8836 = vst.msk [vmem:[%s9 + $0x60] sm:$0xf] %vm8811, %v8771
  %8837 = vst.msk [vmem:[%s9 + $0x64] sm:$0xf] %vm8811, %v8772
  %8838 = vst.msk [vmem:[%s9 + $0x68] sm:$0xf] %vm8811, %v8773
  %8839 = vst.msk [vmem:[%s9 + $0x6c] sm:$0xf] %vm8811, %v8774
  %8840 = vst.msk [vmem:[%s9 + $0x70] sm:$0xf] %vm8811, %v8775
  %8841 = vst.msk [vmem:[%s9 + $0x74] sm:$0xf] %vm8811, %v8776
  %8842 = vst.msk [vmem:[%s9 + $0x78] sm:$0xf] %vm8811, %v8777
  %8843 = vst.msk [vmem:[%s9 + $0x7c] sm:$0xf] %vm8811, %v8778
  %8844 = vst.msk [vmem:[%s9 + $0x80] sm:$0xf] %vm8811, %v8779
  %8845 = vst.msk [vmem:[%s9 + $0x84] sm:$0xf] %vm8811, %v8780
  %8846 = vst.msk [vmem:[%s9 + $0x88] sm:$0xf] %vm8811, %v8781
  %8847 = vst.msk [vmem:[%s9 + $0x8c] sm:$0xf] %vm8811, %v8782
  %8848 = vst.msk [vmem:[%s9 + $0x90] sm:$0xf] %vm8811, %v8783
  %8849 = vst.msk [vmem:[%s9 + $0x94] sm:$0xf] %vm8811, %v8784
  %8850 = vst.msk [vmem:[%s9 + $0x98] sm:$0xf] %vm8811, %v8785
  %8851 = vst.msk [vmem:[%s9 + $0x9c] sm:$0xf] %vm8811, %v8786
  %8852 = vst.msk [vmem:[%s9 + $0xa0] sm:$0xf] %vm8811, %v8787
  %8853 = vst.msk [vmem:[%s9 + $0xa4] sm:$0xf] %vm8811, %v8788
  %8854 = vst.msk [vmem:[%s9 + $0xa8] sm:$0xf] %vm8811, %v8789
  %8855 = vst.msk [vmem:[%s9 + $0xac] sm:$0xf] %vm8811, %v8790
  %8856 = vst.msk [vmem:[%s9 + $0xb0] sm:$0xf] %vm8811, %v8791
  %8857 = vst.msk [vmem:[%s9 + $0xb4] sm:$0xf] %vm8811, %v8792
  %8858 = vst.msk [vmem:[%s9 + $0xb8] sm:$0xf] %vm8811, %v8793
  %8859 = vst.msk [vmem:[%s9 + $0xbc] sm:$0xf] %vm8811, %v8794
  %8860 = vst.msk [vmem:[%s9 + $0xc0] sm:$0xf] %vm8811, %v8795
  %8861 = vst.msk [vmem:[%s9 + $0xc4] sm:$0xf] %vm8811, %v8796
  %8862 = vst.msk [vmem:[%s9 + $0xc8] sm:$0xf] %vm8811, %v8797
  %8863 = vst.msk [vmem:[%s9 + $0xcc] sm:$0xf] %vm8811, %v8798
  %8864 = vst.msk [vmem:[%s9 + $0xd0] sm:$0xf] %vm8811, %v8799
  %8865 = vst.msk [vmem:[%s9 + $0xd4] sm:$0xf] %vm8811, %v8800
  %8866 = vst.msk [vmem:[%s9 + $0xd8] sm:$0xf] %vm8811, %v8801
  %8867 = vst.msk [vmem:[%s9 + $0xdc] sm:$0xf] %vm8811, %v8802
  %8868 = vst.msk [vmem:[%s9 + $0xe0] sm:$0xf] %vm8811, %v8803
  %8869 = vst.msk [vmem:[%s9 + $0xe4] sm:$0xf] %vm8811, %v8804
  %8870 = vst.msk [vmem:[%s9 + $0xe8] sm:$0xf] %vm8811, %v8805
  %8871 = vst.msk [vmem:[%s9 + $0xec] sm:$0xf] %vm8811, %v8806
  %8872 = vst.msk [vmem:[%s9 + $0xf0] sm:$0xf] %vm8811, %v8807
  %8873 = vst.msk [vmem:[%s9 + $0xf4] sm:$0xf] %vm8811, %v8808
  %8874 = vst.msk [vmem:[%s9 + $0xf8] sm:$0xf] %vm8811, %v8809
  %8875 = vst.msk [vmem:[%s9 + $0xfc] sm:$0xf] %vm8811, %v8810
  // Predicated region
  $region38: #{tpu_custom_call.1} parent=0 // pred_check
    _
  $region39: #{tpu_custom_call.1} parent=0 // pred_check_branch
    %8877 = sbr.rel (0) target = $region41
  $region40: #{tpu_custom_call.1} parent=0 // pred_region
    _
  $region41: #{tpu_custom_call.1} parent=0 // pred_fallthru
    _
  // Predicated region
  $region42: #{tpu_custom_call.1} parent=0 // pred_check
    _
  $region43: #{tpu_custom_call.1} parent=0 // pred_check_branch
    %8879 = sbr.rel (0) target = $region45
  $region44: #{tpu_custom_call.1} parent=0 // pred_region
    _
  $region45: #{tpu_custom_call.1} parent=0 // pred_fallthru
    _

</llo_original>
